<compile_context>
chip_gen: v6e
topology: v6e:2x2x1
jax: 0.10.0
libtpu: 0.0.40
codegen_flags: <defaults>
</compile_context>

<pallas_src>
import math

import jax
import jax.numpy as jnp
from jax.experimental import pallas as pl
from jax.experimental.pallas import tpu as pltpu

_VMEM_LIMIT = 32 * 1024 * 1024  # explicit scoped-VMEM budget: safe on v5e/v6e and v7x (64 MiB phys)


# ----------------------------------------------------------------------------
# Small helpers
# ----------------------------------------------------------------------------
def _round_up(x, m):
    return (x + m - 1) // m * m


def _pick_tile(m, target=1024):
    # Large token tiles amortize per-grid-step overhead and fill MXU rows.
    return target if m >= target else _round_up(m, 8)


def _pad_rows(x, mult):
    m = x.shape[0]
    mp = _round_up(m, mult)
    if mp != m:
        x = jnp.pad(x, ((0, mp - m), (0, 0)))
    return x, mp


def _const_spec(shape):
    nd = len(shape)
    return pl.BlockSpec(shape, lambda *_: (0,) * nd)   # weight stays VMEM-resident


def _compiler_params(n_axes):
    return pltpu.CompilerParams(
        dimension_semantics=("parallel",) * n_axes,
        vmem_limit_bytes=_VMEM_LIMIT)


# ----------------------------------------------------------------------------
# Kernel A: fused MLP(6 layers) + ConvTranspose2d(stride==kernel) + ReLU, per token tile
# ----------------------------------------------------------------------------
def _token_stage_kernel(x_ref,
                        w1, b1, w2, b2, w3, b3, w4, b4, w5, b5, w6, b6,
                        wt, bt, o_ref):
    h = x_ref[...]
    for w, b in ((w1, b1), (w2, b2), (w3, b3), (w4, b4), (w5, b5)):
        h = jnp.maximum(
            jnp.dot(h, w[...], preferred_element_type=jnp.float32) + b[...], 0.0)
    h = jnp.dot(h, w6[...], preferred_element_type=jnp.float32) + b6[...]
    # ConvTranspose2d with stride == kernel_size as one matmul; columns ordered (i, j, c_out)
    y = jnp.dot(h, wt[...], preferred_element_type=jnp.float32) + bt[...]
    o_ref[...] = jnp.maximum(y, 0.0)   # ReLU right after ConvTranspose2d (first of the Conv stack)


def token_stage_call(tokens, p):
    m, d2 = tokens.shape
    tile = _pick_tile(m)
    tokens, mp = _pad_rows(tokens, tile)
    n = p["mlp_w"][0].shape[1]
    out_dim = p["convT_w2d"].shape[1]

    args = [tokens]
    in_specs = [pl.BlockSpec((tile, d2), lambda i: (i, 0))]
    for w, b in zip(p["mlp_w"], p["mlp_b"]):
        args += [w, b]
        in_specs += [_const_spec(w.shape), _const_spec(b.shape)]
    args += [p["convT_w2d"], p["convT_b_rep"]]
    in_specs += [_const_spec(p["convT_w2d"].shape), _const_spec(p["convT_b_rep"].shape)]

    flops = 2 * mp * (d2 * n + 5 * n * n + n * out_dim)
    bytes_accessed = 4 * (mp * (d2 + out_dim)
                          + d2 * n + 5 * n * n + n * out_dim + 6 * n + out_dim)

    y = pl.pallas_call(
        _token_stage_kernel,
        grid=(mp // tile,),
        in_specs=in_specs,
        out_specs=pl.BlockSpec((tile, out_dim), lambda i: (i, 0)),
        out_shape=jax.ShapeDtypeStruct((mp, out_dim), jnp.float32),
        compiler_params=_compiler_params(1),
        cost_estimate=pl.CostEstimate(flops=int(flops), transcendentals=0,
                                      bytes_accessed=int(bytes_accessed)),
    )(*args)
    return y[:m]


# ----------------------------------------------------------------------------
# Kernel B: fused Conv2d(3x3, pad=1)+ReLU -> Conv2d(3x3, pad=1) -> MLP2(6 layers), per batch image
# ----------------------------------------------------------------------------
def _make_conv_stage_kernel(H, W, n, c_out):
    hw = H * W

    def kern(x_ref, cw1, cb1, cw2, cb2,
             mw1, mb1, mw2, mb2, mw3, mb3, mw4, mb4, mw5, mb5, mw6, mb6,
             o_ref, xp_ref):

        def read_shift(di, dj):
            return xp_ref[di:di + H, dj:dj + W, :].reshape(hw, n)

        def conv3x3(w_ref, b_ref, relu):
            acc = jnp.zeros((hw, n), jnp.float32)
            for di in range(3):
                for dj in range(3):
                    acc = acc + jnp.dot(read_shift(di, dj), w_ref[di, dj],
                                        preferred_element_type=jnp.float32)
            acc = acc + b_ref[...]
            return jnp.maximum(acc, 0.0) if relu else acc

        # Build the 1-pixel zero halo once in VMEM (no wrapper-side jnp.pad / HBM round trip).
        xp_ref[...] = jnp.zeros((H + 2, W + 2, n), jnp.float32)
        xp_ref[1:H + 1, 1:W + 1, :] = x_ref[...].reshape(H, W, n)
        c1 = conv3x3(cw1, cb1, relu=True)

        # Reuse the same padded scratch (border ring is still zero) for the second conv.
        xp_ref[1:H + 1, 1:W + 1, :] = c1.reshape(H, W, n)
        h = conv3x3(cw2, cb2, relu=False)

        for w, b in ((mw1, mb1), (mw2, mb2), (mw3, mb3), (mw4, mb4), (mw5, mb5)):
            h = jnp.maximum(
                jnp.dot(h, w[...], preferred_element_type=jnp.float32) + b[...], 0.0)
        h = jnp.dot(h, mw6[...], preferred_element_type=jnp.float32) + mb6[...]
        o_ref[...] = h.reshape(1, H, W, c_out)

    return kern


def conv_stage_call(pix, p):
    bsz, H, W, n = pix.shape
    c_out = p["mlp2_w"][-1].shape[1]

    args = [pix]
    in_specs = [pl.BlockSpec((1, H, W, n), lambda i: (i, 0, 0, 0))]
    for name in ("conv1", "conv2"):
        args += [p[name + "_w"], p[name + "_b"]]
        in_specs += [_const_spec(p[name + "_w"].shape), _const_spec(p[name + "_b"].shape)]
    for w, b in zip(p["mlp2_w"], p["mlp2_b"]):
        args += [w, b]
        in_specs += [_const_spec(w.shape), _const_spec(b.shape)]

    flops = 2 * bsz * H * W * (2 * 9 * n * n + 5 * n * n + n * c_out)
    bytes_accessed = 4 * bsz * H * W * (n + c_out) + 4 * (2 * 9 * n * n + 5 * n * n + n * c_out)

    return pl.pallas_call(
        _make_conv_stage_kernel(H, W, n, c_out),
        grid=(bsz,),
        in_specs=in_specs,
        out_specs=pl.BlockSpec((1, H, W, c_out), lambda i: (i, 0, 0, 0)),
        out_shape=jax.ShapeDtypeStruct((bsz, H, W, c_out), jnp.float32),
        scratch_shapes=[pltpu.VMEM((H + 2, W + 2, n), jnp.float32)],
        compiler_params=_compiler_params(1),
        cost_estimate=pl.CostEstimate(flops=int(flops), transcendentals=0,
                                      bytes_accessed=int(bytes_accessed)),
    )(*args)


# ----------------------------------------------------------------------------
# Kernel C: rotated tiles, keeping only the first D1 - D2 columns (U1 pre-sliced in the wrapper)
# ----------------------------------------------------------------------------
def _make_tail_kernel(d1):
    def kern(t_ref, u1k_ref, mu_ref, ls_ref):
        u1k = u1k_ref[...]
        t = t_ref[...]
        mu_ref[...] = jnp.dot(t[:, :d1], u1k, preferred_element_type=jnp.float32)
        ls_ref[...] = jnp.dot(t[:, d1:], u1k, preferred_element_type=jnp.float32)
    return kern


def tail_call(tiles2, u1_keep):
    m, two_d1 = tiles2.shape
    d1 = two_d1 // 2
    d_keep = u1_keep.shape[1]
    tile = _pick_tile(m)
    tiles2, mp = _pad_rows(tiles2, tile)

    flops = 2 * mp * two_d1 * d_keep
    bytes_accessed = 4 * (mp * (two_d1 + 2 * d_keep) + d1 * d_keep)

    mu, ls = pl.pallas_call(
        _make_tail_kernel(d1),
        grid=(mp // tile,),
        in_specs=[pl.BlockSpec((tile, two_d1), lambda i: (i, 0)),
                  _const_spec(u1_keep.shape)],
        out_specs=(pl.BlockSpec((tile, d_keep), lambda i: (i, 0)),
                   pl.BlockSpec((tile, d_keep), lambda i: (i, 0))),
        out_shape=(jax.ShapeDtypeStruct((mp, d_keep), jnp.float32),
                   jax.ShapeDtypeStruct((mp, d_keep), jnp.float32)),
        compiler_params=_compiler_params(1),
        cost_estimate=pl.CostEstimate(flops=int(flops), transcendentals=0,
                                      bytes_accessed=int(bytes_accessed)),
    )(tiles2, u1_keep)
    return mu[:m], ls[:m]


# ----------------------------------------------------------------------------
# Deterministic parameter initialization (shapes per the module's __init__)
# ----------------------------------------------------------------------------
def init_patching_inverse_params(key, in_channels, out_channels, kernel_size, stride):
    kh, kw = kernel_size
    D1 = kh * kw * in_channels
    D2 = out_channels
    N = 2 * in_channels + out_channels
    d_keep = D1 - D2
    assert d_keep > 0, "module returns the first D1 - D2 rotated features"
    keys = iter(jax.random.split(key, 32))

    def ortho(k, d):
        q, _ = jnp.linalg.qr(jax.random.normal(k, (d, d), jnp.float32))
        return q

    def linear(k, din, dout):
        k1, k2 = jax.random.split(k)
        w = jax.random.normal(k1, (din, dout), jnp.float32) * (1.0 / math.sqrt(din))
        b = jax.random.normal(k2, (1, dout), jnp.float32) * 0.01
        return w, b

    p = {}
    # TODO(synk): Rotation source unavailable; modeled as a fixed orthogonal right-multiply.
    u1 = ortho(next(keys), D1)
    p["U1_keep"] = u1[:, :d_keep]          # sliced once here -> no MXU-result slicing in-kernel

    mlp_dims = [D2] + [N] * 6              # MLP: D2->N, then 5 x (N->N)
    p["mlp_w"], p["mlp_b"] = [], []
    for i in range(6):
        w, b = linear(next(keys), mlp_dims[i], mlp_dims[i + 1])
        p["mlp_w"].append(w); p["mlp_b"].append(b)

    mlp2_dims = [N] * 6 + [2 * in_channels]  # MLP2: 5 x (N->N), N -> 2*Cin
    p["mlp2_w"], p["mlp2_b"] = [], []
    for i in range(6):
        w, b = linear(next(keys), mlp2_dims[i], mlp2_dims[i + 1])
        p["mlp2_w"].append(w); p["mlp2_b"].append(b)

    # ConvTranspose2d(N, N, kernel_size, stride): weight (Cin=N, Cout=N, kh, kw).
    # Columns re-ordered to (i, j, c_out) so the kernel output reshapes straight to pixel NHWC.
    wt = jax.random.normal(next(keys), (N, N, kh, kw), jnp.float32) * (1.0 / math.sqrt(N * kh * kw))
    bt = jax.random.normal(next(keys), (N,), jnp.float32) * 0.01
    p["convT_w2d"] = wt.transpose(0, 2, 3, 1).reshape(N, kh * kw * N)
    p["convT_b_rep"] = jnp.tile(bt, kh * kw).reshape(1, kh * kw * N)

    for name in ("conv1", "conv2"):        # two Conv2d(N, N, 3, 1, padding=1), weights (3,3,Cin,Cout)
        w = jax.random.normal(next(keys), (3, 3, N, N), jnp.float32) * (1.0 / math.sqrt(9 * N))
        b = jax.random.normal(next(keys), (1, N), jnp.float32) * 0.01
        p[name + "_w"] = w
        p[name + "_b"] = b

    p["config"] = dict(in_channels=in_channels, out_channels=out_channels,
                       kernel_size=kernel_size, stride=stride,
                       D1=D1, D2=D2, N=N, d_keep=d_keep)
    return p


# ----------------------------------------------------------------------------
# PatchingInverse.forward
# ----------------------------------------------------------------------------
def patching_inverse_forward(params, z):
    cfg = params["config"]
    Cin, D1, N, d_keep = cfg["in_channels"], cfg["D1"], cfg["N"], cfg["d_keep"]
    kh, kw = cfg["kernel_size"]
    sh, sw = cfg["stride"]
    # This decomposition assumes non-overlapping patching (the module's standard configuration).
    assert (kh, kw) == (sh, sw), "stride must equal kernel_size for this kernel decomposition"

    B, C, Hz, Wz = z.shape
    assert C == cfg["out_channels"]

    # NCHW -> token rows (B*Hz*Wz, D2)
    tokens = z.astype(jnp.float32).transpose(0, 2, 3, 1).reshape(B * Hz * Wz, C)

    # Fused MLP(6) + ConvTranspose2d + ReLU
    y = token_stage_call(tokens, params)                       # (B*Hz*Wz, kh*kw*N), cols (i, j, c)

    H, W = Hz * kh, Wz * kw
    # TODO(synk): patch -> pixel relayout kept as XLA glue (pure leading-dim transpose).
    pix = (y.reshape(B, Hz, Wz, kh, kw, N)
             .transpose(0, 1, 3, 2, 4, 5)
             .reshape(B, H, W, N))                             # pixel NHWC

    # Fused conv3x3+ReLU -> conv3x3 -> MLP2(6); output (B, H, W, 2*Cin), channels [mu | logstd]
    net = conv_stage_call(pix, params)

    # nn.Unfold for mu and logstd done once on the concatenated tensor:
    # feature index = c*kh*kw + i*kw + j, so features [0, D1) are mu's tiles, [D1, 2*D1) logstd's.
    tiles2 = (net.reshape(B, Hz, kh, Wz, kw, 2 * Cin)
                 .transpose(0, 1, 3, 5, 2, 4)
                 .reshape(B * Hz * Wz, 2 * D1))

    mu_keep, logstd_keep = tail_call(tiles2, params["U1_keep"])   # each (B*Hz*Wz, D1-D2)

    return (mu_keep.reshape(B, Hz, Wz, d_keep),
            logstd_keep.reshape(B, Hz, Wz, d_keep))


if __name__ == "__main__":
    key = jax.random.PRNGKey(0)
    kp, kz = jax.random.split(key)

    in_channels, out_channels = 3, 4
    kernel_size = (2, 2)
    stride = (2, 2)
    B, Hz, Wz = 2, 8, 8            # z is the module's input: (B, out_channels, Hz, Wz)

    params = init_patching_inverse_params(kp, in_channels, out_channels, kernel_size, stride)
    z = jax.random.normal(kz, (B, out_channels, Hz, Wz), jnp.float32)

    fwd = jax.jit(lambda zz: patching_inverse_forward(params, zz))
    mu_keep, logstd_keep = fwd(z)
    jax.block_until_ready((mu_keep, logstd_keep))

    d_keep = params["config"]["d_keep"]
    assert mu_keep.shape == (B, Hz, Wz, d_keep)
    assert logstd_keep.shape == (B, Hz, Wz, d_keep)
    assert bool(jnp.all(jnp.isfinite(mu_keep)))
    assert bool(jnp.all(jnp.isfinite(logstd_keep)))
    print("KERNEL_OK")
</pallas_src>

<mosaic_0001>
module attributes {stable_mosaic.version = 11 : i64} {
  func.func @_token_stage_kernel(%arg0: i32, %arg1: memref<128x4xf32, #tpu.memory_space<vmem>>, %arg2: memref<4x10xf32, #tpu.memory_space<vmem>>, %arg3: memref<1x10xf32, #tpu.memory_space<vmem>>, %arg4: memref<10x10xf32, #tpu.memory_space<vmem>>, %arg5: memref<1x10xf32, #tpu.memory_space<vmem>>, %arg6: memref<10x10xf32, #tpu.memory_space<vmem>>, %arg7: memref<1x10xf32, #tpu.memory_space<vmem>>, %arg8: memref<10x10xf32, #tpu.memory_space<vmem>>, %arg9: memref<1x10xf32, #tpu.memory_space<vmem>>, %arg10: memref<10x10xf32, #tpu.memory_space<vmem>>, %arg11: memref<1x10xf32, #tpu.memory_space<vmem>>, %arg12: memref<10x10xf32, #tpu.memory_space<vmem>>, %arg13: memref<1x10xf32, #tpu.memory_space<vmem>>, %arg14: memref<10x40xf32, #tpu.memory_space<vmem>>, %arg15: memref<1x40xf32, #tpu.memory_space<vmem>>, %arg16: memref<128x40xf32, #tpu.memory_space<vmem>>) attributes {dimension_semantics = [#tpu.dimension_semantics<parallel>], iteration_bounds = array<i64: 1>, scalar_prefetch = 0 : i64, scratch_operands = 0 : i64, tpu.core_type = #tpu.core_type<tc>, window_params = [{transform_indices = @transform_0, window_bounds = array<i64: 128, 4>}, {pipeline_mode = #tpu.pipeline_mode<synchronous>, transform_indices = @transform_1, window_bounds = array<i64: 4, 10>}, {pipeline_mode = #tpu.pipeline_mode<synchronous>, transform_indices = @transform_2, window_bounds = array<i64: 1, 10>}, {pipeline_mode = #tpu.pipeline_mode<synchronous>, transform_indices = @transform_3, window_bounds = array<i64: 10, 10>}, {pipeline_mode = #tpu.pipeline_mode<synchronous>, transform_indices = @transform_4, window_bounds = array<i64: 1, 10>}, {pipeline_mode = #tpu.pipeline_mode<synchronous>, transform_indices = @transform_5, window_bounds = array<i64: 10, 10>}, {pipeline_mode = #tpu.pipeline_mode<synchronous>, transform_indices = @transform_6, window_bounds = array<i64: 1, 10>}, {pipeline_mode = #tpu.pipeline_mode<synchronous>, transform_indices = @transform_7, window_bounds = array<i64: 10, 10>}, {pipeline_mode = #tpu.pipeline_mode<synchronous>, transform_indices = @transform_8, window_bounds = array<i64: 1, 10>}, {pipeline_mode = #tpu.pipeline_mode<synchronous>, transform_indices = @transform_9, window_bounds = array<i64: 10, 10>}, {pipeline_mode = #tpu.pipeline_mode<synchronous>, transform_indices = @transform_10, window_bounds = array<i64: 1, 10>}, {pipeline_mode = #tpu.pipeline_mode<synchronous>, transform_indices = @transform_11, window_bounds = array<i64: 10, 10>}, {pipeline_mode = #tpu.pipeline_mode<synchronous>, transform_indices = @transform_12, window_bounds = array<i64: 1, 10>}, {pipeline_mode = #tpu.pipeline_mode<synchronous>, transform_indices = @transform_13, window_bounds = array<i64: 10, 40>}, {pipeline_mode = #tpu.pipeline_mode<synchronous>, transform_indices = @transform_14, window_bounds = array<i64: 1, 40>}, {transform_indices = @transform_15, window_bounds = array<i64: 128, 40>}]} {
    %c0 = arith.constant 0 : index
    %c0_0 = arith.constant 0 : index
    %0 = vector.load %arg1[%c0, %c0_0] : memref<128x4xf32, #tpu.memory_space<vmem>>, vector<128x4xf32>
    %c0_1 = arith.constant 0 : index
    %c0_2 = arith.constant 0 : index
    %1 = vector.load %arg2[%c0_1, %c0_2] : memref<4x10xf32, #tpu.memory_space<vmem>>, vector<4x10xf32>
    %cst = arith.constant dense<0.000000e+00> : vector<128x10xf32>
    %2 = tpu.matmul %0, %1, %cst {dimension_numbers = #tpu.dot_dimension_numbers<[1], [0], [0], [1], [0, 0, 1, 1], [], []>} : vector<128x4xf32>, vector<4x10xf32>, vector<128x10xf32> -> vector<128x10xf32>
    %c0_3 = arith.constant 0 : index
    %c0_4 = arith.constant 0 : index
    %3 = vector.load %arg3[%c0_3, %c0_4] : memref<1x10xf32, #tpu.memory_space<vmem>>, vector<1x10xf32>
    %4 = vector.broadcast %3 : vector<1x10xf32> to vector<128x10xf32>
    %5 = arith.addf %2, %4 : vector<128x10xf32>
    %cst_5 = arith.constant 0.000000e+00 : f32
    %6 = vector.broadcast %cst_5 : f32 to vector<128x10xf32>
    %7 = arith.maximumf %5, %6 : vector<128x10xf32>
    %c0_6 = arith.constant 0 : index
    %c0_7 = arith.constant 0 : index
    %8 = vector.load %arg4[%c0_6, %c0_7] : memref<10x10xf32, #tpu.memory_space<vmem>>, vector<10x10xf32>
    %cst_8 = arith.constant dense<0.000000e+00> : vector<128x10xf32>
    %9 = tpu.matmul %7, %8, %cst_8 {dimension_numbers = #tpu.dot_dimension_numbers<[1], [0], [0], [1], [0, 0, 1, 1], [], []>} : vector<128x10xf32>, vector<10x10xf32>, vector<128x10xf32> -> vector<128x10xf32>
    %c0_9 = arith.constant 0 : index
    %c0_10 = arith.constant 0 : index
    %10 = vector.load %arg5[%c0_9, %c0_10] : memref<1x10xf32, #tpu.memory_space<vmem>>, vector<1x10xf32>
    %11 = vector.broadcast %10 : vector<1x10xf32> to vector<128x10xf32>
    %12 = arith.addf %9, %11 : vector<128x10xf32>
    %cst_11 = arith.constant 0.000000e+00 : f32
    %13 = vector.broadcast %cst_11 : f32 to vector<128x10xf32>
    %14 = arith.maximumf %12, %13 : vector<128x10xf32>
    %c0_12 = arith.constant 0 : index
    %c0_13 = arith.constant 0 : index
    %15 = vector.load %arg6[%c0_12, %c0_13] : memref<10x10xf32, #tpu.memory_space<vmem>>, vector<10x10xf32>
    %cst_14 = arith.constant dense<0.000000e+00> : vector<128x10xf32>
    %16 = tpu.matmul %14, %15, %cst_14 {dimension_numbers = #tpu.dot_dimension_numbers<[1], [0], [0], [1], [0, 0, 1, 1], [], []>} : vector<128x10xf32>, vector<10x10xf32>, vector<128x10xf32> -> vector<128x10xf32>
    %c0_15 = arith.constant 0 : index
    %c0_16 = arith.constant 0 : index
    %17 = vector.load %arg7[%c0_15, %c0_16] : memref<1x10xf32, #tpu.memory_space<vmem>>, vector<1x10xf32>
    %18 = vector.broadcast %17 : vector<1x10xf32> to vector<128x10xf32>
    %19 = arith.addf %16, %18 : vector<128x10xf32>
    %cst_17 = arith.constant 0.000000e+00 : f32
    %20 = vector.broadcast %cst_17 : f32 to vector<128x10xf32>
    %21 = arith.maximumf %19, %20 : vector<128x10xf32>
    %c0_18 = arith.constant 0 : index
    %c0_19 = arith.constant 0 : index
    %22 = vector.load %arg8[%c0_18, %c0_19] : memref<10x10xf32, #tpu.memory_space<vmem>>, vector<10x10xf32>
    %cst_20 = arith.constant dense<0.000000e+00> : vector<128x10xf32>
    %23 = tpu.matmul %21, %22, %cst_20 {dimension_numbers = #tpu.dot_dimension_numbers<[1], [0], [0], [1], [0, 0, 1, 1], [], []>} : vector<128x10xf32>, vector<10x10xf32>, vector<128x10xf32> -> vector<128x10xf32>
    %c0_21 = arith.constant 0 : index
    %c0_22 = arith.constant 0 : index
    %24 = vector.load %arg9[%c0_21, %c0_22] : memref<1x10xf32, #tpu.memory_space<vmem>>, vector<1x10xf32>
    %25 = vector.broadcast %24 : vector<1x10xf32> to vector<128x10xf32>
    %26 = arith.addf %23, %25 : vector<128x10xf32>
    %cst_23 = arith.constant 0.000000e+00 : f32
    %27 = vector.broadcast %cst_23 : f32 to vector<128x10xf32>
    %28 = arith.maximumf %26, %27 : vector<128x10xf32>
    %c0_24 = arith.constant 0 : index
    %c0_25 = arith.constant 0 : index
    %29 = vector.load %arg10[%c0_24, %c0_25] : memref<10x10xf32, #tpu.memory_space<vmem>>, vector<10x10xf32>
    %cst_26 = arith.constant dense<0.000000e+00> : vector<128x10xf32>
    %30 = tpu.matmul %28, %29, %cst_26 {dimension_numbers = #tpu.dot_dimension_numbers<[1], [0], [0], [1], [0, 0, 1, 1], [], []>} : vector<128x10xf32>, vector<10x10xf32>, vector<128x10xf32> -> vector<128x10xf32>
    %c0_27 = arith.constant 0 : index
    %c0_28 = arith.constant 0 : index
    %31 = vector.load %arg11[%c0_27, %c0_28] : memref<1x10xf32, #tpu.memory_space<vmem>>, vector<1x10xf32>
    %32 = vector.broadcast %31 : vector<1x10xf32> to vector<128x10xf32>
    %33 = arith.addf %30, %32 : vector<128x10xf32>
    %cst_29 = arith.constant 0.000000e+00 : f32
    %34 = vector.broadcast %cst_29 : f32 to vector<128x10xf32>
    %35 = arith.maximumf %33, %34 : vector<128x10xf32>
    %c0_30 = arith.constant 0 : index
    %c0_31 = arith.constant 0 : index
    %36 = vector.load %arg12[%c0_30, %c0_31] : memref<10x10xf32, #tpu.memory_space<vmem>>, vector<10x10xf32>
    %cst_32 = arith.constant dense<0.000000e+00> : vector<128x10xf32>
    %37 = tpu.matmul %35, %36, %cst_32 {dimension_numbers = #tpu.dot_dimension_numbers<[1], [0], [0], [1], [0, 0, 1, 1], [], []>} : vector<128x10xf32>, vector<10x10xf32>, vector<128x10xf32> -> vector<128x10xf32>
    %c0_33 = arith.constant 0 : index
    %c0_34 = arith.constant 0 : index
    %38 = vector.load %arg13[%c0_33, %c0_34] : memref<1x10xf32, #tpu.memory_space<vmem>>, vector<1x10xf32>
    %39 = vector.broadcast %38 : vector<1x10xf32> to vector<128x10xf32>
    %40 = arith.addf %37, %39 : vector<128x10xf32>
    %c0_35 = arith.constant 0 : index
    %c0_36 = arith.constant 0 : index
    %41 = vector.load %arg14[%c0_35, %c0_36] : memref<10x40xf32, #tpu.memory_space<vmem>>, vector<10x40xf32>
    %cst_37 = arith.constant dense<0.000000e+00> : vector<128x40xf32>
    %42 = tpu.matmul %40, %41, %cst_37 {dimension_numbers = #tpu.dot_dimension_numbers<[1], [0], [0], [1], [0, 0, 1, 1], [], []>} : vector<128x10xf32>, vector<10x40xf32>, vector<128x40xf32> -> vector<128x40xf32>
    %c0_38 = arith.constant 0 : index
    %c0_39 = arith.constant 0 : index
    %43 = vector.load %arg15[%c0_38, %c0_39] : memref<1x40xf32, #tpu.memory_space<vmem>>, vector<1x40xf32>
    %44 = vector.broadcast %43 : vector<1x40xf32> to vector<128x40xf32>
    %45 = arith.addf %42, %44 : vector<128x40xf32>
    %cst_40 = arith.constant 0.000000e+00 : f32
    %46 = vector.broadcast %cst_40 : f32 to vector<128x40xf32>
    %47 = arith.maximumf %45, %46 : vector<128x40xf32>
    %c0_41 = arith.constant 0 : index
    %c0_42 = arith.constant 0 : index
    %48 = vector.load %arg16[%c0_41, %c0_42] : memref<128x40xf32, #tpu.memory_space<vmem>>, vector<128x40xf32>
    tpu.vector_store %arg16[%c0_41, %c0_42], %47 {strides = array<i32>} : memref<128x40xf32, #tpu.memory_space<vmem>>, vector<128x40xf32>,
    return
  }
  func.func @transform_0(%arg0: i32) -> (i32, i32) {
    %c0_i32 = arith.constant 0 : i32
    %c0_i32_0 = arith.constant 0 : i32
    return %arg0, %c0_i32 : i32, i32
  }
  func.func @transform_1(%arg0: i32) -> (i32, i32) {
    %c0_i32 = arith.constant 0 : i32
    %c0_i32_0 = arith.constant 0 : i32
    %c0_i32_1 = arith.constant 0 : i32
    return %c0_i32, %c0_i32_0 : i32, i32
  }
  func.func @transform_2(%arg0: i32) -> (i32, i32) {
    %c0_i32 = arith.constant 0 : i32
    %c0_i32_0 = arith.constant 0 : i32
    %c0_i32_1 = arith.constant 0 : i32
    return %c0_i32, %c0_i32_0 : i32, i32
  }
  func.func @transform_3(%arg0: i32) -> (i32, i32) {
    %c0_i32 = arith.constant 0 : i32
    %c0_i32_0 = arith.constant 0 : i32
    %c0_i32_1 = arith.constant 0 : i32
    return %c0_i32, %c0_i32_0 : i32, i32
  }
  func.func @transform_4(%arg0: i32) -> (i32, i32) {
    %c0_i32 = arith.constant 0 : i32
    %c0_i32_0 = arith.constant 0 : i32
    %c0_i32_1 = arith.constant 0 : i32
    return %c0_i32, %c0_i32_0 : i32, i32
  }
  func.func @transform_5(%arg0: i32) -> (i32, i32) {
    %c0_i32 = arith.constant 0 : i32
    %c0_i32_0 = arith.constant 0 : i32
    %c0_i32_1 = arith.constant 0 : i32
    return %c0_i32, %c0_i32_0 : i32, i32
  }
  func.func @transform_6(%arg0: i32) -> (i32, i32) {
    %c0_i32 = arith.constant 0 : i32
    %c0_i32_0 = arith.constant 0 : i32
    %c0_i32_1 = arith.constant 0 : i32
    return %c0_i32, %c0_i32_0 : i32, i32
  }
  func.func @transform_7(%arg0: i32) -> (i32, i32) {
    %c0_i32 = arith.constant 0 : i32
    %c0_i32_0 = arith.constant 0 : i32
    %c0_i32_1 = arith.constant 0 : i32
    return %c0_i32, %c0_i32_0 : i32, i32
  }
  func.func @transform_8(%arg0: i32) -> (i32, i32) {
    %c0_i32 = arith.constant 0 : i32
    %c0_i32_0 = arith.constant 0 : i32
    %c0_i32_1 = arith.constant 0 : i32
    return %c0_i32, %c0_i32_0 : i32, i32
  }
  func.func @transform_9(%arg0: i32) -> (i32, i32) {
    %c0_i32 = arith.constant 0 : i32
    %c0_i32_0 = arith.constant 0 : i32
    %c0_i32_1 = arith.constant 0 : i32
    return %c0_i32, %c0_i32_0 : i32, i32
  }
  func.func @transform_10(%arg0: i32) -> (i32, i32) {
    %c0_i32 = arith.constant 0 : i32
    %c0_i32_0 = arith.constant 0 : i32
    %c0_i32_1 = arith.constant 0 : i32
    return %c0_i32, %c0_i32_0 : i32, i32
  }
  func.func @transform_11(%arg0: i32) -> (i32, i32) {
    %c0_i32 = arith.constant 0 : i32
    %c0_i32_0 = arith.constant 0 : i32
    %c0_i32_1 = arith.constant 0 : i32
    return %c0_i32, %c0_i32_0 : i32, i32
  }
  func.func @transform_12(%arg0: i32) -> (i32, i32) {
    %c0_i32 = arith.constant 0 : i32
    %c0_i32_0 = arith.constant 0 : i32
    %c0_i32_1 = arith.constant 0 : i32
    return %c0_i32, %c0_i32_0 : i32, i32
  }
  func.func @transform_13(%arg0: i32) -> (i32, i32) {
    %c0_i32 = arith.constant 0 : i32
    %c0_i32_0 = arith.constant 0 : i32
    %c0_i32_1 = arith.constant 0 : i32
    return %c0_i32, %c0_i32_0 : i32, i32
  }
  func.func @transform_14(%arg0: i32) -> (i32, i32) {
    %c0_i32 = arith.constant 0 : i32
    %c0_i32_0 = arith.constant 0 : i32
    %c0_i32_1 = arith.constant 0 : i32
    return %c0_i32, %c0_i32_0 : i32, i32
  }
  func.func @transform_15(%arg0: i32) -> (i32, i32) {
    %c0_i32 = arith.constant 0 : i32
    %c0_i32_0 = arith.constant 0 : i32
    return %arg0, %c0_i32 : i32, i32
  }
}

module attributes {stable_mosaic.version = 11 : i64} {
  func.func @kern(%arg0: i32, %arg1: memref<1x16x16x10xf32, #tpu.memory_space<vmem>>, %arg2: memref<3x3x10x10xf32, #tpu.memory_space<vmem>>, %arg3: memref<1x10xf32, #tpu.memory_space<vmem>>, %arg4: memref<3x3x10x10xf32, #tpu.memory_space<vmem>>, %arg5: memref<1x10xf32, #tpu.memory_space<vmem>>, %arg6: memref<10x10xf32, #tpu.memory_space<vmem>>, %arg7: memref<1x10xf32, #tpu.memory_space<vmem>>, %arg8: memref<10x10xf32, #tpu.memory_space<vmem>>, %arg9: memref<1x10xf32, #tpu.memory_space<vmem>>, %arg10: memref<10x10xf32, #tpu.memory_space<vmem>>, %arg11: memref<1x10xf32, #tpu.memory_space<vmem>>, %arg12: memref<10x10xf32, #tpu.memory_space<vmem>>, %arg13: memref<1x10xf32, #tpu.memory_space<vmem>>, %arg14: memref<10x10xf32, #tpu.memory_space<vmem>>, %arg15: memref<1x10xf32, #tpu.memory_space<vmem>>, %arg16: memref<10x6xf32, #tpu.memory_space<vmem>>, %arg17: memref<1x6xf32, #tpu.memory_space<vmem>>, %arg18: memref<1x16x16x6xf32, #tpu.memory_space<vmem>>, %arg19: memref<18x18x10xf32, #tpu.memory_space<vmem>>) attributes {dimension_semantics = [#tpu.dimension_semantics<parallel>], iteration_bounds = array<i64: 2>, scalar_prefetch = 0 : i64, scratch_operands = 1 : i64, tpu.core_type = #tpu.core_type<tc>, window_params = [{transform_indices = @transform_0, window_bounds = array<i64: 1, 16, 16, 10>}, {pipeline_mode = #tpu.pipeline_mode<synchronous>, transform_indices = @transform_1, window_bounds = array<i64: 3, 3, 10, 10>}, {pipeline_mode = #tpu.pipeline_mode<synchronous>, transform_indices = @transform_2, window_bounds = array<i64: 1, 10>}, {pipeline_mode = #tpu.pipeline_mode<synchronous>, transform_indices = @transform_3, window_bounds = array<i64: 3, 3, 10, 10>}, {pipeline_mode = #tpu.pipeline_mode<synchronous>, transform_indices = @transform_4, window_bounds = array<i64: 1, 10>}, {pipeline_mode = #tpu.pipeline_mode<synchronous>, transform_indices = @transform_5, window_bounds = array<i64: 10, 10>}, {pipeline_mode = #tpu.pipeline_mode<synchronous>, transform_indices = @transform_6, window_bounds = array<i64: 1, 10>}, {pipeline_mode = #tpu.pipeline_mode<synchronous>, transform_indices = @transform_7, window_bounds = array<i64: 10, 10>}, {pipeline_mode = #tpu.pipeline_mode<synchronous>, transform_indices = @transform_8, window_bounds = array<i64: 1, 10>}, {pipeline_mode = #tpu.pipeline_mode<synchronous>, transform_indices = @transform_9, window_bounds = array<i64: 10, 10>}, {pipeline_mode = #tpu.pipeline_mode<synchronous>, transform_indices = @transform_10, window_bounds = array<i64: 1, 10>}, {pipeline_mode = #tpu.pipeline_mode<synchronous>, transform_indices = @transform_11, window_bounds = array<i64: 10, 10>}, {pipeline_mode = #tpu.pipeline_mode<synchronous>, transform_indices = @transform_12, window_bounds = array<i64: 1, 10>}, {pipeline_mode = #tpu.pipeline_mode<synchronous>, transform_indices = @transform_13, window_bounds = array<i64: 10, 10>}, {pipeline_mode = #tpu.pipeline_mode<synchronous>, transform_indices = @transform_14, window_bounds = array<i64: 1, 10>}, {pipeline_mode = #tpu.pipeline_mode<synchronous>, transform_indices = @transform_15, window_bounds = array<i64: 10, 6>}, {pipeline_mode = #tpu.pipeline_mode<synchronous>, transform_indices = @transform_16, window_bounds = array<i64: 1, 6>}, {transform_indices = @transform_17, window_bounds = array<i64: 1, 16, 16, 6>}]} {
    %cst = arith.constant 0.000000e+00 : f32
    %0 = vector.broadcast %cst : f32 to vector<18x18x10xf32>
    %c0 = arith.constant 0 : index
    %c0_0 = arith.constant 0 : index
    %c0_1 = arith.constant 0 : index
    %1 = vector.load %arg19[%c0, %c0_0, %c0_1] : memref<18x18x10xf32, #tpu.memory_space<vmem>>, vector<18x18x10xf32>
    tpu.vector_store %arg19[%c0, %c0_0, %c0_1], %0 {strides = array<i32>} : memref<18x18x10xf32, #tpu.memory_space<vmem>>, vector<18x18x10xf32>,
    %c0_2 = arith.constant 0 : index
    %c0_3 = arith.constant 0 : index
    %c0_4 = arith.constant 0 : index
    %c0_5 = arith.constant 0 : index
    %2 = vector.load %arg1[%c0_2, %c0_3, %c0_4, %c0_5] : memref<1x16x16x10xf32, #tpu.memory_space<vmem>>, vector<1x16x16x10xf32>
    %3 = vector.shape_cast %2 : vector<1x16x16x10xf32> to vector<16x16x10xf32>
    %c1 = arith.constant 1 : index
    %c1_6 = arith.constant 1 : index
    %c0_7 = arith.constant 0 : index
    %4 = vector.load %arg19[%c1, %c1_6, %c0_7] : memref<18x18x10xf32, #tpu.memory_space<vmem>>, vector<16x16x10xf32>
    tpu.vector_store %arg19[%c1, %c1_6, %c0_7], %3 {strides = array<i32>} : memref<18x18x10xf32, #tpu.memory_space<vmem>>, vector<16x16x10xf32>,
    %cst_8 = arith.constant 0.000000e+00 : f32
    %5 = vector.broadcast %cst_8 : f32 to vector<256x10xf32>
    %c0_9 = arith.constant 0 : index
    %c0_10 = arith.constant 0 : index
    %c0_11 = arith.constant 0 : index
    %6 = vector.load %arg19[%c0_9, %c0_10, %c0_11] : memref<18x18x10xf32, #tpu.memory_space<vmem>>, vector<16x16x10xf32>
    %7 = vector.shape_cast %6 : vector<16x16x10xf32> to vector<256x10xf32>
    %c0_12 = arith.constant 0 : index
    %c0_13 = arith.constant 0 : index
    %c0_14 = arith.constant 0 : index
    %c0_15 = arith.constant 0 : index
    %8 = vector.load %arg2[%c0_12, %c0_13, %c0_14, %c0_15] : memref<3x3x10x10xf32, #tpu.memory_space<vmem>>, vector<1x1x10x10xf32>
    %9 = vector.shape_cast %8 : vector<1x1x10x10xf32> to vector<10x10xf32>
    %cst_16 = arith.constant dense<0.000000e+00> : vector<256x10xf32>
    %10 = tpu.matmul %7, %9, %cst_16 {dimension_numbers = #tpu.dot_dimension_numbers<[1], [0], [0], [1], [0, 0, 1, 1], [], []>} : vector<256x10xf32>, vector<10x10xf32>, vector<256x10xf32> -> vector<256x10xf32>
    %11 = arith.addf %5, %10 : vector<256x10xf32>
    %c0_17 = arith.constant 0 : index
    %c1_18 = arith.constant 1 : index
    %c0_19 = arith.constant 0 : index
    %12 = vector.load %arg19[%c0_17, %c1_18, %c0_19] : memref<18x18x10xf32, #tpu.memory_space<vmem>>, vector<16x16x10xf32>
    %13 = vector.shape_cast %12 : vector<16x16x10xf32> to vector<256x10xf32>
    %c0_20 = arith.constant 0 : index
    %c1_21 = arith.constant 1 : index
    %c0_22 = arith.constant 0 : index
    %c0_23 = arith.constant 0 : index
    %14 = vector.load %arg2[%c0_20, %c1_21, %c0_22, %c0_23] : memref<3x3x10x10xf32, #tpu.memory_space<vmem>>, vector<1x1x10x10xf32>
    %15 = vector.shape_cast %14 : vector<1x1x10x10xf32> to vector<10x10xf32>
    %cst_24 = arith.constant dense<0.000000e+00> : vector<256x10xf32>
    %16 = tpu.matmul %13, %15, %cst_24 {dimension_numbers = #tpu.dot_dimension_numbers<[1], [0], [0], [1], [0, 0, 1, 1], [], []>} : vector<256x10xf32>, vector<10x10xf32>, vector<256x10xf32> -> vector<256x10xf32>
    %17 = arith.addf %11, %16 : vector<256x10xf32>
    %c0_25 = arith.constant 0 : index
    %c2 = arith.constant 2 : index
    %c0_26 = arith.constant 0 : index
    %18 = vector.load %arg19[%c0_25, %c2, %c0_26] : memref<18x18x10xf32, #tpu.memory_space<vmem>>, vector<16x16x10xf32>
    %19 = vector.shape_cast %18 : vector<16x16x10xf32> to vector<256x10xf32>
    %c0_27 = arith.constant 0 : index
    %c2_28 = arith.constant 2 : index
    %c0_29 = arith.constant 0 : index
    %c0_30 = arith.constant 0 : index
    %20 = vector.load %arg2[%c0_27, %c2_28, %c0_29, %c0_30] : memref<3x3x10x10xf32, #tpu.memory_space<vmem>>, vector<1x1x10x10xf32>
    %21 = vector.shape_cast %20 : vector<1x1x10x10xf32> to vector<10x10xf32>
    %cst_31 = arith.constant dense<0.000000e+00> : vector<256x10xf32>
    %22 = tpu.matmul %19, %21, %cst_31 {dimension_numbers = #tpu.dot_dimension_numbers<[1], [0], [0], [1], [0, 0, 1, 1], [], []>} : vector<256x10xf32>, vector<10x10xf32>, vector<256x10xf32> -> vector<256x10xf32>
    %23 = arith.addf %17, %22 : vector<256x10xf32>
    %c1_32 = arith.constant 1 : index
    %c0_33 = arith.constant 0 : index
    %c0_34 = arith.constant 0 : index
    %24 = vector.load %arg19[%c1_32, %c0_33, %c0_34] : memref<18x18x10xf32, #tpu.memory_space<vmem>>, vector<16x16x10xf32>
    %25 = vector.shape_cast %24 : vector<16x16x10xf32> to vector<256x10xf32>
    %c1_35 = arith.constant 1 : index
    %c0_36 = arith.constant 0 : index
    %c0_37 = arith.constant 0 : index
    %c0_38 = arith.constant 0 : index
    %26 = vector.load %arg2[%c1_35, %c0_36, %c0_37, %c0_38] : memref<3x3x10x10xf32, #tpu.memory_space<vmem>>, vector<1x1x10x10xf32>
    %27 = vector.shape_cast %26 : vector<1x1x10x10xf32> to vector<10x10xf32>
    %cst_39 = arith.constant dense<0.000000e+00> : vector<256x10xf32>
    %28 = tpu.matmul %25, %27, %cst_39 {dimension_numbers = #tpu.dot_dimension_numbers<[1], [0], [0], [1], [0, 0, 1, 1], [], []>} : vector<256x10xf32>, vector<10x10xf32>, vector<256x10xf32> -> vector<256x10xf32>
    %29 = arith.addf %23, %28 : vector<256x10xf32>
    %c1_40 = arith.constant 1 : index
    %c1_41 = arith.constant 1 : index
    %c0_42 = arith.constant 0 : index
    %30 = vector.load %arg19[%c1_40, %c1_41, %c0_42] : memref<18x18x10xf32, #tpu.memory_space<vmem>>, vector<16x16x10xf32>
    %31 = vector.shape_cast %30 : vector<16x16x10xf32> to vector<256x10xf32>
    %c1_43 = arith.constant 1 : index
    %c1_44 = arith.constant 1 : index
    %c0_45 = arith.constant 0 : index
    %c0_46 = arith.constant 0 : index
    %32 = vector.load %arg2[%c1_43, %c1_44, %c0_45, %c0_46] : memref<3x3x10x10xf32, #tpu.memory_space<vmem>>, vector<1x1x10x10xf32>
    %33 = vector.shape_cast %32 : vector<1x1x10x10xf32> to vector<10x10xf32>
    %cst_47 = arith.constant dense<0.000000e+00> : vector<256x10xf32>
    %34 = tpu.matmul %31, %33, %cst_47 {dimension_numbers = #tpu.dot_dimension_numbers<[1], [0], [0], [1], [0, 0, 1, 1], [], []>} : vector<256x10xf32>, vector<10x10xf32>, vector<256x10xf32> -> vector<256x10xf32>
    %35 = arith.addf %29, %34 : vector<256x10xf32>
    %c1_48 = arith.constant 1 : index
    %c2_49 = arith.constant 2 : index
    %c0_50 = arith.constant 0 : index
    %36 = vector.load %arg19[%c1_48, %c2_49, %c0_50] : memref<18x18x10xf32, #tpu.memory_space<vmem>>, vector<16x16x10xf32>
    %37 = vector.shape_cast %36 : vector<16x16x10xf32> to vector<256x10xf32>
    %c1_51 = arith.constant 1 : index
    %c2_52 = arith.constant 2 : index
    %c0_53 = arith.constant 0 : index
    %c0_54 = arith.constant 0 : index
    %38 = vector.load %arg2[%c1_51, %c2_52, %c0_53, %c0_54] : memref<3x3x10x10xf32, #tpu.memory_space<vmem>>, vector<1x1x10x10xf32>
    %39 = vector.shape_cast %38 : vector<1x1x10x10xf32> to vector<10x10xf32>
    %cst_55 = arith.constant dense<0.000000e+00> : vector<256x10xf32>
    %40 = tpu.matmul %37, %39, %cst_55 {dimension_numbers = #tpu.dot_dimension_numbers<[1], [0], [0], [1], [0, 0, 1, 1], [], []>} : vector<256x10xf32>, vector<10x10xf32>, vector<256x10xf32> -> vector<256x10xf32>
    %41 = arith.addf %35, %40 : vector<256x10xf32>
    %c2_56 = arith.constant 2 : index
    %c0_57 = arith.constant 0 : index
    %c0_58 = arith.constant 0 : index
    %42 = vector.load %arg19[%c2_56, %c0_57, %c0_58] : memref<18x18x10xf32, #tpu.memory_space<vmem>>, vector<16x16x10xf32>
    %43 = vector.shape_cast %42 : vector<16x16x10xf32> to vector<256x10xf32>
    %c2_59 = arith.constant 2 : index
    %c0_60 = arith.constant 0 : index
    %c0_61 = arith.constant 0 : index
    %c0_62 = arith.constant 0 : index
    %44 = vector.load %arg2[%c2_59, %c0_60, %c0_61, %c0_62] : memref<3x3x10x10xf32, #tpu.memory_space<vmem>>, vector<1x1x10x10xf32>
    %45 = vector.shape_cast %44 : vector<1x1x10x10xf32> to vector<10x10xf32>
    %cst_63 = arith.constant dense<0.000000e+00> : vector<256x10xf32>
    %46 = tpu.matmul %43, %45, %cst_63 {dimension_numbers = #tpu.dot_dimension_numbers<[1], [0], [0], [1], [0, 0, 1, 1], [], []>} : vector<256x10xf32>, vector<10x10xf32>, vector<256x10xf32> -> vector<256x10xf32>
    %47 = arith.addf %41, %46 : vector<256x10xf32>
    %c2_64 = arith.constant 2 : index
    %c1_65 = arith.constant 1 : index
    %c0_66 = arith.constant 0 : index
    %48 = vector.load %arg19[%c2_64, %c1_65, %c0_66] : memref<18x18x10xf32, #tpu.memory_space<vmem>>, vector<16x16x10xf32>
    %49 = vector.shape_cast %48 : vector<16x16x10xf32> to vector<256x10xf32>
    %c2_67 = arith.constant 2 : index
    %c1_68 = arith.constant 1 : index
    %c0_69 = arith.constant 0 : index
    %c0_70 = arith.constant 0 : index
    %50 = vector.load %arg2[%c2_67, %c1_68, %c0_69, %c0_70] : memref<3x3x10x10xf32, #tpu.memory_space<vmem>>, vector<1x1x10x10xf32>
    %51 = vector.shape_cast %50 : vector<1x1x10x10xf32> to vector<10x10xf32>
    %cst_71 = arith.constant dense<0.000000e+00> : vector<256x10xf32>
    %52 = tpu.matmul %49, %51, %cst_71 {dimension_numbers = #tpu.dot_dimension_numbers<[1], [0], [0], [1], [0, 0, 1, 1], [], []>} : vector<256x10xf32>, vector<10x10xf32>, vector<256x10xf32> -> vector<256x10xf32>
    %53 = arith.addf %47, %52 : vector<256x10xf32>
    %c2_72 = arith.constant 2 : index
    %c2_73 = arith.constant 2 : index
    %c0_74 = arith.constant 0 : index
    %54 = vector.load %arg19[%c2_72, %c2_73, %c0_74] : memref<18x18x10xf32, #tpu.memory_space<vmem>>, vector<16x16x10xf32>
    %55 = vector.shape_cast %54 : vector<16x16x10xf32> to vector<256x10xf32>
    %c2_75 = arith.constant 2 : index
    %c2_76 = arith.constant 2 : index
    %c0_77 = arith.constant 0 : index
    %c0_78 = arith.constant 0 : index
    %56 = vector.load %arg2[%c2_75, %c2_76, %c0_77, %c0_78] : memref<3x3x10x10xf32, #tpu.memory_space<vmem>>, vector<1x1x10x10xf32>
    %57 = vector.shape_cast %56 : vector<1x1x10x10xf32> to vector<10x10xf32>
    %cst_79 = arith.constant dense<0.000000e+00> : vector<256x10xf32>
    %58 = tpu.matmul %55, %57, %cst_79 {dimension_numbers = #tpu.dot_dimension_numbers<[1], [0], [0], [1], [0, 0, 1, 1], [], []>} : vector<256x10xf32>, vector<10x10xf32>, vector<256x10xf32> -> vector<256x10xf32>
    %59 = arith.addf %53, %58 : vector<256x10xf32>
    %c0_80 = arith.constant 0 : index
    %c0_81 = arith.constant 0 : index
    %60 = vector.load %arg3[%c0_80, %c0_81] : memref<1x10xf32, #tpu.memory_space<vmem>>, vector<1x10xf32>
    %61 = vector.broadcast %60 : vector<1x10xf32> to vector<256x10xf32>
    %62 = arith.addf %59, %61 : vector<256x10xf32>
    %cst_82 = arith.constant 0.000000e+00 : f32
    %63 = vector.broadcast %cst_82 : f32 to vector<256x10xf32>
    %64 = arith.maximumf %62, %63 : vector<256x10xf32>
    %65 = vector.shape_cast %64 : vector<256x10xf32> to vector<16x16x10xf32>
    %c1_83 = arith.constant 1 : index
    %c1_84 = arith.constant 1 : index
    %c0_85 = arith.constant 0 : index
    %66 = vector.load %arg19[%c1_83, %c1_84, %c0_85] : memref<18x18x10xf32, #tpu.memory_space<vmem>>, vector<16x16x10xf32>
    tpu.vector_store %arg19[%c1_83, %c1_84, %c0_85], %65 {strides = array<i32>} : memref<18x18x10xf32, #tpu.memory_space<vmem>>, vector<16x16x10xf32>,
    %cst_86 = arith.constant 0.000000e+00 : f32
    %67 = vector.broadcast %cst_86 : f32 to vector<256x10xf32>
    %c0_87 = arith.constant 0 : index
    %c0_88 = arith.constant 0 : index
    %c0_89 = arith.constant 0 : index
    %68 = vector.load %arg19[%c0_87, %c0_88, %c0_89] : memref<18x18x10xf32, #tpu.memory_space<vmem>>, vector<16x16x10xf32>
    %69 = vector.shape_cast %68 : vector<16x16x10xf32> to vector<256x10xf32>
    %c0_90 = arith.constant 0 : index
    %c0_91 = arith.constant 0 : index
    %c0_92 = arith.constant 0 : index
    %c0_93 = arith.constant 0 : index
    %70 = vector.load %arg4[%c0_90, %c0_91, %c0_92, %c0_93] : memref<3x3x10x10xf32, #tpu.memory_space<vmem>>, vector<1x1x10x10xf32>
    %71 = vector.shape_cast %70 : vector<1x1x10x10xf32> to vector<10x10xf32>
    %cst_94 = arith.constant dense<0.000000e+00> : vector<256x10xf32>
    %72 = tpu.matmul %69, %71, %cst_94 {dimension_numbers = #tpu.dot_dimension_numbers<[1], [0], [0], [1], [0, 0, 1, 1], [], []>} : vector<256x10xf32>, vector<10x10xf32>, vector<256x10xf32> -> vector<256x10xf32>
    %73 = arith.addf %67, %72 : vector<256x10xf32>
    %c0_95 = arith.constant 0 : index
    %c1_96 = arith.constant 1 : index
    %c0_97 = arith.constant 0 : index
    %74 = vector.load %arg19[%c0_95, %c1_96, %c0_97] : memref<18x18x10xf32, #tpu.memory_space<vmem>>, vector<16x16x10xf32>
    %75 = vector.shape_cast %74 : vector<16x16x10xf32> to vector<256x10xf32>
    %c0_98 = arith.constant 0 : index
    %c1_99 = arith.constant 1 : index
    %c0_100 = arith.constant 0 : index
    %c0_101 = arith.constant 0 : index
    %76 = vector.load %arg4[%c0_98, %c1_99, %c0_100, %c0_101] : memref<3x3x10x10xf32, #tpu.memory_space<vmem>>, vector<1x1x10x10xf32>
    %77 = vector.shape_cast %76 : vector<1x1x10x10xf32> to vector<10x10xf32>
    %cst_102 = arith.constant dense<0.000000e+00> : vector<256x10xf32>
    %78 = tpu.matmul %75, %77, %cst_102 {dimension_numbers = #tpu.dot_dimension_numbers<[1], [0], [0], [1], [0, 0, 1, 1], [], []>} : vector<256x10xf32>, vector<10x10xf32>, vector<256x10xf32> -> vector<256x10xf32>
    %79 = arith.addf %73, %78 : vector<256x10xf32>
    %c0_103 = arith.constant 0 : index
    %c2_104 = arith.constant 2 : index
    %c0_105 = arith.constant 0 : index
    %80 = vector.load %arg19[%c0_103, %c2_104, %c0_105] : memref<18x18x10xf32, #tpu.memory_space<vmem>>, vector<16x16x10xf32>
    %81 = vector.shape_cast %80 : vector<16x16x10xf32> to vector<256x10xf32>
    %c0_106 = arith.constant 0 : index
    %c2_107 = arith.constant 2 : index
    %c0_108 = arith.constant 0 : index
    %c0_109 = arith.constant 0 : index
    %82 = vector.load %arg4[%c0_106, %c2_107, %c0_108, %c0_109] : memref<3x3x10x10xf32, #tpu.memory_space<vmem>>, vector<1x1x10x10xf32>
    %83 = vector.shape_cast %82 : vector<1x1x10x10xf32> to vector<10x10xf32>
    %cst_110 = arith.constant dense<0.000000e+00> : vector<256x10xf32>
    %84 = tpu.matmul %81, %83, %cst_110 {dimension_numbers = #tpu.dot_dimension_numbers<[1], [0], [0], [1], [0, 0, 1, 1], [], []>} : vector<256x10xf32>, vector<10x10xf32>, vector<256x10xf32> -> vector<256x10xf32>
    %85 = arith.addf %79, %84 : vector<256x10xf32>
    %c1_111 = arith.constant 1 : index
    %c0_112 = arith.constant 0 : index
    %c0_113 = arith.constant 0 : index
    %86 = vector.load %arg19[%c1_111, %c0_112, %c0_113] : memref<18x18x10xf32, #tpu.memory_space<vmem>>, vector<16x16x10xf32>
    %87 = vector.shape_cast %86 : vector<16x16x10xf32> to vector<256x10xf32>
    %c1_114 = arith.constant 1 : index
    %c0_115 = arith.constant 0 : index
    %c0_116 = arith.constant 0 : index
    %c0_117 = arith.constant 0 : index
    %88 = vector.load %arg4[%c1_114, %c0_115, %c0_116, %c0_117] : memref<3x3x10x10xf32, #tpu.memory_space<vmem>>, vector<1x1x10x10xf32>
    %89 = vector.shape_cast %88 : vector<1x1x10x10xf32> to vector<10x10xf32>
    %cst_118 = arith.constant dense<0.000000e+00> : vector<256x10xf32>
    %90 = tpu.matmul %87, %89, %cst_118 {dimension_numbers = #tpu.dot_dimension_numbers<[1], [0], [0], [1], [0, 0, 1, 1], [], []>} : vector<256x10xf32>, vector<10x10xf32>, vector<256x10xf32> -> vector<256x10xf32>
    %91 = arith.addf %85, %90 : vector<256x10xf32>
    %c1_119 = arith.constant 1 : index
    %c1_120 = arith.constant 1 : index
    %c0_121 = arith.constant 0 : index
    %92 = vector.load %arg19[%c1_119, %c1_120, %c0_121] : memref<18x18x10xf32, #tpu.memory_space<vmem>>, vector<16x16x10xf32>
    %93 = vector.shape_cast %92 : vector<16x16x10xf32> to vector<256x10xf32>
    %c1_122 = arith.constant 1 : index
    %c1_123 = arith.constant 1 : index
    %c0_124 = arith.constant 0 : index
    %c0_125 = arith.constant 0 : index
    %94 = vector.load %arg4[%c1_122, %c1_123, %c0_124, %c0_125] : memref<3x3x10x10xf32, #tpu.memory_space<vmem>>, vector<1x1x10x10xf32>
    %95 = vector.shape_cast %94 : vector<1x1x10x10xf32> to vector<10x10xf32>
    %cst_126 = arith.constant dense<0.000000e+00> : vector<256x10xf32>
    %96 = tpu.matmul %93, %95, %cst_126 {dimension_numbers = #tpu.dot_dimension_numbers<[1], [0], [0], [1], [0, 0, 1, 1], [], []>} : vector<256x10xf32>, vector<10x10xf32>, vector<256x10xf32> -> vector<256x10xf32>
    %97 = arith.addf %91, %96 : vector<256x10xf32>
    %c1_127 = arith.constant 1 : index
    %c2_128 = arith.constant 2 : index
    %c0_129 = arith.constant 0 : index
    %98 = vector.load %arg19[%c1_127, %c2_128, %c0_129] : memref<18x18x10xf32, #tpu.memory_space<vmem>>, vector<16x16x10xf32>
    %99 = vector.shape_cast %98 : vector<16x16x10xf32> to vector<256x10xf32>
    %c1_130 = arith.constant 1 : index
    %c2_131 = arith.constant 2 : index
    %c0_132 = arith.constant 0 : index
    %c0_133 = arith.constant 0 : index
    %100 = vector.load %arg4[%c1_130, %c2_131, %c0_132, %c0_133] : memref<3x3x10x10xf32, #tpu.memory_space<vmem>>, vector<1x1x10x10xf32>
    %101 = vector.shape_cast %100 : vector<1x1x10x10xf32> to vector<10x10xf32>
    %cst_134 = arith.constant dense<0.000000e+00> : vector<256x10xf32>
    %102 = tpu.matmul %99, %101, %cst_134 {dimension_numbers = #tpu.dot_dimension_numbers<[1], [0], [0], [1], [0, 0, 1, 1], [], []>} : vector<256x10xf32>, vector<10x10xf32>, vector<256x10xf32> -> vector<256x10xf32>
    %103 = arith.addf %97, %102 : vector<256x10xf32>
    %c2_135 = arith.constant 2 : index
    %c0_136 = arith.constant 0 : index
    %c0_137 = arith.constant 0 : index
    %104 = vector.load %arg19[%c2_135, %c0_136, %c0_137] : memref<18x18x10xf32, #tpu.memory_space<vmem>>, vector<16x16x10xf32>
    %105 = vector.shape_cast %104 : vector<16x16x10xf32> to vector<256x10xf32>
    %c2_138 = arith.constant 2 : index
    %c0_139 = arith.constant 0 : index
    %c0_140 = arith.constant 0 : index
    %c0_141 = arith.constant 0 : index
    %106 = vector.load %arg4[%c2_138, %c0_139, %c0_140, %c0_141] : memref<3x3x10x10xf32, #tpu.memory_space<vmem>>, vector<1x1x10x10xf32>
    %107 = vector.shape_cast %106 : vector<1x1x10x10xf32> to vector<10x10xf32>
    %cst_142 = arith.constant dense<0.000000e+00> : vector<256x10xf32>
    %108 = tpu.matmul %105, %107, %cst_142 {dimension_numbers = #tpu.dot_dimension_numbers<[1], [0], [0], [1], [0, 0, 1, 1], [], []>} : vector<256x10xf32>, vector<10x10xf32>, vector<256x10xf32> -> vector<256x10xf32>
    %109 = arith.addf %103, %108 : vector<256x10xf32>
    %c2_143 = arith.constant 2 : index
    %c1_144 = arith.constant 1 : index
    %c0_145 = arith.constant 0 : index
    %110 = vector.load %arg19[%c2_143, %c1_144, %c0_145] : memref<18x18x10xf32, #tpu.memory_space<vmem>>, vector<16x16x10xf32>
    %111 = vector.shape_cast %110 : vector<16x16x10xf32> to vector<256x10xf32>
    %c2_146 = arith.constant 2 : index
    %c1_147 = arith.constant 1 : index
    %c0_148 = arith.constant 0 : index
    %c0_149 = arith.constant 0 : index
    %112 = vector.load %arg4[%c2_146, %c1_147, %c0_148, %c0_149] : memref<3x3x10x10xf32, #tpu.memory_space<vmem>>, vector<1x1x10x10xf32>
    %113 = vector.shape_cast %112 : vector<1x1x10x10xf32> to vector<10x10xf32>
    %cst_150 = arith.constant dense<0.000000e+00> : vector<256x10xf32>
    %114 = tpu.matmul %111, %113, %cst_150 {dimension_numbers = #tpu.dot_dimension_numbers<[1], [0], [0], [1], [0, 0, 1, 1], [], []>} : vector<256x10xf32>, vector<10x10xf32>, vector<256x10xf32> -> vector<256x10xf32>
    %115 = arith.addf %109, %114 : vector<256x10xf32>
    %c2_151 = arith.constant 2 : index
    %c2_152 = arith.constant 2 : index
    %c0_153 = arith.constant 0 : index
    %116 = vector.load %arg19[%c2_151, %c2_152, %c0_153] : memref<18x18x10xf32, #tpu.memory_space<vmem>>, vector<16x16x10xf32>
    %117 = vector.shape_cast %116 : vector<16x16x10xf32> to vector<256x10xf32>
    %c2_154 = arith.constant 2 : index
    %c2_155 = arith.constant 2 : index
    %c0_156 = arith.constant 0 : index
    %c0_157 = arith.constant 0 : index
    %118 = vector.load %arg4[%c2_154, %c2_155, %c0_156, %c0_157] : memref<3x3x10x10xf32, #tpu.memory_space<vmem>>, vector<1x1x10x10xf32>
    %119 = vector.shape_cast %118 : vector<1x1x10x10xf32> to vector<10x10xf32>
    %cst_158 = arith.constant dense<0.000000e+00> : vector<256x10xf32>
    %120 = tpu.matmul %117, %119, %cst_158 {dimension_numbers = #tpu.dot_dimension_numbers<[1], [0], [0], [1], [0, 0, 1, 1], [], []>} : vector<256x10xf32>, vector<10x10xf32>, vector<256x10xf32> -> vector<256x10xf32>
    %121 = arith.addf %115, %120 : vector<256x10xf32>
    %c0_159 = arith.constant 0 : index
    %c0_160 = arith.constant 0 : index
    %122 = vector.load %arg5[%c0_159, %c0_160] : memref<1x10xf32, #tpu.memory_space<vmem>>, vector<1x10xf32>
    %123 = vector.broadcast %122 : vector<1x10xf32> to vector<256x10xf32>
    %124 = arith.addf %121, %123 : vector<256x10xf32>
    %c0_161 = arith.constant 0 : index
    %c0_162 = arith.constant 0 : index
    %125 = vector.load %arg6[%c0_161, %c0_162] : memref<10x10xf32, #tpu.memory_space<vmem>>, vector<10x10xf32>
    %cst_163 = arith.constant dense<0.000000e+00> : vector<256x10xf32>
    %126 = tpu.matmul %124, %125, %cst_163 {dimension_numbers = #tpu.dot_dimension_numbers<[1], [0], [0], [1], [0, 0, 1, 1], [], []>} : vector<256x10xf32>, vector<10x10xf32>, vector<256x10xf32> -> vector<256x10xf32>
    %c0_164 = arith.constant 0 : index
    %c0_165 = arith.constant 0 : index
    %127 = vector.load %arg7[%c0_164, %c0_165] : memref<1x10xf32, #tpu.memory_space<vmem>>, vector<1x10xf32>
    %128 = vector.broadcast %127 : vector<1x10xf32> to vector<256x10xf32>
    %129 = arith.addf %126, %128 : vector<256x10xf32>
    %cst_166 = arith.constant 0.000000e+00 : f32
    %130 = vector.broadcast %cst_166 : f32 to vector<256x10xf32>
    %131 = arith.maximumf %129, %130 : vector<256x10xf32>
    %c0_167 = arith.constant 0 : index
    %c0_168 = arith.constant 0 : index
    %132 = vector.load %arg8[%c0_167, %c0_168] : memref<10x10xf32, #tpu.memory_space<vmem>>, vector<10x10xf32>
    %cst_169 = arith.constant dense<0.000000e+00> : vector<256x10xf32>
    %133 = tpu.matmul %131, %132, %cst_169 {dimension_numbers = #tpu.dot_dimension_numbers<[1], [0], [0], [1], [0, 0, 1, 1], [], []>} : vector<256x10xf32>, vector<10x10xf32>, vector<256x10xf32> -> vector<256x10xf32>
    %c0_170 = arith.constant 0 : index
    %c0_171 = arith.constant 0 : index
    %134 = vector.load %arg9[%c0_170, %c0_171] : memref<1x10xf32, #tpu.memory_space<vmem>>, vector<1x10xf32>
    %135 = vector.broadcast %134 : vector<1x10xf32> to vector<256x10xf32>
    %136 = arith.addf %133, %135 : vector<256x10xf32>
    %cst_172 = arith.constant 0.000000e+00 : f32
    %137 = vector.broadcast %cst_172 : f32 to vector<256x10xf32>
    %138 = arith.maximumf %136, %137 : vector<256x10xf32>
    %c0_173 = arith.constant 0 : index
    %c0_174 = arith.constant 0 : index
    %139 = vector.load %arg10[%c0_173, %c0_174] : memref<10x10xf32, #tpu.memory_space<vmem>>, vector<10x10xf32>
    %cst_175 = arith.constant dense<0.000000e+00> : vector<256x10xf32>
    %140 = tpu.matmul %138, %139, %cst_175 {dimension_numbers = #tpu.dot_dimension_numbers<[1], [0], [0], [1], [0, 0, 1, 1], [], []>} : vector<256x10xf32>, vector<10x10xf32>, vector<256x10xf32> -> vector<256x10xf32>
    %c0_176 = arith.constant 0 : index
    %c0_177 = arith.constant 0 : index
    %141 = vector.load %arg11[%c0_176, %c0_177] : memref<1x10xf32, #tpu.memory_space<vmem>>, vector<1x10xf32>
    %142 = vector.broadcast %141 : vector<1x10xf32> to vector<256x10xf32>
    %143 = arith.addf %140, %142 : vector<256x10xf32>
    %cst_178 = arith.constant 0.000000e+00 : f32
    %144 = vector.broadcast %cst_178 : f32 to vector<256x10xf32>
    %145 = arith.maximumf %143, %144 : vector<256x10xf32>
    %c0_179 = arith.constant 0 : index
    %c0_180 = arith.constant 0 : index
    %146 = vector.load %arg12[%c0_179, %c0_180] : memref<10x10xf32, #tpu.memory_space<vmem>>, vector<10x10xf32>
    %cst_181 = arith.constant dense<0.000000e+00> : vector<256x10xf32>
    %147 = tpu.matmul %145, %146, %cst_181 {dimension_numbers = #tpu.dot_dimension_numbers<[1], [0], [0], [1], [0, 0, 1, 1], [], []>} : vector<256x10xf32>, vector<10x10xf32>, vector<256x10xf32> -> vector<256x10xf32>
    %c0_182 = arith.constant 0 : index
    %c0_183 = arith.constant 0 : index
    %148 = vector.load %arg13[%c0_182, %c0_183] : memref<1x10xf32, #tpu.memory_space<vmem>>, vector<1x10xf32>
    %149 = vector.broadcast %148 : vector<1x10xf32> to vector<256x10xf32>
    %150 = arith.addf %147, %149 : vector<256x10xf32>
    %cst_184 = arith.constant 0.000000e+00 : f32
    %151 = vector.broadcast %cst_184 : f32 to vector<256x10xf32>
    %152 = arith.maximumf %150, %151 : vector<256x10xf32>
    %c0_185 = arith.constant 0 : index
    %c0_186 = arith.constant 0 : index
    %153 = vector.load %arg14[%c0_185, %c0_186] : memref<10x10xf32, #tpu.memory_space<vmem>>, vector<10x10xf32>
    %cst_187 = arith.constant dense<0.000000e+00> : vector<256x10xf32>
    %154 = tpu.matmul %152, %153, %cst_187 {dimension_numbers = #tpu.dot_dimension_numbers<[1], [0], [0], [1], [0, 0, 1, 1], [], []>} : vector<256x10xf32>, vector<10x10xf32>, vector<256x10xf32> -> vector<256x10xf32>
    %c0_188 = arith.constant 0 : index
    %c0_189 = arith.constant 0 : index
    %155 = vector.load %arg15[%c0_188, %c0_189] : memref<1x10xf32, #tpu.memory_space<vmem>>, vector<1x10xf32>
    %156 = vector.broadcast %155 : vector<1x10xf32> to vector<256x10xf32>
    %157 = arith.addf %154, %156 : vector<256x10xf32>
    %cst_190 = arith.constant 0.000000e+00 : f32
    %158 = vector.broadcast %cst_190 : f32 to vector<256x10xf32>
    %159 = arith.maximumf %157, %158 : vector<256x10xf32>
    %c0_191 = arith.constant 0 : index
    %c0_192 = arith.constant 0 : index
    %160 = vector.load %arg16[%c0_191, %c0_192] : memref<10x6xf32, #tpu.memory_space<vmem>>, vector<10x6xf32>
    %cst_193 = arith.constant dense<0.000000e+00> : vector<256x6xf32>
    %161 = tpu.matmul %159, %160, %cst_193 {dimension_numbers = #tpu.dot_dimension_numbers<[1], [0], [0], [1], [0, 0, 1, 1], [], []>} : vector<256x10xf32>, vector<10x6xf32>, vector<256x6xf32> -> vector<256x6xf32>
    %c0_194 = arith.constant 0 : index
    %c0_195 = arith.constant 0 : index
    %162 = vector.load %arg17[%c0_194, %c0_195] : memref<1x6xf32, #tpu.memory_space<vmem>>, vector<1x6xf32>
    %163 = vector.broadcast %162 : vector<1x6xf32> to vector<256x6xf32>
    %164 = arith.addf %161, %163 : vector<256x6xf32>
    %165 = vector.shape_cast %164 : vector<256x6xf32> to vector<1x16x16x6xf32>
    %c0_196 = arith.constant 0 : index
    %c0_197 = arith.constant 0 : index
    %c0_198 = arith.constant 0 : index
    %c0_199 = arith.constant 0 : index
    %166 = vector.load %arg18[%c0_196, %c0_197, %c0_198, %c0_199] : memref<1x16x16x6xf32, #tpu.memory_space<vmem>>, vector<1x16x16x6xf32>
    tpu.vector_store %arg18[%c0_196, %c0_197, %c0_198, %c0_199], %165 {strides = array<i32>} : memref<1x16x16x6xf32, #tpu.memory_space<vmem>>, vector<1x16x16x6xf32>,
    return
  }
  func.func @transform_0(%arg0: i32) -> (i32, i32, i32, i32) {
    %c0_i32 = arith.constant 0 : i32
    %c0_i32_0 = arith.constant 0 : i32
    %c0_i32_1 = arith.constant 0 : i32
    %c0_i32_2 = arith.constant 0 : i32
    return %arg0, %c0_i32, %c0_i32_0, %c0_i32_1 : i32, i32, i32, i32
  }
  func.func @transform_1(%arg0: i32) -> (i32, i32, i32, i32) {
    %c0_i32 = arith.constant 0 : i32
    %c0_i32_0 = arith.constant 0 : i32
    %c0_i32_1 = arith.constant 0 : i32
    %c0_i32_2 = arith.constant 0 : i32
    %c0_i32_3 = arith.constant 0 : i32
    return %c0_i32, %c0_i32_0, %c0_i32_1, %c0_i32_2 : i32, i32, i32, i32
  }
  func.func @transform_2(%arg0: i32) -> (i32, i32) {
    %c0_i32 = arith.constant 0 : i32
    %c0_i32_0 = arith.constant 0 : i32
    %c0_i32_1 = arith.constant 0 : i32
    return %c0_i32, %c0_i32_0 : i32, i32
  }
  func.func @transform_3(%arg0: i32) -> (i32, i32, i32, i32) {
    %c0_i32 = arith.constant 0 : i32
    %c0_i32_0 = arith.constant 0 : i32
    %c0_i32_1 = arith.constant 0 : i32
    %c0_i32_2 = arith.constant 0 : i32
    %c0_i32_3 = arith.constant 0 : i32
    return %c0_i32, %c0_i32_0, %c0_i32_1, %c0_i32_2 : i32, i32, i32, i32
  }
  func.func @transform_4(%arg0: i32) -> (i32, i32) {
    %c0_i32 = arith.constant 0 : i32
    %c0_i32_0 = arith.constant 0 : i32
    %c0_i32_1 = arith.constant 0 : i32
    return %c0_i32, %c0_i32_0 : i32, i32
  }
  func.func @transform_5(%arg0: i32) -> (i32, i32) {
    %c0_i32 = arith.constant 0 : i32
    %c0_i32_0 = arith.constant 0 : i32
    %c0_i32_1 = arith.constant 0 : i32
    return %c0_i32, %c0_i32_0 : i32, i32
  }
  func.func @transform_6(%arg0: i32) -> (i32, i32) {
    %c0_i32 = arith.constant 0 : i32
    %c0_i32_0 = arith.constant 0 : i32
    %c0_i32_1 = arith.constant 0 : i32
    return %c0_i32, %c0_i32_0 : i32, i32
  }
  func.func @transform_7(%arg0: i32) -> (i32, i32) {
    %c0_i32 = arith.constant 0 : i32
    %c0_i32_0 = arith.constant 0 : i32
    %c0_i32_1 = arith.constant 0 : i32
    return %c0_i32, %c0_i32_0 : i32, i32
  }
  func.func @transform_8(%arg0: i32) -> (i32, i32) {
    %c0_i32 = arith.constant 0 : i32
    %c0_i32_0 = arith.constant 0 : i32
    %c0_i32_1 = arith.constant 0 : i32
    return %c0_i32, %c0_i32_0 : i32, i32
  }
  func.func @transform_9(%arg0: i32) -> (i32, i32) {
    %c0_i32 = arith.constant 0 : i32
    %c0_i32_0 = arith.constant 0 : i32
    %c0_i32_1 = arith.constant 0 : i32
    return %c0_i32, %c0_i32_0 : i32, i32
  }
  func.func @transform_10(%arg0: i32) -> (i32, i32) {
    %c0_i32 = arith.constant 0 : i32
    %c0_i32_0 = arith.constant 0 : i32
    %c0_i32_1 = arith.constant 0 : i32
    return %c0_i32, %c0_i32_0 : i32, i32
  }
  func.func @transform_11(%arg0: i32) -> (i32, i32) {
    %c0_i32 = arith.constant 0 : i32
    %c0_i32_0 = arith.constant 0 : i32
    %c0_i32_1 = arith.constant 0 : i32
    return %c0_i32, %c0_i32_0 : i32, i32
  }
  func.func @transform_12(%arg0: i32) -> (i32, i32) {
    %c0_i32 = arith.constant 0 : i32
    %c0_i32_0 = arith.constant 0 : i32
    %c0_i32_1 = arith.constant 0 : i32
    return %c0_i32, %c0_i32_0 : i32, i32
  }
  func.func @transform_13(%arg0: i32) -> (i32, i32) {
    %c0_i32 = arith.constant 0 : i32
    %c0_i32_0 = arith.constant 0 : i32
    %c0_i32_1 = arith.constant 0 : i32
    return %c0_i32, %c0_i32_0 : i32, i32
  }
  func.func @transform_14(%arg0: i32) -> (i32, i32) {
    %c0_i32 = arith.constant 0 : i32
    %c0_i32_0 = arith.constant 0 : i32
    %c0_i32_1 = arith.constant 0 : i32
    return %c0_i32, %c0_i32_0 : i32, i32
  }
  func.func @transform_15(%arg0: i32) -> (i32, i32) {
    %c0_i32 = arith.constant 0 : i32
    %c0_i32_0 = arith.constant 0 : i32
    %c0_i32_1 = arith.constant 0 : i32
    return %c0_i32, %c0_i32_0 : i32, i32
  }
  func.func @transform_16(%arg0: i32) -> (i32, i32) {
    %c0_i32 = arith.constant 0 : i32
    %c0_i32_0 = arith.constant 0 : i32
    %c0_i32_1 = arith.constant 0 : i32
    return %c0_i32, %c0_i32_0 : i32, i32
  }
  func.func @transform_17(%arg0: i32) -> (i32, i32, i32, i32) {
    %c0_i32 = arith.constant 0 : i32
    %c0_i32_0 = arith.constant 0 : i32
    %c0_i32_1 = arith.constant 0 : i32
    %c0_i32_2 = arith.constant 0 : i32
    return %arg0, %c0_i32, %c0_i32_0, %c0_i32_1 : i32, i32, i32, i32
  }
}

module attributes {stable_mosaic.version = 11 : i64} {
  func.func @kern(%arg0: i32, %arg1: memref<128x24xf32, #tpu.memory_space<vmem>>, %arg2: memref<12x8xf32, #tpu.memory_space<vmem>>, %arg3: memref<128x8xf32, #tpu.memory_space<vmem>>, %arg4: memref<128x8xf32, #tpu.memory_space<vmem>>) attributes {dimension_semantics = [#tpu.dimension_semantics<parallel>], iteration_bounds = array<i64: 1>, scalar_prefetch = 0 : i64, scratch_operands = 0 : i64, tpu.core_type = #tpu.core_type<tc>, window_params = [{transform_indices = @transform_0, window_bounds = array<i64: 128, 24>}, {pipeline_mode = #tpu.pipeline_mode<synchronous>, transform_indices = @transform_1, window_bounds = array<i64: 12, 8>}, {transform_indices = @transform_2, window_bounds = array<i64: 128, 8>}, {transform_indices = @transform_3, window_bounds = array<i64: 128, 8>}]} {
    %c0 = arith.constant 0 : index
    %c0_0 = arith.constant 0 : index
    %0 = vector.load %arg2[%c0, %c0_0] : memref<12x8xf32, #tpu.memory_space<vmem>>, vector<12x8xf32>
    %c0_1 = arith.constant 0 : index
    %c0_2 = arith.constant 0 : index
    %1 = vector.load %arg1[%c0_1, %c0_2] : memref<128x24xf32, #tpu.memory_space<vmem>>, vector<128x24xf32>
    %2 = vector.extract_strided_slice %1 {offsets = [0, 0], sizes = [128, 12], strides = [1, 1]} : vector<128x24xf32> to vector<128x12xf32>
    %cst = arith.constant dense<0.000000e+00> : vector<128x8xf32>
    %3 = tpu.matmul %2, %0, %cst {dimension_numbers = #tpu.dot_dimension_numbers<[1], [0], [0], [1], [0, 0, 1, 1], [], []>} : vector<128x12xf32>, vector<12x8xf32>, vector<128x8xf32> -> vector<128x8xf32>
    %c0_3 = arith.constant 0 : index
    %c0_4 = arith.constant 0 : index
    %4 = vector.load %arg3[%c0_3, %c0_4] : memref<128x8xf32, #tpu.memory_space<vmem>>, vector<128x8xf32>
    tpu.vector_store %arg3[%c0_3, %c0_4], %3 {strides = array<i32>} : memref<128x8xf32, #tpu.memory_space<vmem>>, vector<128x8xf32>,
    %5 = vector.extract_strided_slice %1 {offsets = [0, 12], sizes = [128, 12], strides = [1, 1]} : vector<128x24xf32> to vector<128x12xf32>
    %cst_5 = arith.constant dense<0.000000e+00> : vector<128x8xf32>
    %6 = tpu.matmul %5, %0, %cst_5 {dimension_numbers = #tpu.dot_dimension_numbers<[1], [0], [0], [1], [0, 0, 1, 1], [], []>} : vector<128x12xf32>, vector<12x8xf32>, vector<128x8xf32> -> vector<128x8xf32>
    %c0_6 = arith.constant 0 : index
    %c0_7 = arith.constant 0 : index
    %7 = vector.load %arg4[%c0_6, %c0_7] : memref<128x8xf32, #tpu.memory_space<vmem>>, vector<128x8xf32>
    tpu.vector_store %arg4[%c0_6, %c0_7], %6 {strides = array<i32>} : memref<128x8xf32, #tpu.memory_space<vmem>>, vector<128x8xf32>,
    return
  }
  func.func @transform_0(%arg0: i32) -> (i32, i32) {
    %c0_i32 = arith.constant 0 : i32
    %c0_i32_0 = arith.constant 0 : i32
    return %arg0, %c0_i32 : i32, i32
  }
  func.func @transform_1(%arg0: i32) -> (i32, i32) {
    %c0_i32 = arith.constant 0 : i32
    %c0_i32_0 = arith.constant 0 : i32
    %c0_i32_1 = arith.constant 0 : i32
    return %c0_i32, %c0_i32_0 : i32, i32
  }
  func.func @transform_2(%arg0: i32) -> (i32, i32) {
    %c0_i32 = arith.constant 0 : i32
    %c0_i32_0 = arith.constant 0 : i32
    return %arg0, %c0_i32 : i32, i32
  }
  func.func @transform_3(%arg0: i32) -> (i32, i32) {
    %c0_i32 = arith.constant 0 : i32
    %c0_i32_0 = arith.constant 0 : i32
    return %arg0, %c0_i32 : i32, i32
  }
}

</mosaic_0001>

<llo_original>
// kernel: _lambda_.3
$region0: #{_lambda_.3}
  #allocation0 [shape = 'u32[]', space=smem, size = 0x4, offset = 0x4, fixed_abs, tag = 'smem constant byte address 0x4 - core index']
  #allocation1 [shape = 'u32[144,128]{1,0:T(1,128)}', space=vmem, size = 0x12000, scoped, tag = 'internal scratch']
  %s0 = inlined_call_operand.vmem [shape: f32[128,4], index: 0, kind: input, shape index: {}]
  %s1 = inlined_call_operand.vmem [shape: f32[4,10], index: 1, kind: input, shape index: {}]
  %s2 = inlined_call_operand.vmem [shape: f32[1,10], index: 2, kind: input, shape index: {}]
  %s3 = inlined_call_operand.vmem [shape: f32[10,10], index: 3, kind: input, shape index: {}]
  %s4 = inlined_call_operand.vmem [shape: f32[1,10], index: 4, kind: input, shape index: {}]
  %s5 = inlined_call_operand.vmem [shape: f32[10,10], index: 5, kind: input, shape index: {}]
  %s6 = inlined_call_operand.vmem [shape: f32[1,10], index: 6, kind: input, shape index: {}]
  %s7 = inlined_call_operand.vmem [shape: f32[10,10], index: 7, kind: input, shape index: {}]
  %s8 = inlined_call_operand.vmem [shape: f32[1,10], index: 8, kind: input, shape index: {}]
  %s9 = inlined_call_operand.vmem [shape: f32[10,10], index: 9, kind: input, shape index: {}]
  %s10 = inlined_call_operand.vmem [shape: f32[1,10], index: 10, kind: input, shape index: {}]
  %s11 = inlined_call_operand.vmem [shape: f32[10,10], index: 11, kind: input, shape index: {}]
  %s12 = inlined_call_operand.vmem [shape: f32[1,10], index: 12, kind: input, shape index: {}]
  %s13 = inlined_call_operand.vmem [shape: f32[10,40], index: 13, kind: input, shape index: {}]
  %s14 = inlined_call_operand.vmem [shape: f32[1,40], index: 14, kind: input, shape index: {}]
  %s15 = inlined_call_operand.vmem [shape: f32[128,40], index: 15, kind: output, shape index: {}]
  %s16 = sld [smem:[#allocation0]]
  $region70: #{_lambda_.3} parent=0
    _
  %s18 = ssub.s32 1, %s16
  %s19 = scalar_select 0, %s18, %s16
  // Predicated region
  $region2: #{_lambda_.3} parent=0 // pred_check
    _
  $region3: #{_lambda_.3} parent=0 // pred_check_branch
    %21 = sbr.rel (0) target = $region5
  $region4: #{_lambda_.3} parent=0 // pred_region
    _
  $region5: #{_lambda_.3} parent=0 // pred_fallthru
    _
  // Predicated region
  $region6: #{_lambda_.3} parent=0 // pred_check
    _
  $region7: #{_lambda_.3} parent=0 // pred_check_branch
    %23 = sbr.rel (0) target = $region9
  $region8: #{_lambda_.3} parent=0 // pred_region
    _
  $region9: #{_lambda_.3} parent=0 // pred_fallthru
    _
  // Predicated region
  $region10: #{_lambda_.3} parent=0 // pred_check
    _
  $region11: #{_lambda_.3} parent=0 // pred_check_branch
    %25 = sbr.rel (0) target = $region13
  $region12: #{_lambda_.3} parent=0 // pred_region
    _
  $region13: #{_lambda_.3} parent=0 // pred_fallthru
    _
  // Predicated region
  $region14: #{_lambda_.3} parent=0 // pred_check
    _
  $region15: #{_lambda_.3} parent=0 // pred_check_branch
    %27 = sbr.rel (0) target = $region17
  $region16: #{_lambda_.3} parent=0 // pred_region
    _
  $region17: #{_lambda_.3} parent=0 // pred_fallthru
    _
  // Predicated region
  $region18: #{_lambda_.3} parent=0 // pred_check
    _
  $region19: #{_lambda_.3} parent=0 // pred_check_branch
    %29 = sbr.rel (0) target = $region21
  $region20: #{_lambda_.3} parent=0 // pred_region
    _
  $region21: #{_lambda_.3} parent=0 // pred_fallthru
    _
  // Predicated region
  $region22: #{_lambda_.3} parent=0 // pred_check
    _
  $region23: #{_lambda_.3} parent=0 // pred_check_branch
    %31 = sbr.rel (0) target = $region25
  $region24: #{_lambda_.3} parent=0 // pred_region
    _
  $region25: #{_lambda_.3} parent=0 // pred_fallthru
    _
  // Predicated region
  $region26: #{_lambda_.3} parent=0 // pred_check
    _
  $region27: #{_lambda_.3} parent=0 // pred_check_branch
    %33 = sbr.rel (0) target = $region29
  $region28: #{_lambda_.3} parent=0 // pred_region
    _
  $region29: #{_lambda_.3} parent=0 // pred_fallthru
    _
  // Predicated region
  $region30: #{_lambda_.3} parent=0 // pred_check
    _
  $region31: #{_lambda_.3} parent=0 // pred_check_branch
    %35 = sbr.rel (0) target = $region33
  $region32: #{_lambda_.3} parent=0 // pred_region
    _
  $region33: #{_lambda_.3} parent=0 // pred_fallthru
    _
  // Predicated region
  $region34: #{_lambda_.3} parent=0 // pred_check
    _
  $region35: #{_lambda_.3} parent=0 // pred_check_branch
    %37 = sbr.rel (0) target = $region37
  $region36: #{_lambda_.3} parent=0 // pred_region
    _
  $region37: #{_lambda_.3} parent=0 // pred_fallthru
    _
  // Predicated region
  $region38: #{_lambda_.3} parent=0 // pred_check
    _
  $region39: #{_lambda_.3} parent=0 // pred_check_branch
    %39 = sbr.rel (0) target = $region41
  $region40: #{_lambda_.3} parent=0 // pred_region
    _
  $region41: #{_lambda_.3} parent=0 // pred_fallthru
    _
  // Predicated region
  $region42: #{_lambda_.3} parent=0 // pred_check
    _
  $region43: #{_lambda_.3} parent=0 // pred_check_branch
    %41 = sbr.rel (0) target = $region45
  $region44: #{_lambda_.3} parent=0 // pred_region
    _
  $region45: #{_lambda_.3} parent=0 // pred_fallthru
    _
  // Predicated region
  $region46: #{_lambda_.3} parent=0 // pred_check
    _
  $region47: #{_lambda_.3} parent=0 // pred_check_branch
    %43 = sbr.rel (0) target = $region49
  $region48: #{_lambda_.3} parent=0 // pred_region
    _
  $region49: #{_lambda_.3} parent=0 // pred_fallthru
    _
  // Predicated region
  $region50: #{_lambda_.3} parent=0 // pred_check
    _
  $region51: #{_lambda_.3} parent=0 // pred_check_branch
    %45 = sbr.rel (0) target = $region53
  $region52: #{_lambda_.3} parent=0 // pred_region
    _
  $region53: #{_lambda_.3} parent=0 // pred_fallthru
    _
  // Predicated region
  $region54: #{_lambda_.3} parent=0 // pred_check
    _
  $region55: #{_lambda_.3} parent=0 // pred_check_branch
    %47 = sbr.rel (0) target = $region57
  $region56: #{_lambda_.3} parent=0 // pred_region
    _
  $region57: #{_lambda_.3} parent=0 // pred_fallthru
    _
  // Predicated region
  $region58: #{_lambda_.3} parent=0 // pred_check
    _
  $region59: #{_lambda_.3} parent=0 // pred_check_branch
    %49 = sbr.rel (0) target = $region61
  $region60: #{_lambda_.3} parent=0 // pred_region
    _
  $region61: #{_lambda_.3} parent=0 // pred_fallthru
    _
  %v50 = vld [vmem:[%s0] sm:$0xff]
  %v51 = vld [vmem:[%s0 + $0x8] sm:$0xff]
  %v52 = vld [vmem:[%s0 + $0x10] sm:$0xff]
  %v53 = vld [vmem:[%s0 + $0x18] sm:$0xff]
  %v54 = vld [vmem:[%s0 + $0x20] sm:$0xff]
  %v55 = vld [vmem:[%s0 + $0x28] sm:$0xff]
  %v56 = vld [vmem:[%s0 + $0x30] sm:$0xff]
  %v57 = vld [vmem:[%s0 + $0x38] sm:$0xff]
  %v58 = vld [vmem:[%s0 + $0x40] sm:$0xff]
  %v59 = vld [vmem:[%s0 + $0x48] sm:$0xff]
  %v60 = vld [vmem:[%s0 + $0x50] sm:$0xff]
  %v61 = vld [vmem:[%s0 + $0x58] sm:$0xff]
  %v62 = vld [vmem:[%s0 + $0x60] sm:$0xff]
  %v63 = vld [vmem:[%s0 + $0x68] sm:$0xff]
  %v64 = vld [vmem:[%s0 + $0x70] sm:$0xff]
  %v65 = vld [vmem:[%s0 + $0x78] sm:$0xff]
  %v66 = vld [vmem:[%s1] sm:$0xf]
  %v67 = vld [vmem:[%s2] sm:$0x1]
  %v69 = vlaneseq
  %v70 = vshrl.u32 %v69, 7
  %v71 = vsub.s32 0, %v70
  %v72 = vrot.slane %v67, %v71
  %vm74 = vcmask 31744
  %v76 = vsel %vm74, %v50, 0
  %v79 = vsel %vm74, %v51, 0
  %v82 = vsel %vm74, %v52, 0
  %v85 = vsel %vm74, %v53, 0
  %v88 = vsel %vm74, %v54, 0
  %v91 = vsel %vm74, %v55, 0
  %v94 = vsel %vm74, %v56, 0
  %v97 = vsel %vm74, %v57, 0
  %v100 = vsel %vm74, %v58, 0
  %v103 = vsel %vm74, %v59, 0
  %v106 = vsel %vm74, %v60, 0
  %v109 = vsel %vm74, %v61, 0
  %v112 = vsel %vm74, %v62, 0
  %v115 = vsel %vm74, %v63, 0
  %v118 = vsel %vm74, %v64, 0
  %v121 = vsel %vm74, %v65, 0
  %vm123 = vcmask 1043456
  %v125 = vsel %vm123, %v66, 0
  %127 = vmatprep.subr.mxu0 0.0
  %128 = vmatpush1.msra.mxu0 0.0
  %129 = vmatprep.subr.mxu0 0.0
  %130 = vmatpush1.msra.mxu0 0.0
  %131 = vmatprep.subr.mxu0 0.0
  %132 = vmatpush1.msra.mxu0 0.0
  %133 = vmatprep.subr.mxu0 0.0
  %134 = vmatpush1.msra.mxu0 0.0
  %135 = vmatprep.subr.mxu0 0.0
  %136 = vmatpush1.msra.mxu0 0.0
  %137 = vmatprep.subr.mxu0 0.0
  %138 = vmatpush1.msra.mxu0 0.0
  %139 = vmatprep.subr.mxu0 0.0
  %140 = vmatpush1.msra.mxu0 0.0
  %141 = vmatprep.subr.mxu0 0.0
  %142 = vmatpush1.msra.mxu0 0.0
  %143 = vmatprep.subr.mxu0 0.0
  %144 = vmatpush1.msra.mxu0 0.0
  %145 = vmatprep.subr.mxu0 0.0
  %146 = vmatpush1.msra.mxu0 0.0
  %147 = vmatprep.subr.mxu0 0.0
  %148 = vmatpush1.msra.mxu0 0.0
  %149 = vmatprep.subr.mxu0 0.0
  %150 = vmatpush1.msra.mxu0 0.0
  %151 = vmatprep.subr.mxu0 0.0
  %152 = vmatpush1.msra.mxu0 0.0
  %153 = vmatprep.subr.mxu0 0.0
  %154 = vmatpush1.msra.mxu0 0.0
  %155 = vmatprep.subr.mxu0 0.0
  %156 = vmatpush1.msra.mxu0 0.0
  %157 = vmatprep.subr.mxu0 0.0
  %158 = vmatpush1.msra.mxu0 %v125
  %159 = vmatprep.subr.mxu0 0.0
  %160 = vmatpush2.msra.mxu0 0.0
  %161 = vmatprep.subr.mxu0 0.0
  %162 = vmatpush2.msra.mxu0 0.0
  %163 = vmatprep.subr.mxu0 0.0
  %164 = vmatpush2.msra.mxu0 0.0
  %165 = vmatprep.subr.mxu0 0.0
  %166 = vmatpush2.msra.mxu0 0.0
  %167 = vmatprep.subr.mxu0 0.0
  %168 = vmatpush2.msra.mxu0 0.0
  %169 = vmatprep.subr.mxu0 0.0
  %170 = vmatpush2.msra.mxu0 0.0
  %171 = vmatprep.subr.mxu0 0.0
  %172 = vmatpush2.msra.mxu0 0.0
  %173 = vmatprep.subr.mxu0 0.0
  %174 = vmatpush2.msra.mxu0 0.0
  %175 = vmatprep.subr.mxu0 0.0
  %176 = vmatpush2.msra.mxu0 0.0
  %177 = vmatprep.subr.mxu0 0.0
  %178 = vmatpush2.msra.mxu0 0.0
  %179 = vmatprep.subr.mxu0 0.0
  %180 = vmatpush2.msra.mxu0 0.0
  %181 = vmatprep.subr.mxu0 0.0
  %182 = vmatpush2.msra.mxu0 0.0
  %183 = vmatprep.subr.mxu0 0.0
  %184 = vmatpush2.msra.mxu0 0.0
  %185 = vmatprep.subr.mxu0 0.0
  %186 = vmatpush2.msra.mxu0 0.0
  %187 = vmatprep.subr.mxu0 0.0
  %188 = vmatpush2.msra.mxu0 0.0
  %189 = vmatprep.subr.mxu0 0.0
  %190 = vmatpush2.msra.mxu0 0.0
  %191 = vmatprep.mubr.f32.mxu0 0.0
  %192 = vmatmul.mubr.f32.gmra.mxu0 %v76
  %v193 = vpop.f32.mrf.mxu0
  %v194 = vadd.f32 %v72, %v193
  %v195 = vpop.f32.mrf.mxu0
  %196 = vmatprep.mubr.f32.mxu0 0.0
  %197 = vmatmul.mubr.f32.gmra.mxu0 %v79
  %v198 = vpop.f32.mrf.mxu0
  %v199 = vadd.f32 %v72, %v198
  %v200 = vpop.f32.mrf.mxu0
  %201 = vmatprep.mubr.f32.mxu0 0.0
  %202 = vmatmul.mubr.f32.gmra.mxu0 %v82
  %v203 = vpop.f32.mrf.mxu0
  %v204 = vadd.f32 %v72, %v203
  %v205 = vpop.f32.mrf.mxu0
  %206 = vmatprep.mubr.f32.mxu0 0.0
  %207 = vmatmul.mubr.f32.gmra.mxu0 %v85
  %v208 = vpop.f32.mrf.mxu0
  %v209 = vadd.f32 %v72, %v208
  %v210 = vpop.f32.mrf.mxu0
  %211 = vmatprep.mubr.f32.mxu0 0.0
  %212 = vmatmul.mubr.f32.gmra.mxu0 %v88
  %v213 = vpop.f32.mrf.mxu0
  %v214 = vadd.f32 %v72, %v213
  %v215 = vpop.f32.mrf.mxu0
  %216 = vmatprep.mubr.f32.mxu0 0.0
  %217 = vmatmul.mubr.f32.gmra.mxu0 %v91
  %v218 = vpop.f32.mrf.mxu0
  %v219 = vadd.f32 %v72, %v218
  %v220 = vpop.f32.mrf.mxu0
  %221 = vmatprep.mubr.f32.mxu0 0.0
  %222 = vmatmul.mubr.f32.gmra.mxu0 %v94
  %v223 = vpop.f32.mrf.mxu0
  %v224 = vadd.f32 %v72, %v223
  %v225 = vpop.f32.mrf.mxu0
  %226 = vmatprep.mubr.f32.mxu0 0.0
  %227 = vmatmul.mubr.f32.gmra.mxu0 %v97
  %v228 = vpop.f32.mrf.mxu0
  %v229 = vadd.f32 %v72, %v228
  %v230 = vpop.f32.mrf.mxu0
  %231 = vmatprep.mubr.f32.mxu0 0.0
  %232 = vmatmul.mubr.f32.gmra.mxu0 %v100
  %v233 = vpop.f32.mrf.mxu0
  %v234 = vadd.f32 %v72, %v233
  %v235 = vpop.f32.mrf.mxu0
  %236 = vmatprep.mubr.f32.mxu0 0.0
  %237 = vmatmul.mubr.f32.gmra.mxu0 %v103
  %v238 = vpop.f32.mrf.mxu0
  %v239 = vadd.f32 %v72, %v238
  %v240 = vpop.f32.mrf.mxu0
  %241 = vmatprep.mubr.f32.mxu0 0.0
  %242 = vmatmul.mubr.f32.gmra.mxu0 %v106
  %v243 = vpop.f32.mrf.mxu0
  %v244 = vadd.f32 %v72, %v243
  %v245 = vpop.f32.mrf.mxu0
  %246 = vmatprep.mubr.f32.mxu0 0.0
  %247 = vmatmul.mubr.f32.gmra.mxu0 %v109
  %v248 = vpop.f32.mrf.mxu0
  %v249 = vadd.f32 %v72, %v248
  %v250 = vpop.f32.mrf.mxu0
  %251 = vmatprep.mubr.f32.mxu0 0.0
  %252 = vmatmul.mubr.f32.gmra.mxu0 %v112
  %v253 = vpop.f32.mrf.mxu0
  %v254 = vadd.f32 %v72, %v253
  %v255 = vpop.f32.mrf.mxu0
  %256 = vmatprep.mubr.f32.mxu0 0.0
  %257 = vmatmul.mubr.f32.gmra.mxu0 %v115
  %v258 = vpop.f32.mrf.mxu0
  %v259 = vadd.f32 %v72, %v258
  %v260 = vpop.f32.mrf.mxu0
  %261 = vmatprep.mubr.f32.mxu0 0.0
  %262 = vmatmul.mubr.f32.gmra.mxu0 %v118
  %v263 = vpop.f32.mrf.mxu0
  %v264 = vadd.f32 %v72, %v263
  %v265 = vpop.f32.mrf.mxu0
  %266 = vmatprep.mubr.f32.mxu0 0.0
  %267 = vmatmul.mubr.f32.gmra.mxu0 %v121
  %v268 = vpop.f32.mrf.mxu0
  %v269 = vadd.f32 %v72, %v268
  %v270 = vpop.f32.mrf.mxu0
  %271 = vdwg.mxu0
  %v272 = vmax.f32 %v194, 0.0
  %v273 = vmax.f32 %v199, 0.0
  %v274 = vmax.f32 %v204, 0.0
  %v275 = vmax.f32 %v209, 0.0
  %v276 = vmax.f32 %v214, 0.0
  %v277 = vmax.f32 %v219, 0.0
  %v278 = vmax.f32 %v224, 0.0
  %v279 = vmax.f32 %v229, 0.0
  %v280 = vmax.f32 %v234, 0.0
  %v281 = vmax.f32 %v239, 0.0
  %v282 = vmax.f32 %v244, 0.0
  %v283 = vmax.f32 %v249, 0.0
  %v284 = vmax.f32 %v254, 0.0
  %v285 = vmax.f32 %v259, 0.0
  %v286 = vmax.f32 %v264, 0.0
  %v287 = vmax.f32 %v269, 0.0
  %v288 = vld [vmem:[%s3] sm:$0xff]
  %v289 = vld [vmem:[%s3 + $0x8] sm:$0x3]
  %v290 = vld [vmem:[%s4] sm:$0x1]
  %v292 = vlaneseq
  %v293 = vshrl.u32 %v292, 7
  %v294 = vsub.s32 0, %v293
  %v295 = vrot.slane %v290, %v294
  %vm297 = vcmask 80896
  %v299 = vsel %vm297, %v272, 0
  %v302 = vsel %vm297, %v273, 0
  %v305 = vsel %vm297, %v274, 0
  %v308 = vsel %vm297, %v275, 0
  %v311 = vsel %vm297, %v276, 0
  %v314 = vsel %vm297, %v277, 0
  %v317 = vsel %vm297, %v278, 0
  %v320 = vsel %vm297, %v279, 0
  %v323 = vsel %vm297, %v280, 0
  %v326 = vsel %vm297, %v281, 0
  %v329 = vsel %vm297, %v282, 0
  %v332 = vsel %vm297, %v283, 0
  %v335 = vsel %vm297, %v284, 0
  %v338 = vsel %vm297, %v285, 0
  %v341 = vsel %vm297, %v286, 0
  %v344 = vsel %vm297, %v287, 0
  %vm346 = vcmask 1041408
  %v348 = vsel %vm346, %v289, 0
  %350 = vmatprep.subr.mxu0 0.0
  %351 = vmatpush1.msra.mxu0 0.0
  %352 = vmatprep.subr.mxu0 0.0
  %353 = vmatpush1.msra.mxu0 0.0
  %354 = vmatprep.subr.mxu0 0.0
  %355 = vmatpush1.msra.mxu0 0.0
  %356 = vmatprep.subr.mxu0 0.0
  %357 = vmatpush1.msra.mxu0 0.0
  %358 = vmatprep.subr.mxu0 0.0
  %359 = vmatpush1.msra.mxu0 0.0
  %360 = vmatprep.subr.mxu0 0.0
  %361 = vmatpush1.msra.mxu0 0.0
  %362 = vmatprep.subr.mxu0 0.0
  %363 = vmatpush1.msra.mxu0 0.0
  %364 = vmatprep.subr.mxu0 0.0
  %365 = vmatpush1.msra.mxu0 0.0
  %366 = vmatprep.subr.mxu0 0.0
  %367 = vmatpush1.msra.mxu0 0.0
  %368 = vmatprep.subr.mxu0 0.0
  %369 = vmatpush1.msra.mxu0 0.0
  %370 = vmatprep.subr.mxu0 0.0
  %371 = vmatpush1.msra.mxu0 0.0
  %372 = vmatprep.subr.mxu0 0.0
  %373 = vmatpush1.msra.mxu0 0.0
  %374 = vmatprep.subr.mxu0 0.0
  %375 = vmatpush1.msra.mxu0 0.0
  %376 = vmatprep.subr.mxu0 0.0
  %377 = vmatpush1.msra.mxu0 0.0
  %378 = vmatprep.subr.mxu0 0.0
  %379 = vmatpush1.msra.mxu0 %v348
  %380 = vmatprep.subr.mxu0 0.0
  %381 = vmatpush1.msra.mxu0 %v288
  %382 = vmatprep.subr.mxu0 0.0
  %383 = vmatpush2.msra.mxu0 0.0
  %384 = vmatprep.subr.mxu0 0.0
  %385 = vmatpush2.msra.mxu0 0.0
  %386 = vmatprep.subr.mxu0 0.0
  %387 = vmatpush2.msra.mxu0 0.0
  %388 = vmatprep.subr.mxu0 0.0
  %389 = vmatpush2.msra.mxu0 0.0
  %390 = vmatprep.subr.mxu0 0.0
  %391 = vmatpush2.msra.mxu0 0.0
  %392 = vmatprep.subr.mxu0 0.0
  %393 = vmatpush2.msra.mxu0 0.0
  %394 = vmatprep.subr.mxu0 0.0
  %395 = vmatpush2.msra.mxu0 0.0
  %396 = vmatprep.subr.mxu0 0.0
  %397 = vmatpush2.msra.mxu0 0.0
  %398 = vmatprep.subr.mxu0 0.0
  %399 = vmatpush2.msra.mxu0 0.0
  %400 = vmatprep.subr.mxu0 0.0
  %401 = vmatpush2.msra.mxu0 0.0
  %402 = vmatprep.subr.mxu0 0.0
  %403 = vmatpush2.msra.mxu0 0.0
  %404 = vmatprep.subr.mxu0 0.0
  %405 = vmatpush2.msra.mxu0 0.0
  %406 = vmatprep.subr.mxu0 0.0
  %407 = vmatpush2.msra.mxu0 0.0
  %408 = vmatprep.subr.mxu0 0.0
  %409 = vmatpush2.msra.mxu0 0.0
  %410 = vmatprep.subr.mxu0 0.0
  %411 = vmatpush2.msra.mxu0 0.0
  %412 = vmatprep.subr.mxu0 0.0
  %413 = vmatpush2.msra.mxu0 0.0
  %414 = vmatprep.mubr.f32.mxu0 0.0
  %415 = vmatmul.mubr.f32.gmra.mxu0 %v299
  %v416 = vpop.f32.mrf.mxu0
  %v417 = vadd.f32 %v295, %v416
  %v418 = vpop.f32.mrf.mxu0
  %419 = vmatprep.mubr.f32.mxu0 0.0
  %420 = vmatmul.mubr.f32.gmra.mxu0 %v302
  %v421 = vpop.f32.mrf.mxu0
  %v422 = vadd.f32 %v295, %v421
  %v423 = vpop.f32.mrf.mxu0
  %424 = vmatprep.mubr.f32.mxu0 0.0
  %425 = vmatmul.mubr.f32.gmra.mxu0 %v305
  %v426 = vpop.f32.mrf.mxu0
  %v427 = vadd.f32 %v295, %v426
  %v428 = vpop.f32.mrf.mxu0
  %429 = vmatprep.mubr.f32.mxu0 0.0
  %430 = vmatmul.mubr.f32.gmra.mxu0 %v308
  %v431 = vpop.f32.mrf.mxu0
  %v432 = vadd.f32 %v295, %v431
  %v433 = vpop.f32.mrf.mxu0
  %434 = vmatprep.mubr.f32.mxu0 0.0
  %435 = vmatmul.mubr.f32.gmra.mxu0 %v311
  %v436 = vpop.f32.mrf.mxu0
  %v437 = vadd.f32 %v295, %v436
  %v438 = vpop.f32.mrf.mxu0
  %439 = vmatprep.mubr.f32.mxu0 0.0
  %440 = vmatmul.mubr.f32.gmra.mxu0 %v314
  %v441 = vpop.f32.mrf.mxu0
  %v442 = vadd.f32 %v295, %v441
  %v443 = vpop.f32.mrf.mxu0
  %444 = vmatprep.mubr.f32.mxu0 0.0
  %445 = vmatmul.mubr.f32.gmra.mxu0 %v317
  %v446 = vpop.f32.mrf.mxu0
  %v447 = vadd.f32 %v295, %v446
  %v448 = vpop.f32.mrf.mxu0
  %449 = vmatprep.mubr.f32.mxu0 0.0
  %450 = vmatmul.mubr.f32.gmra.mxu0 %v320
  %v451 = vpop.f32.mrf.mxu0
  %v452 = vadd.f32 %v295, %v451
  %v453 = vpop.f32.mrf.mxu0
  %454 = vmatprep.mubr.f32.mxu0 0.0
  %455 = vmatmul.mubr.f32.gmra.mxu0 %v323
  %v456 = vpop.f32.mrf.mxu0
  %v457 = vadd.f32 %v295, %v456
  %v458 = vpop.f32.mrf.mxu0
  %459 = vmatprep.mubr.f32.mxu0 0.0
  %460 = vmatmul.mubr.f32.gmra.mxu0 %v326
  %v461 = vpop.f32.mrf.mxu0
  %v462 = vadd.f32 %v295, %v461
  %v463 = vpop.f32.mrf.mxu0
  %464 = vmatprep.mubr.f32.mxu0 0.0
  %465 = vmatmul.mubr.f32.gmra.mxu0 %v329
  %v466 = vpop.f32.mrf.mxu0
  %v467 = vadd.f32 %v295, %v466
  %v468 = vpop.f32.mrf.mxu0
  %469 = vmatprep.mubr.f32.mxu0 0.0
  %470 = vmatmul.mubr.f32.gmra.mxu0 %v332
  %v471 = vpop.f32.mrf.mxu0
  %v472 = vadd.f32 %v295, %v471
  %v473 = vpop.f32.mrf.mxu0
  %474 = vmatprep.mubr.f32.mxu0 0.0
  %475 = vmatmul.mubr.f32.gmra.mxu0 %v335
  %v476 = vpop.f32.mrf.mxu0
  %v477 = vadd.f32 %v295, %v476
  %v478 = vpop.f32.mrf.mxu0
  %479 = vmatprep.mubr.f32.mxu0 0.0
  %480 = vmatmul.mubr.f32.gmra.mxu0 %v338
  %v481 = vpop.f32.mrf.mxu0
  %v482 = vadd.f32 %v295, %v481
  %v483 = vpop.f32.mrf.mxu0
  %484 = vmatprep.mubr.f32.mxu0 0.0
  %485 = vmatmul.mubr.f32.gmra.mxu0 %v341
  %v486 = vpop.f32.mrf.mxu0
  %v487 = vadd.f32 %v295, %v486
  %v488 = vpop.f32.mrf.mxu0
  %489 = vmatprep.mubr.f32.mxu0 0.0
  %490 = vmatmul.mubr.f32.gmra.mxu0 %v344
  %v491 = vpop.f32.mrf.mxu0
  %v492 = vadd.f32 %v295, %v491
  %v493 = vpop.f32.mrf.mxu0
  %494 = vdwg.mxu0
  %v495 = vmax.f32 %v417, 0.0
  %v496 = vmax.f32 %v422, 0.0
  %v497 = vmax.f32 %v427, 0.0
  %v498 = vmax.f32 %v432, 0.0
  %v499 = vmax.f32 %v437, 0.0
  %v500 = vmax.f32 %v442, 0.0
  %v501 = vmax.f32 %v447, 0.0
  %v502 = vmax.f32 %v452, 0.0
  %v503 = vmax.f32 %v457, 0.0
  %v504 = vmax.f32 %v462, 0.0
  %v505 = vmax.f32 %v467, 0.0
  %v506 = vmax.f32 %v472, 0.0
  %v507 = vmax.f32 %v477, 0.0
  %v508 = vmax.f32 %v482, 0.0
  %v509 = vmax.f32 %v487, 0.0
  %v510 = vmax.f32 %v492, 0.0
  %v511 = vld [vmem:[%s5] sm:$0xff]
  %v512 = vld [vmem:[%s5 + $0x8] sm:$0x3]
  %v513 = vld [vmem:[%s6] sm:$0x1]
  %v515 = vlaneseq
  %v516 = vshrl.u32 %v515, 7
  %v517 = vsub.s32 0, %v516
  %v518 = vrot.slane %v513, %v517
  %v521 = vsel %vm297, %v495, 0
  %v524 = vsel %vm297, %v496, 0
  %v527 = vsel %vm297, %v497, 0
  %v530 = vsel %vm297, %v498, 0
  %v533 = vsel %vm297, %v499, 0
  %v536 = vsel %vm297, %v500, 0
  %v539 = vsel %vm297, %v501, 0
  %v542 = vsel %vm297, %v502, 0
  %v545 = vsel %vm297, %v503, 0
  %v548 = vsel %vm297, %v504, 0
  %v551 = vsel %vm297, %v505, 0
  %v554 = vsel %vm297, %v506, 0
  %v557 = vsel %vm297, %v507, 0
  %v560 = vsel %vm297, %v508, 0
  %v563 = vsel %vm297, %v509, 0
  %v566 = vsel %vm297, %v510, 0
  %v569 = vsel %vm346, %v512, 0
  %571 = vmatprep.subr.mxu0 0.0
  %572 = vmatpush1.msra.mxu0 0.0
  %573 = vmatprep.subr.mxu0 0.0
  %574 = vmatpush1.msra.mxu0 0.0
  %575 = vmatprep.subr.mxu0 0.0
  %576 = vmatpush1.msra.mxu0 0.0
  %577 = vmatprep.subr.mxu0 0.0
  %578 = vmatpush1.msra.mxu0 0.0
  %579 = vmatprep.subr.mxu0 0.0
  %580 = vmatpush1.msra.mxu0 0.0
  %581 = vmatprep.subr.mxu0 0.0
  %582 = vmatpush1.msra.mxu0 0.0
  %583 = vmatprep.subr.mxu0 0.0
  %584 = vmatpush1.msra.mxu0 0.0
  %585 = vmatprep.subr.mxu0 0.0
  %586 = vmatpush1.msra.mxu0 0.0
  %587 = vmatprep.subr.mxu0 0.0
  %588 = vmatpush1.msra.mxu0 0.0
  %589 = vmatprep.subr.mxu0 0.0
  %590 = vmatpush1.msra.mxu0 0.0
  %591 = vmatprep.subr.mxu0 0.0
  %592 = vmatpush1.msra.mxu0 0.0
  %593 = vmatprep.subr.mxu0 0.0
  %594 = vmatpush1.msra.mxu0 0.0
  %595 = vmatprep.subr.mxu0 0.0
  %596 = vmatpush1.msra.mxu0 0.0
  %597 = vmatprep.subr.mxu0 0.0
  %598 = vmatpush1.msra.mxu0 0.0
  %599 = vmatprep.subr.mxu0 0.0
  %600 = vmatpush1.msra.mxu0 %v569
  %601 = vmatprep.subr.mxu0 0.0
  %602 = vmatpush1.msra.mxu0 %v511
  %603 = vmatprep.subr.mxu0 0.0
  %604 = vmatpush2.msra.mxu0 0.0
  %605 = vmatprep.subr.mxu0 0.0
  %606 = vmatpush2.msra.mxu0 0.0
  %607 = vmatprep.subr.mxu0 0.0
  %608 = vmatpush2.msra.mxu0 0.0
  %609 = vmatprep.subr.mxu0 0.0
  %610 = vmatpush2.msra.mxu0 0.0
  %611 = vmatprep.subr.mxu0 0.0
  %612 = vmatpush2.msra.mxu0 0.0
  %613 = vmatprep.subr.mxu0 0.0
  %614 = vmatpush2.msra.mxu0 0.0
  %615 = vmatprep.subr.mxu0 0.0
  %616 = vmatpush2.msra.mxu0 0.0
  %617 = vmatprep.subr.mxu0 0.0
  %618 = vmatpush2.msra.mxu0 0.0
  %619 = vmatprep.subr.mxu0 0.0
  %620 = vmatpush2.msra.mxu0 0.0
  %621 = vmatprep.subr.mxu0 0.0
  %622 = vmatpush2.msra.mxu0 0.0
  %623 = vmatprep.subr.mxu0 0.0
  %624 = vmatpush2.msra.mxu0 0.0
  %625 = vmatprep.subr.mxu0 0.0
  %626 = vmatpush2.msra.mxu0 0.0
  %627 = vmatprep.subr.mxu0 0.0
  %628 = vmatpush2.msra.mxu0 0.0
  %629 = vmatprep.subr.mxu0 0.0
  %630 = vmatpush2.msra.mxu0 0.0
  %631 = vmatprep.subr.mxu0 0.0
  %632 = vmatpush2.msra.mxu0 0.0
  %633 = vmatprep.subr.mxu0 0.0
  %634 = vmatpush2.msra.mxu0 0.0
  %635 = vmatprep.mubr.f32.mxu0 0.0
  %636 = vmatmul.mubr.f32.gmra.mxu0 %v521
  %v637 = vpop.f32.mrf.mxu0
  %v638 = vadd.f32 %v518, %v637
  %v639 = vpop.f32.mrf.mxu0
  %640 = vmatprep.mubr.f32.mxu0 0.0
  %641 = vmatmul.mubr.f32.gmra.mxu0 %v524
  %v642 = vpop.f32.mrf.mxu0
  %v643 = vadd.f32 %v518, %v642
  %v644 = vpop.f32.mrf.mxu0
  %645 = vmatprep.mubr.f32.mxu0 0.0
  %646 = vmatmul.mubr.f32.gmra.mxu0 %v527
  %v647 = vpop.f32.mrf.mxu0
  %v648 = vadd.f32 %v518, %v647
  %v649 = vpop.f32.mrf.mxu0
  %650 = vmatprep.mubr.f32.mxu0 0.0
  %651 = vmatmul.mubr.f32.gmra.mxu0 %v530
  %v652 = vpop.f32.mrf.mxu0
  %v653 = vadd.f32 %v518, %v652
  %v654 = vpop.f32.mrf.mxu0
  %655 = vmatprep.mubr.f32.mxu0 0.0
  %656 = vmatmul.mubr.f32.gmra.mxu0 %v533
  %v657 = vpop.f32.mrf.mxu0
  %v658 = vadd.f32 %v518, %v657
  %v659 = vpop.f32.mrf.mxu0
  %660 = vmatprep.mubr.f32.mxu0 0.0
  %661 = vmatmul.mubr.f32.gmra.mxu0 %v536
  %v662 = vpop.f32.mrf.mxu0
  %v663 = vadd.f32 %v518, %v662
  %v664 = vpop.f32.mrf.mxu0
  %665 = vmatprep.mubr.f32.mxu0 0.0
  %666 = vmatmul.mubr.f32.gmra.mxu0 %v539
  %v667 = vpop.f32.mrf.mxu0
  %v668 = vadd.f32 %v518, %v667
  %v669 = vpop.f32.mrf.mxu0
  %670 = vmatprep.mubr.f32.mxu0 0.0
  %671 = vmatmul.mubr.f32.gmra.mxu0 %v542
  %v672 = vpop.f32.mrf.mxu0
  %v673 = vadd.f32 %v518, %v672
  %v674 = vpop.f32.mrf.mxu0
  %675 = vmatprep.mubr.f32.mxu0 0.0
  %676 = vmatmul.mubr.f32.gmra.mxu0 %v545
  %v677 = vpop.f32.mrf.mxu0
  %v678 = vadd.f32 %v518, %v677
  %v679 = vpop.f32.mrf.mxu0
  %680 = vmatprep.mubr.f32.mxu0 0.0
  %681 = vmatmul.mubr.f32.gmra.mxu0 %v548
  %v682 = vpop.f32.mrf.mxu0
  %v683 = vadd.f32 %v518, %v682
  %v684 = vpop.f32.mrf.mxu0
  %685 = vmatprep.mubr.f32.mxu0 0.0
  %686 = vmatmul.mubr.f32.gmra.mxu0 %v551
  %v687 = vpop.f32.mrf.mxu0
  %v688 = vadd.f32 %v518, %v687
  %v689 = vpop.f32.mrf.mxu0
  %690 = vmatprep.mubr.f32.mxu0 0.0
  %691 = vmatmul.mubr.f32.gmra.mxu0 %v554
  %v692 = vpop.f32.mrf.mxu0
  %v693 = vadd.f32 %v518, %v692
  %v694 = vpop.f32.mrf.mxu0
  %695 = vmatprep.mubr.f32.mxu0 0.0
  %696 = vmatmul.mubr.f32.gmra.mxu0 %v557
  %v697 = vpop.f32.mrf.mxu0
  %v698 = vadd.f32 %v518, %v697
  %v699 = vpop.f32.mrf.mxu0
  %700 = vmatprep.mubr.f32.mxu0 0.0
  %701 = vmatmul.mubr.f32.gmra.mxu0 %v560
  %v702 = vpop.f32.mrf.mxu0
  %v703 = vadd.f32 %v518, %v702
  %v704 = vpop.f32.mrf.mxu0
  %705 = vmatprep.mubr.f32.mxu0 0.0
  %706 = vmatmul.mubr.f32.gmra.mxu0 %v563
  %v707 = vpop.f32.mrf.mxu0
  %v708 = vadd.f32 %v518, %v707
  %v709 = vpop.f32.mrf.mxu0
  %710 = vmatprep.mubr.f32.mxu0 0.0
  %711 = vmatmul.mubr.f32.gmra.mxu0 %v566
  %v712 = vpop.f32.mrf.mxu0
  %v713 = vadd.f32 %v518, %v712
  %v714 = vpop.f32.mrf.mxu0
  %715 = vdwg.mxu0
  %v716 = vmax.f32 %v638, 0.0
  %v717 = vmax.f32 %v643, 0.0
  %v718 = vmax.f32 %v648, 0.0
  %v719 = vmax.f32 %v653, 0.0
  %v720 = vmax.f32 %v658, 0.0
  %v721 = vmax.f32 %v663, 0.0
  %v722 = vmax.f32 %v668, 0.0
  %v723 = vmax.f32 %v673, 0.0
  %v724 = vmax.f32 %v678, 0.0
  %v725 = vmax.f32 %v683, 0.0
  %v726 = vmax.f32 %v688, 0.0
  %v727 = vmax.f32 %v693, 0.0
  %v728 = vmax.f32 %v698, 0.0
  %v729 = vmax.f32 %v703, 0.0
  %v730 = vmax.f32 %v708, 0.0
  %v731 = vmax.f32 %v713, 0.0
  %v732 = vld [vmem:[%s7] sm:$0xff]
  %v733 = vld [vmem:[%s7 + $0x8] sm:$0x3]
  %v734 = vld [vmem:[%s8] sm:$0x1]
  %v736 = vlaneseq
  %v737 = vshrl.u32 %v736, 7
  %v738 = vsub.s32 0, %v737
  %v739 = vrot.slane %v734, %v738
  %v742 = vsel %vm297, %v716, 0
  %v745 = vsel %vm297, %v717, 0
  %v748 = vsel %vm297, %v718, 0
  %v751 = vsel %vm297, %v719, 0
  %v754 = vsel %vm297, %v720, 0
  %v757 = vsel %vm297, %v721, 0
  %v760 = vsel %vm297, %v722, 0
  %v763 = vsel %vm297, %v723, 0
  %v766 = vsel %vm297, %v724, 0
  %v769 = vsel %vm297, %v725, 0
  %v772 = vsel %vm297, %v726, 0
  %v775 = vsel %vm297, %v727, 0
  %v778 = vsel %vm297, %v728, 0
  %v781 = vsel %vm297, %v729, 0
  %v784 = vsel %vm297, %v730, 0
  %v787 = vsel %vm297, %v731, 0
  %v790 = vsel %vm346, %v733, 0
  %792 = vmatprep.subr.mxu0 0.0
  %793 = vmatpush1.msra.mxu0 0.0
  %794 = vmatprep.subr.mxu0 0.0
  %795 = vmatpush1.msra.mxu0 0.0
  %796 = vmatprep.subr.mxu0 0.0
  %797 = vmatpush1.msra.mxu0 0.0
  %798 = vmatprep.subr.mxu0 0.0
  %799 = vmatpush1.msra.mxu0 0.0
  %800 = vmatprep.subr.mxu0 0.0
  %801 = vmatpush1.msra.mxu0 0.0
  %802 = vmatprep.subr.mxu0 0.0
  %803 = vmatpush1.msra.mxu0 0.0
  %804 = vmatprep.subr.mxu0 0.0
  %805 = vmatpush1.msra.mxu0 0.0
  %806 = vmatprep.subr.mxu0 0.0
  %807 = vmatpush1.msra.mxu0 0.0
  %808 = vmatprep.subr.mxu0 0.0
  %809 = vmatpush1.msra.mxu0 0.0
  %810 = vmatprep.subr.mxu0 0.0
  %811 = vmatpush1.msra.mxu0 0.0
  %812 = vmatprep.subr.mxu0 0.0
  %813 = vmatpush1.msra.mxu0 0.0
  %814 = vmatprep.subr.mxu0 0.0
  %815 = vmatpush1.msra.mxu0 0.0
  %816 = vmatprep.subr.mxu0 0.0
  %817 = vmatpush1.msra.mxu0 0.0
  %818 = vmatprep.subr.mxu0 0.0
  %819 = vmatpush1.msra.mxu0 0.0
  %820 = vmatprep.subr.mxu0 0.0
  %821 = vmatpush1.msra.mxu0 %v790
  %822 = vmatprep.subr.mxu0 0.0
  %823 = vmatpush1.msra.mxu0 %v732
  %824 = vmatprep.subr.mxu0 0.0
  %825 = vmatpush2.msra.mxu0 0.0
  %826 = vmatprep.subr.mxu0 0.0
  %827 = vmatpush2.msra.mxu0 0.0
  %828 = vmatprep.subr.mxu0 0.0
  %829 = vmatpush2.msra.mxu0 0.0
  %830 = vmatprep.subr.mxu0 0.0
  %831 = vmatpush2.msra.mxu0 0.0
  %832 = vmatprep.subr.mxu0 0.0
  %833 = vmatpush2.msra.mxu0 0.0
  %834 = vmatprep.subr.mxu0 0.0
  %835 = vmatpush2.msra.mxu0 0.0
  %836 = vmatprep.subr.mxu0 0.0
  %837 = vmatpush2.msra.mxu0 0.0
  %838 = vmatprep.subr.mxu0 0.0
  %839 = vmatpush2.msra.mxu0 0.0
  %840 = vmatprep.subr.mxu0 0.0
  %841 = vmatpush2.msra.mxu0 0.0
  %842 = vmatprep.subr.mxu0 0.0
  %843 = vmatpush2.msra.mxu0 0.0
  %844 = vmatprep.subr.mxu0 0.0
  %845 = vmatpush2.msra.mxu0 0.0
  %846 = vmatprep.subr.mxu0 0.0
  %847 = vmatpush2.msra.mxu0 0.0
  %848 = vmatprep.subr.mxu0 0.0
  %849 = vmatpush2.msra.mxu0 0.0
  %850 = vmatprep.subr.mxu0 0.0
  %851 = vmatpush2.msra.mxu0 0.0
  %852 = vmatprep.subr.mxu0 0.0
  %853 = vmatpush2.msra.mxu0 0.0
  %854 = vmatprep.subr.mxu0 0.0
  %855 = vmatpush2.msra.mxu0 0.0
  %856 = vmatprep.mubr.f32.mxu0 0.0
  %857 = vmatmul.mubr.f32.gmra.mxu0 %v742
  %v858 = vpop.f32.mrf.mxu0
  %v859 = vadd.f32 %v739, %v858
  %v860 = vpop.f32.mrf.mxu0
  %861 = vmatprep.mubr.f32.mxu0 0.0
  %862 = vmatmul.mubr.f32.gmra.mxu0 %v745
  %v863 = vpop.f32.mrf.mxu0
  %v864 = vadd.f32 %v739, %v863
  %v865 = vpop.f32.mrf.mxu0
  %866 = vmatprep.mubr.f32.mxu0 0.0
  %867 = vmatmul.mubr.f32.gmra.mxu0 %v748
  %v868 = vpop.f32.mrf.mxu0
  %v869 = vadd.f32 %v739, %v868
  %v870 = vpop.f32.mrf.mxu0
  %871 = vmatprep.mubr.f32.mxu0 0.0
  %872 = vmatmul.mubr.f32.gmra.mxu0 %v751
  %v873 = vpop.f32.mrf.mxu0
  %v874 = vadd.f32 %v739, %v873
  %v875 = vpop.f32.mrf.mxu0
  %876 = vmatprep.mubr.f32.mxu0 0.0
  %877 = vmatmul.mubr.f32.gmra.mxu0 %v754
  %v878 = vpop.f32.mrf.mxu0
  %v879 = vadd.f32 %v739, %v878
  %v880 = vpop.f32.mrf.mxu0
  %881 = vmatprep.mubr.f32.mxu0 0.0
  %882 = vmatmul.mubr.f32.gmra.mxu0 %v757
  %v883 = vpop.f32.mrf.mxu0
  %v884 = vadd.f32 %v739, %v883
  %v885 = vpop.f32.mrf.mxu0
  %886 = vmatprep.mubr.f32.mxu0 0.0
  %887 = vmatmul.mubr.f32.gmra.mxu0 %v760
  %v888 = vpop.f32.mrf.mxu0
  %v889 = vadd.f32 %v739, %v888
  %v890 = vpop.f32.mrf.mxu0
  %891 = vmatprep.mubr.f32.mxu0 0.0
  %892 = vmatmul.mubr.f32.gmra.mxu0 %v763
  %v893 = vpop.f32.mrf.mxu0
  %v894 = vadd.f32 %v739, %v893
  %v895 = vpop.f32.mrf.mxu0
  %896 = vmatprep.mubr.f32.mxu0 0.0
  %897 = vmatmul.mubr.f32.gmra.mxu0 %v766
  %v898 = vpop.f32.mrf.mxu0
  %v899 = vadd.f32 %v739, %v898
  %v900 = vpop.f32.mrf.mxu0
  %901 = vmatprep.mubr.f32.mxu0 0.0
  %902 = vmatmul.mubr.f32.gmra.mxu0 %v769
  %v903 = vpop.f32.mrf.mxu0
  %v904 = vadd.f32 %v739, %v903
  %v905 = vpop.f32.mrf.mxu0
  %906 = vmatprep.mubr.f32.mxu0 0.0
  %907 = vmatmul.mubr.f32.gmra.mxu0 %v772
  %v908 = vpop.f32.mrf.mxu0
  %v909 = vadd.f32 %v739, %v908
  %v910 = vpop.f32.mrf.mxu0
  %911 = vmatprep.mubr.f32.mxu0 0.0
  %912 = vmatmul.mubr.f32.gmra.mxu0 %v775
  %v913 = vpop.f32.mrf.mxu0
  %v914 = vadd.f32 %v739, %v913
  %v915 = vpop.f32.mrf.mxu0
  %916 = vmatprep.mubr.f32.mxu0 0.0
  %917 = vmatmul.mubr.f32.gmra.mxu0 %v778
  %v918 = vpop.f32.mrf.mxu0
  %v919 = vadd.f32 %v739, %v918
  %v920 = vpop.f32.mrf.mxu0
  %921 = vmatprep.mubr.f32.mxu0 0.0
  %922 = vmatmul.mubr.f32.gmra.mxu0 %v781
  %v923 = vpop.f32.mrf.mxu0
  %v924 = vadd.f32 %v739, %v923
  %v925 = vpop.f32.mrf.mxu0
  %926 = vmatprep.mubr.f32.mxu0 0.0
  %927 = vmatmul.mubr.f32.gmra.mxu0 %v784
  %v928 = vpop.f32.mrf.mxu0
  %v929 = vadd.f32 %v739, %v928
  %v930 = vpop.f32.mrf.mxu0
  %931 = vmatprep.mubr.f32.mxu0 0.0
  %932 = vmatmul.mubr.f32.gmra.mxu0 %v787
  %v933 = vpop.f32.mrf.mxu0
  %v934 = vadd.f32 %v739, %v933
  %v935 = vpop.f32.mrf.mxu0
  %936 = vdwg.mxu0
  %v937 = vmax.f32 %v859, 0.0
  %v938 = vmax.f32 %v864, 0.0
  %v939 = vmax.f32 %v869, 0.0
  %v940 = vmax.f32 %v874, 0.0
  %v941 = vmax.f32 %v879, 0.0
  %v942 = vmax.f32 %v884, 0.0
  %v943 = vmax.f32 %v889, 0.0
  %v944 = vmax.f32 %v894, 0.0
  %v945 = vmax.f32 %v899, 0.0
  %v946 = vmax.f32 %v904, 0.0
  %v947 = vmax.f32 %v909, 0.0
  %v948 = vmax.f32 %v914, 0.0
  %v949 = vmax.f32 %v919, 0.0
  %v950 = vmax.f32 %v924, 0.0
  %v951 = vmax.f32 %v929, 0.0
  %v952 = vmax.f32 %v934, 0.0
  %v953 = vld [vmem:[%s9] sm:$0xff]
  %v954 = vld [vmem:[%s9 + $0x8] sm:$0x3]
  %v955 = vld [vmem:[%s10] sm:$0x1]
  %v957 = vlaneseq
  %v958 = vshrl.u32 %v957, 7
  %v959 = vsub.s32 0, %v958
  %v960 = vrot.slane %v955, %v959
  %v963 = vsel %vm297, %v937, 0
  %v966 = vsel %vm297, %v938, 0
  %v969 = vsel %vm297, %v939, 0
  %v972 = vsel %vm297, %v940, 0
  %v975 = vsel %vm297, %v941, 0
  %v978 = vsel %vm297, %v942, 0
  %v981 = vsel %vm297, %v943, 0
  %v984 = vsel %vm297, %v944, 0
  %v987 = vsel %vm297, %v945, 0
  %v990 = vsel %vm297, %v946, 0
  %v993 = vsel %vm297, %v947, 0
  %v996 = vsel %vm297, %v948, 0
  %v999 = vsel %vm297, %v949, 0
  %v1002 = vsel %vm297, %v950, 0
  %v1005 = vsel %vm297, %v951, 0
  %v1008 = vsel %vm297, %v952, 0
  %v1011 = vsel %vm346, %v954, 0
  %1013 = vmatprep.subr.mxu0 0.0
  %1014 = vmatpush1.msra.mxu0 0.0
  %1015 = vmatprep.subr.mxu0 0.0
  %1016 = vmatpush1.msra.mxu0 0.0
  %1017 = vmatprep.subr.mxu0 0.0
  %1018 = vmatpush1.msra.mxu0 0.0
  %1019 = vmatprep.subr.mxu0 0.0
  %1020 = vmatpush1.msra.mxu0 0.0
  %1021 = vmatprep.subr.mxu0 0.0
  %1022 = vmatpush1.msra.mxu0 0.0
  %1023 = vmatprep.subr.mxu0 0.0
  %1024 = vmatpush1.msra.mxu0 0.0
  %1025 = vmatprep.subr.mxu0 0.0
  %1026 = vmatpush1.msra.mxu0 0.0
  %1027 = vmatprep.subr.mxu0 0.0
  %1028 = vmatpush1.msra.mxu0 0.0
  %1029 = vmatprep.subr.mxu0 0.0
  %1030 = vmatpush1.msra.mxu0 0.0
  %1031 = vmatprep.subr.mxu0 0.0
  %1032 = vmatpush1.msra.mxu0 0.0
  %1033 = vmatprep.subr.mxu0 0.0
  %1034 = vmatpush1.msra.mxu0 0.0
  %1035 = vmatprep.subr.mxu0 0.0
  %1036 = vmatpush1.msra.mxu0 0.0
  %1037 = vmatprep.subr.mxu0 0.0
  %1038 = vmatpush1.msra.mxu0 0.0
  %1039 = vmatprep.subr.mxu0 0.0
  %1040 = vmatpush1.msra.mxu0 0.0
  %1041 = vmatprep.subr.mxu0 0.0
  %1042 = vmatpush1.msra.mxu0 %v1011
  %1043 = vmatprep.subr.mxu0 0.0
  %1044 = vmatpush1.msra.mxu0 %v953
  %1045 = vmatprep.subr.mxu0 0.0
  %1046 = vmatpush2.msra.mxu0 0.0
  %1047 = vmatprep.subr.mxu0 0.0
  %1048 = vmatpush2.msra.mxu0 0.0
  %1049 = vmatprep.subr.mxu0 0.0
  %1050 = vmatpush2.msra.mxu0 0.0
  %1051 = vmatprep.subr.mxu0 0.0
  %1052 = vmatpush2.msra.mxu0 0.0
  %1053 = vmatprep.subr.mxu0 0.0
  %1054 = vmatpush2.msra.mxu0 0.0
  %1055 = vmatprep.subr.mxu0 0.0
  %1056 = vmatpush2.msra.mxu0 0.0
  %1057 = vmatprep.subr.mxu0 0.0
  %1058 = vmatpush2.msra.mxu0 0.0
  %1059 = vmatprep.subr.mxu0 0.0
  %1060 = vmatpush2.msra.mxu0 0.0
  %1061 = vmatprep.subr.mxu0 0.0
  %1062 = vmatpush2.msra.mxu0 0.0
  %1063 = vmatprep.subr.mxu0 0.0
  %1064 = vmatpush2.msra.mxu0 0.0
  %1065 = vmatprep.subr.mxu0 0.0
  %1066 = vmatpush2.msra.mxu0 0.0
  %1067 = vmatprep.subr.mxu0 0.0
  %1068 = vmatpush2.msra.mxu0 0.0
  %1069 = vmatprep.subr.mxu0 0.0
  %1070 = vmatpush2.msra.mxu0 0.0
  %1071 = vmatprep.subr.mxu0 0.0
  %1072 = vmatpush2.msra.mxu0 0.0
  %1073 = vmatprep.subr.mxu0 0.0
  %1074 = vmatpush2.msra.mxu0 0.0
  %1075 = vmatprep.subr.mxu0 0.0
  %1076 = vmatpush2.msra.mxu0 0.0
  %1077 = vmatprep.mubr.f32.mxu0 0.0
  %1078 = vmatmul.mubr.f32.gmra.mxu0 %v963
  %v1079 = vpop.f32.mrf.mxu0
  %v1080 = vadd.f32 %v960, %v1079
  %v1081 = vpop.f32.mrf.mxu0
  %1082 = vmatprep.mubr.f32.mxu0 0.0
  %1083 = vmatmul.mubr.f32.gmra.mxu0 %v966
  %v1084 = vpop.f32.mrf.mxu0
  %v1085 = vadd.f32 %v960, %v1084
  %v1086 = vpop.f32.mrf.mxu0
  %1087 = vmatprep.mubr.f32.mxu0 0.0
  %1088 = vmatmul.mubr.f32.gmra.mxu0 %v969
  %v1089 = vpop.f32.mrf.mxu0
  %v1090 = vadd.f32 %v960, %v1089
  %v1091 = vpop.f32.mrf.mxu0
  %1092 = vmatprep.mubr.f32.mxu0 0.0
  %1093 = vmatmul.mubr.f32.gmra.mxu0 %v972
  %v1094 = vpop.f32.mrf.mxu0
  %v1095 = vadd.f32 %v960, %v1094
  %v1096 = vpop.f32.mrf.mxu0
  %1097 = vmatprep.mubr.f32.mxu0 0.0
  %1098 = vmatmul.mubr.f32.gmra.mxu0 %v975
  %v1099 = vpop.f32.mrf.mxu0
  %v1100 = vadd.f32 %v960, %v1099
  %v1101 = vpop.f32.mrf.mxu0
  %1102 = vmatprep.mubr.f32.mxu0 0.0
  %1103 = vmatmul.mubr.f32.gmra.mxu0 %v978
  %v1104 = vpop.f32.mrf.mxu0
  %v1105 = vadd.f32 %v960, %v1104
  %v1106 = vpop.f32.mrf.mxu0
  %1107 = vmatprep.mubr.f32.mxu0 0.0
  %1108 = vmatmul.mubr.f32.gmra.mxu0 %v981
  %v1109 = vpop.f32.mrf.mxu0
  %v1110 = vadd.f32 %v960, %v1109
  %v1111 = vpop.f32.mrf.mxu0
  %1112 = vmatprep.mubr.f32.mxu0 0.0
  %1113 = vmatmul.mubr.f32.gmra.mxu0 %v984
  %v1114 = vpop.f32.mrf.mxu0
  %v1115 = vadd.f32 %v960, %v1114
  %v1116 = vpop.f32.mrf.mxu0
  %1117 = vmatprep.mubr.f32.mxu0 0.0
  %1118 = vmatmul.mubr.f32.gmra.mxu0 %v987
  %v1119 = vpop.f32.mrf.mxu0
  %v1120 = vadd.f32 %v960, %v1119
  %v1121 = vpop.f32.mrf.mxu0
  %1122 = vmatprep.mubr.f32.mxu0 0.0
  %1123 = vmatmul.mubr.f32.gmra.mxu0 %v990
  %v1124 = vpop.f32.mrf.mxu0
  %v1125 = vadd.f32 %v960, %v1124
  %v1126 = vpop.f32.mrf.mxu0
  %1127 = vmatprep.mubr.f32.mxu0 0.0
  %1128 = vmatmul.mubr.f32.gmra.mxu0 %v993
  %v1129 = vpop.f32.mrf.mxu0
  %v1130 = vadd.f32 %v960, %v1129
  %v1131 = vpop.f32.mrf.mxu0
  %1132 = vmatprep.mubr.f32.mxu0 0.0
  %1133 = vmatmul.mubr.f32.gmra.mxu0 %v996
  %v1134 = vpop.f32.mrf.mxu0
  %v1135 = vadd.f32 %v960, %v1134
  %v1136 = vpop.f32.mrf.mxu0
  %1137 = vmatprep.mubr.f32.mxu0 0.0
  %1138 = vmatmul.mubr.f32.gmra.mxu0 %v999
  %v1139 = vpop.f32.mrf.mxu0
  %v1140 = vadd.f32 %v960, %v1139
  %v1141 = vpop.f32.mrf.mxu0
  %1142 = vmatprep.mubr.f32.mxu0 0.0
  %1143 = vmatmul.mubr.f32.gmra.mxu0 %v1002
  %v1144 = vpop.f32.mrf.mxu0
  %v1145 = vadd.f32 %v960, %v1144
  %v1146 = vpop.f32.mrf.mxu0
  %1147 = vmatprep.mubr.f32.mxu0 0.0
  %1148 = vmatmul.mubr.f32.gmra.mxu0 %v1005
  %v1149 = vpop.f32.mrf.mxu0
  %v1150 = vadd.f32 %v960, %v1149
  %v1151 = vpop.f32.mrf.mxu0
  %1152 = vmatprep.mubr.f32.mxu0 0.0
  %1153 = vmatmul.mubr.f32.gmra.mxu0 %v1008
  %v1154 = vpop.f32.mrf.mxu0
  %v1155 = vadd.f32 %v960, %v1154
  %v1156 = vpop.f32.mrf.mxu0
  %1157 = vdwg.mxu0
  %v1158 = vmax.f32 %v1080, 0.0
  %v1159 = vmax.f32 %v1085, 0.0
  %v1160 = vmax.f32 %v1090, 0.0
  %v1161 = vmax.f32 %v1095, 0.0
  %v1162 = vmax.f32 %v1100, 0.0
  %v1163 = vmax.f32 %v1105, 0.0
  %v1164 = vmax.f32 %v1110, 0.0
  %v1165 = vmax.f32 %v1115, 0.0
  %v1166 = vmax.f32 %v1120, 0.0
  %v1167 = vmax.f32 %v1125, 0.0
  %v1168 = vmax.f32 %v1130, 0.0
  %v1169 = vmax.f32 %v1135, 0.0
  %v1170 = vmax.f32 %v1140, 0.0
  %v1171 = vmax.f32 %v1145, 0.0
  %v1172 = vmax.f32 %v1150, 0.0
  %v1173 = vmax.f32 %v1155, 0.0
  %v1174 = vld [vmem:[%s11] sm:$0xff]
  %v1175 = vld [vmem:[%s11 + $0x8] sm:$0x3]
  %v1176 = vld [vmem:[%s12] sm:$0x1]
  %v1178 = vlaneseq
  %v1179 = vshrl.u32 %v1178, 7
  %v1180 = vsub.s32 0, %v1179
  %v1181 = vrot.slane %v1176, %v1180
  %v1184 = vsel %vm297, %v1158, 0
  %v1187 = vsel %vm297, %v1159, 0
  %v1190 = vsel %vm297, %v1160, 0
  %v1193 = vsel %vm297, %v1161, 0
  %v1196 = vsel %vm297, %v1162, 0
  %v1199 = vsel %vm297, %v1163, 0
  %v1202 = vsel %vm297, %v1164, 0
  %v1205 = vsel %vm297, %v1165, 0
  %v1208 = vsel %vm297, %v1166, 0
  %v1211 = vsel %vm297, %v1167, 0
  %v1214 = vsel %vm297, %v1168, 0
  %v1217 = vsel %vm297, %v1169, 0
  %v1220 = vsel %vm297, %v1170, 0
  %v1223 = vsel %vm297, %v1171, 0
  %v1226 = vsel %vm297, %v1172, 0
  %v1229 = vsel %vm297, %v1173, 0
  %v1232 = vsel %vm346, %v1175, 0
  %1234 = vmatprep.subr.mxu0 0.0
  %1235 = vmatpush1.msra.mxu0 0.0
  %1236 = vmatprep.subr.mxu0 0.0
  %1237 = vmatpush1.msra.mxu0 0.0
  %1238 = vmatprep.subr.mxu0 0.0
  %1239 = vmatpush1.msra.mxu0 0.0
  %1240 = vmatprep.subr.mxu0 0.0
  %1241 = vmatpush1.msra.mxu0 0.0
  %1242 = vmatprep.subr.mxu0 0.0
  %1243 = vmatpush1.msra.mxu0 0.0
  %1244 = vmatprep.subr.mxu0 0.0
  %1245 = vmatpush1.msra.mxu0 0.0
  %1246 = vmatprep.subr.mxu0 0.0
  %1247 = vmatpush1.msra.mxu0 0.0
  %1248 = vmatprep.subr.mxu0 0.0
  %1249 = vmatpush1.msra.mxu0 0.0
  %1250 = vmatprep.subr.mxu0 0.0
  %1251 = vmatpush1.msra.mxu0 0.0
  %1252 = vmatprep.subr.mxu0 0.0
  %1253 = vmatpush1.msra.mxu0 0.0
  %1254 = vmatprep.subr.mxu0 0.0
  %1255 = vmatpush1.msra.mxu0 0.0
  %1256 = vmatprep.subr.mxu0 0.0
  %1257 = vmatpush1.msra.mxu0 0.0
  %1258 = vmatprep.subr.mxu0 0.0
  %1259 = vmatpush1.msra.mxu0 0.0
  %1260 = vmatprep.subr.mxu0 0.0
  %1261 = vmatpush1.msra.mxu0 0.0
  %1262 = vmatprep.subr.mxu0 0.0
  %1263 = vmatpush1.msra.mxu0 %v1232
  %1264 = vmatprep.subr.mxu0 0.0
  %1265 = vmatpush1.msra.mxu0 %v1174
  %1266 = vmatprep.subr.mxu0 0.0
  %1267 = vmatpush2.msra.mxu0 0.0
  %1268 = vmatprep.subr.mxu0 0.0
  %1269 = vmatpush2.msra.mxu0 0.0
  %1270 = vmatprep.subr.mxu0 0.0
  %1271 = vmatpush2.msra.mxu0 0.0
  %1272 = vmatprep.subr.mxu0 0.0
  %1273 = vmatpush2.msra.mxu0 0.0
  %1274 = vmatprep.subr.mxu0 0.0
  %1275 = vmatpush2.msra.mxu0 0.0
  %1276 = vmatprep.subr.mxu0 0.0
  %1277 = vmatpush2.msra.mxu0 0.0
  %1278 = vmatprep.subr.mxu0 0.0
  %1279 = vmatpush2.msra.mxu0 0.0
  %1280 = vmatprep.subr.mxu0 0.0
  %1281 = vmatpush2.msra.mxu0 0.0
  %1282 = vmatprep.subr.mxu0 0.0
  %1283 = vmatpush2.msra.mxu0 0.0
  %1284 = vmatprep.subr.mxu0 0.0
  %1285 = vmatpush2.msra.mxu0 0.0
  %1286 = vmatprep.subr.mxu0 0.0
  %1287 = vmatpush2.msra.mxu0 0.0
  %1288 = vmatprep.subr.mxu0 0.0
  %1289 = vmatpush2.msra.mxu0 0.0
  %1290 = vmatprep.subr.mxu0 0.0
  %1291 = vmatpush2.msra.mxu0 0.0
  %1292 = vmatprep.subr.mxu0 0.0
  %1293 = vmatpush2.msra.mxu0 0.0
  %1294 = vmatprep.subr.mxu0 0.0
  %1295 = vmatpush2.msra.mxu0 0.0
  %1296 = vmatprep.subr.mxu0 0.0
  %1297 = vmatpush2.msra.mxu0 0.0
  %1298 = vmatprep.mubr.f32.mxu0 0.0
  %1299 = vmatmul.mubr.f32.gmra.mxu0 %v1184
  %v1300 = vpop.f32.mrf.mxu0
  %v1301 = vadd.f32 %v1181, %v1300
  %v1302 = vpop.f32.mrf.mxu0
  %1303 = vmatprep.mubr.f32.mxu0 0.0
  %1304 = vmatmul.mubr.f32.gmra.mxu0 %v1187
  %v1305 = vpop.f32.mrf.mxu0
  %v1306 = vadd.f32 %v1181, %v1305
  %v1307 = vpop.f32.mrf.mxu0
  %1308 = vmatprep.mubr.f32.mxu0 0.0
  %1309 = vmatmul.mubr.f32.gmra.mxu0 %v1190
  %v1310 = vpop.f32.mrf.mxu0
  %v1311 = vadd.f32 %v1181, %v1310
  %v1312 = vpop.f32.mrf.mxu0
  %1313 = vmatprep.mubr.f32.mxu0 0.0
  %1314 = vmatmul.mubr.f32.gmra.mxu0 %v1193
  %v1315 = vpop.f32.mrf.mxu0
  %v1316 = vadd.f32 %v1181, %v1315
  %v1317 = vpop.f32.mrf.mxu0
  %1318 = vmatprep.mubr.f32.mxu0 0.0
  %1319 = vmatmul.mubr.f32.gmra.mxu0 %v1196
  %v1320 = vpop.f32.mrf.mxu0
  %v1321 = vadd.f32 %v1181, %v1320
  %v1322 = vpop.f32.mrf.mxu0
  %1323 = vmatprep.mubr.f32.mxu0 0.0
  %1324 = vmatmul.mubr.f32.gmra.mxu0 %v1199
  %v1325 = vpop.f32.mrf.mxu0
  %v1326 = vadd.f32 %v1181, %v1325
  %v1327 = vpop.f32.mrf.mxu0
  %1328 = vmatprep.mubr.f32.mxu0 0.0
  %1329 = vmatmul.mubr.f32.gmra.mxu0 %v1202
  %v1330 = vpop.f32.mrf.mxu0
  %v1331 = vadd.f32 %v1181, %v1330
  %v1332 = vpop.f32.mrf.mxu0
  %1333 = vmatprep.mubr.f32.mxu0 0.0
  %1334 = vmatmul.mubr.f32.gmra.mxu0 %v1205
  %v1335 = vpop.f32.mrf.mxu0
  %v1336 = vadd.f32 %v1181, %v1335
  %v1337 = vpop.f32.mrf.mxu0
  %1338 = vmatprep.mubr.f32.mxu0 0.0
  %1339 = vmatmul.mubr.f32.gmra.mxu0 %v1208
  %v1340 = vpop.f32.mrf.mxu0
  %v1341 = vadd.f32 %v1181, %v1340
  %v1342 = vpop.f32.mrf.mxu0
  %1343 = vmatprep.mubr.f32.mxu0 0.0
  %1344 = vmatmul.mubr.f32.gmra.mxu0 %v1211
  %v1345 = vpop.f32.mrf.mxu0
  %v1346 = vadd.f32 %v1181, %v1345
  %v1347 = vpop.f32.mrf.mxu0
  %1348 = vmatprep.mubr.f32.mxu0 0.0
  %1349 = vmatmul.mubr.f32.gmra.mxu0 %v1214
  %v1350 = vpop.f32.mrf.mxu0
  %v1351 = vadd.f32 %v1181, %v1350
  %v1352 = vpop.f32.mrf.mxu0
  %1353 = vmatprep.mubr.f32.mxu0 0.0
  %1354 = vmatmul.mubr.f32.gmra.mxu0 %v1217
  %v1355 = vpop.f32.mrf.mxu0
  %v1356 = vadd.f32 %v1181, %v1355
  %v1357 = vpop.f32.mrf.mxu0
  %1358 = vmatprep.mubr.f32.mxu0 0.0
  %1359 = vmatmul.mubr.f32.gmra.mxu0 %v1220
  %v1360 = vpop.f32.mrf.mxu0
  %v1361 = vadd.f32 %v1181, %v1360
  %v1362 = vpop.f32.mrf.mxu0
  %1363 = vmatprep.mubr.f32.mxu0 0.0
  %1364 = vmatmul.mubr.f32.gmra.mxu0 %v1223
  %v1365 = vpop.f32.mrf.mxu0
  %v1366 = vadd.f32 %v1181, %v1365
  %v1367 = vpop.f32.mrf.mxu0
  %1368 = vmatprep.mubr.f32.mxu0 0.0
  %1369 = vmatmul.mubr.f32.gmra.mxu0 %v1226
  %v1370 = vpop.f32.mrf.mxu0
  %v1371 = vadd.f32 %v1181, %v1370
  %v1372 = vpop.f32.mrf.mxu0
  %1373 = vmatprep.mubr.f32.mxu0 0.0
  %1374 = vmatmul.mubr.f32.gmra.mxu0 %v1229
  %v1375 = vpop.f32.mrf.mxu0
  %v1376 = vadd.f32 %v1181, %v1375
  %v1377 = vpop.f32.mrf.mxu0
  %1378 = vdwg.mxu0
  %v1379 = vld [vmem:[%s13] sm:$0xff]
  %v1380 = vld [vmem:[%s13 + $0x8] sm:$0x3]
  %v1381 = vld [vmem:[%s14] sm:$0x1]
  %v1383 = vlaneseq
  %v1384 = vshrl.u32 %v1383, 7
  %v1385 = vsub.s32 0, %v1384
  %v1386 = vrot.slane %v1381, %v1385
  %v1389 = vsel %vm297, %v1301, 0
  %v1392 = vsel %vm297, %v1306, 0
  %v1395 = vsel %vm297, %v1311, 0
  %v1398 = vsel %vm297, %v1316, 0
  %v1401 = vsel %vm297, %v1321, 0
  %v1404 = vsel %vm297, %v1326, 0
  %v1407 = vsel %vm297, %v1331, 0
  %v1410 = vsel %vm297, %v1336, 0
  %v1413 = vsel %vm297, %v1341, 0
  %v1416 = vsel %vm297, %v1346, 0
  %v1419 = vsel %vm297, %v1351, 0
  %v1422 = vsel %vm297, %v1356, 0
  %v1425 = vsel %vm297, %v1361, 0
  %v1428 = vsel %vm297, %v1366, 0
  %v1431 = vsel %vm297, %v1371, 0
  %v1434 = vsel %vm297, %v1376, 0
  %v1437 = vsel %vm346, %v1380, 0
  %1439 = vmatprep.subr.mxu0 0.0
  %1440 = vmatpush1.msra.mxu0 0.0
  %1441 = vmatprep.subr.mxu0 0.0
  %1442 = vmatpush1.msra.mxu0 0.0
  %1443 = vmatprep.subr.mxu0 0.0
  %1444 = vmatpush1.msra.mxu0 0.0
  %1445 = vmatprep.subr.mxu0 0.0
  %1446 = vmatpush1.msra.mxu0 0.0
  %1447 = vmatprep.subr.mxu0 0.0
  %1448 = vmatpush1.msra.mxu0 0.0
  %1449 = vmatprep.subr.mxu0 0.0
  %1450 = vmatpush1.msra.mxu0 0.0
  %1451 = vmatprep.subr.mxu0 0.0
  %1452 = vmatpush1.msra.mxu0 0.0
  %1453 = vmatprep.subr.mxu0 0.0
  %1454 = vmatpush1.msra.mxu0 0.0
  %1455 = vmatprep.subr.mxu0 0.0
  %1456 = vmatpush1.msra.mxu0 0.0
  %1457 = vmatprep.subr.mxu0 0.0
  %1458 = vmatpush1.msra.mxu0 0.0
  %1459 = vmatprep.subr.mxu0 0.0
  %1460 = vmatpush1.msra.mxu0 0.0
  %1461 = vmatprep.subr.mxu0 0.0
  %1462 = vmatpush1.msra.mxu0 0.0
  %1463 = vmatprep.subr.mxu0 0.0
  %1464 = vmatpush1.msra.mxu0 0.0
  %1465 = vmatprep.subr.mxu0 0.0
  %1466 = vmatpush1.msra.mxu0 0.0
  %1467 = vmatprep.subr.mxu0 0.0
  %1468 = vmatpush1.msra.mxu0 %v1437
  %1469 = vmatprep.subr.mxu0 0.0
  %1470 = vmatpush1.msra.mxu0 %v1379
  %1471 = vmatprep.subr.mxu0 0.0
  %1472 = vmatpush2.msra.mxu0 0.0
  %1473 = vmatprep.subr.mxu0 0.0
  %1474 = vmatpush2.msra.mxu0 0.0
  %1475 = vmatprep.subr.mxu0 0.0
  %1476 = vmatpush2.msra.mxu0 0.0
  %1477 = vmatprep.subr.mxu0 0.0
  %1478 = vmatpush2.msra.mxu0 0.0
  %1479 = vmatprep.subr.mxu0 0.0
  %1480 = vmatpush2.msra.mxu0 0.0
  %1481 = vmatprep.subr.mxu0 0.0
  %1482 = vmatpush2.msra.mxu0 0.0
  %1483 = vmatprep.subr.mxu0 0.0
  %1484 = vmatpush2.msra.mxu0 0.0
  %1485 = vmatprep.subr.mxu0 0.0
  %1486 = vmatpush2.msra.mxu0 0.0
  %1487 = vmatprep.subr.mxu0 0.0
  %1488 = vmatpush2.msra.mxu0 0.0
  %1489 = vmatprep.subr.mxu0 0.0
  %1490 = vmatpush2.msra.mxu0 0.0
  %1491 = vmatprep.subr.mxu0 0.0
  %1492 = vmatpush2.msra.mxu0 0.0
  %1493 = vmatprep.subr.mxu0 0.0
  %1494 = vmatpush2.msra.mxu0 0.0
  %1495 = vmatprep.subr.mxu0 0.0
  %1496 = vmatpush2.msra.mxu0 0.0
  %1497 = vmatprep.subr.mxu0 0.0
  %1498 = vmatpush2.msra.mxu0 0.0
  %1499 = vmatprep.subr.mxu0 0.0
  %1500 = vmatpush2.msra.mxu0 0.0
  %1501 = vmatprep.subr.mxu0 0.0
  %1502 = vmatpush2.msra.mxu0 0.0
  %1503 = vmatprep.mubr.f32.mxu0 0.0
  %1504 = vmatmul.mubr.f32.gmra.mxu0 %v1389
  %v1505 = vpop.f32.mrf.mxu0
  %v1506 = vadd.f32 %v1386, %v1505
  %v1507 = vpop.f32.mrf.mxu0
  %1508 = vmatprep.mubr.f32.mxu0 0.0
  %1509 = vmatmul.mubr.f32.gmra.mxu0 %v1392
  %v1510 = vpop.f32.mrf.mxu0
  %v1511 = vadd.f32 %v1386, %v1510
  %v1512 = vpop.f32.mrf.mxu0
  %1513 = vmatprep.mubr.f32.mxu0 0.0
  %1514 = vmatmul.mubr.f32.gmra.mxu0 %v1395
  %v1515 = vpop.f32.mrf.mxu0
  %v1516 = vadd.f32 %v1386, %v1515
  %v1517 = vpop.f32.mrf.mxu0
  %1518 = vmatprep.mubr.f32.mxu0 0.0
  %1519 = vmatmul.mubr.f32.gmra.mxu0 %v1398
  %v1520 = vpop.f32.mrf.mxu0
  %v1521 = vadd.f32 %v1386, %v1520
  %v1522 = vpop.f32.mrf.mxu0
  %1523 = vmatprep.mubr.f32.mxu0 0.0
  %1524 = vmatmul.mubr.f32.gmra.mxu0 %v1401
  %v1525 = vpop.f32.mrf.mxu0
  %v1526 = vadd.f32 %v1386, %v1525
  %v1527 = vpop.f32.mrf.mxu0
  %1528 = vmatprep.mubr.f32.mxu0 0.0
  %1529 = vmatmul.mubr.f32.gmra.mxu0 %v1404
  %v1530 = vpop.f32.mrf.mxu0
  %v1531 = vadd.f32 %v1386, %v1530
  %v1532 = vpop.f32.mrf.mxu0
  %1533 = vmatprep.mubr.f32.mxu0 0.0
  %1534 = vmatmul.mubr.f32.gmra.mxu0 %v1407
  %v1535 = vpop.f32.mrf.mxu0
  %v1536 = vadd.f32 %v1386, %v1535
  %v1537 = vpop.f32.mrf.mxu0
  %1538 = vmatprep.mubr.f32.mxu0 0.0
  %1539 = vmatmul.mubr.f32.gmra.mxu0 %v1410
  %v1540 = vpop.f32.mrf.mxu0
  %v1541 = vadd.f32 %v1386, %v1540
  %v1542 = vpop.f32.mrf.mxu0
  %1543 = vmatprep.mubr.f32.mxu0 0.0
  %1544 = vmatmul.mubr.f32.gmra.mxu0 %v1413
  %v1545 = vpop.f32.mrf.mxu0
  %v1546 = vadd.f32 %v1386, %v1545
  %v1547 = vpop.f32.mrf.mxu0
  %1548 = vmatprep.mubr.f32.mxu0 0.0
  %1549 = vmatmul.mubr.f32.gmra.mxu0 %v1416
  %v1550 = vpop.f32.mrf.mxu0
  %v1551 = vadd.f32 %v1386, %v1550
  %v1552 = vpop.f32.mrf.mxu0
  %1553 = vmatprep.mubr.f32.mxu0 0.0
  %1554 = vmatmul.mubr.f32.gmra.mxu0 %v1419
  %v1555 = vpop.f32.mrf.mxu0
  %v1556 = vadd.f32 %v1386, %v1555
  %v1557 = vpop.f32.mrf.mxu0
  %1558 = vmatprep.mubr.f32.mxu0 0.0
  %1559 = vmatmul.mubr.f32.gmra.mxu0 %v1422
  %v1560 = vpop.f32.mrf.mxu0
  %v1561 = vadd.f32 %v1386, %v1560
  %v1562 = vpop.f32.mrf.mxu0
  %1563 = vmatprep.mubr.f32.mxu0 0.0
  %1564 = vmatmul.mubr.f32.gmra.mxu0 %v1425
  %v1565 = vpop.f32.mrf.mxu0
  %v1566 = vadd.f32 %v1386, %v1565
  %v1567 = vpop.f32.mrf.mxu0
  %1568 = vmatprep.mubr.f32.mxu0 0.0
  %1569 = vmatmul.mubr.f32.gmra.mxu0 %v1428
  %v1570 = vpop.f32.mrf.mxu0
  %v1571 = vadd.f32 %v1386, %v1570
  %v1572 = vpop.f32.mrf.mxu0
  %1573 = vmatprep.mubr.f32.mxu0 0.0
  %1574 = vmatmul.mubr.f32.gmra.mxu0 %v1431
  %v1575 = vpop.f32.mrf.mxu0
  %v1576 = vadd.f32 %v1386, %v1575
  %v1577 = vpop.f32.mrf.mxu0
  %1578 = vmatprep.mubr.f32.mxu0 0.0
  %1579 = vmatmul.mubr.f32.gmra.mxu0 %v1434
  %v1580 = vpop.f32.mrf.mxu0
  %v1581 = vadd.f32 %v1386, %v1580
  %v1582 = vpop.f32.mrf.mxu0
  %1583 = vdwg.mxu0
  %v1584 = vmax.f32 %v1506, 0.0
  %v1585 = vmax.f32 %v1511, 0.0
  %v1586 = vmax.f32 %v1516, 0.0
  %v1587 = vmax.f32 %v1521, 0.0
  %v1588 = vmax.f32 %v1526, 0.0
  %v1589 = vmax.f32 %v1531, 0.0
  %v1590 = vmax.f32 %v1536, 0.0
  %v1591 = vmax.f32 %v1541, 0.0
  %v1592 = vmax.f32 %v1546, 0.0
  %v1593 = vmax.f32 %v1551, 0.0
  %v1594 = vmax.f32 %v1556, 0.0
  %v1595 = vmax.f32 %v1561, 0.0
  %v1596 = vmax.f32 %v1566, 0.0
  %v1597 = vmax.f32 %v1571, 0.0
  %v1598 = vmax.f32 %v1576, 0.0
  %v1599 = vmax.f32 %v1581, 0.0
  %vm1600 = vcmask 326656
  %1601 = vst.msk [vmem:[%s15] sm:$0xff] %vm1600, %v1584
  %1602 = vst.msk [vmem:[%s15 + $0x8] sm:$0xff] %vm1600, %v1585
  %1603 = vst.msk [vmem:[%s15 + $0x10] sm:$0xff] %vm1600, %v1586
  %1604 = vst.msk [vmem:[%s15 + $0x18] sm:$0xff] %vm1600, %v1587
  %1605 = vst.msk [vmem:[%s15 + $0x20] sm:$0xff] %vm1600, %v1588
  %1606 = vst.msk [vmem:[%s15 + $0x28] sm:$0xff] %vm1600, %v1589
  %1607 = vst.msk [vmem:[%s15 + $0x30] sm:$0xff] %vm1600, %v1590
  %1608 = vst.msk [vmem:[%s15 + $0x38] sm:$0xff] %vm1600, %v1591
  %1609 = vst.msk [vmem:[%s15 + $0x40] sm:$0xff] %vm1600, %v1592
  %1610 = vst.msk [vmem:[%s15 + $0x48] sm:$0xff] %vm1600, %v1593
  %1611 = vst.msk [vmem:[%s15 + $0x50] sm:$0xff] %vm1600, %v1594
  %1612 = vst.msk [vmem:[%s15 + $0x58] sm:$0xff] %vm1600, %v1595
  %1613 = vst.msk [vmem:[%s15 + $0x60] sm:$0xff] %vm1600, %v1596
  %1614 = vst.msk [vmem:[%s15 + $0x68] sm:$0xff] %vm1600, %v1597
  %1615 = vst.msk [vmem:[%s15 + $0x70] sm:$0xff] %vm1600, %v1598
  %1616 = vst.msk [vmem:[%s15 + $0x78] sm:$0xff] %vm1600, %v1599
  // Predicated region
  $region62: #{_lambda_.3} parent=0 // pred_check
    _
  $region63: #{_lambda_.3} parent=0 // pred_check_branch
    %1618 = sbr.rel (0) target = $region65
  $region64: #{_lambda_.3} parent=0 // pred_region
    _
  $region65: #{_lambda_.3} parent=0 // pred_fallthru
    _
  // Predicated region
  $region66: #{_lambda_.3} parent=0 // pred_check
    _
  $region67: #{_lambda_.3} parent=0 // pred_check_branch
    %1620 = sbr.rel (0) target = $region69
  $region68: #{_lambda_.3} parent=0 // pred_region
    _
  $region69: #{_lambda_.3} parent=0 // pred_fallthru
    _

// kernel: _lambda_.5
$region0: #{_lambda_.5}
  #allocation0 [shape = 'u32[]', space=smem, size = 0x4, offset = 0x4, fixed_abs, tag = 'smem constant byte address 0x4 - core index']
  #allocation1 [shape = 'u32[144,128]{1,0:T(1,128)}', space=vmem, size = 0x12000, scoped, tag = 'internal scratch']
  %s0 = inlined_call_operand.vmem [shape: f32[128,24], index: 0, kind: input, shape index: {}]
  %s1 = inlined_call_operand.vmem [shape: f32[12,8], index: 1, kind: input, shape index: {}]
  %s2 = inlined_call_operand.hbm [shape: f32[128,8], index: 2, kind: output, shape index: {0}]
  %s3 = inlined_call_operand.hbm [shape: f32[128,8], index: 3, kind: output, shape index: {1}]
  %4 = xla_tuple %s2, %s3
  %s5 = sld [smem:[#allocation0]]
  $region26: #{_lambda_.5} parent=0
    _
  %s7 = ssub.s32 1, %s5
  %s8 = scalar_select 0, %s7, %s5
  $region1: #{_lambda_.5} parent=0
    #allocation2 [shape = 'u8[65536]{0}', space=vmem, size = 0x10000, scoped, tag = 'output window, operand 0, single buffered']
    #allocation3 [shape = 's32[1]{0}', space=sflag, size = 0x4, scoped, tag = 'scoped memory for _lambda_.5']
    #allocation4 [shape = 'u8[65536]{0}', space=vmem, size = 0x10000, scoped, tag = 'output window, operand 1, single buffered']
    #allocation5 [shape = 's32[1]{0}', space=sflag, size = 0x4, scoped, tag = 'scoped memory for _lambda_.5']
    %9 = vsyncpa [#allocation3], 0
    %10 = vsyncpa [#allocation5], 0
    // Predicated region
    $region2: #{_lambda_.5} parent=1 // pred_check
      _
    $region3: #{_lambda_.5} parent=1 // pred_check_branch
      %12 = sbr.rel (0) target = $region5
    $region4: #{_lambda_.5} parent=1 // pred_region
      _
    $region5: #{_lambda_.5} parent=1 // pred_fallthru
      _
    // Predicated region
    $region6: #{_lambda_.5} parent=1 // pred_check
      _
    $region7: #{_lambda_.5} parent=1 // pred_check_branch
      %14 = sbr.rel (0) target = $region9
    $region8: #{_lambda_.5} parent=1 // pred_region
      _
    $region9: #{_lambda_.5} parent=1 // pred_fallthru
      _
    %v15 = vld [vmem:[%s1] sm:$0xff]
    %v16 = vld [vmem:[%s1 + $0x8] sm:$0xf]
    %v17 = vld [vmem:[%s0] sm:$0xff]
    %v18 = vld [vmem:[%s0 + $0x8] sm:$0xff]
    %v19 = vld [vmem:[%s0 + $0x10] sm:$0xff]
    %v20 = vld [vmem:[%s0 + $0x18] sm:$0xff]
    %v21 = vld [vmem:[%s0 + $0x20] sm:$0xff]
    %v22 = vld [vmem:[%s0 + $0x28] sm:$0xff]
    %v23 = vld [vmem:[%s0 + $0x30] sm:$0xff]
    %v24 = vld [vmem:[%s0 + $0x38] sm:$0xff]
    %v25 = vld [vmem:[%s0 + $0x40] sm:$0xff]
    %v26 = vld [vmem:[%s0 + $0x48] sm:$0xff]
    %v27 = vld [vmem:[%s0 + $0x50] sm:$0xff]
    %v28 = vld [vmem:[%s0 + $0x58] sm:$0xff]
    %v29 = vld [vmem:[%s0 + $0x60] sm:$0xff]
    %v30 = vld [vmem:[%s0 + $0x68] sm:$0xff]
    %v31 = vld [vmem:[%s0 + $0x70] sm:$0xff]
    %v32 = vld [vmem:[%s0 + $0x78] sm:$0xff]
    %vm33 = vcmask 97280
    %v35 = vsel %vm33, %v17, 0
    %v38 = vsel %vm33, %v18, 0
    %v41 = vsel %vm33, %v19, 0
    %v44 = vsel %vm33, %v20, 0
    %v47 = vsel %vm33, %v21, 0
    %v50 = vsel %vm33, %v22, 0
    %v53 = vsel %vm33, %v23, 0
    %v56 = vsel %vm33, %v24, 0
    %v59 = vsel %vm33, %v25, 0
    %v62 = vsel %vm33, %v26, 0
    %v65 = vsel %vm33, %v27, 0
    %v68 = vsel %vm33, %v28, 0
    %v71 = vsel %vm33, %v29, 0
    %v74 = vsel %vm33, %v30, 0
    %v77 = vsel %vm33, %v31, 0
    %v80 = vsel %vm33, %v32, 0
    %vm82 = vcmask 1043456
    %v84 = vsel %vm82, %v16, 0
    %86 = vmatprep.subr.mxu0 0.0
    %87 = vmatpush1.msra.mxu0 0.0
    %88 = vmatprep.subr.mxu0 0.0
    %89 = vmatpush1.msra.mxu0 0.0
    %90 = vmatprep.subr.mxu0 0.0
    %91 = vmatpush1.msra.mxu0 0.0
    %92 = vmatprep.subr.mxu0 0.0
    %93 = vmatpush1.msra.mxu0 0.0
    %94 = vmatprep.subr.mxu0 0.0
    %95 = vmatpush1.msra.mxu0 0.0
    %96 = vmatprep.subr.mxu0 0.0
    %97 = vmatpush1.msra.mxu0 0.0
    %98 = vmatprep.subr.mxu0 0.0
    %99 = vmatpush1.msra.mxu0 0.0
    %100 = vmatprep.subr.mxu0 0.0
    %101 = vmatpush1.msra.mxu0 0.0
    %102 = vmatprep.subr.mxu0 0.0
    %103 = vmatpush1.msra.mxu0 0.0
    %104 = vmatprep.subr.mxu0 0.0
    %105 = vmatpush1.msra.mxu0 0.0
    %106 = vmatprep.subr.mxu0 0.0
    %107 = vmatpush1.msra.mxu0 0.0
    %108 = vmatprep.subr.mxu0 0.0
    %109 = vmatpush1.msra.mxu0 0.0
    %110 = vmatprep.subr.mxu0 0.0
    %111 = vmatpush1.msra.mxu0 0.0
    %112 = vmatprep.subr.mxu0 0.0
    %113 = vmatpush1.msra.mxu0 0.0
    %114 = vmatprep.subr.mxu0 0.0
    %115 = vmatpush1.msra.mxu0 %v84
    %116 = vmatprep.subr.mxu0 0.0
    %117 = vmatpush1.msra.mxu0 %v15
    %118 = vmatprep.subr.mxu0 0.0
    %119 = vmatpush2.msra.mxu0 0.0
    %120 = vmatprep.subr.mxu0 0.0
    %121 = vmatpush2.msra.mxu0 0.0
    %122 = vmatprep.subr.mxu0 0.0
    %123 = vmatpush2.msra.mxu0 0.0
    %124 = vmatprep.subr.mxu0 0.0
    %125 = vmatpush2.msra.mxu0 0.0
    %126 = vmatprep.subr.mxu0 0.0
    %127 = vmatpush2.msra.mxu0 0.0
    %128 = vmatprep.subr.mxu0 0.0
    %129 = vmatpush2.msra.mxu0 0.0
    %130 = vmatprep.subr.mxu0 0.0
    %131 = vmatpush2.msra.mxu0 0.0
    %132 = vmatprep.subr.mxu0 0.0
    %133 = vmatpush2.msra.mxu0 0.0
    %134 = vmatprep.subr.mxu0 0.0
    %135 = vmatpush2.msra.mxu0 0.0
    %136 = vmatprep.subr.mxu0 0.0
    %137 = vmatpush2.msra.mxu0 0.0
    %138 = vmatprep.subr.mxu0 0.0
    %139 = vmatpush2.msra.mxu0 0.0
    %140 = vmatprep.subr.mxu0 0.0
    %141 = vmatpush2.msra.mxu0 0.0
    %142 = vmatprep.subr.mxu0 0.0
    %143 = vmatpush2.msra.mxu0 0.0
    %144 = vmatprep.subr.mxu0 0.0
    %145 = vmatpush2.msra.mxu0 0.0
    %146 = vmatprep.subr.mxu0 0.0
    %147 = vmatpush2.msra.mxu0 0.0
    %148 = vmatprep.subr.mxu0 0.0
    %149 = vmatpush2.msra.mxu0 0.0
    %150 = vmatprep.mubr.f32.mxu0 0.0
    %151 = vmatmul.mubr.f32.gmra.mxu0 %v35
    %v152 = vpop.f32.mrf.mxu0
    %v153 = vadd.f32 0.0, %v152
    %v154 = vpop.f32.mrf.mxu0
    %155 = vmatprep.mubr.f32.mxu0 0.0
    %156 = vmatmul.mubr.f32.gmra.mxu0 %v38
    %v157 = vpop.f32.mrf.mxu0
    %v158 = vadd.f32 0.0, %v157
    %v159 = vpop.f32.mrf.mxu0
    %160 = vmatprep.mubr.f32.mxu0 0.0
    %161 = vmatmul.mubr.f32.gmra.mxu0 %v41
    %v162 = vpop.f32.mrf.mxu0
    %v163 = vadd.f32 0.0, %v162
    %v164 = vpop.f32.mrf.mxu0
    %165 = vmatprep.mubr.f32.mxu0 0.0
    %166 = vmatmul.mubr.f32.gmra.mxu0 %v44
    %v167 = vpop.f32.mrf.mxu0
    %v168 = vadd.f32 0.0, %v167
    %v169 = vpop.f32.mrf.mxu0
    %170 = vmatprep.mubr.f32.mxu0 0.0
    %171 = vmatmul.mubr.f32.gmra.mxu0 %v47
    %v172 = vpop.f32.mrf.mxu0
    %v173 = vadd.f32 0.0, %v172
    %v174 = vpop.f32.mrf.mxu0
    %175 = vmatprep.mubr.f32.mxu0 0.0
    %176 = vmatmul.mubr.f32.gmra.mxu0 %v50
    %v177 = vpop.f32.mrf.mxu0
    %v178 = vadd.f32 0.0, %v177
    %v179 = vpop.f32.mrf.mxu0
    %180 = vmatprep.mubr.f32.mxu0 0.0
    %181 = vmatmul.mubr.f32.gmra.mxu0 %v53
    %v182 = vpop.f32.mrf.mxu0
    %v183 = vadd.f32 0.0, %v182
    %v184 = vpop.f32.mrf.mxu0
    %185 = vmatprep.mubr.f32.mxu0 0.0
    %186 = vmatmul.mubr.f32.gmra.mxu0 %v56
    %v187 = vpop.f32.mrf.mxu0
    %v188 = vadd.f32 0.0, %v187
    %v189 = vpop.f32.mrf.mxu0
    %190 = vmatprep.mubr.f32.mxu0 0.0
    %191 = vmatmul.mubr.f32.gmra.mxu0 %v59
    %v192 = vpop.f32.mrf.mxu0
    %v193 = vadd.f32 0.0, %v192
    %v194 = vpop.f32.mrf.mxu0
    %195 = vmatprep.mubr.f32.mxu0 0.0
    %196 = vmatmul.mubr.f32.gmra.mxu0 %v62
    %v197 = vpop.f32.mrf.mxu0
    %v198 = vadd.f32 0.0, %v197
    %v199 = vpop.f32.mrf.mxu0
    %200 = vmatprep.mubr.f32.mxu0 0.0
    %201 = vmatmul.mubr.f32.gmra.mxu0 %v65
    %v202 = vpop.f32.mrf.mxu0
    %v203 = vadd.f32 0.0, %v202
    %v204 = vpop.f32.mrf.mxu0
    %205 = vmatprep.mubr.f32.mxu0 0.0
    %206 = vmatmul.mubr.f32.gmra.mxu0 %v68
    %v207 = vpop.f32.mrf.mxu0
    %v208 = vadd.f32 0.0, %v207
    %v209 = vpop.f32.mrf.mxu0
    %210 = vmatprep.mubr.f32.mxu0 0.0
    %211 = vmatmul.mubr.f32.gmra.mxu0 %v71
    %v212 = vpop.f32.mrf.mxu0
    %v213 = vadd.f32 0.0, %v212
    %v214 = vpop.f32.mrf.mxu0
    %215 = vmatprep.mubr.f32.mxu0 0.0
    %216 = vmatmul.mubr.f32.gmra.mxu0 %v74
    %v217 = vpop.f32.mrf.mxu0
    %v218 = vadd.f32 0.0, %v217
    %v219 = vpop.f32.mrf.mxu0
    %220 = vmatprep.mubr.f32.mxu0 0.0
    %221 = vmatmul.mubr.f32.gmra.mxu0 %v77
    %v222 = vpop.f32.mrf.mxu0
    %v223 = vadd.f32 0.0, %v222
    %v224 = vpop.f32.mrf.mxu0
    %225 = vmatprep.mubr.f32.mxu0 0.0
    %226 = vmatmul.mubr.f32.gmra.mxu0 %v80
    %v227 = vpop.f32.mrf.mxu0
    %v228 = vadd.f32 0.0, %v227
    %v229 = vpop.f32.mrf.mxu0
    %230 = vdwg.mxu0
    %vm231 = vcmask 64512
    %232 = vst.msk [vmem:[#allocation2] sm:$0xff] %vm231, %v153
    %233 = vst.msk [vmem:[#allocation2 + $0x8] sm:$0xff] %vm231, %v158
    %234 = vst.msk [vmem:[#allocation2 + $0x10] sm:$0xff] %vm231, %v163
    %235 = vst.msk [vmem:[#allocation2 + $0x18] sm:$0xff] %vm231, %v168
    %236 = vst.msk [vmem:[#allocation2 + $0x20] sm:$0xff] %vm231, %v173
    %237 = vst.msk [vmem:[#allocation2 + $0x28] sm:$0xff] %vm231, %v178
    %238 = vst.msk [vmem:[#allocation2 + $0x30] sm:$0xff] %vm231, %v183
    %239 = vst.msk [vmem:[#allocation2 + $0x38] sm:$0xff] %vm231, %v188
    %240 = vst.msk [vmem:[#allocation2 + $0x40] sm:$0xff] %vm231, %v193
    %241 = vst.msk [vmem:[#allocation2 + $0x48] sm:$0xff] %vm231, %v198
    %242 = vst.msk [vmem:[#allocation2 + $0x50] sm:$0xff] %vm231, %v203
    %243 = vst.msk [vmem:[#allocation2 + $0x58] sm:$0xff] %vm231, %v208
    %244 = vst.msk [vmem:[#allocation2 + $0x60] sm:$0xff] %vm231, %v213
    %245 = vst.msk [vmem:[#allocation2 + $0x68] sm:$0xff] %vm231, %v218
    %246 = vst.msk [vmem:[#allocation2 + $0x70] sm:$0xff] %vm231, %v223
    %247 = vst.msk [vmem:[#allocation2 + $0x78] sm:$0xff] %vm231, %v228
    %248 = vrot.lane.b32.xlu0 %v17, 116
    %v249 = vpop.permute.xlu0 %248
    %250 = vrot.lane.b32.xlu0 %v18, 116
    %v251 = vpop.permute.xlu0 %250
    %252 = vrot.lane.b32.xlu0 %v19, 116
    %v253 = vpop.permute.xlu0 %252
    %254 = vrot.lane.b32.xlu0 %v20, 116
    %v255 = vpop.permute.xlu0 %254
    %256 = vrot.lane.b32.xlu0 %v21, 116
    %v257 = vpop.permute.xlu0 %256
    %258 = vrot.lane.b32.xlu0 %v22, 116
    %v259 = vpop.permute.xlu0 %258
    %260 = vrot.lane.b32.xlu0 %v23, 116
    %v261 = vpop.permute.xlu0 %260
    %262 = vrot.lane.b32.xlu0 %v24, 116
    %v263 = vpop.permute.xlu0 %262
    %264 = vrot.lane.b32.xlu0 %v25, 116
    %v265 = vpop.permute.xlu0 %264
    %266 = vrot.lane.b32.xlu0 %v26, 116
    %v267 = vpop.permute.xlu0 %266
    %268 = vrot.lane.b32.xlu0 %v27, 116
    %v269 = vpop.permute.xlu0 %268
    %270 = vrot.lane.b32.xlu0 %v28, 116
    %v271 = vpop.permute.xlu0 %270
    %272 = vrot.lane.b32.xlu0 %v29, 116
    %v273 = vpop.permute.xlu0 %272
    %274 = vrot.lane.b32.xlu0 %v30, 116
    %v275 = vpop.permute.xlu0 %274
    %276 = vrot.lane.b32.xlu0 %v31, 116
    %v277 = vpop.permute.xlu0 %276
    %278 = vrot.lane.b32.xlu0 %v32, 116
    %v279 = vpop.permute.xlu0 %278
    %v280 = vsel %vm33, %v249, 0
    %v282 = vsel %vm33, %v251, 0
    %v284 = vsel %vm33, %v253, 0
    %v286 = vsel %vm33, %v255, 0
    %v288 = vsel %vm33, %v257, 0
    %v290 = vsel %vm33, %v259, 0
    %v292 = vsel %vm33, %v261, 0
    %v294 = vsel %vm33, %v263, 0
    %v296 = vsel %vm33, %v265, 0
    %v298 = vsel %vm33, %v267, 0
    %v300 = vsel %vm33, %v269, 0
    %v302 = vsel %vm33, %v271, 0
    %v304 = vsel %vm33, %v273, 0
    %v306 = vsel %vm33, %v275, 0
    %v308 = vsel %vm33, %v277, 0
    %v310 = vsel %vm33, %v279, 0
    %312 = vmatprep.subr.mxu0 0.0
    %313 = vmatpush1.msra.mxu0 0.0
    %314 = vmatprep.subr.mxu0 0.0
    %315 = vmatpush1.msra.mxu0 0.0
    %316 = vmatprep.subr.mxu0 0.0
    %317 = vmatpush1.msra.mxu0 0.0
    %318 = vmatprep.subr.mxu0 0.0
    %319 = vmatpush1.msra.mxu0 0.0
    %320 = vmatprep.subr.mxu0 0.0
    %321 = vmatpush1.msra.mxu0 0.0
    %322 = vmatprep.subr.mxu0 0.0
    %323 = vmatpush1.msra.mxu0 0.0
    %324 = vmatprep.subr.mxu0 0.0
    %325 = vmatpush1.msra.mxu0 0.0
    %326 = vmatprep.subr.mxu0 0.0
    %327 = vmatpush1.msra.mxu0 0.0
    %328 = vmatprep.subr.mxu0 0.0
    %329 = vmatpush1.msra.mxu0 0.0
    %330 = vmatprep.subr.mxu0 0.0
    %331 = vmatpush1.msra.mxu0 0.0
    %332 = vmatprep.subr.mxu0 0.0
    %333 = vmatpush1.msra.mxu0 0.0
    %334 = vmatprep.subr.mxu0 0.0
    %335 = vmatpush1.msra.mxu0 0.0
    %336 = vmatprep.subr.mxu0 0.0
    %337 = vmatpush1.msra.mxu0 0.0
    %338 = vmatprep.subr.mxu0 0.0
    %339 = vmatpush1.msra.mxu0 0.0
    %340 = vmatprep.subr.mxu0 0.0
    %341 = vmatpush1.msra.mxu0 %v84
    %342 = vmatprep.subr.mxu0 0.0
    %343 = vmatpush1.msra.mxu0 %v15
    %344 = vmatprep.subr.mxu0 0.0
    %345 = vmatpush2.msra.mxu0 0.0
    %346 = vmatprep.subr.mxu0 0.0
    %347 = vmatpush2.msra.mxu0 0.0
    %348 = vmatprep.subr.mxu0 0.0
    %349 = vmatpush2.msra.mxu0 0.0
    %350 = vmatprep.subr.mxu0 0.0
    %351 = vmatpush2.msra.mxu0 0.0
    %352 = vmatprep.subr.mxu0 0.0
    %353 = vmatpush2.msra.mxu0 0.0
    %354 = vmatprep.subr.mxu0 0.0
    %355 = vmatpush2.msra.mxu0 0.0
    %356 = vmatprep.subr.mxu0 0.0
    %357 = vmatpush2.msra.mxu0 0.0
    %358 = vmatprep.subr.mxu0 0.0
    %359 = vmatpush2.msra.mxu0 0.0
    %360 = vmatprep.subr.mxu0 0.0
    %361 = vmatpush2.msra.mxu0 0.0
    %362 = vmatprep.subr.mxu0 0.0
    %363 = vmatpush2.msra.mxu0 0.0
    %364 = vmatprep.subr.mxu0 0.0
    %365 = vmatpush2.msra.mxu0 0.0
    %366 = vmatprep.subr.mxu0 0.0
    %367 = vmatpush2.msra.mxu0 0.0
    %368 = vmatprep.subr.mxu0 0.0
    %369 = vmatpush2.msra.mxu0 0.0
    %370 = vmatprep.subr.mxu0 0.0
    %371 = vmatpush2.msra.mxu0 0.0
    %372 = vmatprep.subr.mxu0 0.0
    %373 = vmatpush2.msra.mxu0 0.0
    %374 = vmatprep.subr.mxu0 0.0
    %375 = vmatpush2.msra.mxu0 0.0
    %376 = vmatprep.mubr.f32.mxu0 0.0
    %377 = vmatmul.mubr.f32.gmra.mxu0 %v280
    %v378 = vpop.f32.mrf.mxu0
    %v379 = vadd.f32 0.0, %v378
    %v380 = vpop.f32.mrf.mxu0
    %381 = vmatprep.mubr.f32.mxu0 0.0
    %382 = vmatmul.mubr.f32.gmra.mxu0 %v282
    %v383 = vpop.f32.mrf.mxu0
    %v384 = vadd.f32 0.0, %v383
    %v385 = vpop.f32.mrf.mxu0
    %386 = vmatprep.mubr.f32.mxu0 0.0
    %387 = vmatmul.mubr.f32.gmra.mxu0 %v284
    %v388 = vpop.f32.mrf.mxu0
    %v389 = vadd.f32 0.0, %v388
    %v390 = vpop.f32.mrf.mxu0
    %391 = vmatprep.mubr.f32.mxu0 0.0
    %392 = vmatmul.mubr.f32.gmra.mxu0 %v286
    %v393 = vpop.f32.mrf.mxu0
    %v394 = vadd.f32 0.0, %v393
    %v395 = vpop.f32.mrf.mxu0
    %396 = vmatprep.mubr.f32.mxu0 0.0
    %397 = vmatmul.mubr.f32.gmra.mxu0 %v288
    %v398 = vpop.f32.mrf.mxu0
    %v399 = vadd.f32 0.0, %v398
    %v400 = vpop.f32.mrf.mxu0
    %401 = vmatprep.mubr.f32.mxu0 0.0
    %402 = vmatmul.mubr.f32.gmra.mxu0 %v290
    %v403 = vpop.f32.mrf.mxu0
    %v404 = vadd.f32 0.0, %v403
    %v405 = vpop.f32.mrf.mxu0
    %406 = vmatprep.mubr.f32.mxu0 0.0
    %407 = vmatmul.mubr.f32.gmra.mxu0 %v292
    %v408 = vpop.f32.mrf.mxu0
    %v409 = vadd.f32 0.0, %v408
    %v410 = vpop.f32.mrf.mxu0
    %411 = vmatprep.mubr.f32.mxu0 0.0
    %412 = vmatmul.mubr.f32.gmra.mxu0 %v294
    %v413 = vpop.f32.mrf.mxu0
    %v414 = vadd.f32 0.0, %v413
    %v415 = vpop.f32.mrf.mxu0
    %416 = vmatprep.mubr.f32.mxu0 0.0
    %417 = vmatmul.mubr.f32.gmra.mxu0 %v296
    %v418 = vpop.f32.mrf.mxu0
    %v419 = vadd.f32 0.0, %v418
    %v420 = vpop.f32.mrf.mxu0
    %421 = vmatprep.mubr.f32.mxu0 0.0
    %422 = vmatmul.mubr.f32.gmra.mxu0 %v298
    %v423 = vpop.f32.mrf.mxu0
    %v424 = vadd.f32 0.0, %v423
    %v425 = vpop.f32.mrf.mxu0
    %426 = vmatprep.mubr.f32.mxu0 0.0
    %427 = vmatmul.mubr.f32.gmra.mxu0 %v300
    %v428 = vpop.f32.mrf.mxu0
    %v429 = vadd.f32 0.0, %v428
    %v430 = vpop.f32.mrf.mxu0
    %431 = vmatprep.mubr.f32.mxu0 0.0
    %432 = vmatmul.mubr.f32.gmra.mxu0 %v302
    %v433 = vpop.f32.mrf.mxu0
    %v434 = vadd.f32 0.0, %v433
    %v435 = vpop.f32.mrf.mxu0
    %436 = vmatprep.mubr.f32.mxu0 0.0
    %437 = vmatmul.mubr.f32.gmra.mxu0 %v304
    %v438 = vpop.f32.mrf.mxu0
    %v439 = vadd.f32 0.0, %v438
    %v440 = vpop.f32.mrf.mxu0
    %441 = vmatprep.mubr.f32.mxu0 0.0
    %442 = vmatmul.mubr.f32.gmra.mxu0 %v306
    %v443 = vpop.f32.mrf.mxu0
    %v444 = vadd.f32 0.0, %v443
    %v445 = vpop.f32.mrf.mxu0
    %446 = vmatprep.mubr.f32.mxu0 0.0
    %447 = vmatmul.mubr.f32.gmra.mxu0 %v308
    %v448 = vpop.f32.mrf.mxu0
    %v449 = vadd.f32 0.0, %v448
    %v450 = vpop.f32.mrf.mxu0
    %451 = vmatprep.mubr.f32.mxu0 0.0
    %452 = vmatmul.mubr.f32.gmra.mxu0 %v310
    %v453 = vpop.f32.mrf.mxu0
    %v454 = vadd.f32 0.0, %v453
    %v455 = vpop.f32.mrf.mxu0
    %456 = vdwg.mxu0
    %457 = vst.msk [vmem:[#allocation4] sm:$0xff] %vm231, %v379
    %458 = vst.msk [vmem:[#allocation4 + $0x8] sm:$0xff] %vm231, %v384
    %459 = vst.msk [vmem:[#allocation4 + $0x10] sm:$0xff] %vm231, %v389
    %460 = vst.msk [vmem:[#allocation4 + $0x18] sm:$0xff] %vm231, %v394
    %461 = vst.msk [vmem:[#allocation4 + $0x20] sm:$0xff] %vm231, %v399
    %462 = vst.msk [vmem:[#allocation4 + $0x28] sm:$0xff] %vm231, %v404
    %463 = vst.msk [vmem:[#allocation4 + $0x30] sm:$0xff] %vm231, %v409
    %464 = vst.msk [vmem:[#allocation4 + $0x38] sm:$0xff] %vm231, %v414
    %465 = vst.msk [vmem:[#allocation4 + $0x40] sm:$0xff] %vm231, %v419
    %466 = vst.msk [vmem:[#allocation4 + $0x48] sm:$0xff] %vm231, %v424
    %467 = vst.msk [vmem:[#allocation4 + $0x50] sm:$0xff] %vm231, %v429
    %468 = vst.msk [vmem:[#allocation4 + $0x58] sm:$0xff] %vm231, %v434
    %469 = vst.msk [vmem:[#allocation4 + $0x60] sm:$0xff] %vm231, %v439
    %470 = vst.msk [vmem:[#allocation4 + $0x68] sm:$0xff] %vm231, %v444
    %471 = vst.msk [vmem:[#allocation4 + $0x70] sm:$0xff] %vm231, %v449
    %472 = vst.msk [vmem:[#allocation4 + $0x78] sm:$0xff] %vm231, %v454
    // Predicated region
    $region10: #{_lambda_.5} parent=1 // pred_check
      _
    $region11: #{_lambda_.5} parent=1 // pred_check_branch
      %474 = sbr.rel (0) target = $region13
    $region12: #{_lambda_.5} parent=1 // pred_region
      %s476 = ssub.s32 2048, 2048
      %477 = vsyncadd [#allocation3], %s476
      %s478 = sshll.u32 [#allocation2], 4
      %s479 = int_to_ptr.vmem [resolvable:$true] %s478
      %484 = dma.vmem_to_hbm [thread:$0]  %s479, 2048, %s2, [#allocation3], 128, 128, 8
    $region13: #{_lambda_.5} parent=1 // pred_fallthru
      _
    // Predicated region
    $region14: #{_lambda_.5} parent=1 // pred_check
      _
    $region15: #{_lambda_.5} parent=1 // pred_check_branch
      %486 = sbr.rel (0) target = $region17
    $region16: #{_lambda_.5} parent=1 // pred_region
      %s488 = ssub.s32 2048, 2048
      %489 = vsyncadd [#allocation5], %s488
      %s490 = sshll.u32 [#allocation4], 4
      %s491 = int_to_ptr.vmem [resolvable:$true] %s490
      %496 = dma.vmem_to_hbm [thread:$0]  %s491, 2048, %s3, [#allocation5], 128, 128, 8
    $region17: #{_lambda_.5} parent=1 // pred_fallthru
      _
    // Predicated region
    $region18: #{_lambda_.5} parent=1 // pred_check
      _
    $region19: #{_lambda_.5} parent=1 // pred_check_branch
      %498 = sbr.rel (0) target = $region21
    $region20: #{_lambda_.5} parent=1 // pred_region
      %499 = dma.done [#allocation3], 2048
    $region21: #{_lambda_.5} parent=1 // pred_fallthru
      _
    // Predicated region
    $region22: #{_lambda_.5} parent=1 // pred_check
      _
    $region23: #{_lambda_.5} parent=1 // pred_check_branch
      %501 = sbr.rel (0) target = $region25
    $region24: #{_lambda_.5} parent=1 // pred_region
      %502 = dma.done [#allocation5], 2048
    $region25: #{_lambda_.5} parent=1 // pred_fallthru
      _
    %503 = vsyncpa [#allocation3], 1
    %504 = vsyncpa [#allocation5], 1

// kernel: _lambda_.4
$region0: #{_lambda_.4}
  #allocation0 [shape = 'u32[]', space=smem, size = 0x4, offset = 0x4, fixed_abs, tag = 'smem constant byte address 0x4 - core index']
  #allocation1 [shape = 'u32[144,128]{1,0:T(1,128)}', space=vmem, size = 0x12000, scoped, tag = 'internal scratch']
  #allocation2 [shape = 'f32[18,18,10]{2,1,0:T(8,128)}', space=vmem, size = 0x36000, scoped, tag = 'scratch operand']
  %s0 = inlined_call_operand.vmem [shape: f32[2,16,16,10], index: 0, kind: input, shape index: {}]
  %s1 = inlined_call_operand.vmem [shape: f32[3,3,10,10], index: 1, kind: input, shape index: {}]
  %s2 = inlined_call_operand.vmem [shape: f32[1,10], index: 2, kind: input, shape index: {}]
  %s3 = inlined_call_operand.vmem [shape: f32[3,3,10,10], index: 3, kind: input, shape index: {}]
  %s4 = inlined_call_operand.vmem [shape: f32[1,10], index: 4, kind: input, shape index: {}]
  %s5 = inlined_call_operand.vmem [shape: f32[10,10], index: 5, kind: input, shape index: {}]
  %s6 = inlined_call_operand.vmem [shape: f32[1,10], index: 6, kind: input, shape index: {}]
  %s7 = inlined_call_operand.vmem [shape: f32[10,10], index: 7, kind: input, shape index: {}]
  %s8 = inlined_call_operand.vmem [shape: f32[1,10], index: 8, kind: input, shape index: {}]
  %s9 = inlined_call_operand.vmem [shape: f32[10,10], index: 9, kind: input, shape index: {}]
  %s10 = inlined_call_operand.vmem [shape: f32[1,10], index: 10, kind: input, shape index: {}]
  %s11 = inlined_call_operand.vmem [shape: f32[10,10], index: 11, kind: input, shape index: {}]
  %s12 = inlined_call_operand.vmem [shape: f32[1,10], index: 12, kind: input, shape index: {}]
  %s13 = inlined_call_operand.vmem [shape: f32[10,10], index: 13, kind: input, shape index: {}]
  %s14 = inlined_call_operand.vmem [shape: f32[1,10], index: 14, kind: input, shape index: {}]
  %s15 = inlined_call_operand.vmem [shape: f32[10,6], index: 15, kind: input, shape index: {}]
  %s16 = inlined_call_operand.vmem [shape: f32[1,6], index: 16, kind: input, shape index: {}]
  %s17 = inlined_call_operand.vmem [shape: f32[2,16,16,6], index: 17, kind: output, shape index: {}]
  %s18 = sld [smem:[#allocation0]]
  $region101: #{_lambda_.4} parent=0
    _
  %s20 = ssub.s32 1, %s18
  %s21 = scalar_select 0, %s20, %s18
  loop: start=0, step=1, limit=4
  $region2: #{_lambda_.4} parent=0 // loop_pre_header
    _
  $region3: #{_lambda_.4} parent=0 // loop_header
    %s23 = sphi 0, %s27
    %p24 = scmp.ge.s32.totalorder %s23, 4
    %s33 = sphi 0, %s35
    %s36 = sphi 0, %s33
    %s37 = sphi 0, %s36
    %s53 = sphi 0, %s37
    %s57 = sphi 0, %s57
    %s59 = sphi 0, %s57
    %s60 = sphi 0, %s59
    %s74 = sphi 0, %s60
    %s78 = sphi 0, %s78
    %s80 = sphi 0, %s78
    %s81 = sphi 0, %s80
    %s95 = sphi 0, %s81
    %s99 = sphi 0, %s99
    %s101 = sphi 0, %s99
    %s102 = sphi 0, %s101
    %s116 = sphi 0, %s102
    %s120 = sphi 0, %s120
    %s122 = sphi 0, %s120
    %s123 = sphi 0, %s122
    %s137 = sphi 0, %s123
    %s141 = sphi 0, %s141
    %s143 = sphi 0, %s141
    %s144 = sphi 0, %s143
    %s158 = sphi 0, %s144
    %s162 = sphi 0, %s162
    %s164 = sphi 0, %s162
    %s165 = sphi 0, %s164
    %s179 = sphi 0, %s165
    %s183 = sphi 0, %s183
    %s185 = sphi 0, %s183
    %s186 = sphi 0, %s185
    %s200 = sphi 0, %s186
    %s204 = sphi 0, %s204
    %s206 = sphi 0, %s204
    %s207 = sphi 0, %s206
    %s221 = sphi 0, %s207
    %s225 = sphi 0, %s225
    %s227 = sphi 0, %s225
    %s228 = sphi 0, %s227
    %s242 = sphi 0, %s228
    %s246 = sphi 0, %s246
    %s248 = sphi 0, %s246
    %s249 = sphi 0, %s248
    %s263 = sphi 0, %s249
    %s267 = sphi 0, %s267
    %s269 = sphi 0, %s267
    %s270 = sphi 0, %s269
    %s284 = sphi 0, %s270
    %s288 = sphi 0, %s288
    %s290 = sphi 0, %s288
    %s291 = sphi 0, %s290
    %s305 = sphi 0, %s291
    %s309 = sphi 0, %s309
    %s311 = sphi 0, %s309
    %s312 = sphi 0, %s311
    %s326 = sphi 0, %s312
    %s330 = sphi 0, %s330
    %s332 = sphi 0, %s330
    %s333 = sphi 0, %s332
    %s347 = sphi 0, %s333
    %s351 = sphi 0, %s351
    %s353 = sphi 0, %s351
    %s354 = sphi 0, %s353
    %s368 = sphi 0, %s354
    %s372 = sphi 0, %s372
    %s374 = sphi 0, %s372
    %s375 = sphi 0, %s374
    %s389 = sphi 0, %s375
    %s395 = sphi 0, %s397
    %s398 = sphi 0, %s395
    %s399 = sphi 0, %s398
    %s415 = sphi 0, %s399
  $region4: #{_lambda_.4} parent=0 // loop_header_branch
    %26 = sbr.rel (%p24) target = $region8
  $region5: #{_lambda_.4} parent=0 // loop_body
    %s28 = ssub.s32 %s23, 1
    %s29 = ssub.s32 %s23, 2
    %s30 = sadd.s32 %s23, 1
    %s31 = ssub.s32 %s23, %s30
    %p32 = scmp.eq.s32.totalorder %s31, 0
    %s34 = sadd.s32 %s33, 1
    %s35 = scalar_select %p32, %s33, %s34
    %p38 = pneg %p32
    %p39 = scmp.eq.s32.totalorder %s23, 1
    %p40 = por %p38, %p39
    %p41 = scmp.ne.s32.totalorder %s33, %s36
    %p42 = scmp.eq.s32.totalorder %s23, 0
    %p43 = por %p41, %p42
    %p44 = scmp.ne.s32.totalorder %s33, %s36
    %p45 = scmp.eq.s32.totalorder %s28, 1
    %p46 = por %p44, %p45
    %p47 = scmp.ne.s32.totalorder %s36, %s37
    %p48 = scmp.eq.s32.totalorder %s28, 0
    %p49 = por %p47, %p48
    %p50 = scmp.ne.s32.totalorder %s36, %s37
    %p51 = scmp.eq.s32.totalorder %s29, 1
    %p52 = por %p50, %p51
    %p54 = scmp.ne.s32.totalorder %s37, %s53
    %p55 = scmp.eq.s32.totalorder %s29, 0
    %p56 = por %p54, %p55
    %s58 = sadd.s32 %s57, 1
    %p61 = scmp.eq.s32.totalorder %s23, 1
    %p62 = scmp.ne.s32.totalorder %s57, %s59
    %p63 = scmp.eq.s32.totalorder %s23, 0
    %p64 = por %p62, %p63
    %p65 = scmp.ne.s32.totalorder %s57, %s59
    %p66 = scmp.eq.s32.totalorder %s28, 1
    %p67 = por %p65, %p66
    %p68 = scmp.ne.s32.totalorder %s59, %s60
    %p69 = scmp.eq.s32.totalorder %s28, 0
    %p70 = por %p68, %p69
    %p71 = scmp.ne.s32.totalorder %s59, %s60
    %p72 = scmp.eq.s32.totalorder %s29, 1
    %p73 = por %p71, %p72
    %p75 = scmp.ne.s32.totalorder %s60, %s74
    %p76 = scmp.eq.s32.totalorder %s29, 0
    %p77 = por %p75, %p76
    %s79 = sadd.s32 %s78, 1
    %p82 = scmp.eq.s32.totalorder %s23, 1
    %p83 = scmp.ne.s32.totalorder %s78, %s80
    %p84 = scmp.eq.s32.totalorder %s23, 0
    %p85 = por %p83, %p84
    %p86 = scmp.ne.s32.totalorder %s78, %s80
    %p87 = scmp.eq.s32.totalorder %s28, 1
    %p88 = por %p86, %p87
    %p89 = scmp.ne.s32.totalorder %s80, %s81
    %p90 = scmp.eq.s32.totalorder %s28, 0
    %p91 = por %p89, %p90
    %p92 = scmp.ne.s32.totalorder %s80, %s81
    %p93 = scmp.eq.s32.totalorder %s29, 1
    %p94 = por %p92, %p93
    %p96 = scmp.ne.s32.totalorder %s81, %s95
    %p97 = scmp.eq.s32.totalorder %s29, 0
    %p98 = por %p96, %p97
    %s100 = sadd.s32 %s99, 1
    %p103 = scmp.eq.s32.totalorder %s23, 1
    %p104 = scmp.ne.s32.totalorder %s99, %s101
    %p105 = scmp.eq.s32.totalorder %s23, 0
    %p106 = por %p104, %p105
    %p107 = scmp.ne.s32.totalorder %s99, %s101
    %p108 = scmp.eq.s32.totalorder %s28, 1
    %p109 = por %p107, %p108
    %p110 = scmp.ne.s32.totalorder %s101, %s102
    %p111 = scmp.eq.s32.totalorder %s28, 0
    %p112 = por %p110, %p111
    %p113 = scmp.ne.s32.totalorder %s101, %s102
    %p114 = scmp.eq.s32.totalorder %s29, 1
    %p115 = por %p113, %p114
    %p117 = scmp.ne.s32.totalorder %s102, %s116
    %p118 = scmp.eq.s32.totalorder %s29, 0
    %p119 = por %p117, %p118
    %s121 = sadd.s32 %s120, 1
    %p124 = scmp.eq.s32.totalorder %s23, 1
    %p125 = scmp.ne.s32.totalorder %s120, %s122
    %p126 = scmp.eq.s32.totalorder %s23, 0
    %p127 = por %p125, %p126
    %p128 = scmp.ne.s32.totalorder %s120, %s122
    %p129 = scmp.eq.s32.totalorder %s28, 1
    %p130 = por %p128, %p129
    %p131 = scmp.ne.s32.totalorder %s122, %s123
    %p132 = scmp.eq.s32.totalorder %s28, 0
    %p133 = por %p131, %p132
    %p134 = scmp.ne.s32.totalorder %s122, %s123
    %p135 = scmp.eq.s32.totalorder %s29, 1
    %p136 = por %p134, %p135
    %p138 = scmp.ne.s32.totalorder %s123, %s137
    %p139 = scmp.eq.s32.totalorder %s29, 0
    %p140 = por %p138, %p139
    %s142 = sadd.s32 %s141, 1
    %p145 = scmp.eq.s32.totalorder %s23, 1
    %p146 = scmp.ne.s32.totalorder %s141, %s143
    %p147 = scmp.eq.s32.totalorder %s23, 0
    %p148 = por %p146, %p147
    %p149 = scmp.ne.s32.totalorder %s141, %s143
    %p150 = scmp.eq.s32.totalorder %s28, 1
    %p151 = por %p149, %p150
    %p152 = scmp.ne.s32.totalorder %s143, %s144
    %p153 = scmp.eq.s32.totalorder %s28, 0
    %p154 = por %p152, %p153
    %p155 = scmp.ne.s32.totalorder %s143, %s144
    %p156 = scmp.eq.s32.totalorder %s29, 1
    %p157 = por %p155, %p156
    %p159 = scmp.ne.s32.totalorder %s144, %s158
    %p160 = scmp.eq.s32.totalorder %s29, 0
    %p161 = por %p159, %p160
    %s163 = sadd.s32 %s162, 1
    %p166 = scmp.eq.s32.totalorder %s23, 1
    %p167 = scmp.ne.s32.totalorder %s162, %s164
    %p168 = scmp.eq.s32.totalorder %s23, 0
    %p169 = por %p167, %p168
    %p170 = scmp.ne.s32.totalorder %s162, %s164
    %p171 = scmp.eq.s32.totalorder %s28, 1
    %p172 = por %p170, %p171
    %p173 = scmp.ne.s32.totalorder %s164, %s165
    %p174 = scmp.eq.s32.totalorder %s28, 0
    %p175 = por %p173, %p174
    %p176 = scmp.ne.s32.totalorder %s164, %s165
    %p177 = scmp.eq.s32.totalorder %s29, 1
    %p178 = por %p176, %p177
    %p180 = scmp.ne.s32.totalorder %s165, %s179
    %p181 = scmp.eq.s32.totalorder %s29, 0
    %p182 = por %p180, %p181
    %s184 = sadd.s32 %s183, 1
    %p187 = scmp.eq.s32.totalorder %s23, 1
    %p188 = scmp.ne.s32.totalorder %s183, %s185
    %p189 = scmp.eq.s32.totalorder %s23, 0
    %p190 = por %p188, %p189
    %p191 = scmp.ne.s32.totalorder %s183, %s185
    %p192 = scmp.eq.s32.totalorder %s28, 1
    %p193 = por %p191, %p192
    %p194 = scmp.ne.s32.totalorder %s185, %s186
    %p195 = scmp.eq.s32.totalorder %s28, 0
    %p196 = por %p194, %p195
    %p197 = scmp.ne.s32.totalorder %s185, %s186
    %p198 = scmp.eq.s32.totalorder %s29, 1
    %p199 = por %p197, %p198
    %p201 = scmp.ne.s32.totalorder %s186, %s200
    %p202 = scmp.eq.s32.totalorder %s29, 0
    %p203 = por %p201, %p202
    %s205 = sadd.s32 %s204, 1
    %p208 = scmp.eq.s32.totalorder %s23, 1
    %p209 = scmp.ne.s32.totalorder %s204, %s206
    %p210 = scmp.eq.s32.totalorder %s23, 0
    %p211 = por %p209, %p210
    %p212 = scmp.ne.s32.totalorder %s204, %s206
    %p213 = scmp.eq.s32.totalorder %s28, 1
    %p214 = por %p212, %p213
    %p215 = scmp.ne.s32.totalorder %s206, %s207
    %p216 = scmp.eq.s32.totalorder %s28, 0
    %p217 = por %p215, %p216
    %p218 = scmp.ne.s32.totalorder %s206, %s207
    %p219 = scmp.eq.s32.totalorder %s29, 1
    %p220 = por %p218, %p219
    %p222 = scmp.ne.s32.totalorder %s207, %s221
    %p223 = scmp.eq.s32.totalorder %s29, 0
    %p224 = por %p222, %p223
    %s226 = sadd.s32 %s225, 1
    %p229 = scmp.eq.s32.totalorder %s23, 1
    %p230 = scmp.ne.s32.totalorder %s225, %s227
    %p231 = scmp.eq.s32.totalorder %s23, 0
    %p232 = por %p230, %p231
    %p233 = scmp.ne.s32.totalorder %s225, %s227
    %p234 = scmp.eq.s32.totalorder %s28, 1
    %p235 = por %p233, %p234
    %p236 = scmp.ne.s32.totalorder %s227, %s228
    %p237 = scmp.eq.s32.totalorder %s28, 0
    %p238 = por %p236, %p237
    %p239 = scmp.ne.s32.totalorder %s227, %s228
    %p240 = scmp.eq.s32.totalorder %s29, 1
    %p241 = por %p239, %p240
    %p243 = scmp.ne.s32.totalorder %s228, %s242
    %p244 = scmp.eq.s32.totalorder %s29, 0
    %p245 = por %p243, %p244
    %s247 = sadd.s32 %s246, 1
    %p250 = scmp.eq.s32.totalorder %s23, 1
    %p251 = scmp.ne.s32.totalorder %s246, %s248
    %p252 = scmp.eq.s32.totalorder %s23, 0
    %p253 = por %p251, %p252
    %p254 = scmp.ne.s32.totalorder %s246, %s248
    %p255 = scmp.eq.s32.totalorder %s28, 1
    %p256 = por %p254, %p255
    %p257 = scmp.ne.s32.totalorder %s248, %s249
    %p258 = scmp.eq.s32.totalorder %s28, 0
    %p259 = por %p257, %p258
    %p260 = scmp.ne.s32.totalorder %s248, %s249
    %p261 = scmp.eq.s32.totalorder %s29, 1
    %p262 = por %p260, %p261
    %p264 = scmp.ne.s32.totalorder %s249, %s263
    %p265 = scmp.eq.s32.totalorder %s29, 0
    %p266 = por %p264, %p265
    %s268 = sadd.s32 %s267, 1
    %p271 = scmp.eq.s32.totalorder %s23, 1
    %p272 = scmp.ne.s32.totalorder %s267, %s269
    %p273 = scmp.eq.s32.totalorder %s23, 0
    %p274 = por %p272, %p273
    %p275 = scmp.ne.s32.totalorder %s267, %s269
    %p276 = scmp.eq.s32.totalorder %s28, 1
    %p277 = por %p275, %p276
    %p278 = scmp.ne.s32.totalorder %s269, %s270
    %p279 = scmp.eq.s32.totalorder %s28, 0
    %p280 = por %p278, %p279
    %p281 = scmp.ne.s32.totalorder %s269, %s270
    %p282 = scmp.eq.s32.totalorder %s29, 1
    %p283 = por %p281, %p282
    %p285 = scmp.ne.s32.totalorder %s270, %s284
    %p286 = scmp.eq.s32.totalorder %s29, 0
    %p287 = por %p285, %p286
    %s289 = sadd.s32 %s288, 1
    %p292 = scmp.eq.s32.totalorder %s23, 1
    %p293 = scmp.ne.s32.totalorder %s288, %s290
    %p294 = scmp.eq.s32.totalorder %s23, 0
    %p295 = por %p293, %p294
    %p296 = scmp.ne.s32.totalorder %s288, %s290
    %p297 = scmp.eq.s32.totalorder %s28, 1
    %p298 = por %p296, %p297
    %p299 = scmp.ne.s32.totalorder %s290, %s291
    %p300 = scmp.eq.s32.totalorder %s28, 0
    %p301 = por %p299, %p300
    %p302 = scmp.ne.s32.totalorder %s290, %s291
    %p303 = scmp.eq.s32.totalorder %s29, 1
    %p304 = por %p302, %p303
    %p306 = scmp.ne.s32.totalorder %s291, %s305
    %p307 = scmp.eq.s32.totalorder %s29, 0
    %p308 = por %p306, %p307
    %s310 = sadd.s32 %s309, 1
    %p313 = scmp.eq.s32.totalorder %s23, 1
    %p314 = scmp.ne.s32.totalorder %s309, %s311
    %p315 = scmp.eq.s32.totalorder %s23, 0
    %p316 = por %p314, %p315
    %p317 = scmp.ne.s32.totalorder %s309, %s311
    %p318 = scmp.eq.s32.totalorder %s28, 1
    %p319 = por %p317, %p318
    %p320 = scmp.ne.s32.totalorder %s311, %s312
    %p321 = scmp.eq.s32.totalorder %s28, 0
    %p322 = por %p320, %p321
    %p323 = scmp.ne.s32.totalorder %s311, %s312
    %p324 = scmp.eq.s32.totalorder %s29, 1
    %p325 = por %p323, %p324
    %p327 = scmp.ne.s32.totalorder %s312, %s326
    %p328 = scmp.eq.s32.totalorder %s29, 0
    %p329 = por %p327, %p328
    %s331 = sadd.s32 %s330, 1
    %p334 = scmp.eq.s32.totalorder %s23, 1
    %p335 = scmp.ne.s32.totalorder %s330, %s332
    %p336 = scmp.eq.s32.totalorder %s23, 0
    %p337 = por %p335, %p336
    %p338 = scmp.ne.s32.totalorder %s330, %s332
    %p339 = scmp.eq.s32.totalorder %s28, 1
    %p340 = por %p338, %p339
    %p341 = scmp.ne.s32.totalorder %s332, %s333
    %p342 = scmp.eq.s32.totalorder %s28, 0
    %p343 = por %p341, %p342
    %p344 = scmp.ne.s32.totalorder %s332, %s333
    %p345 = scmp.eq.s32.totalorder %s29, 1
    %p346 = por %p344, %p345
    %p348 = scmp.ne.s32.totalorder %s333, %s347
    %p349 = scmp.eq.s32.totalorder %s29, 0
    %p350 = por %p348, %p349
    %s352 = sadd.s32 %s351, 1
    %p355 = scmp.eq.s32.totalorder %s23, 1
    %p356 = scmp.ne.s32.totalorder %s351, %s353
    %p357 = scmp.eq.s32.totalorder %s23, 0
    %p358 = por %p356, %p357
    %p359 = scmp.ne.s32.totalorder %s351, %s353
    %p360 = scmp.eq.s32.totalorder %s28, 1
    %p361 = por %p359, %p360
    %p362 = scmp.ne.s32.totalorder %s353, %s354
    %p363 = scmp.eq.s32.totalorder %s28, 0
    %p364 = por %p362, %p363
    %p365 = scmp.ne.s32.totalorder %s353, %s354
    %p366 = scmp.eq.s32.totalorder %s29, 1
    %p367 = por %p365, %p366
    %p369 = scmp.ne.s32.totalorder %s354, %s368
    %p370 = scmp.eq.s32.totalorder %s29, 0
    %p371 = por %p369, %p370
    %s373 = sadd.s32 %s372, 1
    %p376 = scmp.eq.s32.totalorder %s23, 1
    %p377 = scmp.ne.s32.totalorder %s372, %s374
    %p378 = scmp.eq.s32.totalorder %s23, 0
    %p379 = por %p377, %p378
    %p380 = scmp.ne.s32.totalorder %s372, %s374
    %p381 = scmp.eq.s32.totalorder %s28, 1
    %p382 = por %p380, %p381
    %p383 = scmp.ne.s32.totalorder %s374, %s375
    %p384 = scmp.eq.s32.totalorder %s28, 0
    %p385 = por %p383, %p384
    %p386 = scmp.ne.s32.totalorder %s374, %s375
    %p387 = scmp.eq.s32.totalorder %s29, 1
    %p388 = por %p386, %p387
    %p390 = scmp.ne.s32.totalorder %s375, %s389
    %p391 = scmp.eq.s32.totalorder %s29, 0
    %p392 = por %p390, %p391
    %s393 = ssub.s32 %s23, %s30
    %p394 = scmp.eq.s32.totalorder %s393, 0
    %s396 = sadd.s32 %s395, 1
    %s397 = scalar_select %p394, %s395, %s396
    %p400 = pneg %p394
    %p401 = scmp.eq.s32.totalorder %s23, 1
    %p402 = por %p400, %p401
    %p403 = scmp.ne.s32.totalorder %s395, %s398
    %p404 = scmp.eq.s32.totalorder %s23, 0
    %p405 = por %p403, %p404
    %p406 = scmp.ne.s32.totalorder %s395, %s398
    %p407 = scmp.eq.s32.totalorder %s28, 1
    %p408 = por %p406, %p407
    %p409 = scmp.ne.s32.totalorder %s398, %s399
    %p410 = scmp.eq.s32.totalorder %s28, 0
    %p411 = por %p409, %p410
    %p412 = scmp.ne.s32.totalorder %s398, %s399
    %p413 = scmp.eq.s32.totalorder %s29, 1
    %p414 = por %p412, %p413
    %p416 = scmp.ne.s32.totalorder %s399, %s415
    %p417 = scmp.eq.s32.totalorder %s29, 0
    %p418 = por %p416, %p417
    %p419 = scmp.le.s32.totalorder 1, %s23
    %p420 = scmp.lt.s32.totalorder %s23, 3
    %p421 = pnand %p419, %p420
    %p422 = pneg %p421
    // Predicated region
    $region9: #{_lambda_.4} parent=5 // pred_check
      _
    $region10: #{_lambda_.4} parent=5 // pred_check_branch
      %424 = sbr.rel (%p421) target = $region12
    $region11: #{_lambda_.4} parent=5 // pred_region
      %s425 = ssub.s32 %s23, 1
      // Predicated region
      $region13: #{_lambda_.4} parent=11 // pred_check
        %p426 = pneg %p70
      $region14: #{_lambda_.4} parent=11 // pred_check_branch
        %428 = sbr.rel (%p426) target = $region16
      $region15: #{_lambda_.4} parent=11 // pred_region
        _
      $region16: #{_lambda_.4} parent=11 // pred_fallthru
        _
      // Predicated region
      $region17: #{_lambda_.4} parent=11 // pred_check
        %p429 = pneg %p91
      $region18: #{_lambda_.4} parent=11 // pred_check_branch
        %431 = sbr.rel (%p429) target = $region20
      $region19: #{_lambda_.4} parent=11 // pred_region
        _
      $region20: #{_lambda_.4} parent=11 // pred_fallthru
        _
      // Predicated region
      $region21: #{_lambda_.4} parent=11 // pred_check
        %p432 = pneg %p112
      $region22: #{_lambda_.4} parent=11 // pred_check_branch
        %434 = sbr.rel (%p432) target = $region24
      $region23: #{_lambda_.4} parent=11 // pred_region
        _
      $region24: #{_lambda_.4} parent=11 // pred_fallthru
        _
      // Predicated region
      $region25: #{_lambda_.4} parent=11 // pred_check
        %p435 = pneg %p133
      $region26: #{_lambda_.4} parent=11 // pred_check_branch
        %437 = sbr.rel (%p435) target = $region28
      $region27: #{_lambda_.4} parent=11 // pred_region
        _
      $region28: #{_lambda_.4} parent=11 // pred_fallthru
        _
      // Predicated region
      $region29: #{_lambda_.4} parent=11 // pred_check
        %p438 = pneg %p154
      $region30: #{_lambda_.4} parent=11 // pred_check_branch
        %440 = sbr.rel (%p438) target = $region32
      $region31: #{_lambda_.4} parent=11 // pred_region
        _
      $region32: #{_lambda_.4} parent=11 // pred_fallthru
        _
      // Predicated region
      $region33: #{_lambda_.4} parent=11 // pred_check
        %p441 = pneg %p175
      $region34: #{_lambda_.4} parent=11 // pred_check_branch
        %443 = sbr.rel (%p441) target = $region36
      $region35: #{_lambda_.4} parent=11 // pred_region
        _
      $region36: #{_lambda_.4} parent=11 // pred_fallthru
        _
      // Predicated region
      $region37: #{_lambda_.4} parent=11 // pred_check
        %p444 = pneg %p196
      $region38: #{_lambda_.4} parent=11 // pred_check_branch
        %446 = sbr.rel (%p444) target = $region40
      $region39: #{_lambda_.4} parent=11 // pred_region
        _
      $region40: #{_lambda_.4} parent=11 // pred_fallthru
        _
      // Predicated region
      $region41: #{_lambda_.4} parent=11 // pred_check
        %p447 = pneg %p217
      $region42: #{_lambda_.4} parent=11 // pred_check_branch
        %449 = sbr.rel (%p447) target = $region44
      $region43: #{_lambda_.4} parent=11 // pred_region
        _
      $region44: #{_lambda_.4} parent=11 // pred_fallthru
        _
      // Predicated region
      $region45: #{_lambda_.4} parent=11 // pred_check
        %p450 = pneg %p238
      $region46: #{_lambda_.4} parent=11 // pred_check_branch
        %452 = sbr.rel (%p450) target = $region48
      $region47: #{_lambda_.4} parent=11 // pred_region
        _
      $region48: #{_lambda_.4} parent=11 // pred_fallthru
        _
      // Predicated region
      $region49: #{_lambda_.4} parent=11 // pred_check
        %p453 = pneg %p259
      $region50: #{_lambda_.4} parent=11 // pred_check_branch
        %455 = sbr.rel (%p453) target = $region52
      $region51: #{_lambda_.4} parent=11 // pred_region
        _
      $region52: #{_lambda_.4} parent=11 // pred_fallthru
        _
      // Predicated region
      $region53: #{_lambda_.4} parent=11 // pred_check
        %p456 = pneg %p280
      $region54: #{_lambda_.4} parent=11 // pred_check_branch
        %458 = sbr.rel (%p456) target = $region56
      $region55: #{_lambda_.4} parent=11 // pred_region
        _
      $region56: #{_lambda_.4} parent=11 // pred_fallthru
        _
      // Predicated region
      $region57: #{_lambda_.4} parent=11 // pred_check
        %p459 = pneg %p301
      $region58: #{_lambda_.4} parent=11 // pred_check_branch
        %461 = sbr.rel (%p459) target = $region60
      $region59: #{_lambda_.4} parent=11 // pred_region
        _
      $region60: #{_lambda_.4} parent=11 // pred_fallthru
        _
      // Predicated region
      $region61: #{_lambda_.4} parent=11 // pred_check
        %p462 = pneg %p322
      $region62: #{_lambda_.4} parent=11 // pred_check_branch
        %464 = sbr.rel (%p462) target = $region64
      $region63: #{_lambda_.4} parent=11 // pred_region
        _
      $region64: #{_lambda_.4} parent=11 // pred_fallthru
        _
      // Predicated region
      $region65: #{_lambda_.4} parent=11 // pred_check
        %p465 = pneg %p343
      $region66: #{_lambda_.4} parent=11 // pred_check_branch
        %467 = sbr.rel (%p465) target = $region68
      $region67: #{_lambda_.4} parent=11 // pred_region
        _
      $region68: #{_lambda_.4} parent=11 // pred_fallthru
        _
      // Predicated region
      $region69: #{_lambda_.4} parent=11 // pred_check
        %p468 = pneg %p364
      $region70: #{_lambda_.4} parent=11 // pred_check_branch
        %470 = sbr.rel (%p468) target = $region72
      $region71: #{_lambda_.4} parent=11 // pred_region
        _
      $region72: #{_lambda_.4} parent=11 // pred_fallthru
        _
      // Predicated region
      $region73: #{_lambda_.4} parent=11 // pred_check
        %p471 = pneg %p385
      $region74: #{_lambda_.4} parent=11 // pred_check_branch
        %473 = sbr.rel (%p471) target = $region76
      $region75: #{_lambda_.4} parent=11 // pred_region
        _
      $region76: #{_lambda_.4} parent=11 // pred_fallthru
        _
    $region12: #{_lambda_.4} parent=5 // pred_fallthru
      _
    %p474 = scmp.lt.s32.totalorder %s23, 2
    // Predicated region
    $region77: #{_lambda_.4} parent=5 // pred_check
      %p475 = pneg %p474
    $region78: #{_lambda_.4} parent=5 // pred_check_branch
      %477 = sbr.rel (%p475) target = $region80
    $region79: #{_lambda_.4} parent=5 // pred_region
      // Predicated region
      $region81: #{_lambda_.4} parent=79 // pred_check
        %p478 = pneg %p43
      $region82: #{_lambda_.4} parent=79 // pred_check_branch
        %480 = sbr.rel (%p478) target = $region84
      $region83: #{_lambda_.4} parent=79 // pred_region
        %p481 = scmp.lt.s32.totalorder %s23, 1
        %s482 = scalar_select %p481, %s23, 1
        %s483 = smul.addr %s482, 32
        %s484 = smul.addr %s483, 8
        %s485 = scalar_lea.vmem %s0, %s484
      $region84: #{_lambda_.4} parent=79 // pred_fallthru
        _
    $region80: #{_lambda_.4} parent=5 // pred_fallthru
      _
    %p486 = scmp.le.s32.totalorder 1, %s23
    %p487 = scmp.lt.s32.totalorder %s23, 3
    %p488 = pnand %p486, %p487
    %p489 = pneg %p488
    // Predicated region
    $region85: #{_lambda_.4} parent=5 // pred_check
      _
    $region86: #{_lambda_.4} parent=5 // pred_check_branch
      %491 = sbr.rel (%p488) target = $region88
    $region87: #{_lambda_.4} parent=5 // pred_region
      %s492 = ssub.s32 %s23, 1
      %p493 = scmp.lt.s32.totalorder %s28, 1
      %s494 = scalar_select %p493, %s28, 1
      %s495 = smul.addr %s494, 32
      %s496 = smul.addr %s495, 8
      %s497 = scalar_lea.vmem %s0, %s496
      %p498 = pneg %p49
      %p499 = pneg %p46
      %p500 = pneg %p70
      %p501 = pneg %p67
      %p502 = pneg %p91
      %p503 = pneg %p88
      %p504 = pneg %p112
      %p505 = pneg %p109
      %p506 = pneg %p133
      %p507 = pneg %p130
      %p508 = pneg %p154
      %p509 = pneg %p151
      %p510 = pneg %p175
      %p511 = pneg %p172
      %p512 = pneg %p196
      %p513 = pneg %p193
      %p514 = pneg %p217
      %p515 = pneg %p214
      %p516 = pneg %p238
      %p517 = pneg %p235
      %p518 = pneg %p259
      %p519 = pneg %p256
      %p520 = pneg %p280
      %p521 = pneg %p277
      %p522 = pneg %p301
      %p523 = pneg %p298
      %p524 = pneg %p322
      %p525 = pneg %p319
      %p526 = pneg %p343
      %p527 = pneg %p340
      %p528 = pneg %p364
      %p529 = pneg %p361
      %p530 = pneg %p385
      %p531 = pneg %p382
      %p532 = pneg %p411
      %p533 = pneg %p408
      %p534 = scmp.lt.s32.totalorder %s28, 1
      %s535 = scalar_select %p534, %s28, 1
      %s536 = smul.addr %s535, 32
      %s537 = smul.addr %s536, 8
      %s538 = scalar_lea.vmem %s17, %s537
      %p539 = scmp.lt.s32.totalorder %s28, 1
      %s540 = scalar_select %p539, %s28, 1
      %s541 = smul.addr %s540, 32
      %s542 = smul.addr %s541, 8
      %s543 = scalar_lea.vmem %s0, %s542
      %p544 = scmp.lt.s32.totalorder %s28, 1
      %s545 = scalar_select %p544, %s28, 1
      %s546 = smul.addr %s545, 32
      %s547 = smul.addr %s546, 8
      %s548 = scalar_lea.vmem %s17, %s547
      %vm549 = vcmask 80896
      %550 = vst.msk [vmem:[#allocation2] sm:$0xff] %vm549, 0.0
      %551 = vst.msk [vmem:[#allocation2 + $0x8] sm:$0xff] %vm549, 0.0
      %vm552 = vcmask 74752
      %553 = vst.msk [vmem:[#allocation2 + $0x10] sm:$0x3] %vm552, 0.0
      %554 = vst.msk [vmem:[#allocation2 + $0x18] sm:$0xff] %vm549, 0.0
      %555 = vst.msk [vmem:[#allocation2 + $0x20] sm:$0xff] %vm549, 0.0
      %556 = vst.msk [vmem:[#allocation2 + $0x28] sm:$0x3] %vm552, 0.0
      %557 = vst.msk [vmem:[#allocation2 + $0x30] sm:$0xff] %vm549, 0.0
      %558 = vst.msk [vmem:[#allocation2 + $0x38] sm:$0xff] %vm549, 0.0
      %559 = vst.msk [vmem:[#allocation2 + $0x40] sm:$0x3] %vm552, 0.0
      %560 = vst.msk [vmem:[#allocation2 + $0x48] sm:$0xff] %vm549, 0.0
      %561 = vst.msk [vmem:[#allocation2 + $0x50] sm:$0xff] %vm549, 0.0
      %562 = vst.msk [vmem:[#allocation2 + $0x58] sm:$0x3] %vm552, 0.0
      %563 = vst.msk [vmem:[#allocation2 + $0x60] sm:$0xff] %vm549, 0.0
      %564 = vst.msk [vmem:[#allocation2 + $0x68] sm:$0xff] %vm549, 0.0
      %565 = vst.msk [vmem:[#allocation2 + $0x70] sm:$0x3] %vm552, 0.0
      %566 = vst.msk [vmem:[#allocation2 + $0x78] sm:$0xff] %vm549, 0.0
      %567 = vst.msk [vmem:[#allocation2 + $0x80] sm:$0xff] %vm549, 0.0
      %568 = vst.msk [vmem:[#allocation2 + $0x88] sm:$0x3] %vm552, 0.0
      %569 = vst.msk [vmem:[#allocation2 + $0x90] sm:$0xff] %vm549, 0.0
      %570 = vst.msk [vmem:[#allocation2 + $0x98] sm:$0xff] %vm549, 0.0
      %571 = vst.msk [vmem:[#allocation2 + $0xa0] sm:$0x3] %vm552, 0.0
      %572 = vst.msk [vmem:[#allocation2 + $0xa8] sm:$0xff] %vm549, 0.0
      %573 = vst.msk [vmem:[#allocation2 + $0xb0] sm:$0xff] %vm549, 0.0
      %574 = vst.msk [vmem:[#allocation2 + $0xb8] sm:$0x3] %vm552, 0.0
      %575 = vst.msk [vmem:[#allocation2 + $0xc0] sm:$0xff] %vm549, 0.0
      %576 = vst.msk [vmem:[#allocation2 + $0xc8] sm:$0xff] %vm549, 0.0
      %577 = vst.msk [vmem:[#allocation2 + $0xd0] sm:$0x3] %vm552, 0.0
      %578 = vst.msk [vmem:[#allocation2 + $0xd8] sm:$0xff] %vm549, 0.0
      %579 = vst.msk [vmem:[#allocation2 + $0xe0] sm:$0xff] %vm549, 0.0
      %580 = vst.msk [vmem:[#allocation2 + $0xe8] sm:$0x3] %vm552, 0.0
      %581 = vst.msk [vmem:[#allocation2 + $0xf0] sm:$0xff] %vm549, 0.0
      %582 = vst.msk [vmem:[#allocation2 + $0xf8] sm:$0xff] %vm549, 0.0
      %583 = vst.msk [vmem:[#allocation2 + $0x100] sm:$0x3] %vm552, 0.0
      %584 = vst.msk [vmem:[#allocation2 + $0x108] sm:$0xff] %vm549, 0.0
      %585 = vst.msk [vmem:[#allocation2 + $0x110] sm:$0xff] %vm549, 0.0
      %586 = vst.msk [vmem:[#allocation2 + $0x118] sm:$0x3] %vm552, 0.0
      %587 = vst.msk [vmem:[#allocation2 + $0x120] sm:$0xff] %vm549, 0.0
      %588 = vst.msk [vmem:[#allocation2 + $0x128] sm:$0xff] %vm549, 0.0
      %589 = vst.msk [vmem:[#allocation2 + $0x130] sm:$0x3] %vm552, 0.0
      %590 = vst.msk [vmem:[#allocation2 + $0x138] sm:$0xff] %vm549, 0.0
      %591 = vst.msk [vmem:[#allocation2 + $0x140] sm:$0xff] %vm549, 0.0
      %592 = vst.msk [vmem:[#allocation2 + $0x148] sm:$0x3] %vm552, 0.0
      %593 = vst.msk [vmem:[#allocation2 + $0x150] sm:$0xff] %vm549, 0.0
      %594 = vst.msk [vmem:[#allocation2 + $0x158] sm:$0xff] %vm549, 0.0
      %595 = vst.msk [vmem:[#allocation2 + $0x160] sm:$0x3] %vm552, 0.0
      %596 = vst.msk [vmem:[#allocation2 + $0x168] sm:$0xff] %vm549, 0.0
      %597 = vst.msk [vmem:[#allocation2 + $0x170] sm:$0xff] %vm549, 0.0
      %598 = vst.msk [vmem:[#allocation2 + $0x178] sm:$0x3] %vm552, 0.0
      %599 = vst.msk [vmem:[#allocation2 + $0x180] sm:$0xff] %vm549, 0.0
      %600 = vst.msk [vmem:[#allocation2 + $0x188] sm:$0xff] %vm549, 0.0
      %601 = vst.msk [vmem:[#allocation2 + $0x190] sm:$0x3] %vm552, 0.0
      %602 = vst.msk [vmem:[#allocation2 + $0x198] sm:$0xff] %vm549, 0.0
      %603 = vst.msk [vmem:[#allocation2 + $0x1a0] sm:$0xff] %vm549, 0.0
      %604 = vst.msk [vmem:[#allocation2 + $0x1a8] sm:$0x3] %vm552, 0.0
      %v605 = vld [vmem:[%s543] sm:$0xff]
      %v606 = vld [vmem:[%s543 + $0x8] sm:$0xff]
      %v607 = vld [vmem:[%s543 + $0x10] sm:$0xff]
      %v608 = vld [vmem:[%s543 + $0x18] sm:$0xff]
      %v609 = vld [vmem:[%s543 + $0x20] sm:$0xff]
      %v610 = vld [vmem:[%s543 + $0x28] sm:$0xff]
      %v611 = vld [vmem:[%s543 + $0x30] sm:$0xff]
      %v612 = vld [vmem:[%s543 + $0x38] sm:$0xff]
      %v613 = vld [vmem:[%s543 + $0x40] sm:$0xff]
      %v614 = vld [vmem:[%s543 + $0x48] sm:$0xff]
      %v615 = vld [vmem:[%s543 + $0x50] sm:$0xff]
      %v616 = vld [vmem:[%s543 + $0x58] sm:$0xff]
      %v617 = vld [vmem:[%s543 + $0x60] sm:$0xff]
      %v618 = vld [vmem:[%s543 + $0x68] sm:$0xff]
      %v619 = vld [vmem:[%s543 + $0x70] sm:$0xff]
      %v620 = vld [vmem:[%s543 + $0x78] sm:$0xff]
      %v621 = vld [vmem:[%s543 + $0x80] sm:$0xff]
      %v622 = vld [vmem:[%s543 + $0x88] sm:$0xff]
      %v623 = vld [vmem:[%s543 + $0x90] sm:$0xff]
      %v624 = vld [vmem:[%s543 + $0x98] sm:$0xff]
      %v625 = vld [vmem:[%s543 + $0xa0] sm:$0xff]
      %v626 = vld [vmem:[%s543 + $0xa8] sm:$0xff]
      %v627 = vld [vmem:[%s543 + $0xb0] sm:$0xff]
      %v628 = vld [vmem:[%s543 + $0xb8] sm:$0xff]
      %v629 = vld [vmem:[%s543 + $0xc0] sm:$0xff]
      %v630 = vld [vmem:[%s543 + $0xc8] sm:$0xff]
      %v631 = vld [vmem:[%s543 + $0xd0] sm:$0xff]
      %v632 = vld [vmem:[%s543 + $0xd8] sm:$0xff]
      %v633 = vld [vmem:[%s543 + $0xe0] sm:$0xff]
      %v634 = vld [vmem:[%s543 + $0xe8] sm:$0xff]
      %v635 = vld [vmem:[%s543 + $0xf0] sm:$0xff]
      %v636 = vld [vmem:[%s543 + $0xf8] sm:$0xff]
      %s637 = scalar_lea.vmem [#allocation2], 24
      %638 = vst.msk [vmem:[%s637 + $0x1] sm:$0xff] %vm549, %v605
      %639 = vst.msk [vmem:[%s637 + $0x9] sm:$0xff] %vm549, %v606
      %640 = vst.msk [vmem:[%s637 + $0x19] sm:$0xff] %vm549, %v607
      %641 = vst.msk [vmem:[%s637 + $0x21] sm:$0xff] %vm549, %v608
      %642 = vst.msk [vmem:[%s637 + $0x31] sm:$0xff] %vm549, %v609
      %643 = vst.msk [vmem:[%s637 + $0x39] sm:$0xff] %vm549, %v610
      %644 = vst.msk [vmem:[%s637 + $0x49] sm:$0xff] %vm549, %v611
      %645 = vst.msk [vmem:[%s637 + $0x51] sm:$0xff] %vm549, %v612
      %646 = vst.msk [vmem:[%s637 + $0x61] sm:$0xff] %vm549, %v613
      %647 = vst.msk [vmem:[%s637 + $0x69] sm:$0xff] %vm549, %v614
      %648 = vst.msk [vmem:[%s637 + $0x79] sm:$0xff] %vm549, %v615
      %649 = vst.msk [vmem:[%s637 + $0x81] sm:$0xff] %vm549, %v616
      %650 = vst.msk [vmem:[%s637 + $0x91] sm:$0xff] %vm549, %v617
      %651 = vst.msk [vmem:[%s637 + $0x99] sm:$0xff] %vm549, %v618
      %652 = vst.msk [vmem:[%s637 + $0xa9] sm:$0xff] %vm549, %v619
      %653 = vst.msk [vmem:[%s637 + $0xb1] sm:$0xff] %vm549, %v620
      %654 = vst.msk [vmem:[%s637 + $0xc1] sm:$0xff] %vm549, %v621
      %655 = vst.msk [vmem:[%s637 + $0xc9] sm:$0xff] %vm549, %v622
      %656 = vst.msk [vmem:[%s637 + $0xd9] sm:$0xff] %vm549, %v623
      %657 = vst.msk [vmem:[%s637 + $0xe1] sm:$0xff] %vm549, %v624
      %658 = vst.msk [vmem:[%s637 + $0xf1] sm:$0xff] %vm549, %v625
      %659 = vst.msk [vmem:[%s637 + $0xf9] sm:$0xff] %vm549, %v626
      %660 = vst.msk [vmem:[%s637 + $0x109] sm:$0xff] %vm549, %v627
      %661 = vst.msk [vmem:[%s637 + $0x111] sm:$0xff] %vm549, %v628
      %662 = vst.msk [vmem:[%s637 + $0x121] sm:$0xff] %vm549, %v629
      %663 = vst.msk [vmem:[%s637 + $0x129] sm:$0xff] %vm549, %v630
      %664 = vst.msk [vmem:[%s637 + $0x139] sm:$0xff] %vm549, %v631
      %665 = vst.msk [vmem:[%s637 + $0x141] sm:$0xff] %vm549, %v632
      %666 = vst.msk [vmem:[%s637 + $0x151] sm:$0xff] %vm549, %v633
      %667 = vst.msk [vmem:[%s637 + $0x159] sm:$0xff] %vm549, %v634
      %668 = vst.msk [vmem:[%s637 + $0x169] sm:$0xff] %vm549, %v635
      %669 = vst.msk [vmem:[%s637 + $0x171] sm:$0xff] %vm549, %v636
      %v670 = vld [vmem:[#allocation2] sm:$0xff]
      %v671 = vld [vmem:[#allocation2 + $0x8] sm:$0xff]
      %v672 = vld [vmem:[#allocation2 + $0x18] sm:$0xff]
      %v673 = vld [vmem:[#allocation2 + $0x20] sm:$0xff]
      %v674 = vld [vmem:[#allocation2 + $0x30] sm:$0xff]
      %v675 = vld [vmem:[#allocation2 + $0x38] sm:$0xff]
      %v676 = vld [vmem:[#allocation2 + $0x48] sm:$0xff]
      %v677 = vld [vmem:[#allocation2 + $0x50] sm:$0xff]
      %v678 = vld [vmem:[#allocation2 + $0x60] sm:$0xff]
      %v679 = vld [vmem:[#allocation2 + $0x68] sm:$0xff]
      %v680 = vld [vmem:[#allocation2 + $0x78] sm:$0xff]
      %v681 = vld [vmem:[#allocation2 + $0x80] sm:$0xff]
      %v682 = vld [vmem:[#allocation2 + $0x90] sm:$0xff]
      %v683 = vld [vmem:[#allocation2 + $0x98] sm:$0xff]
      %v684 = vld [vmem:[#allocation2 + $0xa8] sm:$0xff]
      %v685 = vld [vmem:[#allocation2 + $0xb0] sm:$0xff]
      %v686 = vld [vmem:[#allocation2 + $0xc0] sm:$0xff]
      %v687 = vld [vmem:[#allocation2 + $0xc8] sm:$0xff]
      %v688 = vld [vmem:[#allocation2 + $0xd8] sm:$0xff]
      %v689 = vld [vmem:[#allocation2 + $0xe0] sm:$0xff]
      %v690 = vld [vmem:[#allocation2 + $0xf0] sm:$0xff]
      %v691 = vld [vmem:[#allocation2 + $0xf8] sm:$0xff]
      %v692 = vld [vmem:[#allocation2 + $0x108] sm:$0xff]
      %v693 = vld [vmem:[#allocation2 + $0x110] sm:$0xff]
      %v694 = vld [vmem:[#allocation2 + $0x120] sm:$0xff]
      %v695 = vld [vmem:[#allocation2 + $0x128] sm:$0xff]
      %v696 = vld [vmem:[#allocation2 + $0x138] sm:$0xff]
      %v697 = vld [vmem:[#allocation2 + $0x140] sm:$0xff]
      %v698 = vld [vmem:[#allocation2 + $0x150] sm:$0xff]
      %v699 = vld [vmem:[#allocation2 + $0x158] sm:$0xff]
      %v700 = vld [vmem:[#allocation2 + $0x168] sm:$0xff]
      %v701 = vld [vmem:[#allocation2 + $0x170] sm:$0xff]
      %v702 = vld [vmem:[%s1] sm:$0xff]
      %v703 = vld [vmem:[%s1 + $0x8] sm:$0x3]
      %v704 = vld [vmem:[#allocation2 + $0x1] sm:$0xff]
      %v705 = vld [vmem:[#allocation2 + $0x9] sm:$0xff]
      %v706 = vld [vmem:[#allocation2 + $0x19] sm:$0xff]
      %v707 = vld [vmem:[#allocation2 + $0x21] sm:$0xff]
      %v708 = vld [vmem:[#allocation2 + $0x31] sm:$0xff]
      %v709 = vld [vmem:[#allocation2 + $0x39] sm:$0xff]
      %v710 = vld [vmem:[#allocation2 + $0x49] sm:$0xff]
      %v711 = vld [vmem:[#allocation2 + $0x51] sm:$0xff]
      %v712 = vld [vmem:[#allocation2 + $0x61] sm:$0xff]
      %v713 = vld [vmem:[#allocation2 + $0x69] sm:$0xff]
      %v714 = vld [vmem:[#allocation2 + $0x79] sm:$0xff]
      %v715 = vld [vmem:[#allocation2 + $0x81] sm:$0xff]
      %v716 = vld [vmem:[#allocation2 + $0x91] sm:$0xff]
      %v717 = vld [vmem:[#allocation2 + $0x99] sm:$0xff]
      %v718 = vld [vmem:[#allocation2 + $0xa9] sm:$0xff]
      %v719 = vld [vmem:[#allocation2 + $0xb1] sm:$0xff]
      %v720 = vld [vmem:[#allocation2 + $0xc1] sm:$0xff]
      %v721 = vld [vmem:[#allocation2 + $0xc9] sm:$0xff]
      %v722 = vld [vmem:[#allocation2 + $0xd9] sm:$0xff]
      %v723 = vld [vmem:[#allocation2 + $0xe1] sm:$0xff]
      %v724 = vld [vmem:[#allocation2 + $0xf1] sm:$0xff]
      %v725 = vld [vmem:[#allocation2 + $0xf9] sm:$0xff]
      %v726 = vld [vmem:[#allocation2 + $0x109] sm:$0xff]
      %v727 = vld [vmem:[#allocation2 + $0x111] sm:$0xff]
      %v728 = vld [vmem:[#allocation2 + $0x121] sm:$0xff]
      %v729 = vld [vmem:[#allocation2 + $0x129] sm:$0xff]
      %v730 = vld [vmem:[#allocation2 + $0x139] sm:$0xff]
      %v731 = vld [vmem:[#allocation2 + $0x141] sm:$0xff]
      %v732 = vld [vmem:[#allocation2 + $0x151] sm:$0xff]
      %v733 = vld [vmem:[#allocation2 + $0x159] sm:$0xff]
      %v734 = vld [vmem:[#allocation2 + $0x169] sm:$0xff]
      %v735 = vld [vmem:[#allocation2 + $0x171] sm:$0xff]
      %s736 = scalar_lea.vmem %s1, 16
      %v737 = vld [vmem:[%s736] sm:$0xff]
      %v738 = vld [vmem:[%s736 + $0x8] sm:$0x3]
      %v740 = vsel %vm549, %v704, 0
      %v743 = vsel %vm549, %v705, 0
      %v746 = vsel %vm549, %v706, 0
      %v749 = vsel %vm549, %v707, 0
      %v752 = vsel %vm549, %v708, 0
      %v755 = vsel %vm549, %v709, 0
      %v758 = vsel %vm549, %v710, 0
      %v761 = vsel %vm549, %v711, 0
      %v764 = vsel %vm549, %v712, 0
      %v767 = vsel %vm549, %v713, 0
      %v770 = vsel %vm549, %v714, 0
      %v773 = vsel %vm549, %v715, 0
      %v776 = vsel %vm549, %v716, 0
      %v779 = vsel %vm549, %v717, 0
      %v782 = vsel %vm549, %v718, 0
      %v785 = vsel %vm549, %v719, 0
      %v788 = vsel %vm549, %v720, 0
      %v791 = vsel %vm549, %v721, 0
      %v794 = vsel %vm549, %v722, 0
      %v797 = vsel %vm549, %v723, 0
      %v800 = vsel %vm549, %v724, 0
      %v803 = vsel %vm549, %v725, 0
      %v806 = vsel %vm549, %v726, 0
      %v809 = vsel %vm549, %v727, 0
      %v812 = vsel %vm549, %v728, 0
      %v815 = vsel %vm549, %v729, 0
      %v818 = vsel %vm549, %v730, 0
      %v821 = vsel %vm549, %v731, 0
      %v824 = vsel %vm549, %v732, 0
      %v827 = vsel %vm549, %v733, 0
      %v830 = vsel %vm549, %v734, 0
      %v833 = vsel %vm549, %v735, 0
      %vm835 = vcmask 1041408
      %v837 = vsel %vm835, %v738, 0
      %839 = vmatprep.subr.mxu0 0.0
      %840 = vmatpush1.msra.mxu0 0.0
      %841 = vmatprep.subr.mxu0 0.0
      %842 = vmatpush1.msra.mxu0 0.0
      %843 = vmatprep.subr.mxu0 0.0
      %844 = vmatpush1.msra.mxu0 0.0
      %845 = vmatprep.subr.mxu0 0.0
      %846 = vmatpush1.msra.mxu0 0.0
      %847 = vmatprep.subr.mxu0 0.0
      %848 = vmatpush1.msra.mxu0 0.0
      %849 = vmatprep.subr.mxu0 0.0
      %850 = vmatpush1.msra.mxu0 0.0
      %851 = vmatprep.subr.mxu0 0.0
      %852 = vmatpush1.msra.mxu0 0.0
      %853 = vmatprep.subr.mxu0 0.0
      %854 = vmatpush1.msra.mxu0 0.0
      %855 = vmatprep.subr.mxu0 0.0
      %856 = vmatpush1.msra.mxu0 0.0
      %857 = vmatprep.subr.mxu0 0.0
      %858 = vmatpush1.msra.mxu0 0.0
      %859 = vmatprep.subr.mxu0 0.0
      %860 = vmatpush1.msra.mxu0 0.0
      %861 = vmatprep.subr.mxu0 0.0
      %862 = vmatpush1.msra.mxu0 0.0
      %863 = vmatprep.subr.mxu0 0.0
      %864 = vmatpush1.msra.mxu0 0.0
      %865 = vmatprep.subr.mxu0 0.0
      %866 = vmatpush1.msra.mxu0 0.0
      %867 = vmatprep.subr.mxu0 0.0
      %868 = vmatpush1.msra.mxu0 %v837
      %869 = vmatprep.subr.mxu0 0.0
      %870 = vmatpush1.msra.mxu0 %v737
      %871 = vmatprep.subr.mxu0 0.0
      %872 = vmatpush2.msra.mxu0 0.0
      %873 = vmatprep.subr.mxu0 0.0
      %874 = vmatpush2.msra.mxu0 0.0
      %875 = vmatprep.subr.mxu0 0.0
      %876 = vmatpush2.msra.mxu0 0.0
      %877 = vmatprep.subr.mxu0 0.0
      %878 = vmatpush2.msra.mxu0 0.0
      %879 = vmatprep.subr.mxu0 0.0
      %880 = vmatpush2.msra.mxu0 0.0
      %881 = vmatprep.subr.mxu0 0.0
      %882 = vmatpush2.msra.mxu0 0.0
      %883 = vmatprep.subr.mxu0 0.0
      %884 = vmatpush2.msra.mxu0 0.0
      %885 = vmatprep.subr.mxu0 0.0
      %886 = vmatpush2.msra.mxu0 0.0
      %887 = vmatprep.subr.mxu0 0.0
      %888 = vmatpush2.msra.mxu0 0.0
      %889 = vmatprep.subr.mxu0 0.0
      %890 = vmatpush2.msra.mxu0 0.0
      %891 = vmatprep.subr.mxu0 0.0
      %892 = vmatpush2.msra.mxu0 0.0
      %893 = vmatprep.subr.mxu0 0.0
      %894 = vmatpush2.msra.mxu0 0.0
      %895 = vmatprep.subr.mxu0 0.0
      %896 = vmatpush2.msra.mxu0 0.0
      %897 = vmatprep.subr.mxu0 0.0
      %898 = vmatpush2.msra.mxu0 0.0
      %899 = vmatprep.subr.mxu0 0.0
      %900 = vmatpush2.msra.mxu0 0.0
      %901 = vmatprep.subr.mxu0 0.0
      %902 = vmatpush2.msra.mxu0 0.0
      %903 = vmatprep.mubr.f32.mxu0 0.0
      %904 = vmatmul.mubr.f32.gmra.mxu0 %v740
      %v905 = vpop.f32.mrf.mxu0
      %v906 = vadd.f32 0.0, %v905
      %v907 = vpop.f32.mrf.mxu0
      %908 = vmatprep.mubr.f32.mxu0 0.0
      %909 = vmatmul.mubr.f32.gmra.mxu0 %v743
      %v910 = vpop.f32.mrf.mxu0
      %v911 = vadd.f32 0.0, %v910
      %v912 = vpop.f32.mrf.mxu0
      %913 = vmatprep.mubr.f32.mxu0 0.0
      %914 = vmatmul.mubr.f32.gmra.mxu0 %v746
      %v915 = vpop.f32.mrf.mxu0
      %v916 = vadd.f32 0.0, %v915
      %v917 = vpop.f32.mrf.mxu0
      %918 = vmatprep.mubr.f32.mxu0 0.0
      %919 = vmatmul.mubr.f32.gmra.mxu0 %v749
      %v920 = vpop.f32.mrf.mxu0
      %v921 = vadd.f32 0.0, %v920
      %v922 = vpop.f32.mrf.mxu0
      %923 = vmatprep.mubr.f32.mxu0 0.0
      %924 = vmatmul.mubr.f32.gmra.mxu0 %v752
      %v925 = vpop.f32.mrf.mxu0
      %v926 = vadd.f32 0.0, %v925
      %v927 = vpop.f32.mrf.mxu0
      %928 = vmatprep.mubr.f32.mxu0 0.0
      %929 = vmatmul.mubr.f32.gmra.mxu0 %v755
      %v930 = vpop.f32.mrf.mxu0
      %v931 = vadd.f32 0.0, %v930
      %v932 = vpop.f32.mrf.mxu0
      %933 = vmatprep.mubr.f32.mxu0 0.0
      %934 = vmatmul.mubr.f32.gmra.mxu0 %v758
      %v935 = vpop.f32.mrf.mxu0
      %v936 = vadd.f32 0.0, %v935
      %v937 = vpop.f32.mrf.mxu0
      %938 = vmatprep.mubr.f32.mxu0 0.0
      %939 = vmatmul.mubr.f32.gmra.mxu0 %v761
      %v940 = vpop.f32.mrf.mxu0
      %v941 = vadd.f32 0.0, %v940
      %v942 = vpop.f32.mrf.mxu0
      %943 = vmatprep.mubr.f32.mxu0 0.0
      %944 = vmatmul.mubr.f32.gmra.mxu0 %v764
      %v945 = vpop.f32.mrf.mxu0
      %v946 = vadd.f32 0.0, %v945
      %v947 = vpop.f32.mrf.mxu0
      %948 = vmatprep.mubr.f32.mxu0 0.0
      %949 = vmatmul.mubr.f32.gmra.mxu0 %v767
      %v950 = vpop.f32.mrf.mxu0
      %v951 = vadd.f32 0.0, %v950
      %v952 = vpop.f32.mrf.mxu0
      %953 = vmatprep.mubr.f32.mxu0 0.0
      %954 = vmatmul.mubr.f32.gmra.mxu0 %v770
      %v955 = vpop.f32.mrf.mxu0
      %v956 = vadd.f32 0.0, %v955
      %v957 = vpop.f32.mrf.mxu0
      %958 = vmatprep.mubr.f32.mxu0 0.0
      %959 = vmatmul.mubr.f32.gmra.mxu0 %v773
      %v960 = vpop.f32.mrf.mxu0
      %v961 = vadd.f32 0.0, %v960
      %v962 = vpop.f32.mrf.mxu0
      %963 = vmatprep.mubr.f32.mxu0 0.0
      %964 = vmatmul.mubr.f32.gmra.mxu0 %v776
      %v965 = vpop.f32.mrf.mxu0
      %v966 = vadd.f32 0.0, %v965
      %v967 = vpop.f32.mrf.mxu0
      %968 = vmatprep.mubr.f32.mxu0 0.0
      %969 = vmatmul.mubr.f32.gmra.mxu0 %v779
      %v970 = vpop.f32.mrf.mxu0
      %v971 = vadd.f32 0.0, %v970
      %v972 = vpop.f32.mrf.mxu0
      %973 = vmatprep.mubr.f32.mxu0 0.0
      %974 = vmatmul.mubr.f32.gmra.mxu0 %v782
      %v975 = vpop.f32.mrf.mxu0
      %v976 = vadd.f32 0.0, %v975
      %v977 = vpop.f32.mrf.mxu0
      %978 = vmatprep.mubr.f32.mxu0 0.0
      %979 = vmatmul.mubr.f32.gmra.mxu0 %v785
      %v980 = vpop.f32.mrf.mxu0
      %v981 = vadd.f32 0.0, %v980
      %v982 = vpop.f32.mrf.mxu0
      %983 = vmatprep.mubr.f32.mxu0 0.0
      %984 = vmatmul.mubr.f32.gmra.mxu0 %v788
      %v985 = vpop.f32.mrf.mxu0
      %v986 = vadd.f32 0.0, %v985
      %v987 = vpop.f32.mrf.mxu0
      %988 = vmatprep.mubr.f32.mxu0 0.0
      %989 = vmatmul.mubr.f32.gmra.mxu0 %v791
      %v990 = vpop.f32.mrf.mxu0
      %v991 = vadd.f32 0.0, %v990
      %v992 = vpop.f32.mrf.mxu0
      %993 = vmatprep.mubr.f32.mxu0 0.0
      %994 = vmatmul.mubr.f32.gmra.mxu0 %v794
      %v995 = vpop.f32.mrf.mxu0
      %v996 = vadd.f32 0.0, %v995
      %v997 = vpop.f32.mrf.mxu0
      %998 = vmatprep.mubr.f32.mxu0 0.0
      %999 = vmatmul.mubr.f32.gmra.mxu0 %v797
      %v1000 = vpop.f32.mrf.mxu0
      %v1001 = vadd.f32 0.0, %v1000
      %v1002 = vpop.f32.mrf.mxu0
      %1003 = vmatprep.mubr.f32.mxu0 0.0
      %1004 = vmatmul.mubr.f32.gmra.mxu0 %v800
      %v1005 = vpop.f32.mrf.mxu0
      %v1006 = vadd.f32 0.0, %v1005
      %v1007 = vpop.f32.mrf.mxu0
      %1008 = vmatprep.mubr.f32.mxu0 0.0
      %1009 = vmatmul.mubr.f32.gmra.mxu0 %v803
      %v1010 = vpop.f32.mrf.mxu0
      %v1011 = vadd.f32 0.0, %v1010
      %v1012 = vpop.f32.mrf.mxu0
      %1013 = vmatprep.mubr.f32.mxu0 0.0
      %1014 = vmatmul.mubr.f32.gmra.mxu0 %v806
      %v1015 = vpop.f32.mrf.mxu0
      %v1016 = vadd.f32 0.0, %v1015
      %v1017 = vpop.f32.mrf.mxu0
      %1018 = vmatprep.mubr.f32.mxu0 0.0
      %1019 = vmatmul.mubr.f32.gmra.mxu0 %v809
      %v1020 = vpop.f32.mrf.mxu0
      %v1021 = vadd.f32 0.0, %v1020
      %v1022 = vpop.f32.mrf.mxu0
      %1023 = vmatprep.mubr.f32.mxu0 0.0
      %1024 = vmatmul.mubr.f32.gmra.mxu0 %v812
      %v1025 = vpop.f32.mrf.mxu0
      %v1026 = vadd.f32 0.0, %v1025
      %v1027 = vpop.f32.mrf.mxu0
      %1028 = vmatprep.mubr.f32.mxu0 0.0
      %1029 = vmatmul.mubr.f32.gmra.mxu0 %v815
      %v1030 = vpop.f32.mrf.mxu0
      %v1031 = vadd.f32 0.0, %v1030
      %v1032 = vpop.f32.mrf.mxu0
      %1033 = vmatprep.mubr.f32.mxu0 0.0
      %1034 = vmatmul.mubr.f32.gmra.mxu0 %v818
      %v1035 = vpop.f32.mrf.mxu0
      %v1036 = vadd.f32 0.0, %v1035
      %v1037 = vpop.f32.mrf.mxu0
      %1038 = vmatprep.mubr.f32.mxu0 0.0
      %1039 = vmatmul.mubr.f32.gmra.mxu0 %v821
      %v1040 = vpop.f32.mrf.mxu0
      %v1041 = vadd.f32 0.0, %v1040
      %v1042 = vpop.f32.mrf.mxu0
      %1043 = vmatprep.mubr.f32.mxu0 0.0
      %1044 = vmatmul.mubr.f32.gmra.mxu0 %v824
      %v1045 = vpop.f32.mrf.mxu0
      %v1046 = vadd.f32 0.0, %v1045
      %v1047 = vpop.f32.mrf.mxu0
      %1048 = vmatprep.mubr.f32.mxu0 0.0
      %1049 = vmatmul.mubr.f32.gmra.mxu0 %v827
      %v1050 = vpop.f32.mrf.mxu0
      %v1051 = vadd.f32 0.0, %v1050
      %v1052 = vpop.f32.mrf.mxu0
      %1053 = vmatprep.mubr.f32.mxu0 0.0
      %1054 = vmatmul.mubr.f32.gmra.mxu0 %v830
      %v1055 = vpop.f32.mrf.mxu0
      %v1056 = vadd.f32 0.0, %v1055
      %v1057 = vpop.f32.mrf.mxu0
      %1058 = vmatprep.mubr.f32.mxu0 0.0
      %1059 = vmatmul.mubr.f32.gmra.mxu0 %v833
      %v1060 = vpop.f32.mrf.mxu0
      %v1061 = vadd.f32 0.0, %v1060
      %v1062 = vpop.f32.mrf.mxu0
      %1063 = vdwg.mxu0
      %v1065 = vsel %vm549, %v670, 0
      %v1068 = vsel %vm549, %v671, 0
      %v1071 = vsel %vm549, %v672, 0
      %v1074 = vsel %vm549, %v673, 0
      %v1077 = vsel %vm549, %v674, 0
      %v1080 = vsel %vm549, %v675, 0
      %v1083 = vsel %vm549, %v676, 0
      %v1086 = vsel %vm549, %v677, 0
      %v1089 = vsel %vm549, %v678, 0
      %v1092 = vsel %vm549, %v679, 0
      %v1095 = vsel %vm549, %v680, 0
      %v1098 = vsel %vm549, %v681, 0
      %v1101 = vsel %vm549, %v682, 0
      %v1104 = vsel %vm549, %v683, 0
      %v1107 = vsel %vm549, %v684, 0
      %v1110 = vsel %vm549, %v685, 0
      %v1113 = vsel %vm549, %v686, 0
      %v1116 = vsel %vm549, %v687, 0
      %v1119 = vsel %vm549, %v688, 0
      %v1122 = vsel %vm549, %v689, 0
      %v1125 = vsel %vm549, %v690, 0
      %v1128 = vsel %vm549, %v691, 0
      %v1131 = vsel %vm549, %v692, 0
      %v1134 = vsel %vm549, %v693, 0
      %v1137 = vsel %vm549, %v694, 0
      %v1140 = vsel %vm549, %v695, 0
      %v1143 = vsel %vm549, %v696, 0
      %v1146 = vsel %vm549, %v697, 0
      %v1149 = vsel %vm549, %v698, 0
      %v1152 = vsel %vm549, %v699, 0
      %v1155 = vsel %vm549, %v700, 0
      %v1158 = vsel %vm549, %v701, 0
      %v1161 = vsel %vm835, %v703, 0
      %1163 = vmatprep.subr.mxu0 0.0
      %1164 = vmatpush1.msra.mxu0 0.0
      %1165 = vmatprep.subr.mxu0 0.0
      %1166 = vmatpush1.msra.mxu0 0.0
      %1167 = vmatprep.subr.mxu0 0.0
      %1168 = vmatpush1.msra.mxu0 0.0
      %1169 = vmatprep.subr.mxu0 0.0
      %1170 = vmatpush1.msra.mxu0 0.0
      %1171 = vmatprep.subr.mxu0 0.0
      %1172 = vmatpush1.msra.mxu0 0.0
      %1173 = vmatprep.subr.mxu0 0.0
      %1174 = vmatpush1.msra.mxu0 0.0
      %1175 = vmatprep.subr.mxu0 0.0
      %1176 = vmatpush1.msra.mxu0 0.0
      %1177 = vmatprep.subr.mxu0 0.0
      %1178 = vmatpush1.msra.mxu0 0.0
      %1179 = vmatprep.subr.mxu0 0.0
      %1180 = vmatpush1.msra.mxu0 0.0
      %1181 = vmatprep.subr.mxu0 0.0
      %1182 = vmatpush1.msra.mxu0 0.0
      %1183 = vmatprep.subr.mxu0 0.0
      %1184 = vmatpush1.msra.mxu0 0.0
      %1185 = vmatprep.subr.mxu0 0.0
      %1186 = vmatpush1.msra.mxu0 0.0
      %1187 = vmatprep.subr.mxu0 0.0
      %1188 = vmatpush1.msra.mxu0 0.0
      %1189 = vmatprep.subr.mxu0 0.0
      %1190 = vmatpush1.msra.mxu0 0.0
      %1191 = vmatprep.subr.mxu0 0.0
      %1192 = vmatpush1.msra.mxu0 %v1161
      %1193 = vmatprep.subr.mxu0 0.0
      %1194 = vmatpush1.msra.mxu0 %v702
      %1195 = vmatprep.subr.mxu0 0.0
      %1196 = vmatpush2.msra.mxu0 0.0
      %1197 = vmatprep.subr.mxu0 0.0
      %1198 = vmatpush2.msra.mxu0 0.0
      %1199 = vmatprep.subr.mxu0 0.0
      %1200 = vmatpush2.msra.mxu0 0.0
      %1201 = vmatprep.subr.mxu0 0.0
      %1202 = vmatpush2.msra.mxu0 0.0
      %1203 = vmatprep.subr.mxu0 0.0
      %1204 = vmatpush2.msra.mxu0 0.0
      %1205 = vmatprep.subr.mxu0 0.0
      %1206 = vmatpush2.msra.mxu0 0.0
      %1207 = vmatprep.subr.mxu0 0.0
      %1208 = vmatpush2.msra.mxu0 0.0
      %1209 = vmatprep.subr.mxu0 0.0
      %1210 = vmatpush2.msra.mxu0 0.0
      %1211 = vmatprep.subr.mxu0 0.0
      %1212 = vmatpush2.msra.mxu0 0.0
      %1213 = vmatprep.subr.mxu0 0.0
      %1214 = vmatpush2.msra.mxu0 0.0
      %1215 = vmatprep.subr.mxu0 0.0
      %1216 = vmatpush2.msra.mxu0 0.0
      %1217 = vmatprep.subr.mxu0 0.0
      %1218 = vmatpush2.msra.mxu0 0.0
      %1219 = vmatprep.subr.mxu0 0.0
      %1220 = vmatpush2.msra.mxu0 0.0
      %1221 = vmatprep.subr.mxu0 0.0
      %1222 = vmatpush2.msra.mxu0 0.0
      %1223 = vmatprep.subr.mxu0 0.0
      %1224 = vmatpush2.msra.mxu0 0.0
      %1225 = vmatprep.subr.mxu0 0.0
      %1226 = vmatpush2.msra.mxu0 0.0
      %1227 = vmatprep.mubr.f32.mxu0 0.0
      %1228 = vmatmul.mubr.f32.gmra.mxu0 %v1065
      %v1229 = vpop.f32.mrf.mxu0
      %v1230 = vadd.f32 %v906, %v1229
      %v1231 = vpop.f32.mrf.mxu0
      %1232 = vmatprep.mubr.f32.mxu0 0.0
      %1233 = vmatmul.mubr.f32.gmra.mxu0 %v1068
      %v1234 = vpop.f32.mrf.mxu0
      %v1235 = vadd.f32 %v911, %v1234
      %v1236 = vpop.f32.mrf.mxu0
      %1237 = vmatprep.mubr.f32.mxu0 0.0
      %1238 = vmatmul.mubr.f32.gmra.mxu0 %v1071
      %v1239 = vpop.f32.mrf.mxu0
      %v1240 = vadd.f32 %v916, %v1239
      %v1241 = vpop.f32.mrf.mxu0
      %1242 = vmatprep.mubr.f32.mxu0 0.0
      %1243 = vmatmul.mubr.f32.gmra.mxu0 %v1074
      %v1244 = vpop.f32.mrf.mxu0
      %v1245 = vadd.f32 %v921, %v1244
      %v1246 = vpop.f32.mrf.mxu0
      %1247 = vmatprep.mubr.f32.mxu0 0.0
      %1248 = vmatmul.mubr.f32.gmra.mxu0 %v1077
      %v1249 = vpop.f32.mrf.mxu0
      %v1250 = vadd.f32 %v926, %v1249
      %v1251 = vpop.f32.mrf.mxu0
      %1252 = vmatprep.mubr.f32.mxu0 0.0
      %1253 = vmatmul.mubr.f32.gmra.mxu0 %v1080
      %v1254 = vpop.f32.mrf.mxu0
      %v1255 = vadd.f32 %v931, %v1254
      %v1256 = vpop.f32.mrf.mxu0
      %1257 = vmatprep.mubr.f32.mxu0 0.0
      %1258 = vmatmul.mubr.f32.gmra.mxu0 %v1083
      %v1259 = vpop.f32.mrf.mxu0
      %v1260 = vadd.f32 %v936, %v1259
      %v1261 = vpop.f32.mrf.mxu0
      %1262 = vmatprep.mubr.f32.mxu0 0.0
      %1263 = vmatmul.mubr.f32.gmra.mxu0 %v1086
      %v1264 = vpop.f32.mrf.mxu0
      %v1265 = vadd.f32 %v941, %v1264
      %v1266 = vpop.f32.mrf.mxu0
      %1267 = vmatprep.mubr.f32.mxu0 0.0
      %1268 = vmatmul.mubr.f32.gmra.mxu0 %v1089
      %v1269 = vpop.f32.mrf.mxu0
      %v1270 = vadd.f32 %v946, %v1269
      %v1271 = vpop.f32.mrf.mxu0
      %1272 = vmatprep.mubr.f32.mxu0 0.0
      %1273 = vmatmul.mubr.f32.gmra.mxu0 %v1092
      %v1274 = vpop.f32.mrf.mxu0
      %v1275 = vadd.f32 %v951, %v1274
      %v1276 = vpop.f32.mrf.mxu0
      %1277 = vmatprep.mubr.f32.mxu0 0.0
      %1278 = vmatmul.mubr.f32.gmra.mxu0 %v1095
      %v1279 = vpop.f32.mrf.mxu0
      %v1280 = vadd.f32 %v956, %v1279
      %v1281 = vpop.f32.mrf.mxu0
      %1282 = vmatprep.mubr.f32.mxu0 0.0
      %1283 = vmatmul.mubr.f32.gmra.mxu0 %v1098
      %v1284 = vpop.f32.mrf.mxu0
      %v1285 = vadd.f32 %v961, %v1284
      %v1286 = vpop.f32.mrf.mxu0
      %1287 = vmatprep.mubr.f32.mxu0 0.0
      %1288 = vmatmul.mubr.f32.gmra.mxu0 %v1101
      %v1289 = vpop.f32.mrf.mxu0
      %v1290 = vadd.f32 %v966, %v1289
      %v1291 = vpop.f32.mrf.mxu0
      %1292 = vmatprep.mubr.f32.mxu0 0.0
      %1293 = vmatmul.mubr.f32.gmra.mxu0 %v1104
      %v1294 = vpop.f32.mrf.mxu0
      %v1295 = vadd.f32 %v971, %v1294
      %v1296 = vpop.f32.mrf.mxu0
      %1297 = vmatprep.mubr.f32.mxu0 0.0
      %1298 = vmatmul.mubr.f32.gmra.mxu0 %v1107
      %v1299 = vpop.f32.mrf.mxu0
      %v1300 = vadd.f32 %v976, %v1299
      %v1301 = vpop.f32.mrf.mxu0
      %1302 = vmatprep.mubr.f32.mxu0 0.0
      %1303 = vmatmul.mubr.f32.gmra.mxu0 %v1110
      %v1304 = vpop.f32.mrf.mxu0
      %v1305 = vadd.f32 %v981, %v1304
      %v1306 = vpop.f32.mrf.mxu0
      %1307 = vmatprep.mubr.f32.mxu0 0.0
      %1308 = vmatmul.mubr.f32.gmra.mxu0 %v1113
      %v1309 = vpop.f32.mrf.mxu0
      %v1310 = vadd.f32 %v986, %v1309
      %v1311 = vpop.f32.mrf.mxu0
      %1312 = vmatprep.mubr.f32.mxu0 0.0
      %1313 = vmatmul.mubr.f32.gmra.mxu0 %v1116
      %v1314 = vpop.f32.mrf.mxu0
      %v1315 = vadd.f32 %v991, %v1314
      %v1316 = vpop.f32.mrf.mxu0
      %1317 = vmatprep.mubr.f32.mxu0 0.0
      %1318 = vmatmul.mubr.f32.gmra.mxu0 %v1119
      %v1319 = vpop.f32.mrf.mxu0
      %v1320 = vadd.f32 %v996, %v1319
      %v1321 = vpop.f32.mrf.mxu0
      %1322 = vmatprep.mubr.f32.mxu0 0.0
      %1323 = vmatmul.mubr.f32.gmra.mxu0 %v1122
      %v1324 = vpop.f32.mrf.mxu0
      %v1325 = vadd.f32 %v1001, %v1324
      %v1326 = vpop.f32.mrf.mxu0
      %1327 = vmatprep.mubr.f32.mxu0 0.0
      %1328 = vmatmul.mubr.f32.gmra.mxu0 %v1125
      %v1329 = vpop.f32.mrf.mxu0
      %v1330 = vadd.f32 %v1006, %v1329
      %v1331 = vpop.f32.mrf.mxu0
      %1332 = vmatprep.mubr.f32.mxu0 0.0
      %1333 = vmatmul.mubr.f32.gmra.mxu0 %v1128
      %v1334 = vpop.f32.mrf.mxu0
      %v1335 = vadd.f32 %v1011, %v1334
      %v1336 = vpop.f32.mrf.mxu0
      %1337 = vmatprep.mubr.f32.mxu0 0.0
      %1338 = vmatmul.mubr.f32.gmra.mxu0 %v1131
      %v1339 = vpop.f32.mrf.mxu0
      %v1340 = vadd.f32 %v1016, %v1339
      %v1341 = vpop.f32.mrf.mxu0
      %1342 = vmatprep.mubr.f32.mxu0 0.0
      %1343 = vmatmul.mubr.f32.gmra.mxu0 %v1134
      %v1344 = vpop.f32.mrf.mxu0
      %v1345 = vadd.f32 %v1021, %v1344
      %v1346 = vpop.f32.mrf.mxu0
      %1347 = vmatprep.mubr.f32.mxu0 0.0
      %1348 = vmatmul.mubr.f32.gmra.mxu0 %v1137
      %v1349 = vpop.f32.mrf.mxu0
      %v1350 = vadd.f32 %v1026, %v1349
      %v1351 = vpop.f32.mrf.mxu0
      %1352 = vmatprep.mubr.f32.mxu0 0.0
      %1353 = vmatmul.mubr.f32.gmra.mxu0 %v1140
      %v1354 = vpop.f32.mrf.mxu0
      %v1355 = vadd.f32 %v1031, %v1354
      %v1356 = vpop.f32.mrf.mxu0
      %1357 = vmatprep.mubr.f32.mxu0 0.0
      %1358 = vmatmul.mubr.f32.gmra.mxu0 %v1143
      %v1359 = vpop.f32.mrf.mxu0
      %v1360 = vadd.f32 %v1036, %v1359
      %v1361 = vpop.f32.mrf.mxu0
      %1362 = vmatprep.mubr.f32.mxu0 0.0
      %1363 = vmatmul.mubr.f32.gmra.mxu0 %v1146
      %v1364 = vpop.f32.mrf.mxu0
      %v1365 = vadd.f32 %v1041, %v1364
      %v1366 = vpop.f32.mrf.mxu0
      %1367 = vmatprep.mubr.f32.mxu0 0.0
      %1368 = vmatmul.mubr.f32.gmra.mxu0 %v1149
      %v1369 = vpop.f32.mrf.mxu0
      %v1370 = vadd.f32 %v1046, %v1369
      %v1371 = vpop.f32.mrf.mxu0
      %1372 = vmatprep.mubr.f32.mxu0 0.0
      %1373 = vmatmul.mubr.f32.gmra.mxu0 %v1152
      %v1374 = vpop.f32.mrf.mxu0
      %v1375 = vadd.f32 %v1051, %v1374
      %v1376 = vpop.f32.mrf.mxu0
      %1377 = vmatprep.mubr.f32.mxu0 0.0
      %1378 = vmatmul.mubr.f32.gmra.mxu0 %v1155
      %v1379 = vpop.f32.mrf.mxu0
      %v1380 = vadd.f32 %v1056, %v1379
      %v1381 = vpop.f32.mrf.mxu0
      %1382 = vmatprep.mubr.f32.mxu0 0.0
      %1383 = vmatmul.mubr.f32.gmra.mxu0 %v1158
      %v1384 = vpop.f32.mrf.mxu0
      %v1385 = vadd.f32 %v1061, %v1384
      %v1386 = vpop.f32.mrf.mxu0
      %1387 = vdwg.mxu0
      %v1388 = vld [vmem:[#allocation2 + $0x2] sm:$0xff]
      %v1389 = vld [vmem:[#allocation2 + $0xa] sm:$0xff]
      %v1390 = vld [vmem:[#allocation2 + $0x1a] sm:$0xff]
      %v1391 = vld [vmem:[#allocation2 + $0x22] sm:$0xff]
      %v1392 = vld [vmem:[#allocation2 + $0x32] sm:$0xff]
      %v1393 = vld [vmem:[#allocation2 + $0x3a] sm:$0xff]
      %v1394 = vld [vmem:[#allocation2 + $0x4a] sm:$0xff]
      %v1395 = vld [vmem:[#allocation2 + $0x52] sm:$0xff]
      %v1396 = vld [vmem:[#allocation2 + $0x62] sm:$0xff]
      %v1397 = vld [vmem:[#allocation2 + $0x6a] sm:$0xff]
      %v1398 = vld [vmem:[#allocation2 + $0x7a] sm:$0xff]
      %v1399 = vld [vmem:[#allocation2 + $0x82] sm:$0xff]
      %v1400 = vld [vmem:[#allocation2 + $0x92] sm:$0xff]
      %v1401 = vld [vmem:[#allocation2 + $0x9a] sm:$0xff]
      %v1402 = vld [vmem:[#allocation2 + $0xaa] sm:$0xff]
      %v1403 = vld [vmem:[#allocation2 + $0xb2] sm:$0xff]
      %v1404 = vld [vmem:[#allocation2 + $0xc2] sm:$0xff]
      %v1405 = vld [vmem:[#allocation2 + $0xca] sm:$0xff]
      %v1406 = vld [vmem:[#allocation2 + $0xda] sm:$0xff]
      %v1407 = vld [vmem:[#allocation2 + $0xe2] sm:$0xff]
      %v1408 = vld [vmem:[#allocation2 + $0xf2] sm:$0xff]
      %v1409 = vld [vmem:[#allocation2 + $0xfa] sm:$0xff]
      %v1410 = vld [vmem:[#allocation2 + $0x10a] sm:$0xff]
      %v1411 = vld [vmem:[#allocation2 + $0x112] sm:$0xff]
      %v1412 = vld [vmem:[#allocation2 + $0x122] sm:$0xff]
      %v1413 = vld [vmem:[#allocation2 + $0x12a] sm:$0xff]
      %v1414 = vld [vmem:[#allocation2 + $0x13a] sm:$0xff]
      %v1415 = vld [vmem:[#allocation2 + $0x142] sm:$0xff]
      %v1416 = vld [vmem:[#allocation2 + $0x152] sm:$0xff]
      %v1417 = vld [vmem:[#allocation2 + $0x15a] sm:$0xff]
      %v1418 = vld [vmem:[#allocation2 + $0x16a] sm:$0xff]
      %v1419 = vld [vmem:[#allocation2 + $0x172] sm:$0xff]
      %s1420 = scalar_lea.vmem %s1, 32
      %v1421 = vld [vmem:[%s1420] sm:$0xff]
      %v1422 = vld [vmem:[%s1420 + $0x8] sm:$0x3]
      %v1424 = vsel %vm549, %v1388, 0
      %v1427 = vsel %vm549, %v1389, 0
      %v1430 = vsel %vm549, %v1390, 0
      %v1433 = vsel %vm549, %v1391, 0
      %v1436 = vsel %vm549, %v1392, 0
      %v1439 = vsel %vm549, %v1393, 0
      %v1442 = vsel %vm549, %v1394, 0
      %v1445 = vsel %vm549, %v1395, 0
      %v1448 = vsel %vm549, %v1396, 0
      %v1451 = vsel %vm549, %v1397, 0
      %v1454 = vsel %vm549, %v1398, 0
      %v1457 = vsel %vm549, %v1399, 0
      %v1460 = vsel %vm549, %v1400, 0
      %v1463 = vsel %vm549, %v1401, 0
      %v1466 = vsel %vm549, %v1402, 0
      %v1469 = vsel %vm549, %v1403, 0
      %v1472 = vsel %vm549, %v1404, 0
      %v1475 = vsel %vm549, %v1405, 0
      %v1478 = vsel %vm549, %v1406, 0
      %v1481 = vsel %vm549, %v1407, 0
      %v1484 = vsel %vm549, %v1408, 0
      %v1487 = vsel %vm549, %v1409, 0
      %v1490 = vsel %vm549, %v1410, 0
      %v1493 = vsel %vm549, %v1411, 0
      %v1496 = vsel %vm549, %v1412, 0
      %v1499 = vsel %vm549, %v1413, 0
      %v1502 = vsel %vm549, %v1414, 0
      %v1505 = vsel %vm549, %v1415, 0
      %v1508 = vsel %vm549, %v1416, 0
      %v1511 = vsel %vm549, %v1417, 0
      %v1514 = vsel %vm549, %v1418, 0
      %v1517 = vsel %vm549, %v1419, 0
      %v1520 = vsel %vm835, %v1422, 0
      %1522 = vmatprep.subr.mxu0 0.0
      %1523 = vmatpush1.msra.mxu0 0.0
      %1524 = vmatprep.subr.mxu0 0.0
      %1525 = vmatpush1.msra.mxu0 0.0
      %1526 = vmatprep.subr.mxu0 0.0
      %1527 = vmatpush1.msra.mxu0 0.0
      %1528 = vmatprep.subr.mxu0 0.0
      %1529 = vmatpush1.msra.mxu0 0.0
      %1530 = vmatprep.subr.mxu0 0.0
      %1531 = vmatpush1.msra.mxu0 0.0
      %1532 = vmatprep.subr.mxu0 0.0
      %1533 = vmatpush1.msra.mxu0 0.0
      %1534 = vmatprep.subr.mxu0 0.0
      %1535 = vmatpush1.msra.mxu0 0.0
      %1536 = vmatprep.subr.mxu0 0.0
      %1537 = vmatpush1.msra.mxu0 0.0
      %1538 = vmatprep.subr.mxu0 0.0
      %1539 = vmatpush1.msra.mxu0 0.0
      %1540 = vmatprep.subr.mxu0 0.0
      %1541 = vmatpush1.msra.mxu0 0.0
      %1542 = vmatprep.subr.mxu0 0.0
      %1543 = vmatpush1.msra.mxu0 0.0
      %1544 = vmatprep.subr.mxu0 0.0
      %1545 = vmatpush1.msra.mxu0 0.0
      %1546 = vmatprep.subr.mxu0 0.0
      %1547 = vmatpush1.msra.mxu0 0.0
      %1548 = vmatprep.subr.mxu0 0.0
      %1549 = vmatpush1.msra.mxu0 0.0
      %1550 = vmatprep.subr.mxu0 0.0
      %1551 = vmatpush1.msra.mxu0 %v1520
      %1552 = vmatprep.subr.mxu0 0.0
      %1553 = vmatpush1.msra.mxu0 %v1421
      %1554 = vmatprep.subr.mxu0 0.0
      %1555 = vmatpush2.msra.mxu0 0.0
      %1556 = vmatprep.subr.mxu0 0.0
      %1557 = vmatpush2.msra.mxu0 0.0
      %1558 = vmatprep.subr.mxu0 0.0
      %1559 = vmatpush2.msra.mxu0 0.0
      %1560 = vmatprep.subr.mxu0 0.0
      %1561 = vmatpush2.msra.mxu0 0.0
      %1562 = vmatprep.subr.mxu0 0.0
      %1563 = vmatpush2.msra.mxu0 0.0
      %1564 = vmatprep.subr.mxu0 0.0
      %1565 = vmatpush2.msra.mxu0 0.0
      %1566 = vmatprep.subr.mxu0 0.0
      %1567 = vmatpush2.msra.mxu0 0.0
      %1568 = vmatprep.subr.mxu0 0.0
      %1569 = vmatpush2.msra.mxu0 0.0
      %1570 = vmatprep.subr.mxu0 0.0
      %1571 = vmatpush2.msra.mxu0 0.0
      %1572 = vmatprep.subr.mxu0 0.0
      %1573 = vmatpush2.msra.mxu0 0.0
      %1574 = vmatprep.subr.mxu0 0.0
      %1575 = vmatpush2.msra.mxu0 0.0
      %1576 = vmatprep.subr.mxu0 0.0
      %1577 = vmatpush2.msra.mxu0 0.0
      %1578 = vmatprep.subr.mxu0 0.0
      %1579 = vmatpush2.msra.mxu0 0.0
      %1580 = vmatprep.subr.mxu0 0.0
      %1581 = vmatpush2.msra.mxu0 0.0
      %1582 = vmatprep.subr.mxu0 0.0
      %1583 = vmatpush2.msra.mxu0 0.0
      %1584 = vmatprep.subr.mxu0 0.0
      %1585 = vmatpush2.msra.mxu0 0.0
      %1586 = vmatprep.mubr.f32.mxu0 0.0
      %1587 = vmatmul.mubr.f32.gmra.mxu0 %v1424
      %v1588 = vpop.f32.mrf.mxu0
      %v1589 = vadd.f32 0.0, %v1588
      %v1590 = vpop.f32.mrf.mxu0
      %1591 = vmatprep.mubr.f32.mxu0 0.0
      %1592 = vmatmul.mubr.f32.gmra.mxu0 %v1427
      %v1593 = vpop.f32.mrf.mxu0
      %v1594 = vadd.f32 0.0, %v1593
      %v1595 = vpop.f32.mrf.mxu0
      %1596 = vmatprep.mubr.f32.mxu0 0.0
      %1597 = vmatmul.mubr.f32.gmra.mxu0 %v1430
      %v1598 = vpop.f32.mrf.mxu0
      %v1599 = vadd.f32 0.0, %v1598
      %v1600 = vpop.f32.mrf.mxu0
      %1601 = vmatprep.mubr.f32.mxu0 0.0
      %1602 = vmatmul.mubr.f32.gmra.mxu0 %v1433
      %v1603 = vpop.f32.mrf.mxu0
      %v1604 = vadd.f32 0.0, %v1603
      %v1605 = vpop.f32.mrf.mxu0
      %1606 = vmatprep.mubr.f32.mxu0 0.0
      %1607 = vmatmul.mubr.f32.gmra.mxu0 %v1436
      %v1608 = vpop.f32.mrf.mxu0
      %v1609 = vadd.f32 0.0, %v1608
      %v1610 = vpop.f32.mrf.mxu0
      %1611 = vmatprep.mubr.f32.mxu0 0.0
      %1612 = vmatmul.mubr.f32.gmra.mxu0 %v1439
      %v1613 = vpop.f32.mrf.mxu0
      %v1614 = vadd.f32 0.0, %v1613
      %v1615 = vpop.f32.mrf.mxu0
      %1616 = vmatprep.mubr.f32.mxu0 0.0
      %1617 = vmatmul.mubr.f32.gmra.mxu0 %v1442
      %v1618 = vpop.f32.mrf.mxu0
      %v1619 = vadd.f32 0.0, %v1618
      %v1620 = vpop.f32.mrf.mxu0
      %1621 = vmatprep.mubr.f32.mxu0 0.0
      %1622 = vmatmul.mubr.f32.gmra.mxu0 %v1445
      %v1623 = vpop.f32.mrf.mxu0
      %v1624 = vadd.f32 0.0, %v1623
      %v1625 = vpop.f32.mrf.mxu0
      %1626 = vmatprep.mubr.f32.mxu0 0.0
      %1627 = vmatmul.mubr.f32.gmra.mxu0 %v1448
      %v1628 = vpop.f32.mrf.mxu0
      %v1629 = vadd.f32 0.0, %v1628
      %v1630 = vpop.f32.mrf.mxu0
      %1631 = vmatprep.mubr.f32.mxu0 0.0
      %1632 = vmatmul.mubr.f32.gmra.mxu0 %v1451
      %v1633 = vpop.f32.mrf.mxu0
      %v1634 = vadd.f32 0.0, %v1633
      %v1635 = vpop.f32.mrf.mxu0
      %1636 = vmatprep.mubr.f32.mxu0 0.0
      %1637 = vmatmul.mubr.f32.gmra.mxu0 %v1454
      %v1638 = vpop.f32.mrf.mxu0
      %v1639 = vadd.f32 0.0, %v1638
      %v1640 = vpop.f32.mrf.mxu0
      %1641 = vmatprep.mubr.f32.mxu0 0.0
      %1642 = vmatmul.mubr.f32.gmra.mxu0 %v1457
      %v1643 = vpop.f32.mrf.mxu0
      %v1644 = vadd.f32 0.0, %v1643
      %v1645 = vpop.f32.mrf.mxu0
      %1646 = vmatprep.mubr.f32.mxu0 0.0
      %1647 = vmatmul.mubr.f32.gmra.mxu0 %v1460
      %v1648 = vpop.f32.mrf.mxu0
      %v1649 = vadd.f32 0.0, %v1648
      %v1650 = vpop.f32.mrf.mxu0
      %1651 = vmatprep.mubr.f32.mxu0 0.0
      %1652 = vmatmul.mubr.f32.gmra.mxu0 %v1463
      %v1653 = vpop.f32.mrf.mxu0
      %v1654 = vadd.f32 0.0, %v1653
      %v1655 = vpop.f32.mrf.mxu0
      %1656 = vmatprep.mubr.f32.mxu0 0.0
      %1657 = vmatmul.mubr.f32.gmra.mxu0 %v1466
      %v1658 = vpop.f32.mrf.mxu0
      %v1659 = vadd.f32 0.0, %v1658
      %v1660 = vpop.f32.mrf.mxu0
      %1661 = vmatprep.mubr.f32.mxu0 0.0
      %1662 = vmatmul.mubr.f32.gmra.mxu0 %v1469
      %v1663 = vpop.f32.mrf.mxu0
      %v1664 = vadd.f32 0.0, %v1663
      %v1665 = vpop.f32.mrf.mxu0
      %1666 = vmatprep.mubr.f32.mxu0 0.0
      %1667 = vmatmul.mubr.f32.gmra.mxu0 %v1472
      %v1668 = vpop.f32.mrf.mxu0
      %v1669 = vadd.f32 0.0, %v1668
      %v1670 = vpop.f32.mrf.mxu0
      %1671 = vmatprep.mubr.f32.mxu0 0.0
      %1672 = vmatmul.mubr.f32.gmra.mxu0 %v1475
      %v1673 = vpop.f32.mrf.mxu0
      %v1674 = vadd.f32 0.0, %v1673
      %v1675 = vpop.f32.mrf.mxu0
      %1676 = vmatprep.mubr.f32.mxu0 0.0
      %1677 = vmatmul.mubr.f32.gmra.mxu0 %v1478
      %v1678 = vpop.f32.mrf.mxu0
      %v1679 = vadd.f32 0.0, %v1678
      %v1680 = vpop.f32.mrf.mxu0
      %1681 = vmatprep.mubr.f32.mxu0 0.0
      %1682 = vmatmul.mubr.f32.gmra.mxu0 %v1481
      %v1683 = vpop.f32.mrf.mxu0
      %v1684 = vadd.f32 0.0, %v1683
      %v1685 = vpop.f32.mrf.mxu0
      %1686 = vmatprep.mubr.f32.mxu0 0.0
      %1687 = vmatmul.mubr.f32.gmra.mxu0 %v1484
      %v1688 = vpop.f32.mrf.mxu0
      %v1689 = vadd.f32 0.0, %v1688
      %v1690 = vpop.f32.mrf.mxu0
      %1691 = vmatprep.mubr.f32.mxu0 0.0
      %1692 = vmatmul.mubr.f32.gmra.mxu0 %v1487
      %v1693 = vpop.f32.mrf.mxu0
      %v1694 = vadd.f32 0.0, %v1693
      %v1695 = vpop.f32.mrf.mxu0
      %1696 = vmatprep.mubr.f32.mxu0 0.0
      %1697 = vmatmul.mubr.f32.gmra.mxu0 %v1490
      %v1698 = vpop.f32.mrf.mxu0
      %v1699 = vadd.f32 0.0, %v1698
      %v1700 = vpop.f32.mrf.mxu0
      %1701 = vmatprep.mubr.f32.mxu0 0.0
      %1702 = vmatmul.mubr.f32.gmra.mxu0 %v1493
      %v1703 = vpop.f32.mrf.mxu0
      %v1704 = vadd.f32 0.0, %v1703
      %v1705 = vpop.f32.mrf.mxu0
      %1706 = vmatprep.mubr.f32.mxu0 0.0
      %1707 = vmatmul.mubr.f32.gmra.mxu0 %v1496
      %v1708 = vpop.f32.mrf.mxu0
      %v1709 = vadd.f32 0.0, %v1708
      %v1710 = vpop.f32.mrf.mxu0
      %1711 = vmatprep.mubr.f32.mxu0 0.0
      %1712 = vmatmul.mubr.f32.gmra.mxu0 %v1499
      %v1713 = vpop.f32.mrf.mxu0
      %v1714 = vadd.f32 0.0, %v1713
      %v1715 = vpop.f32.mrf.mxu0
      %1716 = vmatprep.mubr.f32.mxu0 0.0
      %1717 = vmatmul.mubr.f32.gmra.mxu0 %v1502
      %v1718 = vpop.f32.mrf.mxu0
      %v1719 = vadd.f32 0.0, %v1718
      %v1720 = vpop.f32.mrf.mxu0
      %1721 = vmatprep.mubr.f32.mxu0 0.0
      %1722 = vmatmul.mubr.f32.gmra.mxu0 %v1505
      %v1723 = vpop.f32.mrf.mxu0
      %v1724 = vadd.f32 0.0, %v1723
      %v1725 = vpop.f32.mrf.mxu0
      %1726 = vmatprep.mubr.f32.mxu0 0.0
      %1727 = vmatmul.mubr.f32.gmra.mxu0 %v1508
      %v1728 = vpop.f32.mrf.mxu0
      %v1729 = vadd.f32 0.0, %v1728
      %v1730 = vpop.f32.mrf.mxu0
      %1731 = vmatprep.mubr.f32.mxu0 0.0
      %1732 = vmatmul.mubr.f32.gmra.mxu0 %v1511
      %v1733 = vpop.f32.mrf.mxu0
      %v1734 = vadd.f32 0.0, %v1733
      %v1735 = vpop.f32.mrf.mxu0
      %1736 = vmatprep.mubr.f32.mxu0 0.0
      %1737 = vmatmul.mubr.f32.gmra.mxu0 %v1514
      %v1738 = vpop.f32.mrf.mxu0
      %v1739 = vadd.f32 0.0, %v1738
      %v1740 = vpop.f32.mrf.mxu0
      %1741 = vmatprep.mubr.f32.mxu0 0.0
      %1742 = vmatmul.mubr.f32.gmra.mxu0 %v1517
      %v1743 = vpop.f32.mrf.mxu0
      %v1744 = vadd.f32 0.0, %v1743
      %v1745 = vpop.f32.mrf.mxu0
      %1746 = vdwg.mxu0
      %v1747 = vadd.f32 %v1230, %v1589
      %v1748 = vadd.f32 %v1235, %v1594
      %v1749 = vadd.f32 %v1240, %v1599
      %v1750 = vadd.f32 %v1245, %v1604
      %v1751 = vadd.f32 %v1250, %v1609
      %v1752 = vadd.f32 %v1255, %v1614
      %v1753 = vadd.f32 %v1260, %v1619
      %v1754 = vadd.f32 %v1265, %v1624
      %v1755 = vadd.f32 %v1270, %v1629
      %v1756 = vadd.f32 %v1275, %v1634
      %v1757 = vadd.f32 %v1280, %v1639
      %v1758 = vadd.f32 %v1285, %v1644
      %v1759 = vadd.f32 %v1290, %v1649
      %v1760 = vadd.f32 %v1295, %v1654
      %v1761 = vadd.f32 %v1300, %v1659
      %v1762 = vadd.f32 %v1305, %v1664
      %v1763 = vadd.f32 %v1310, %v1669
      %v1764 = vadd.f32 %v1315, %v1674
      %v1765 = vadd.f32 %v1320, %v1679
      %v1766 = vadd.f32 %v1325, %v1684
      %v1767 = vadd.f32 %v1330, %v1689
      %v1768 = vadd.f32 %v1335, %v1694
      %v1769 = vadd.f32 %v1340, %v1699
      %v1770 = vadd.f32 %v1345, %v1704
      %v1771 = vadd.f32 %v1350, %v1709
      %v1772 = vadd.f32 %v1355, %v1714
      %v1773 = vadd.f32 %v1360, %v1719
      %v1774 = vadd.f32 %v1365, %v1724
      %v1775 = vadd.f32 %v1370, %v1729
      %v1776 = vadd.f32 %v1375, %v1734
      %v1777 = vadd.f32 %v1380, %v1739
      %v1778 = vadd.f32 %v1385, %v1744
      %v1779 = vld [vmem:[%s637] sm:$0xff]
      %v1780 = vld [vmem:[%s637 + $0x8] sm:$0xff]
      %v1781 = vld [vmem:[%s637 + $0x18] sm:$0xff]
      %v1782 = vld [vmem:[%s637 + $0x20] sm:$0xff]
      %v1783 = vld [vmem:[%s637 + $0x30] sm:$0xff]
      %v1784 = vld [vmem:[%s637 + $0x38] sm:$0xff]
      %v1785 = vld [vmem:[%s637 + $0x48] sm:$0xff]
      %v1786 = vld [vmem:[%s637 + $0x50] sm:$0xff]
      %v1787 = vld [vmem:[%s637 + $0x60] sm:$0xff]
      %v1788 = vld [vmem:[%s637 + $0x68] sm:$0xff]
      %v1789 = vld [vmem:[%s637 + $0x78] sm:$0xff]
      %v1790 = vld [vmem:[%s637 + $0x80] sm:$0xff]
      %v1791 = vld [vmem:[%s637 + $0x90] sm:$0xff]
      %v1792 = vld [vmem:[%s637 + $0x98] sm:$0xff]
      %v1793 = vld [vmem:[%s637 + $0xa8] sm:$0xff]
      %v1794 = vld [vmem:[%s637 + $0xb0] sm:$0xff]
      %v1795 = vld [vmem:[%s637 + $0xc0] sm:$0xff]
      %v1796 = vld [vmem:[%s637 + $0xc8] sm:$0xff]
      %v1797 = vld [vmem:[%s637 + $0xd8] sm:$0xff]
      %v1798 = vld [vmem:[%s637 + $0xe0] sm:$0xff]
      %v1799 = vld [vmem:[%s637 + $0xf0] sm:$0xff]
      %v1800 = vld [vmem:[%s637 + $0xf8] sm:$0xff]
      %v1801 = vld [vmem:[%s637 + $0x108] sm:$0xff]
      %v1802 = vld [vmem:[%s637 + $0x110] sm:$0xff]
      %v1803 = vld [vmem:[%s637 + $0x120] sm:$0xff]
      %v1804 = vld [vmem:[%s637 + $0x128] sm:$0xff]
      %v1805 = vld [vmem:[%s637 + $0x138] sm:$0xff]
      %v1806 = vld [vmem:[%s637 + $0x140] sm:$0xff]
      %v1807 = vld [vmem:[%s637 + $0x150] sm:$0xff]
      %v1808 = vld [vmem:[%s637 + $0x158] sm:$0xff]
      %v1809 = vld [vmem:[%s637 + $0x168] sm:$0xff]
      %v1810 = vld [vmem:[%s637 + $0x170] sm:$0xff]
      %s1811 = scalar_lea.vmem %s1, 48
      %v1812 = vld [vmem:[%s1811] sm:$0xff]
      %v1813 = vld [vmem:[%s1811 + $0x8] sm:$0x3]
      %v1815 = vsel %vm549, %v1779, 0
      %v1818 = vsel %vm549, %v1780, 0
      %v1821 = vsel %vm549, %v1781, 0
      %v1824 = vsel %vm549, %v1782, 0
      %v1827 = vsel %vm549, %v1783, 0
      %v1830 = vsel %vm549, %v1784, 0
      %v1833 = vsel %vm549, %v1785, 0
      %v1836 = vsel %vm549, %v1786, 0
      %v1839 = vsel %vm549, %v1787, 0
      %v1842 = vsel %vm549, %v1788, 0
      %v1845 = vsel %vm549, %v1789, 0
      %v1848 = vsel %vm549, %v1790, 0
      %v1851 = vsel %vm549, %v1791, 0
      %v1854 = vsel %vm549, %v1792, 0
      %v1857 = vsel %vm549, %v1793, 0
      %v1860 = vsel %vm549, %v1794, 0
      %v1863 = vsel %vm549, %v1795, 0
      %v1866 = vsel %vm549, %v1796, 0
      %v1869 = vsel %vm549, %v1797, 0
      %v1872 = vsel %vm549, %v1798, 0
      %v1875 = vsel %vm549, %v1799, 0
      %v1878 = vsel %vm549, %v1800, 0
      %v1881 = vsel %vm549, %v1801, 0
      %v1884 = vsel %vm549, %v1802, 0
      %v1887 = vsel %vm549, %v1803, 0
      %v1890 = vsel %vm549, %v1804, 0
      %v1893 = vsel %vm549, %v1805, 0
      %v1896 = vsel %vm549, %v1806, 0
      %v1899 = vsel %vm549, %v1807, 0
      %v1902 = vsel %vm549, %v1808, 0
      %v1905 = vsel %vm549, %v1809, 0
      %v1908 = vsel %vm549, %v1810, 0
      %v1911 = vsel %vm835, %v1813, 0
      %1913 = vmatprep.subr.mxu0 0.0
      %1914 = vmatpush1.msra.mxu0 0.0
      %1915 = vmatprep.subr.mxu0 0.0
      %1916 = vmatpush1.msra.mxu0 0.0
      %1917 = vmatprep.subr.mxu0 0.0
      %1918 = vmatpush1.msra.mxu0 0.0
      %1919 = vmatprep.subr.mxu0 0.0
      %1920 = vmatpush1.msra.mxu0 0.0
      %1921 = vmatprep.subr.mxu0 0.0
      %1922 = vmatpush1.msra.mxu0 0.0
      %1923 = vmatprep.subr.mxu0 0.0
      %1924 = vmatpush1.msra.mxu0 0.0
      %1925 = vmatprep.subr.mxu0 0.0
      %1926 = vmatpush1.msra.mxu0 0.0
      %1927 = vmatprep.subr.mxu0 0.0
      %1928 = vmatpush1.msra.mxu0 0.0
      %1929 = vmatprep.subr.mxu0 0.0
      %1930 = vmatpush1.msra.mxu0 0.0
      %1931 = vmatprep.subr.mxu0 0.0
      %1932 = vmatpush1.msra.mxu0 0.0
      %1933 = vmatprep.subr.mxu0 0.0
      %1934 = vmatpush1.msra.mxu0 0.0
      %1935 = vmatprep.subr.mxu0 0.0
      %1936 = vmatpush1.msra.mxu0 0.0
      %1937 = vmatprep.subr.mxu0 0.0
      %1938 = vmatpush1.msra.mxu0 0.0
      %1939 = vmatprep.subr.mxu0 0.0
      %1940 = vmatpush1.msra.mxu0 0.0
      %1941 = vmatprep.subr.mxu0 0.0
      %1942 = vmatpush1.msra.mxu0 %v1911
      %1943 = vmatprep.subr.mxu0 0.0
      %1944 = vmatpush1.msra.mxu0 %v1812
      %1945 = vmatprep.subr.mxu0 0.0
      %1946 = vmatpush2.msra.mxu0 0.0
      %1947 = vmatprep.subr.mxu0 0.0
      %1948 = vmatpush2.msra.mxu0 0.0
      %1949 = vmatprep.subr.mxu0 0.0
      %1950 = vmatpush2.msra.mxu0 0.0
      %1951 = vmatprep.subr.mxu0 0.0
      %1952 = vmatpush2.msra.mxu0 0.0
      %1953 = vmatprep.subr.mxu0 0.0
      %1954 = vmatpush2.msra.mxu0 0.0
      %1955 = vmatprep.subr.mxu0 0.0
      %1956 = vmatpush2.msra.mxu0 0.0
      %1957 = vmatprep.subr.mxu0 0.0
      %1958 = vmatpush2.msra.mxu0 0.0
      %1959 = vmatprep.subr.mxu0 0.0
      %1960 = vmatpush2.msra.mxu0 0.0
      %1961 = vmatprep.subr.mxu0 0.0
      %1962 = vmatpush2.msra.mxu0 0.0
      %1963 = vmatprep.subr.mxu0 0.0
      %1964 = vmatpush2.msra.mxu0 0.0
      %1965 = vmatprep.subr.mxu0 0.0
      %1966 = vmatpush2.msra.mxu0 0.0
      %1967 = vmatprep.subr.mxu0 0.0
      %1968 = vmatpush2.msra.mxu0 0.0
      %1969 = vmatprep.subr.mxu0 0.0
      %1970 = vmatpush2.msra.mxu0 0.0
      %1971 = vmatprep.subr.mxu0 0.0
      %1972 = vmatpush2.msra.mxu0 0.0
      %1973 = vmatprep.subr.mxu0 0.0
      %1974 = vmatpush2.msra.mxu0 0.0
      %1975 = vmatprep.subr.mxu0 0.0
      %1976 = vmatpush2.msra.mxu0 0.0
      %1977 = vmatprep.mubr.f32.mxu0 0.0
      %1978 = vmatmul.mubr.f32.gmra.mxu0 %v1815
      %v1979 = vpop.f32.mrf.mxu0
      %v1980 = vadd.f32 0.0, %v1979
      %v1981 = vpop.f32.mrf.mxu0
      %1982 = vmatprep.mubr.f32.mxu0 0.0
      %1983 = vmatmul.mubr.f32.gmra.mxu0 %v1818
      %v1984 = vpop.f32.mrf.mxu0
      %v1985 = vadd.f32 0.0, %v1984
      %v1986 = vpop.f32.mrf.mxu0
      %1987 = vmatprep.mubr.f32.mxu0 0.0
      %1988 = vmatmul.mubr.f32.gmra.mxu0 %v1821
      %v1989 = vpop.f32.mrf.mxu0
      %v1990 = vadd.f32 0.0, %v1989
      %v1991 = vpop.f32.mrf.mxu0
      %1992 = vmatprep.mubr.f32.mxu0 0.0
      %1993 = vmatmul.mubr.f32.gmra.mxu0 %v1824
      %v1994 = vpop.f32.mrf.mxu0
      %v1995 = vadd.f32 0.0, %v1994
      %v1996 = vpop.f32.mrf.mxu0
      %1997 = vmatprep.mubr.f32.mxu0 0.0
      %1998 = vmatmul.mubr.f32.gmra.mxu0 %v1827
      %v1999 = vpop.f32.mrf.mxu0
      %v2000 = vadd.f32 0.0, %v1999
      %v2001 = vpop.f32.mrf.mxu0
      %2002 = vmatprep.mubr.f32.mxu0 0.0
      %2003 = vmatmul.mubr.f32.gmra.mxu0 %v1830
      %v2004 = vpop.f32.mrf.mxu0
      %v2005 = vadd.f32 0.0, %v2004
      %v2006 = vpop.f32.mrf.mxu0
      %2007 = vmatprep.mubr.f32.mxu0 0.0
      %2008 = vmatmul.mubr.f32.gmra.mxu0 %v1833
      %v2009 = vpop.f32.mrf.mxu0
      %v2010 = vadd.f32 0.0, %v2009
      %v2011 = vpop.f32.mrf.mxu0
      %2012 = vmatprep.mubr.f32.mxu0 0.0
      %2013 = vmatmul.mubr.f32.gmra.mxu0 %v1836
      %v2014 = vpop.f32.mrf.mxu0
      %v2015 = vadd.f32 0.0, %v2014
      %v2016 = vpop.f32.mrf.mxu0
      %2017 = vmatprep.mubr.f32.mxu0 0.0
      %2018 = vmatmul.mubr.f32.gmra.mxu0 %v1839
      %v2019 = vpop.f32.mrf.mxu0
      %v2020 = vadd.f32 0.0, %v2019
      %v2021 = vpop.f32.mrf.mxu0
      %2022 = vmatprep.mubr.f32.mxu0 0.0
      %2023 = vmatmul.mubr.f32.gmra.mxu0 %v1842
      %v2024 = vpop.f32.mrf.mxu0
      %v2025 = vadd.f32 0.0, %v2024
      %v2026 = vpop.f32.mrf.mxu0
      %2027 = vmatprep.mubr.f32.mxu0 0.0
      %2028 = vmatmul.mubr.f32.gmra.mxu0 %v1845
      %v2029 = vpop.f32.mrf.mxu0
      %v2030 = vadd.f32 0.0, %v2029
      %v2031 = vpop.f32.mrf.mxu0
      %2032 = vmatprep.mubr.f32.mxu0 0.0
      %2033 = vmatmul.mubr.f32.gmra.mxu0 %v1848
      %v2034 = vpop.f32.mrf.mxu0
      %v2035 = vadd.f32 0.0, %v2034
      %v2036 = vpop.f32.mrf.mxu0
      %2037 = vmatprep.mubr.f32.mxu0 0.0
      %2038 = vmatmul.mubr.f32.gmra.mxu0 %v1851
      %v2039 = vpop.f32.mrf.mxu0
      %v2040 = vadd.f32 0.0, %v2039
      %v2041 = vpop.f32.mrf.mxu0
      %2042 = vmatprep.mubr.f32.mxu0 0.0
      %2043 = vmatmul.mubr.f32.gmra.mxu0 %v1854
      %v2044 = vpop.f32.mrf.mxu0
      %v2045 = vadd.f32 0.0, %v2044
      %v2046 = vpop.f32.mrf.mxu0
      %2047 = vmatprep.mubr.f32.mxu0 0.0
      %2048 = vmatmul.mubr.f32.gmra.mxu0 %v1857
      %v2049 = vpop.f32.mrf.mxu0
      %v2050 = vadd.f32 0.0, %v2049
      %v2051 = vpop.f32.mrf.mxu0
      %2052 = vmatprep.mubr.f32.mxu0 0.0
      %2053 = vmatmul.mubr.f32.gmra.mxu0 %v1860
      %v2054 = vpop.f32.mrf.mxu0
      %v2055 = vadd.f32 0.0, %v2054
      %v2056 = vpop.f32.mrf.mxu0
      %2057 = vmatprep.mubr.f32.mxu0 0.0
      %2058 = vmatmul.mubr.f32.gmra.mxu0 %v1863
      %v2059 = vpop.f32.mrf.mxu0
      %v2060 = vadd.f32 0.0, %v2059
      %v2061 = vpop.f32.mrf.mxu0
      %2062 = vmatprep.mubr.f32.mxu0 0.0
      %2063 = vmatmul.mubr.f32.gmra.mxu0 %v1866
      %v2064 = vpop.f32.mrf.mxu0
      %v2065 = vadd.f32 0.0, %v2064
      %v2066 = vpop.f32.mrf.mxu0
      %2067 = vmatprep.mubr.f32.mxu0 0.0
      %2068 = vmatmul.mubr.f32.gmra.mxu0 %v1869
      %v2069 = vpop.f32.mrf.mxu0
      %v2070 = vadd.f32 0.0, %v2069
      %v2071 = vpop.f32.mrf.mxu0
      %2072 = vmatprep.mubr.f32.mxu0 0.0
      %2073 = vmatmul.mubr.f32.gmra.mxu0 %v1872
      %v2074 = vpop.f32.mrf.mxu0
      %v2075 = vadd.f32 0.0, %v2074
      %v2076 = vpop.f32.mrf.mxu0
      %2077 = vmatprep.mubr.f32.mxu0 0.0
      %2078 = vmatmul.mubr.f32.gmra.mxu0 %v1875
      %v2079 = vpop.f32.mrf.mxu0
      %v2080 = vadd.f32 0.0, %v2079
      %v2081 = vpop.f32.mrf.mxu0
      %2082 = vmatprep.mubr.f32.mxu0 0.0
      %2083 = vmatmul.mubr.f32.gmra.mxu0 %v1878
      %v2084 = vpop.f32.mrf.mxu0
      %v2085 = vadd.f32 0.0, %v2084
      %v2086 = vpop.f32.mrf.mxu0
      %2087 = vmatprep.mubr.f32.mxu0 0.0
      %2088 = vmatmul.mubr.f32.gmra.mxu0 %v1881
      %v2089 = vpop.f32.mrf.mxu0
      %v2090 = vadd.f32 0.0, %v2089
      %v2091 = vpop.f32.mrf.mxu0
      %2092 = vmatprep.mubr.f32.mxu0 0.0
      %2093 = vmatmul.mubr.f32.gmra.mxu0 %v1884
      %v2094 = vpop.f32.mrf.mxu0
      %v2095 = vadd.f32 0.0, %v2094
      %v2096 = vpop.f32.mrf.mxu0
      %2097 = vmatprep.mubr.f32.mxu0 0.0
      %2098 = vmatmul.mubr.f32.gmra.mxu0 %v1887
      %v2099 = vpop.f32.mrf.mxu0
      %v2100 = vadd.f32 0.0, %v2099
      %v2101 = vpop.f32.mrf.mxu0
      %2102 = vmatprep.mubr.f32.mxu0 0.0
      %2103 = vmatmul.mubr.f32.gmra.mxu0 %v1890
      %v2104 = vpop.f32.mrf.mxu0
      %v2105 = vadd.f32 0.0, %v2104
      %v2106 = vpop.f32.mrf.mxu0
      %2107 = vmatprep.mubr.f32.mxu0 0.0
      %2108 = vmatmul.mubr.f32.gmra.mxu0 %v1893
      %v2109 = vpop.f32.mrf.mxu0
      %v2110 = vadd.f32 0.0, %v2109
      %v2111 = vpop.f32.mrf.mxu0
      %2112 = vmatprep.mubr.f32.mxu0 0.0
      %2113 = vmatmul.mubr.f32.gmra.mxu0 %v1896
      %v2114 = vpop.f32.mrf.mxu0
      %v2115 = vadd.f32 0.0, %v2114
      %v2116 = vpop.f32.mrf.mxu0
      %2117 = vmatprep.mubr.f32.mxu0 0.0
      %2118 = vmatmul.mubr.f32.gmra.mxu0 %v1899
      %v2119 = vpop.f32.mrf.mxu0
      %v2120 = vadd.f32 0.0, %v2119
      %v2121 = vpop.f32.mrf.mxu0
      %2122 = vmatprep.mubr.f32.mxu0 0.0
      %2123 = vmatmul.mubr.f32.gmra.mxu0 %v1902
      %v2124 = vpop.f32.mrf.mxu0
      %v2125 = vadd.f32 0.0, %v2124
      %v2126 = vpop.f32.mrf.mxu0
      %2127 = vmatprep.mubr.f32.mxu0 0.0
      %2128 = vmatmul.mubr.f32.gmra.mxu0 %v1905
      %v2129 = vpop.f32.mrf.mxu0
      %v2130 = vadd.f32 0.0, %v2129
      %v2131 = vpop.f32.mrf.mxu0
      %2132 = vmatprep.mubr.f32.mxu0 0.0
      %2133 = vmatmul.mubr.f32.gmra.mxu0 %v1908
      %v2134 = vpop.f32.mrf.mxu0
      %v2135 = vadd.f32 0.0, %v2134
      %v2136 = vpop.f32.mrf.mxu0
      %2137 = vdwg.mxu0
      %v2138 = vadd.f32 %v1747, %v1980
      %v2139 = vadd.f32 %v1748, %v1985
      %v2140 = vadd.f32 %v1749, %v1990
      %v2141 = vadd.f32 %v1750, %v1995
      %v2142 = vadd.f32 %v1751, %v2000
      %v2143 = vadd.f32 %v1752, %v2005
      %v2144 = vadd.f32 %v1753, %v2010
      %v2145 = vadd.f32 %v1754, %v2015
      %v2146 = vadd.f32 %v1755, %v2020
      %v2147 = vadd.f32 %v1756, %v2025
      %v2148 = vadd.f32 %v1757, %v2030
      %v2149 = vadd.f32 %v1758, %v2035
      %v2150 = vadd.f32 %v1759, %v2040
      %v2151 = vadd.f32 %v1760, %v2045
      %v2152 = vadd.f32 %v1761, %v2050
      %v2153 = vadd.f32 %v1762, %v2055
      %v2154 = vadd.f32 %v1763, %v2060
      %v2155 = vadd.f32 %v1764, %v2065
      %v2156 = vadd.f32 %v1765, %v2070
      %v2157 = vadd.f32 %v1766, %v2075
      %v2158 = vadd.f32 %v1767, %v2080
      %v2159 = vadd.f32 %v1768, %v2085
      %v2160 = vadd.f32 %v1769, %v2090
      %v2161 = vadd.f32 %v1770, %v2095
      %v2162 = vadd.f32 %v1771, %v2100
      %v2163 = vadd.f32 %v1772, %v2105
      %v2164 = vadd.f32 %v1773, %v2110
      %v2165 = vadd.f32 %v1774, %v2115
      %v2166 = vadd.f32 %v1775, %v2120
      %v2167 = vadd.f32 %v1776, %v2125
      %v2168 = vadd.f32 %v1777, %v2130
      %v2169 = vadd.f32 %v1778, %v2135
      %v2170 = vld [vmem:[%s637 + $0x1] sm:$0xff]
      %v2171 = vld [vmem:[%s637 + $0x9] sm:$0xff]
      %v2172 = vld [vmem:[%s637 + $0x19] sm:$0xff]
      %v2173 = vld [vmem:[%s637 + $0x21] sm:$0xff]
      %v2174 = vld [vmem:[%s637 + $0x31] sm:$0xff]
      %v2175 = vld [vmem:[%s637 + $0x39] sm:$0xff]
      %v2176 = vld [vmem:[%s637 + $0x49] sm:$0xff]
      %v2177 = vld [vmem:[%s637 + $0x51] sm:$0xff]
      %v2178 = vld [vmem:[%s637 + $0x61] sm:$0xff]
      %v2179 = vld [vmem:[%s637 + $0x69] sm:$0xff]
      %v2180 = vld [vmem:[%s637 + $0x79] sm:$0xff]
      %v2181 = vld [vmem:[%s637 + $0x81] sm:$0xff]
      %v2182 = vld [vmem:[%s637 + $0x91] sm:$0xff]
      %v2183 = vld [vmem:[%s637 + $0x99] sm:$0xff]
      %v2184 = vld [vmem:[%s637 + $0xa9] sm:$0xff]
      %v2185 = vld [vmem:[%s637 + $0xb1] sm:$0xff]
      %v2186 = vld [vmem:[%s637 + $0xc1] sm:$0xff]
      %v2187 = vld [vmem:[%s637 + $0xc9] sm:$0xff]
      %v2188 = vld [vmem:[%s637 + $0xd9] sm:$0xff]
      %v2189 = vld [vmem:[%s637 + $0xe1] sm:$0xff]
      %v2190 = vld [vmem:[%s637 + $0xf1] sm:$0xff]
      %v2191 = vld [vmem:[%s637 + $0xf9] sm:$0xff]
      %v2192 = vld [vmem:[%s637 + $0x109] sm:$0xff]
      %v2193 = vld [vmem:[%s637 + $0x111] sm:$0xff]
      %v2194 = vld [vmem:[%s637 + $0x121] sm:$0xff]
      %v2195 = vld [vmem:[%s637 + $0x129] sm:$0xff]
      %v2196 = vld [vmem:[%s637 + $0x139] sm:$0xff]
      %v2197 = vld [vmem:[%s637 + $0x141] sm:$0xff]
      %v2198 = vld [vmem:[%s637 + $0x151] sm:$0xff]
      %v2199 = vld [vmem:[%s637 + $0x159] sm:$0xff]
      %v2200 = vld [vmem:[%s637 + $0x169] sm:$0xff]
      %v2201 = vld [vmem:[%s637 + $0x171] sm:$0xff]
      %s2202 = scalar_lea.vmem %s1, 64
      %v2203 = vld [vmem:[%s2202] sm:$0xff]
      %v2204 = vld [vmem:[%s2202 + $0x8] sm:$0x3]
      %v2206 = vsel %vm549, %v2170, 0
      %v2209 = vsel %vm549, %v2171, 0
      %v2212 = vsel %vm549, %v2172, 0
      %v2215 = vsel %vm549, %v2173, 0
      %v2218 = vsel %vm549, %v2174, 0
      %v2221 = vsel %vm549, %v2175, 0
      %v2224 = vsel %vm549, %v2176, 0
      %v2227 = vsel %vm549, %v2177, 0
      %v2230 = vsel %vm549, %v2178, 0
      %v2233 = vsel %vm549, %v2179, 0
      %v2236 = vsel %vm549, %v2180, 0
      %v2239 = vsel %vm549, %v2181, 0
      %v2242 = vsel %vm549, %v2182, 0
      %v2245 = vsel %vm549, %v2183, 0
      %v2248 = vsel %vm549, %v2184, 0
      %v2251 = vsel %vm549, %v2185, 0
      %v2254 = vsel %vm549, %v2186, 0
      %v2257 = vsel %vm549, %v2187, 0
      %v2260 = vsel %vm549, %v2188, 0
      %v2263 = vsel %vm549, %v2189, 0
      %v2266 = vsel %vm549, %v2190, 0
      %v2269 = vsel %vm549, %v2191, 0
      %v2272 = vsel %vm549, %v2192, 0
      %v2275 = vsel %vm549, %v2193, 0
      %v2278 = vsel %vm549, %v2194, 0
      %v2281 = vsel %vm549, %v2195, 0
      %v2284 = vsel %vm549, %v2196, 0
      %v2287 = vsel %vm549, %v2197, 0
      %v2290 = vsel %vm549, %v2198, 0
      %v2293 = vsel %vm549, %v2199, 0
      %v2296 = vsel %vm549, %v2200, 0
      %v2299 = vsel %vm549, %v2201, 0
      %v2302 = vsel %vm835, %v2204, 0
      %2304 = vmatprep.subr.mxu0 0.0
      %2305 = vmatpush1.msra.mxu0 0.0
      %2306 = vmatprep.subr.mxu0 0.0
      %2307 = vmatpush1.msra.mxu0 0.0
      %2308 = vmatprep.subr.mxu0 0.0
      %2309 = vmatpush1.msra.mxu0 0.0
      %2310 = vmatprep.subr.mxu0 0.0
      %2311 = vmatpush1.msra.mxu0 0.0
      %2312 = vmatprep.subr.mxu0 0.0
      %2313 = vmatpush1.msra.mxu0 0.0
      %2314 = vmatprep.subr.mxu0 0.0
      %2315 = vmatpush1.msra.mxu0 0.0
      %2316 = vmatprep.subr.mxu0 0.0
      %2317 = vmatpush1.msra.mxu0 0.0
      %2318 = vmatprep.subr.mxu0 0.0
      %2319 = vmatpush1.msra.mxu0 0.0
      %2320 = vmatprep.subr.mxu0 0.0
      %2321 = vmatpush1.msra.mxu0 0.0
      %2322 = vmatprep.subr.mxu0 0.0
      %2323 = vmatpush1.msra.mxu0 0.0
      %2324 = vmatprep.subr.mxu0 0.0
      %2325 = vmatpush1.msra.mxu0 0.0
      %2326 = vmatprep.subr.mxu0 0.0
      %2327 = vmatpush1.msra.mxu0 0.0
      %2328 = vmatprep.subr.mxu0 0.0
      %2329 = vmatpush1.msra.mxu0 0.0
      %2330 = vmatprep.subr.mxu0 0.0
      %2331 = vmatpush1.msra.mxu0 0.0
      %2332 = vmatprep.subr.mxu0 0.0
      %2333 = vmatpush1.msra.mxu0 %v2302
      %2334 = vmatprep.subr.mxu0 0.0
      %2335 = vmatpush1.msra.mxu0 %v2203
      %2336 = vmatprep.subr.mxu0 0.0
      %2337 = vmatpush2.msra.mxu0 0.0
      %2338 = vmatprep.subr.mxu0 0.0
      %2339 = vmatpush2.msra.mxu0 0.0
      %2340 = vmatprep.subr.mxu0 0.0
      %2341 = vmatpush2.msra.mxu0 0.0
      %2342 = vmatprep.subr.mxu0 0.0
      %2343 = vmatpush2.msra.mxu0 0.0
      %2344 = vmatprep.subr.mxu0 0.0
      %2345 = vmatpush2.msra.mxu0 0.0
      %2346 = vmatprep.subr.mxu0 0.0
      %2347 = vmatpush2.msra.mxu0 0.0
      %2348 = vmatprep.subr.mxu0 0.0
      %2349 = vmatpush2.msra.mxu0 0.0
      %2350 = vmatprep.subr.mxu0 0.0
      %2351 = vmatpush2.msra.mxu0 0.0
      %2352 = vmatprep.subr.mxu0 0.0
      %2353 = vmatpush2.msra.mxu0 0.0
      %2354 = vmatprep.subr.mxu0 0.0
      %2355 = vmatpush2.msra.mxu0 0.0
      %2356 = vmatprep.subr.mxu0 0.0
      %2357 = vmatpush2.msra.mxu0 0.0
      %2358 = vmatprep.subr.mxu0 0.0
      %2359 = vmatpush2.msra.mxu0 0.0
      %2360 = vmatprep.subr.mxu0 0.0
      %2361 = vmatpush2.msra.mxu0 0.0
      %2362 = vmatprep.subr.mxu0 0.0
      %2363 = vmatpush2.msra.mxu0 0.0
      %2364 = vmatprep.subr.mxu0 0.0
      %2365 = vmatpush2.msra.mxu0 0.0
      %2366 = vmatprep.subr.mxu0 0.0
      %2367 = vmatpush2.msra.mxu0 0.0
      %2368 = vmatprep.mubr.f32.mxu0 0.0
      %2369 = vmatmul.mubr.f32.gmra.mxu0 %v2206
      %v2370 = vpop.f32.mrf.mxu0
      %v2371 = vadd.f32 0.0, %v2370
      %v2372 = vpop.f32.mrf.mxu0
      %2373 = vmatprep.mubr.f32.mxu0 0.0
      %2374 = vmatmul.mubr.f32.gmra.mxu0 %v2209
      %v2375 = vpop.f32.mrf.mxu0
      %v2376 = vadd.f32 0.0, %v2375
      %v2377 = vpop.f32.mrf.mxu0
      %2378 = vmatprep.mubr.f32.mxu0 0.0
      %2379 = vmatmul.mubr.f32.gmra.mxu0 %v2212
      %v2380 = vpop.f32.mrf.mxu0
      %v2381 = vadd.f32 0.0, %v2380
      %v2382 = vpop.f32.mrf.mxu0
      %2383 = vmatprep.mubr.f32.mxu0 0.0
      %2384 = vmatmul.mubr.f32.gmra.mxu0 %v2215
      %v2385 = vpop.f32.mrf.mxu0
      %v2386 = vadd.f32 0.0, %v2385
      %v2387 = vpop.f32.mrf.mxu0
      %2388 = vmatprep.mubr.f32.mxu0 0.0
      %2389 = vmatmul.mubr.f32.gmra.mxu0 %v2218
      %v2390 = vpop.f32.mrf.mxu0
      %v2391 = vadd.f32 0.0, %v2390
      %v2392 = vpop.f32.mrf.mxu0
      %2393 = vmatprep.mubr.f32.mxu0 0.0
      %2394 = vmatmul.mubr.f32.gmra.mxu0 %v2221
      %v2395 = vpop.f32.mrf.mxu0
      %v2396 = vadd.f32 0.0, %v2395
      %v2397 = vpop.f32.mrf.mxu0
      %2398 = vmatprep.mubr.f32.mxu0 0.0
      %2399 = vmatmul.mubr.f32.gmra.mxu0 %v2224
      %v2400 = vpop.f32.mrf.mxu0
      %v2401 = vadd.f32 0.0, %v2400
      %v2402 = vpop.f32.mrf.mxu0
      %2403 = vmatprep.mubr.f32.mxu0 0.0
      %2404 = vmatmul.mubr.f32.gmra.mxu0 %v2227
      %v2405 = vpop.f32.mrf.mxu0
      %v2406 = vadd.f32 0.0, %v2405
      %v2407 = vpop.f32.mrf.mxu0
      %2408 = vmatprep.mubr.f32.mxu0 0.0
      %2409 = vmatmul.mubr.f32.gmra.mxu0 %v2230
      %v2410 = vpop.f32.mrf.mxu0
      %v2411 = vadd.f32 0.0, %v2410
      %v2412 = vpop.f32.mrf.mxu0
      %2413 = vmatprep.mubr.f32.mxu0 0.0
      %2414 = vmatmul.mubr.f32.gmra.mxu0 %v2233
      %v2415 = vpop.f32.mrf.mxu0
      %v2416 = vadd.f32 0.0, %v2415
      %v2417 = vpop.f32.mrf.mxu0
      %2418 = vmatprep.mubr.f32.mxu0 0.0
      %2419 = vmatmul.mubr.f32.gmra.mxu0 %v2236
      %v2420 = vpop.f32.mrf.mxu0
      %v2421 = vadd.f32 0.0, %v2420
      %v2422 = vpop.f32.mrf.mxu0
      %2423 = vmatprep.mubr.f32.mxu0 0.0
      %2424 = vmatmul.mubr.f32.gmra.mxu0 %v2239
      %v2425 = vpop.f32.mrf.mxu0
      %v2426 = vadd.f32 0.0, %v2425
      %v2427 = vpop.f32.mrf.mxu0
      %2428 = vmatprep.mubr.f32.mxu0 0.0
      %2429 = vmatmul.mubr.f32.gmra.mxu0 %v2242
      %v2430 = vpop.f32.mrf.mxu0
      %v2431 = vadd.f32 0.0, %v2430
      %v2432 = vpop.f32.mrf.mxu0
      %2433 = vmatprep.mubr.f32.mxu0 0.0
      %2434 = vmatmul.mubr.f32.gmra.mxu0 %v2245
      %v2435 = vpop.f32.mrf.mxu0
      %v2436 = vadd.f32 0.0, %v2435
      %v2437 = vpop.f32.mrf.mxu0
      %2438 = vmatprep.mubr.f32.mxu0 0.0
      %2439 = vmatmul.mubr.f32.gmra.mxu0 %v2248
      %v2440 = vpop.f32.mrf.mxu0
      %v2441 = vadd.f32 0.0, %v2440
      %v2442 = vpop.f32.mrf.mxu0
      %2443 = vmatprep.mubr.f32.mxu0 0.0
      %2444 = vmatmul.mubr.f32.gmra.mxu0 %v2251
      %v2445 = vpop.f32.mrf.mxu0
      %v2446 = vadd.f32 0.0, %v2445
      %v2447 = vpop.f32.mrf.mxu0
      %2448 = vmatprep.mubr.f32.mxu0 0.0
      %2449 = vmatmul.mubr.f32.gmra.mxu0 %v2254
      %v2450 = vpop.f32.mrf.mxu0
      %v2451 = vadd.f32 0.0, %v2450
      %v2452 = vpop.f32.mrf.mxu0
      %2453 = vmatprep.mubr.f32.mxu0 0.0
      %2454 = vmatmul.mubr.f32.gmra.mxu0 %v2257
      %v2455 = vpop.f32.mrf.mxu0
      %v2456 = vadd.f32 0.0, %v2455
      %v2457 = vpop.f32.mrf.mxu0
      %2458 = vmatprep.mubr.f32.mxu0 0.0
      %2459 = vmatmul.mubr.f32.gmra.mxu0 %v2260
      %v2460 = vpop.f32.mrf.mxu0
      %v2461 = vadd.f32 0.0, %v2460
      %v2462 = vpop.f32.mrf.mxu0
      %2463 = vmatprep.mubr.f32.mxu0 0.0
      %2464 = vmatmul.mubr.f32.gmra.mxu0 %v2263
      %v2465 = vpop.f32.mrf.mxu0
      %v2466 = vadd.f32 0.0, %v2465
      %v2467 = vpop.f32.mrf.mxu0
      %2468 = vmatprep.mubr.f32.mxu0 0.0
      %2469 = vmatmul.mubr.f32.gmra.mxu0 %v2266
      %v2470 = vpop.f32.mrf.mxu0
      %v2471 = vadd.f32 0.0, %v2470
      %v2472 = vpop.f32.mrf.mxu0
      %2473 = vmatprep.mubr.f32.mxu0 0.0
      %2474 = vmatmul.mubr.f32.gmra.mxu0 %v2269
      %v2475 = vpop.f32.mrf.mxu0
      %v2476 = vadd.f32 0.0, %v2475
      %v2477 = vpop.f32.mrf.mxu0
      %2478 = vmatprep.mubr.f32.mxu0 0.0
      %2479 = vmatmul.mubr.f32.gmra.mxu0 %v2272
      %v2480 = vpop.f32.mrf.mxu0
      %v2481 = vadd.f32 0.0, %v2480
      %v2482 = vpop.f32.mrf.mxu0
      %2483 = vmatprep.mubr.f32.mxu0 0.0
      %2484 = vmatmul.mubr.f32.gmra.mxu0 %v2275
      %v2485 = vpop.f32.mrf.mxu0
      %v2486 = vadd.f32 0.0, %v2485
      %v2487 = vpop.f32.mrf.mxu0
      %2488 = vmatprep.mubr.f32.mxu0 0.0
      %2489 = vmatmul.mubr.f32.gmra.mxu0 %v2278
      %v2490 = vpop.f32.mrf.mxu0
      %v2491 = vadd.f32 0.0, %v2490
      %v2492 = vpop.f32.mrf.mxu0
      %2493 = vmatprep.mubr.f32.mxu0 0.0
      %2494 = vmatmul.mubr.f32.gmra.mxu0 %v2281
      %v2495 = vpop.f32.mrf.mxu0
      %v2496 = vadd.f32 0.0, %v2495
      %v2497 = vpop.f32.mrf.mxu0
      %2498 = vmatprep.mubr.f32.mxu0 0.0
      %2499 = vmatmul.mubr.f32.gmra.mxu0 %v2284
      %v2500 = vpop.f32.mrf.mxu0
      %v2501 = vadd.f32 0.0, %v2500
      %v2502 = vpop.f32.mrf.mxu0
      %2503 = vmatprep.mubr.f32.mxu0 0.0
      %2504 = vmatmul.mubr.f32.gmra.mxu0 %v2287
      %v2505 = vpop.f32.mrf.mxu0
      %v2506 = vadd.f32 0.0, %v2505
      %v2507 = vpop.f32.mrf.mxu0
      %2508 = vmatprep.mubr.f32.mxu0 0.0
      %2509 = vmatmul.mubr.f32.gmra.mxu0 %v2290
      %v2510 = vpop.f32.mrf.mxu0
      %v2511 = vadd.f32 0.0, %v2510
      %v2512 = vpop.f32.mrf.mxu0
      %2513 = vmatprep.mubr.f32.mxu0 0.0
      %2514 = vmatmul.mubr.f32.gmra.mxu0 %v2293
      %v2515 = vpop.f32.mrf.mxu0
      %v2516 = vadd.f32 0.0, %v2515
      %v2517 = vpop.f32.mrf.mxu0
      %2518 = vmatprep.mubr.f32.mxu0 0.0
      %2519 = vmatmul.mubr.f32.gmra.mxu0 %v2296
      %v2520 = vpop.f32.mrf.mxu0
      %v2521 = vadd.f32 0.0, %v2520
      %v2522 = vpop.f32.mrf.mxu0
      %2523 = vmatprep.mubr.f32.mxu0 0.0
      %2524 = vmatmul.mubr.f32.gmra.mxu0 %v2299
      %v2525 = vpop.f32.mrf.mxu0
      %v2526 = vadd.f32 0.0, %v2525
      %v2527 = vpop.f32.mrf.mxu0
      %2528 = vdwg.mxu0
      %v2529 = vadd.f32 %v2138, %v2371
      %v2530 = vadd.f32 %v2139, %v2376
      %v2531 = vadd.f32 %v2140, %v2381
      %v2532 = vadd.f32 %v2141, %v2386
      %v2533 = vadd.f32 %v2142, %v2391
      %v2534 = vadd.f32 %v2143, %v2396
      %v2535 = vadd.f32 %v2144, %v2401
      %v2536 = vadd.f32 %v2145, %v2406
      %v2537 = vadd.f32 %v2146, %v2411
      %v2538 = vadd.f32 %v2147, %v2416
      %v2539 = vadd.f32 %v2148, %v2421
      %v2540 = vadd.f32 %v2149, %v2426
      %v2541 = vadd.f32 %v2150, %v2431
      %v2542 = vadd.f32 %v2151, %v2436
      %v2543 = vadd.f32 %v2152, %v2441
      %v2544 = vadd.f32 %v2153, %v2446
      %v2545 = vadd.f32 %v2154, %v2451
      %v2546 = vadd.f32 %v2155, %v2456
      %v2547 = vadd.f32 %v2156, %v2461
      %v2548 = vadd.f32 %v2157, %v2466
      %v2549 = vadd.f32 %v2158, %v2471
      %v2550 = vadd.f32 %v2159, %v2476
      %v2551 = vadd.f32 %v2160, %v2481
      %v2552 = vadd.f32 %v2161, %v2486
      %v2553 = vadd.f32 %v2162, %v2491
      %v2554 = vadd.f32 %v2163, %v2496
      %v2555 = vadd.f32 %v2164, %v2501
      %v2556 = vadd.f32 %v2165, %v2506
      %v2557 = vadd.f32 %v2166, %v2511
      %v2558 = vadd.f32 %v2167, %v2516
      %v2559 = vadd.f32 %v2168, %v2521
      %v2560 = vadd.f32 %v2169, %v2526
      %v2561 = vld [vmem:[%s637 + $0x2] sm:$0xff]
      %v2562 = vld [vmem:[%s637 + $0xa] sm:$0xff]
      %v2563 = vld [vmem:[%s637 + $0x1a] sm:$0xff]
      %v2564 = vld [vmem:[%s637 + $0x22] sm:$0xff]
      %v2565 = vld [vmem:[%s637 + $0x32] sm:$0xff]
      %v2566 = vld [vmem:[%s637 + $0x3a] sm:$0xff]
      %v2567 = vld [vmem:[%s637 + $0x4a] sm:$0xff]
      %v2568 = vld [vmem:[%s637 + $0x52] sm:$0xff]
      %v2569 = vld [vmem:[%s637 + $0x62] sm:$0xff]
      %v2570 = vld [vmem:[%s637 + $0x6a] sm:$0xff]
      %v2571 = vld [vmem:[%s637 + $0x7a] sm:$0xff]
      %v2572 = vld [vmem:[%s637 + $0x82] sm:$0xff]
      %v2573 = vld [vmem:[%s637 + $0x92] sm:$0xff]
      %v2574 = vld [vmem:[%s637 + $0x9a] sm:$0xff]
      %v2575 = vld [vmem:[%s637 + $0xaa] sm:$0xff]
      %v2576 = vld [vmem:[%s637 + $0xb2] sm:$0xff]
      %v2577 = vld [vmem:[%s637 + $0xc2] sm:$0xff]
      %v2578 = vld [vmem:[%s637 + $0xca] sm:$0xff]
      %v2579 = vld [vmem:[%s637 + $0xda] sm:$0xff]
      %v2580 = vld [vmem:[%s637 + $0xe2] sm:$0xff]
      %v2581 = vld [vmem:[%s637 + $0xf2] sm:$0xff]
      %v2582 = vld [vmem:[%s637 + $0xfa] sm:$0xff]
      %v2583 = vld [vmem:[%s637 + $0x10a] sm:$0xff]
      %v2584 = vld [vmem:[%s637 + $0x112] sm:$0xff]
      %v2585 = vld [vmem:[%s637 + $0x122] sm:$0xff]
      %v2586 = vld [vmem:[%s637 + $0x12a] sm:$0xff]
      %v2587 = vld [vmem:[%s637 + $0x13a] sm:$0xff]
      %v2588 = vld [vmem:[%s637 + $0x142] sm:$0xff]
      %v2589 = vld [vmem:[%s637 + $0x152] sm:$0xff]
      %v2590 = vld [vmem:[%s637 + $0x15a] sm:$0xff]
      %v2591 = vld [vmem:[%s637 + $0x16a] sm:$0xff]
      %v2592 = vld [vmem:[%s637 + $0x172] sm:$0xff]
      %s2593 = scalar_lea.vmem %s1, 80
      %v2594 = vld [vmem:[%s2593] sm:$0xff]
      %v2595 = vld [vmem:[%s2593 + $0x8] sm:$0x3]
      %v2597 = vsel %vm549, %v2561, 0
      %v2600 = vsel %vm549, %v2562, 0
      %v2603 = vsel %vm549, %v2563, 0
      %v2606 = vsel %vm549, %v2564, 0
      %v2609 = vsel %vm549, %v2565, 0
      %v2612 = vsel %vm549, %v2566, 0
      %v2615 = vsel %vm549, %v2567, 0
      %v2618 = vsel %vm549, %v2568, 0
      %v2621 = vsel %vm549, %v2569, 0
      %v2624 = vsel %vm549, %v2570, 0
      %v2627 = vsel %vm549, %v2571, 0
      %v2630 = vsel %vm549, %v2572, 0
      %v2633 = vsel %vm549, %v2573, 0
      %v2636 = vsel %vm549, %v2574, 0
      %v2639 = vsel %vm549, %v2575, 0
      %v2642 = vsel %vm549, %v2576, 0
      %v2645 = vsel %vm549, %v2577, 0
      %v2648 = vsel %vm549, %v2578, 0
      %v2651 = vsel %vm549, %v2579, 0
      %v2654 = vsel %vm549, %v2580, 0
      %v2657 = vsel %vm549, %v2581, 0
      %v2660 = vsel %vm549, %v2582, 0
      %v2663 = vsel %vm549, %v2583, 0
      %v2666 = vsel %vm549, %v2584, 0
      %v2669 = vsel %vm549, %v2585, 0
      %v2672 = vsel %vm549, %v2586, 0
      %v2675 = vsel %vm549, %v2587, 0
      %v2678 = vsel %vm549, %v2588, 0
      %v2681 = vsel %vm549, %v2589, 0
      %v2684 = vsel %vm549, %v2590, 0
      %v2687 = vsel %vm549, %v2591, 0
      %v2690 = vsel %vm549, %v2592, 0
      %v2693 = vsel %vm835, %v2595, 0
      %2695 = vmatprep.subr.mxu0 0.0
      %2696 = vmatpush1.msra.mxu0 0.0
      %2697 = vmatprep.subr.mxu0 0.0
      %2698 = vmatpush1.msra.mxu0 0.0
      %2699 = vmatprep.subr.mxu0 0.0
      %2700 = vmatpush1.msra.mxu0 0.0
      %2701 = vmatprep.subr.mxu0 0.0
      %2702 = vmatpush1.msra.mxu0 0.0
      %2703 = vmatprep.subr.mxu0 0.0
      %2704 = vmatpush1.msra.mxu0 0.0
      %2705 = vmatprep.subr.mxu0 0.0
      %2706 = vmatpush1.msra.mxu0 0.0
      %2707 = vmatprep.subr.mxu0 0.0
      %2708 = vmatpush1.msra.mxu0 0.0
      %2709 = vmatprep.subr.mxu0 0.0
      %2710 = vmatpush1.msra.mxu0 0.0
      %2711 = vmatprep.subr.mxu0 0.0
      %2712 = vmatpush1.msra.mxu0 0.0
      %2713 = vmatprep.subr.mxu0 0.0
      %2714 = vmatpush1.msra.mxu0 0.0
      %2715 = vmatprep.subr.mxu0 0.0
      %2716 = vmatpush1.msra.mxu0 0.0
      %2717 = vmatprep.subr.mxu0 0.0
      %2718 = vmatpush1.msra.mxu0 0.0
      %2719 = vmatprep.subr.mxu0 0.0
      %2720 = vmatpush1.msra.mxu0 0.0
      %2721 = vmatprep.subr.mxu0 0.0
      %2722 = vmatpush1.msra.mxu0 0.0
      %2723 = vmatprep.subr.mxu0 0.0
      %2724 = vmatpush1.msra.mxu0 %v2693
      %2725 = vmatprep.subr.mxu0 0.0
      %2726 = vmatpush1.msra.mxu0 %v2594
      %2727 = vmatprep.subr.mxu0 0.0
      %2728 = vmatpush2.msra.mxu0 0.0
      %2729 = vmatprep.subr.mxu0 0.0
      %2730 = vmatpush2.msra.mxu0 0.0
      %2731 = vmatprep.subr.mxu0 0.0
      %2732 = vmatpush2.msra.mxu0 0.0
      %2733 = vmatprep.subr.mxu0 0.0
      %2734 = vmatpush2.msra.mxu0 0.0
      %2735 = vmatprep.subr.mxu0 0.0
      %2736 = vmatpush2.msra.mxu0 0.0
      %2737 = vmatprep.subr.mxu0 0.0
      %2738 = vmatpush2.msra.mxu0 0.0
      %2739 = vmatprep.subr.mxu0 0.0
      %2740 = vmatpush2.msra.mxu0 0.0
      %2741 = vmatprep.subr.mxu0 0.0
      %2742 = vmatpush2.msra.mxu0 0.0
      %2743 = vmatprep.subr.mxu0 0.0
      %2744 = vmatpush2.msra.mxu0 0.0
      %2745 = vmatprep.subr.mxu0 0.0
      %2746 = vmatpush2.msra.mxu0 0.0
      %2747 = vmatprep.subr.mxu0 0.0
      %2748 = vmatpush2.msra.mxu0 0.0
      %2749 = vmatprep.subr.mxu0 0.0
      %2750 = vmatpush2.msra.mxu0 0.0
      %2751 = vmatprep.subr.mxu0 0.0
      %2752 = vmatpush2.msra.mxu0 0.0
      %2753 = vmatprep.subr.mxu0 0.0
      %2754 = vmatpush2.msra.mxu0 0.0
      %2755 = vmatprep.subr.mxu0 0.0
      %2756 = vmatpush2.msra.mxu0 0.0
      %2757 = vmatprep.subr.mxu0 0.0
      %2758 = vmatpush2.msra.mxu0 0.0
      %2759 = vmatprep.mubr.f32.mxu0 0.0
      %2760 = vmatmul.mubr.f32.gmra.mxu0 %v2597
      %v2761 = vpop.f32.mrf.mxu0
      %v2762 = vadd.f32 0.0, %v2761
      %v2763 = vpop.f32.mrf.mxu0
      %2764 = vmatprep.mubr.f32.mxu0 0.0
      %2765 = vmatmul.mubr.f32.gmra.mxu0 %v2600
      %v2766 = vpop.f32.mrf.mxu0
      %v2767 = vadd.f32 0.0, %v2766
      %v2768 = vpop.f32.mrf.mxu0
      %2769 = vmatprep.mubr.f32.mxu0 0.0
      %2770 = vmatmul.mubr.f32.gmra.mxu0 %v2603
      %v2771 = vpop.f32.mrf.mxu0
      %v2772 = vadd.f32 0.0, %v2771
      %v2773 = vpop.f32.mrf.mxu0
      %2774 = vmatprep.mubr.f32.mxu0 0.0
      %2775 = vmatmul.mubr.f32.gmra.mxu0 %v2606
      %v2776 = vpop.f32.mrf.mxu0
      %v2777 = vadd.f32 0.0, %v2776
      %v2778 = vpop.f32.mrf.mxu0
      %2779 = vmatprep.mubr.f32.mxu0 0.0
      %2780 = vmatmul.mubr.f32.gmra.mxu0 %v2609
      %v2781 = vpop.f32.mrf.mxu0
      %v2782 = vadd.f32 0.0, %v2781
      %v2783 = vpop.f32.mrf.mxu0
      %2784 = vmatprep.mubr.f32.mxu0 0.0
      %2785 = vmatmul.mubr.f32.gmra.mxu0 %v2612
      %v2786 = vpop.f32.mrf.mxu0
      %v2787 = vadd.f32 0.0, %v2786
      %v2788 = vpop.f32.mrf.mxu0
      %2789 = vmatprep.mubr.f32.mxu0 0.0
      %2790 = vmatmul.mubr.f32.gmra.mxu0 %v2615
      %v2791 = vpop.f32.mrf.mxu0
      %v2792 = vadd.f32 0.0, %v2791
      %v2793 = vpop.f32.mrf.mxu0
      %2794 = vmatprep.mubr.f32.mxu0 0.0
      %2795 = vmatmul.mubr.f32.gmra.mxu0 %v2618
      %v2796 = vpop.f32.mrf.mxu0
      %v2797 = vadd.f32 0.0, %v2796
      %v2798 = vpop.f32.mrf.mxu0
      %2799 = vmatprep.mubr.f32.mxu0 0.0
      %2800 = vmatmul.mubr.f32.gmra.mxu0 %v2621
      %v2801 = vpop.f32.mrf.mxu0
      %v2802 = vadd.f32 0.0, %v2801
      %v2803 = vpop.f32.mrf.mxu0
      %2804 = vmatprep.mubr.f32.mxu0 0.0
      %2805 = vmatmul.mubr.f32.gmra.mxu0 %v2624
      %v2806 = vpop.f32.mrf.mxu0
      %v2807 = vadd.f32 0.0, %v2806
      %v2808 = vpop.f32.mrf.mxu0
      %2809 = vmatprep.mubr.f32.mxu0 0.0
      %2810 = vmatmul.mubr.f32.gmra.mxu0 %v2627
      %v2811 = vpop.f32.mrf.mxu0
      %v2812 = vadd.f32 0.0, %v2811
      %v2813 = vpop.f32.mrf.mxu0
      %2814 = vmatprep.mubr.f32.mxu0 0.0
      %2815 = vmatmul.mubr.f32.gmra.mxu0 %v2630
      %v2816 = vpop.f32.mrf.mxu0
      %v2817 = vadd.f32 0.0, %v2816
      %v2818 = vpop.f32.mrf.mxu0
      %2819 = vmatprep.mubr.f32.mxu0 0.0
      %2820 = vmatmul.mubr.f32.gmra.mxu0 %v2633
      %v2821 = vpop.f32.mrf.mxu0
      %v2822 = vadd.f32 0.0, %v2821
      %v2823 = vpop.f32.mrf.mxu0
      %2824 = vmatprep.mubr.f32.mxu0 0.0
      %2825 = vmatmul.mubr.f32.gmra.mxu0 %v2636
      %v2826 = vpop.f32.mrf.mxu0
      %v2827 = vadd.f32 0.0, %v2826
      %v2828 = vpop.f32.mrf.mxu0
      %2829 = vmatprep.mubr.f32.mxu0 0.0
      %2830 = vmatmul.mubr.f32.gmra.mxu0 %v2639
      %v2831 = vpop.f32.mrf.mxu0
      %v2832 = vadd.f32 0.0, %v2831
      %v2833 = vpop.f32.mrf.mxu0
      %2834 = vmatprep.mubr.f32.mxu0 0.0
      %2835 = vmatmul.mubr.f32.gmra.mxu0 %v2642
      %v2836 = vpop.f32.mrf.mxu0
      %v2837 = vadd.f32 0.0, %v2836
      %v2838 = vpop.f32.mrf.mxu0
      %2839 = vmatprep.mubr.f32.mxu0 0.0
      %2840 = vmatmul.mubr.f32.gmra.mxu0 %v2645
      %v2841 = vpop.f32.mrf.mxu0
      %v2842 = vadd.f32 0.0, %v2841
      %v2843 = vpop.f32.mrf.mxu0
      %2844 = vmatprep.mubr.f32.mxu0 0.0
      %2845 = vmatmul.mubr.f32.gmra.mxu0 %v2648
      %v2846 = vpop.f32.mrf.mxu0
      %v2847 = vadd.f32 0.0, %v2846
      %v2848 = vpop.f32.mrf.mxu0
      %2849 = vmatprep.mubr.f32.mxu0 0.0
      %2850 = vmatmul.mubr.f32.gmra.mxu0 %v2651
      %v2851 = vpop.f32.mrf.mxu0
      %v2852 = vadd.f32 0.0, %v2851
      %v2853 = vpop.f32.mrf.mxu0
      %2854 = vmatprep.mubr.f32.mxu0 0.0
      %2855 = vmatmul.mubr.f32.gmra.mxu0 %v2654
      %v2856 = vpop.f32.mrf.mxu0
      %v2857 = vadd.f32 0.0, %v2856
      %v2858 = vpop.f32.mrf.mxu0
      %2859 = vmatprep.mubr.f32.mxu0 0.0
      %2860 = vmatmul.mubr.f32.gmra.mxu0 %v2657
      %v2861 = vpop.f32.mrf.mxu0
      %v2862 = vadd.f32 0.0, %v2861
      %v2863 = vpop.f32.mrf.mxu0
      %2864 = vmatprep.mubr.f32.mxu0 0.0
      %2865 = vmatmul.mubr.f32.gmra.mxu0 %v2660
      %v2866 = vpop.f32.mrf.mxu0
      %v2867 = vadd.f32 0.0, %v2866
      %v2868 = vpop.f32.mrf.mxu0
      %2869 = vmatprep.mubr.f32.mxu0 0.0
      %2870 = vmatmul.mubr.f32.gmra.mxu0 %v2663
      %v2871 = vpop.f32.mrf.mxu0
      %v2872 = vadd.f32 0.0, %v2871
      %v2873 = vpop.f32.mrf.mxu0
      %2874 = vmatprep.mubr.f32.mxu0 0.0
      %2875 = vmatmul.mubr.f32.gmra.mxu0 %v2666
      %v2876 = vpop.f32.mrf.mxu0
      %v2877 = vadd.f32 0.0, %v2876
      %v2878 = vpop.f32.mrf.mxu0
      %2879 = vmatprep.mubr.f32.mxu0 0.0
      %2880 = vmatmul.mubr.f32.gmra.mxu0 %v2669
      %v2881 = vpop.f32.mrf.mxu0
      %v2882 = vadd.f32 0.0, %v2881
      %v2883 = vpop.f32.mrf.mxu0
      %2884 = vmatprep.mubr.f32.mxu0 0.0
      %2885 = vmatmul.mubr.f32.gmra.mxu0 %v2672
      %v2886 = vpop.f32.mrf.mxu0
      %v2887 = vadd.f32 0.0, %v2886
      %v2888 = vpop.f32.mrf.mxu0
      %2889 = vmatprep.mubr.f32.mxu0 0.0
      %2890 = vmatmul.mubr.f32.gmra.mxu0 %v2675
      %v2891 = vpop.f32.mrf.mxu0
      %v2892 = vadd.f32 0.0, %v2891
      %v2893 = vpop.f32.mrf.mxu0
      %2894 = vmatprep.mubr.f32.mxu0 0.0
      %2895 = vmatmul.mubr.f32.gmra.mxu0 %v2678
      %v2896 = vpop.f32.mrf.mxu0
      %v2897 = vadd.f32 0.0, %v2896
      %v2898 = vpop.f32.mrf.mxu0
      %2899 = vmatprep.mubr.f32.mxu0 0.0
      %2900 = vmatmul.mubr.f32.gmra.mxu0 %v2681
      %v2901 = vpop.f32.mrf.mxu0
      %v2902 = vadd.f32 0.0, %v2901
      %v2903 = vpop.f32.mrf.mxu0
      %2904 = vmatprep.mubr.f32.mxu0 0.0
      %2905 = vmatmul.mubr.f32.gmra.mxu0 %v2684
      %v2906 = vpop.f32.mrf.mxu0
      %v2907 = vadd.f32 0.0, %v2906
      %v2908 = vpop.f32.mrf.mxu0
      %2909 = vmatprep.mubr.f32.mxu0 0.0
      %2910 = vmatmul.mubr.f32.gmra.mxu0 %v2687
      %v2911 = vpop.f32.mrf.mxu0
      %v2912 = vadd.f32 0.0, %v2911
      %v2913 = vpop.f32.mrf.mxu0
      %2914 = vmatprep.mubr.f32.mxu0 0.0
      %2915 = vmatmul.mubr.f32.gmra.mxu0 %v2690
      %v2916 = vpop.f32.mrf.mxu0
      %v2917 = vadd.f32 0.0, %v2916
      %v2918 = vpop.f32.mrf.mxu0
      %2919 = vdwg.mxu0
      %v2920 = vadd.f32 %v2529, %v2762
      %v2921 = vadd.f32 %v2530, %v2767
      %v2922 = vadd.f32 %v2531, %v2772
      %v2923 = vadd.f32 %v2532, %v2777
      %v2924 = vadd.f32 %v2533, %v2782
      %v2925 = vadd.f32 %v2534, %v2787
      %v2926 = vadd.f32 %v2535, %v2792
      %v2927 = vadd.f32 %v2536, %v2797
      %v2928 = vadd.f32 %v2537, %v2802
      %v2929 = vadd.f32 %v2538, %v2807
      %v2930 = vadd.f32 %v2539, %v2812
      %v2931 = vadd.f32 %v2540, %v2817
      %v2932 = vadd.f32 %v2541, %v2822
      %v2933 = vadd.f32 %v2542, %v2827
      %v2934 = vadd.f32 %v2543, %v2832
      %v2935 = vadd.f32 %v2544, %v2837
      %v2936 = vadd.f32 %v2545, %v2842
      %v2937 = vadd.f32 %v2546, %v2847
      %v2938 = vadd.f32 %v2547, %v2852
      %v2939 = vadd.f32 %v2548, %v2857
      %v2940 = vadd.f32 %v2549, %v2862
      %v2941 = vadd.f32 %v2550, %v2867
      %v2942 = vadd.f32 %v2551, %v2872
      %v2943 = vadd.f32 %v2552, %v2877
      %v2944 = vadd.f32 %v2553, %v2882
      %v2945 = vadd.f32 %v2554, %v2887
      %v2946 = vadd.f32 %v2555, %v2892
      %v2947 = vadd.f32 %v2556, %v2897
      %v2948 = vadd.f32 %v2557, %v2902
      %v2949 = vadd.f32 %v2558, %v2907
      %v2950 = vadd.f32 %v2559, %v2912
      %v2951 = vadd.f32 %v2560, %v2917
      %s2952 = scalar_lea.vmem [#allocation2], 48
      %v2953 = vld [vmem:[%s2952] sm:$0xff]
      %v2954 = vld [vmem:[%s2952 + $0x8] sm:$0xff]
      %v2955 = vld [vmem:[%s2952 + $0x18] sm:$0xff]
      %v2956 = vld [vmem:[%s2952 + $0x20] sm:$0xff]
      %v2957 = vld [vmem:[%s2952 + $0x30] sm:$0xff]
      %v2958 = vld [vmem:[%s2952 + $0x38] sm:$0xff]
      %v2959 = vld [vmem:[%s2952 + $0x48] sm:$0xff]
      %v2960 = vld [vmem:[%s2952 + $0x50] sm:$0xff]
      %v2961 = vld [vmem:[%s2952 + $0x60] sm:$0xff]
      %v2962 = vld [vmem:[%s2952 + $0x68] sm:$0xff]
      %v2963 = vld [vmem:[%s2952 + $0x78] sm:$0xff]
      %v2964 = vld [vmem:[%s2952 + $0x80] sm:$0xff]
      %v2965 = vld [vmem:[%s2952 + $0x90] sm:$0xff]
      %v2966 = vld [vmem:[%s2952 + $0x98] sm:$0xff]
      %v2967 = vld [vmem:[%s2952 + $0xa8] sm:$0xff]
      %v2968 = vld [vmem:[%s2952 + $0xb0] sm:$0xff]
      %v2969 = vld [vmem:[%s2952 + $0xc0] sm:$0xff]
      %v2970 = vld [vmem:[%s2952 + $0xc8] sm:$0xff]
      %v2971 = vld [vmem:[%s2952 + $0xd8] sm:$0xff]
      %v2972 = vld [vmem:[%s2952 + $0xe0] sm:$0xff]
      %v2973 = vld [vmem:[%s2952 + $0xf0] sm:$0xff]
      %v2974 = vld [vmem:[%s2952 + $0xf8] sm:$0xff]
      %v2975 = vld [vmem:[%s2952 + $0x108] sm:$0xff]
      %v2976 = vld [vmem:[%s2952 + $0x110] sm:$0xff]
      %v2977 = vld [vmem:[%s2952 + $0x120] sm:$0xff]
      %v2978 = vld [vmem:[%s2952 + $0x128] sm:$0xff]
      %v2979 = vld [vmem:[%s2952 + $0x138] sm:$0xff]
      %v2980 = vld [vmem:[%s2952 + $0x140] sm:$0xff]
      %v2981 = vld [vmem:[%s2952 + $0x150] sm:$0xff]
      %v2982 = vld [vmem:[%s2952 + $0x158] sm:$0xff]
      %v2983 = vld [vmem:[%s2952 + $0x168] sm:$0xff]
      %v2984 = vld [vmem:[%s2952 + $0x170] sm:$0xff]
      %s2985 = scalar_lea.vmem %s1, 96
      %v2986 = vld [vmem:[%s2985] sm:$0xff]
      %v2987 = vld [vmem:[%s2985 + $0x8] sm:$0x3]
      %v2989 = vsel %vm549, %v2953, 0
      %v2992 = vsel %vm549, %v2954, 0
      %v2995 = vsel %vm549, %v2955, 0
      %v2998 = vsel %vm549, %v2956, 0
      %v3001 = vsel %vm549, %v2957, 0
      %v3004 = vsel %vm549, %v2958, 0
      %v3007 = vsel %vm549, %v2959, 0
      %v3010 = vsel %vm549, %v2960, 0
      %v3013 = vsel %vm549, %v2961, 0
      %v3016 = vsel %vm549, %v2962, 0
      %v3019 = vsel %vm549, %v2963, 0
      %v3022 = vsel %vm549, %v2964, 0
      %v3025 = vsel %vm549, %v2965, 0
      %v3028 = vsel %vm549, %v2966, 0
      %v3031 = vsel %vm549, %v2967, 0
      %v3034 = vsel %vm549, %v2968, 0
      %v3037 = vsel %vm549, %v2969, 0
      %v3040 = vsel %vm549, %v2970, 0
      %v3043 = vsel %vm549, %v2971, 0
      %v3046 = vsel %vm549, %v2972, 0
      %v3049 = vsel %vm549, %v2973, 0
      %v3052 = vsel %vm549, %v2974, 0
      %v3055 = vsel %vm549, %v2975, 0
      %v3058 = vsel %vm549, %v2976, 0
      %v3061 = vsel %vm549, %v2977, 0
      %v3064 = vsel %vm549, %v2978, 0
      %v3067 = vsel %vm549, %v2979, 0
      %v3070 = vsel %vm549, %v2980, 0
      %v3073 = vsel %vm549, %v2981, 0
      %v3076 = vsel %vm549, %v2982, 0
      %v3079 = vsel %vm549, %v2983, 0
      %v3082 = vsel %vm549, %v2984, 0
      %v3085 = vsel %vm835, %v2987, 0
      %3087 = vmatprep.subr.mxu0 0.0
      %3088 = vmatpush1.msra.mxu0 0.0
      %3089 = vmatprep.subr.mxu0 0.0
      %3090 = vmatpush1.msra.mxu0 0.0
      %3091 = vmatprep.subr.mxu0 0.0
      %3092 = vmatpush1.msra.mxu0 0.0
      %3093 = vmatprep.subr.mxu0 0.0
      %3094 = vmatpush1.msra.mxu0 0.0
      %3095 = vmatprep.subr.mxu0 0.0
      %3096 = vmatpush1.msra.mxu0 0.0
      %3097 = vmatprep.subr.mxu0 0.0
      %3098 = vmatpush1.msra.mxu0 0.0
      %3099 = vmatprep.subr.mxu0 0.0
      %3100 = vmatpush1.msra.mxu0 0.0
      %3101 = vmatprep.subr.mxu0 0.0
      %3102 = vmatpush1.msra.mxu0 0.0
      %3103 = vmatprep.subr.mxu0 0.0
      %3104 = vmatpush1.msra.mxu0 0.0
      %3105 = vmatprep.subr.mxu0 0.0
      %3106 = vmatpush1.msra.mxu0 0.0
      %3107 = vmatprep.subr.mxu0 0.0
      %3108 = vmatpush1.msra.mxu0 0.0
      %3109 = vmatprep.subr.mxu0 0.0
      %3110 = vmatpush1.msra.mxu0 0.0
      %3111 = vmatprep.subr.mxu0 0.0
      %3112 = vmatpush1.msra.mxu0 0.0
      %3113 = vmatprep.subr.mxu0 0.0
      %3114 = vmatpush1.msra.mxu0 0.0
      %3115 = vmatprep.subr.mxu0 0.0
      %3116 = vmatpush1.msra.mxu0 %v3085
      %3117 = vmatprep.subr.mxu0 0.0
      %3118 = vmatpush1.msra.mxu0 %v2986
      %3119 = vmatprep.subr.mxu0 0.0
      %3120 = vmatpush2.msra.mxu0 0.0
      %3121 = vmatprep.subr.mxu0 0.0
      %3122 = vmatpush2.msra.mxu0 0.0
      %3123 = vmatprep.subr.mxu0 0.0
      %3124 = vmatpush2.msra.mxu0 0.0
      %3125 = vmatprep.subr.mxu0 0.0
      %3126 = vmatpush2.msra.mxu0 0.0
      %3127 = vmatprep.subr.mxu0 0.0
      %3128 = vmatpush2.msra.mxu0 0.0
      %3129 = vmatprep.subr.mxu0 0.0
      %3130 = vmatpush2.msra.mxu0 0.0
      %3131 = vmatprep.subr.mxu0 0.0
      %3132 = vmatpush2.msra.mxu0 0.0
      %3133 = vmatprep.subr.mxu0 0.0
      %3134 = vmatpush2.msra.mxu0 0.0
      %3135 = vmatprep.subr.mxu0 0.0
      %3136 = vmatpush2.msra.mxu0 0.0
      %3137 = vmatprep.subr.mxu0 0.0
      %3138 = vmatpush2.msra.mxu0 0.0
      %3139 = vmatprep.subr.mxu0 0.0
      %3140 = vmatpush2.msra.mxu0 0.0
      %3141 = vmatprep.subr.mxu0 0.0
      %3142 = vmatpush2.msra.mxu0 0.0
      %3143 = vmatprep.subr.mxu0 0.0
      %3144 = vmatpush2.msra.mxu0 0.0
      %3145 = vmatprep.subr.mxu0 0.0
      %3146 = vmatpush2.msra.mxu0 0.0
      %3147 = vmatprep.subr.mxu0 0.0
      %3148 = vmatpush2.msra.mxu0 0.0
      %3149 = vmatprep.subr.mxu0 0.0
      %3150 = vmatpush2.msra.mxu0 0.0
      %3151 = vmatprep.mubr.f32.mxu0 0.0
      %3152 = vmatmul.mubr.f32.gmra.mxu0 %v2989
      %v3153 = vpop.f32.mrf.mxu0
      %v3154 = vadd.f32 0.0, %v3153
      %v3155 = vpop.f32.mrf.mxu0
      %3156 = vmatprep.mubr.f32.mxu0 0.0
      %3157 = vmatmul.mubr.f32.gmra.mxu0 %v2992
      %v3158 = vpop.f32.mrf.mxu0
      %v3159 = vadd.f32 0.0, %v3158
      %v3160 = vpop.f32.mrf.mxu0
      %3161 = vmatprep.mubr.f32.mxu0 0.0
      %3162 = vmatmul.mubr.f32.gmra.mxu0 %v2995
      %v3163 = vpop.f32.mrf.mxu0
      %v3164 = vadd.f32 0.0, %v3163
      %v3165 = vpop.f32.mrf.mxu0
      %3166 = vmatprep.mubr.f32.mxu0 0.0
      %3167 = vmatmul.mubr.f32.gmra.mxu0 %v2998
      %v3168 = vpop.f32.mrf.mxu0
      %v3169 = vadd.f32 0.0, %v3168
      %v3170 = vpop.f32.mrf.mxu0
      %3171 = vmatprep.mubr.f32.mxu0 0.0
      %3172 = vmatmul.mubr.f32.gmra.mxu0 %v3001
      %v3173 = vpop.f32.mrf.mxu0
      %v3174 = vadd.f32 0.0, %v3173
      %v3175 = vpop.f32.mrf.mxu0
      %3176 = vmatprep.mubr.f32.mxu0 0.0
      %3177 = vmatmul.mubr.f32.gmra.mxu0 %v3004
      %v3178 = vpop.f32.mrf.mxu0
      %v3179 = vadd.f32 0.0, %v3178
      %v3180 = vpop.f32.mrf.mxu0
      %3181 = vmatprep.mubr.f32.mxu0 0.0
      %3182 = vmatmul.mubr.f32.gmra.mxu0 %v3007
      %v3183 = vpop.f32.mrf.mxu0
      %v3184 = vadd.f32 0.0, %v3183
      %v3185 = vpop.f32.mrf.mxu0
      %3186 = vmatprep.mubr.f32.mxu0 0.0
      %3187 = vmatmul.mubr.f32.gmra.mxu0 %v3010
      %v3188 = vpop.f32.mrf.mxu0
      %v3189 = vadd.f32 0.0, %v3188
      %v3190 = vpop.f32.mrf.mxu0
      %3191 = vmatprep.mubr.f32.mxu0 0.0
      %3192 = vmatmul.mubr.f32.gmra.mxu0 %v3013
      %v3193 = vpop.f32.mrf.mxu0
      %v3194 = vadd.f32 0.0, %v3193
      %v3195 = vpop.f32.mrf.mxu0
      %3196 = vmatprep.mubr.f32.mxu0 0.0
      %3197 = vmatmul.mubr.f32.gmra.mxu0 %v3016
      %v3198 = vpop.f32.mrf.mxu0
      %v3199 = vadd.f32 0.0, %v3198
      %v3200 = vpop.f32.mrf.mxu0
      %3201 = vmatprep.mubr.f32.mxu0 0.0
      %3202 = vmatmul.mubr.f32.gmra.mxu0 %v3019
      %v3203 = vpop.f32.mrf.mxu0
      %v3204 = vadd.f32 0.0, %v3203
      %v3205 = vpop.f32.mrf.mxu0
      %3206 = vmatprep.mubr.f32.mxu0 0.0
      %3207 = vmatmul.mubr.f32.gmra.mxu0 %v3022
      %v3208 = vpop.f32.mrf.mxu0
      %v3209 = vadd.f32 0.0, %v3208
      %v3210 = vpop.f32.mrf.mxu0
      %3211 = vmatprep.mubr.f32.mxu0 0.0
      %3212 = vmatmul.mubr.f32.gmra.mxu0 %v3025
      %v3213 = vpop.f32.mrf.mxu0
      %v3214 = vadd.f32 0.0, %v3213
      %v3215 = vpop.f32.mrf.mxu0
      %3216 = vmatprep.mubr.f32.mxu0 0.0
      %3217 = vmatmul.mubr.f32.gmra.mxu0 %v3028
      %v3218 = vpop.f32.mrf.mxu0
      %v3219 = vadd.f32 0.0, %v3218
      %v3220 = vpop.f32.mrf.mxu0
      %3221 = vmatprep.mubr.f32.mxu0 0.0
      %3222 = vmatmul.mubr.f32.gmra.mxu0 %v3031
      %v3223 = vpop.f32.mrf.mxu0
      %v3224 = vadd.f32 0.0, %v3223
      %v3225 = vpop.f32.mrf.mxu0
      %3226 = vmatprep.mubr.f32.mxu0 0.0
      %3227 = vmatmul.mubr.f32.gmra.mxu0 %v3034
      %v3228 = vpop.f32.mrf.mxu0
      %v3229 = vadd.f32 0.0, %v3228
      %v3230 = vpop.f32.mrf.mxu0
      %3231 = vmatprep.mubr.f32.mxu0 0.0
      %3232 = vmatmul.mubr.f32.gmra.mxu0 %v3037
      %v3233 = vpop.f32.mrf.mxu0
      %v3234 = vadd.f32 0.0, %v3233
      %v3235 = vpop.f32.mrf.mxu0
      %3236 = vmatprep.mubr.f32.mxu0 0.0
      %3237 = vmatmul.mubr.f32.gmra.mxu0 %v3040
      %v3238 = vpop.f32.mrf.mxu0
      %v3239 = vadd.f32 0.0, %v3238
      %v3240 = vpop.f32.mrf.mxu0
      %3241 = vmatprep.mubr.f32.mxu0 0.0
      %3242 = vmatmul.mubr.f32.gmra.mxu0 %v3043
      %v3243 = vpop.f32.mrf.mxu0
      %v3244 = vadd.f32 0.0, %v3243
      %v3245 = vpop.f32.mrf.mxu0
      %3246 = vmatprep.mubr.f32.mxu0 0.0
      %3247 = vmatmul.mubr.f32.gmra.mxu0 %v3046
      %v3248 = vpop.f32.mrf.mxu0
      %v3249 = vadd.f32 0.0, %v3248
      %v3250 = vpop.f32.mrf.mxu0
      %3251 = vmatprep.mubr.f32.mxu0 0.0
      %3252 = vmatmul.mubr.f32.gmra.mxu0 %v3049
      %v3253 = vpop.f32.mrf.mxu0
      %v3254 = vadd.f32 0.0, %v3253
      %v3255 = vpop.f32.mrf.mxu0
      %3256 = vmatprep.mubr.f32.mxu0 0.0
      %3257 = vmatmul.mubr.f32.gmra.mxu0 %v3052
      %v3258 = vpop.f32.mrf.mxu0
      %v3259 = vadd.f32 0.0, %v3258
      %v3260 = vpop.f32.mrf.mxu0
      %3261 = vmatprep.mubr.f32.mxu0 0.0
      %3262 = vmatmul.mubr.f32.gmra.mxu0 %v3055
      %v3263 = vpop.f32.mrf.mxu0
      %v3264 = vadd.f32 0.0, %v3263
      %v3265 = vpop.f32.mrf.mxu0
      %3266 = vmatprep.mubr.f32.mxu0 0.0
      %3267 = vmatmul.mubr.f32.gmra.mxu0 %v3058
      %v3268 = vpop.f32.mrf.mxu0
      %v3269 = vadd.f32 0.0, %v3268
      %v3270 = vpop.f32.mrf.mxu0
      %3271 = vmatprep.mubr.f32.mxu0 0.0
      %3272 = vmatmul.mubr.f32.gmra.mxu0 %v3061
      %v3273 = vpop.f32.mrf.mxu0
      %v3274 = vadd.f32 0.0, %v3273
      %v3275 = vpop.f32.mrf.mxu0
      %3276 = vmatprep.mubr.f32.mxu0 0.0
      %3277 = vmatmul.mubr.f32.gmra.mxu0 %v3064
      %v3278 = vpop.f32.mrf.mxu0
      %v3279 = vadd.f32 0.0, %v3278
      %v3280 = vpop.f32.mrf.mxu0
      %3281 = vmatprep.mubr.f32.mxu0 0.0
      %3282 = vmatmul.mubr.f32.gmra.mxu0 %v3067
      %v3283 = vpop.f32.mrf.mxu0
      %v3284 = vadd.f32 0.0, %v3283
      %v3285 = vpop.f32.mrf.mxu0
      %3286 = vmatprep.mubr.f32.mxu0 0.0
      %3287 = vmatmul.mubr.f32.gmra.mxu0 %v3070
      %v3288 = vpop.f32.mrf.mxu0
      %v3289 = vadd.f32 0.0, %v3288
      %v3290 = vpop.f32.mrf.mxu0
      %3291 = vmatprep.mubr.f32.mxu0 0.0
      %3292 = vmatmul.mubr.f32.gmra.mxu0 %v3073
      %v3293 = vpop.f32.mrf.mxu0
      %v3294 = vadd.f32 0.0, %v3293
      %v3295 = vpop.f32.mrf.mxu0
      %3296 = vmatprep.mubr.f32.mxu0 0.0
      %3297 = vmatmul.mubr.f32.gmra.mxu0 %v3076
      %v3298 = vpop.f32.mrf.mxu0
      %v3299 = vadd.f32 0.0, %v3298
      %v3300 = vpop.f32.mrf.mxu0
      %3301 = vmatprep.mubr.f32.mxu0 0.0
      %3302 = vmatmul.mubr.f32.gmra.mxu0 %v3079
      %v3303 = vpop.f32.mrf.mxu0
      %v3304 = vadd.f32 0.0, %v3303
      %v3305 = vpop.f32.mrf.mxu0
      %3306 = vmatprep.mubr.f32.mxu0 0.0
      %3307 = vmatmul.mubr.f32.gmra.mxu0 %v3082
      %v3308 = vpop.f32.mrf.mxu0
      %v3309 = vadd.f32 0.0, %v3308
      %v3310 = vpop.f32.mrf.mxu0
      %3311 = vdwg.mxu0
      %v3312 = vadd.f32 %v2920, %v3154
      %v3313 = vadd.f32 %v2921, %v3159
      %v3314 = vadd.f32 %v2922, %v3164
      %v3315 = vadd.f32 %v2923, %v3169
      %v3316 = vadd.f32 %v2924, %v3174
      %v3317 = vadd.f32 %v2925, %v3179
      %v3318 = vadd.f32 %v2926, %v3184
      %v3319 = vadd.f32 %v2927, %v3189
      %v3320 = vadd.f32 %v2928, %v3194
      %v3321 = vadd.f32 %v2929, %v3199
      %v3322 = vadd.f32 %v2930, %v3204
      %v3323 = vadd.f32 %v2931, %v3209
      %v3324 = vadd.f32 %v2932, %v3214
      %v3325 = vadd.f32 %v2933, %v3219
      %v3326 = vadd.f32 %v2934, %v3224
      %v3327 = vadd.f32 %v2935, %v3229
      %v3328 = vadd.f32 %v2936, %v3234
      %v3329 = vadd.f32 %v2937, %v3239
      %v3330 = vadd.f32 %v2938, %v3244
      %v3331 = vadd.f32 %v2939, %v3249
      %v3332 = vadd.f32 %v2940, %v3254
      %v3333 = vadd.f32 %v2941, %v3259
      %v3334 = vadd.f32 %v2942, %v3264
      %v3335 = vadd.f32 %v2943, %v3269
      %v3336 = vadd.f32 %v2944, %v3274
      %v3337 = vadd.f32 %v2945, %v3279
      %v3338 = vadd.f32 %v2946, %v3284
      %v3339 = vadd.f32 %v2947, %v3289
      %v3340 = vadd.f32 %v2948, %v3294
      %v3341 = vadd.f32 %v2949, %v3299
      %v3342 = vadd.f32 %v2950, %v3304
      %v3343 = vadd.f32 %v2951, %v3309
      %v3344 = vld [vmem:[%s2952 + $0x1] sm:$0xff]
      %v3345 = vld [vmem:[%s2952 + $0x9] sm:$0xff]
      %v3346 = vld [vmem:[%s2952 + $0x19] sm:$0xff]
      %v3347 = vld [vmem:[%s2952 + $0x21] sm:$0xff]
      %v3348 = vld [vmem:[%s2952 + $0x31] sm:$0xff]
      %v3349 = vld [vmem:[%s2952 + $0x39] sm:$0xff]
      %v3350 = vld [vmem:[%s2952 + $0x49] sm:$0xff]
      %v3351 = vld [vmem:[%s2952 + $0x51] sm:$0xff]
      %v3352 = vld [vmem:[%s2952 + $0x61] sm:$0xff]
      %v3353 = vld [vmem:[%s2952 + $0x69] sm:$0xff]
      %v3354 = vld [vmem:[%s2952 + $0x79] sm:$0xff]
      %v3355 = vld [vmem:[%s2952 + $0x81] sm:$0xff]
      %v3356 = vld [vmem:[%s2952 + $0x91] sm:$0xff]
      %v3357 = vld [vmem:[%s2952 + $0x99] sm:$0xff]
      %v3358 = vld [vmem:[%s2952 + $0xa9] sm:$0xff]
      %v3359 = vld [vmem:[%s2952 + $0xb1] sm:$0xff]
      %v3360 = vld [vmem:[%s2952 + $0xc1] sm:$0xff]
      %v3361 = vld [vmem:[%s2952 + $0xc9] sm:$0xff]
      %v3362 = vld [vmem:[%s2952 + $0xd9] sm:$0xff]
      %v3363 = vld [vmem:[%s2952 + $0xe1] sm:$0xff]
      %v3364 = vld [vmem:[%s2952 + $0xf1] sm:$0xff]
      %v3365 = vld [vmem:[%s2952 + $0xf9] sm:$0xff]
      %v3366 = vld [vmem:[%s2952 + $0x109] sm:$0xff]
      %v3367 = vld [vmem:[%s2952 + $0x111] sm:$0xff]
      %v3368 = vld [vmem:[%s2952 + $0x121] sm:$0xff]
      %v3369 = vld [vmem:[%s2952 + $0x129] sm:$0xff]
      %v3370 = vld [vmem:[%s2952 + $0x139] sm:$0xff]
      %v3371 = vld [vmem:[%s2952 + $0x141] sm:$0xff]
      %v3372 = vld [vmem:[%s2952 + $0x151] sm:$0xff]
      %v3373 = vld [vmem:[%s2952 + $0x159] sm:$0xff]
      %v3374 = vld [vmem:[%s2952 + $0x169] sm:$0xff]
      %v3375 = vld [vmem:[%s2952 + $0x171] sm:$0xff]
      %s3376 = scalar_lea.vmem %s1, 112
      %v3377 = vld [vmem:[%s3376] sm:$0xff]
      %v3378 = vld [vmem:[%s3376 + $0x8] sm:$0x3]
      %v3380 = vsel %vm549, %v3344, 0
      %v3383 = vsel %vm549, %v3345, 0
      %v3386 = vsel %vm549, %v3346, 0
      %v3389 = vsel %vm549, %v3347, 0
      %v3392 = vsel %vm549, %v3348, 0
      %v3395 = vsel %vm549, %v3349, 0
      %v3398 = vsel %vm549, %v3350, 0
      %v3401 = vsel %vm549, %v3351, 0
      %v3404 = vsel %vm549, %v3352, 0
      %v3407 = vsel %vm549, %v3353, 0
      %v3410 = vsel %vm549, %v3354, 0
      %v3413 = vsel %vm549, %v3355, 0
      %v3416 = vsel %vm549, %v3356, 0
      %v3419 = vsel %vm549, %v3357, 0
      %v3422 = vsel %vm549, %v3358, 0
      %v3425 = vsel %vm549, %v3359, 0
      %v3428 = vsel %vm549, %v3360, 0
      %v3431 = vsel %vm549, %v3361, 0
      %v3434 = vsel %vm549, %v3362, 0
      %v3437 = vsel %vm549, %v3363, 0
      %v3440 = vsel %vm549, %v3364, 0
      %v3443 = vsel %vm549, %v3365, 0
      %v3446 = vsel %vm549, %v3366, 0
      %v3449 = vsel %vm549, %v3367, 0
      %v3452 = vsel %vm549, %v3368, 0
      %v3455 = vsel %vm549, %v3369, 0
      %v3458 = vsel %vm549, %v3370, 0
      %v3461 = vsel %vm549, %v3371, 0
      %v3464 = vsel %vm549, %v3372, 0
      %v3467 = vsel %vm549, %v3373, 0
      %v3470 = vsel %vm549, %v3374, 0
      %v3473 = vsel %vm549, %v3375, 0
      %v3476 = vsel %vm835, %v3378, 0
      %3478 = vmatprep.subr.mxu0 0.0
      %3479 = vmatpush1.msra.mxu0 0.0
      %3480 = vmatprep.subr.mxu0 0.0
      %3481 = vmatpush1.msra.mxu0 0.0
      %3482 = vmatprep.subr.mxu0 0.0
      %3483 = vmatpush1.msra.mxu0 0.0
      %3484 = vmatprep.subr.mxu0 0.0
      %3485 = vmatpush1.msra.mxu0 0.0
      %3486 = vmatprep.subr.mxu0 0.0
      %3487 = vmatpush1.msra.mxu0 0.0
      %3488 = vmatprep.subr.mxu0 0.0
      %3489 = vmatpush1.msra.mxu0 0.0
      %3490 = vmatprep.subr.mxu0 0.0
      %3491 = vmatpush1.msra.mxu0 0.0
      %3492 = vmatprep.subr.mxu0 0.0
      %3493 = vmatpush1.msra.mxu0 0.0
      %3494 = vmatprep.subr.mxu0 0.0
      %3495 = vmatpush1.msra.mxu0 0.0
      %3496 = vmatprep.subr.mxu0 0.0
      %3497 = vmatpush1.msra.mxu0 0.0
      %3498 = vmatprep.subr.mxu0 0.0
      %3499 = vmatpush1.msra.mxu0 0.0
      %3500 = vmatprep.subr.mxu0 0.0
      %3501 = vmatpush1.msra.mxu0 0.0
      %3502 = vmatprep.subr.mxu0 0.0
      %3503 = vmatpush1.msra.mxu0 0.0
      %3504 = vmatprep.subr.mxu0 0.0
      %3505 = vmatpush1.msra.mxu0 0.0
      %3506 = vmatprep.subr.mxu0 0.0
      %3507 = vmatpush1.msra.mxu0 %v3476
      %3508 = vmatprep.subr.mxu0 0.0
      %3509 = vmatpush1.msra.mxu0 %v3377
      %3510 = vmatprep.subr.mxu0 0.0
      %3511 = vmatpush2.msra.mxu0 0.0
      %3512 = vmatprep.subr.mxu0 0.0
      %3513 = vmatpush2.msra.mxu0 0.0
      %3514 = vmatprep.subr.mxu0 0.0
      %3515 = vmatpush2.msra.mxu0 0.0
      %3516 = vmatprep.subr.mxu0 0.0
      %3517 = vmatpush2.msra.mxu0 0.0
      %3518 = vmatprep.subr.mxu0 0.0
      %3519 = vmatpush2.msra.mxu0 0.0
      %3520 = vmatprep.subr.mxu0 0.0
      %3521 = vmatpush2.msra.mxu0 0.0
      %3522 = vmatprep.subr.mxu0 0.0
      %3523 = vmatpush2.msra.mxu0 0.0
      %3524 = vmatprep.subr.mxu0 0.0
      %3525 = vmatpush2.msra.mxu0 0.0
      %3526 = vmatprep.subr.mxu0 0.0
      %3527 = vmatpush2.msra.mxu0 0.0
      %3528 = vmatprep.subr.mxu0 0.0
      %3529 = vmatpush2.msra.mxu0 0.0
      %3530 = vmatprep.subr.mxu0 0.0
      %3531 = vmatpush2.msra.mxu0 0.0
      %3532 = vmatprep.subr.mxu0 0.0
      %3533 = vmatpush2.msra.mxu0 0.0
      %3534 = vmatprep.subr.mxu0 0.0
      %3535 = vmatpush2.msra.mxu0 0.0
      %3536 = vmatprep.subr.mxu0 0.0
      %3537 = vmatpush2.msra.mxu0 0.0
      %3538 = vmatprep.subr.mxu0 0.0
      %3539 = vmatpush2.msra.mxu0 0.0
      %3540 = vmatprep.subr.mxu0 0.0
      %3541 = vmatpush2.msra.mxu0 0.0
      %3542 = vmatprep.mubr.f32.mxu0 0.0
      %3543 = vmatmul.mubr.f32.gmra.mxu0 %v3380
      %v3544 = vpop.f32.mrf.mxu0
      %v3545 = vadd.f32 0.0, %v3544
      %v3546 = vpop.f32.mrf.mxu0
      %3547 = vmatprep.mubr.f32.mxu0 0.0
      %3548 = vmatmul.mubr.f32.gmra.mxu0 %v3383
      %v3549 = vpop.f32.mrf.mxu0
      %v3550 = vadd.f32 0.0, %v3549
      %v3551 = vpop.f32.mrf.mxu0
      %3552 = vmatprep.mubr.f32.mxu0 0.0
      %3553 = vmatmul.mubr.f32.gmra.mxu0 %v3386
      %v3554 = vpop.f32.mrf.mxu0
      %v3555 = vadd.f32 0.0, %v3554
      %v3556 = vpop.f32.mrf.mxu0
      %3557 = vmatprep.mubr.f32.mxu0 0.0
      %3558 = vmatmul.mubr.f32.gmra.mxu0 %v3389
      %v3559 = vpop.f32.mrf.mxu0
      %v3560 = vadd.f32 0.0, %v3559
      %v3561 = vpop.f32.mrf.mxu0
      %3562 = vmatprep.mubr.f32.mxu0 0.0
      %3563 = vmatmul.mubr.f32.gmra.mxu0 %v3392
      %v3564 = vpop.f32.mrf.mxu0
      %v3565 = vadd.f32 0.0, %v3564
      %v3566 = vpop.f32.mrf.mxu0
      %3567 = vmatprep.mubr.f32.mxu0 0.0
      %3568 = vmatmul.mubr.f32.gmra.mxu0 %v3395
      %v3569 = vpop.f32.mrf.mxu0
      %v3570 = vadd.f32 0.0, %v3569
      %v3571 = vpop.f32.mrf.mxu0
      %3572 = vmatprep.mubr.f32.mxu0 0.0
      %3573 = vmatmul.mubr.f32.gmra.mxu0 %v3398
      %v3574 = vpop.f32.mrf.mxu0
      %v3575 = vadd.f32 0.0, %v3574
      %v3576 = vpop.f32.mrf.mxu0
      %3577 = vmatprep.mubr.f32.mxu0 0.0
      %3578 = vmatmul.mubr.f32.gmra.mxu0 %v3401
      %v3579 = vpop.f32.mrf.mxu0
      %v3580 = vadd.f32 0.0, %v3579
      %v3581 = vpop.f32.mrf.mxu0
      %3582 = vmatprep.mubr.f32.mxu0 0.0
      %3583 = vmatmul.mubr.f32.gmra.mxu0 %v3404
      %v3584 = vpop.f32.mrf.mxu0
      %v3585 = vadd.f32 0.0, %v3584
      %v3586 = vpop.f32.mrf.mxu0
      %3587 = vmatprep.mubr.f32.mxu0 0.0
      %3588 = vmatmul.mubr.f32.gmra.mxu0 %v3407
      %v3589 = vpop.f32.mrf.mxu0
      %v3590 = vadd.f32 0.0, %v3589
      %v3591 = vpop.f32.mrf.mxu0
      %3592 = vmatprep.mubr.f32.mxu0 0.0
      %3593 = vmatmul.mubr.f32.gmra.mxu0 %v3410
      %v3594 = vpop.f32.mrf.mxu0
      %v3595 = vadd.f32 0.0, %v3594
      %v3596 = vpop.f32.mrf.mxu0
      %3597 = vmatprep.mubr.f32.mxu0 0.0
      %3598 = vmatmul.mubr.f32.gmra.mxu0 %v3413
      %v3599 = vpop.f32.mrf.mxu0
      %v3600 = vadd.f32 0.0, %v3599
      %v3601 = vpop.f32.mrf.mxu0
      %3602 = vmatprep.mubr.f32.mxu0 0.0
      %3603 = vmatmul.mubr.f32.gmra.mxu0 %v3416
      %v3604 = vpop.f32.mrf.mxu0
      %v3605 = vadd.f32 0.0, %v3604
      %v3606 = vpop.f32.mrf.mxu0
      %3607 = vmatprep.mubr.f32.mxu0 0.0
      %3608 = vmatmul.mubr.f32.gmra.mxu0 %v3419
      %v3609 = vpop.f32.mrf.mxu0
      %v3610 = vadd.f32 0.0, %v3609
      %v3611 = vpop.f32.mrf.mxu0
      %3612 = vmatprep.mubr.f32.mxu0 0.0
      %3613 = vmatmul.mubr.f32.gmra.mxu0 %v3422
      %v3614 = vpop.f32.mrf.mxu0
      %v3615 = vadd.f32 0.0, %v3614
      %v3616 = vpop.f32.mrf.mxu0
      %3617 = vmatprep.mubr.f32.mxu0 0.0
      %3618 = vmatmul.mubr.f32.gmra.mxu0 %v3425
      %v3619 = vpop.f32.mrf.mxu0
      %v3620 = vadd.f32 0.0, %v3619
      %v3621 = vpop.f32.mrf.mxu0
      %3622 = vmatprep.mubr.f32.mxu0 0.0
      %3623 = vmatmul.mubr.f32.gmra.mxu0 %v3428
      %v3624 = vpop.f32.mrf.mxu0
      %v3625 = vadd.f32 0.0, %v3624
      %v3626 = vpop.f32.mrf.mxu0
      %3627 = vmatprep.mubr.f32.mxu0 0.0
      %3628 = vmatmul.mubr.f32.gmra.mxu0 %v3431
      %v3629 = vpop.f32.mrf.mxu0
      %v3630 = vadd.f32 0.0, %v3629
      %v3631 = vpop.f32.mrf.mxu0
      %3632 = vmatprep.mubr.f32.mxu0 0.0
      %3633 = vmatmul.mubr.f32.gmra.mxu0 %v3434
      %v3634 = vpop.f32.mrf.mxu0
      %v3635 = vadd.f32 0.0, %v3634
      %v3636 = vpop.f32.mrf.mxu0
      %3637 = vmatprep.mubr.f32.mxu0 0.0
      %3638 = vmatmul.mubr.f32.gmra.mxu0 %v3437
      %v3639 = vpop.f32.mrf.mxu0
      %v3640 = vadd.f32 0.0, %v3639
      %v3641 = vpop.f32.mrf.mxu0
      %3642 = vmatprep.mubr.f32.mxu0 0.0
      %3643 = vmatmul.mubr.f32.gmra.mxu0 %v3440
      %v3644 = vpop.f32.mrf.mxu0
      %v3645 = vadd.f32 0.0, %v3644
      %v3646 = vpop.f32.mrf.mxu0
      %3647 = vmatprep.mubr.f32.mxu0 0.0
      %3648 = vmatmul.mubr.f32.gmra.mxu0 %v3443
      %v3649 = vpop.f32.mrf.mxu0
      %v3650 = vadd.f32 0.0, %v3649
      %v3651 = vpop.f32.mrf.mxu0
      %3652 = vmatprep.mubr.f32.mxu0 0.0
      %3653 = vmatmul.mubr.f32.gmra.mxu0 %v3446
      %v3654 = vpop.f32.mrf.mxu0
      %v3655 = vadd.f32 0.0, %v3654
      %v3656 = vpop.f32.mrf.mxu0
      %3657 = vmatprep.mubr.f32.mxu0 0.0
      %3658 = vmatmul.mubr.f32.gmra.mxu0 %v3449
      %v3659 = vpop.f32.mrf.mxu0
      %v3660 = vadd.f32 0.0, %v3659
      %v3661 = vpop.f32.mrf.mxu0
      %3662 = vmatprep.mubr.f32.mxu0 0.0
      %3663 = vmatmul.mubr.f32.gmra.mxu0 %v3452
      %v3664 = vpop.f32.mrf.mxu0
      %v3665 = vadd.f32 0.0, %v3664
      %v3666 = vpop.f32.mrf.mxu0
      %3667 = vmatprep.mubr.f32.mxu0 0.0
      %3668 = vmatmul.mubr.f32.gmra.mxu0 %v3455
      %v3669 = vpop.f32.mrf.mxu0
      %v3670 = vadd.f32 0.0, %v3669
      %v3671 = vpop.f32.mrf.mxu0
      %3672 = vmatprep.mubr.f32.mxu0 0.0
      %3673 = vmatmul.mubr.f32.gmra.mxu0 %v3458
      %v3674 = vpop.f32.mrf.mxu0
      %v3675 = vadd.f32 0.0, %v3674
      %v3676 = vpop.f32.mrf.mxu0
      %3677 = vmatprep.mubr.f32.mxu0 0.0
      %3678 = vmatmul.mubr.f32.gmra.mxu0 %v3461
      %v3679 = vpop.f32.mrf.mxu0
      %v3680 = vadd.f32 0.0, %v3679
      %v3681 = vpop.f32.mrf.mxu0
      %3682 = vmatprep.mubr.f32.mxu0 0.0
      %3683 = vmatmul.mubr.f32.gmra.mxu0 %v3464
      %v3684 = vpop.f32.mrf.mxu0
      %v3685 = vadd.f32 0.0, %v3684
      %v3686 = vpop.f32.mrf.mxu0
      %3687 = vmatprep.mubr.f32.mxu0 0.0
      %3688 = vmatmul.mubr.f32.gmra.mxu0 %v3467
      %v3689 = vpop.f32.mrf.mxu0
      %v3690 = vadd.f32 0.0, %v3689
      %v3691 = vpop.f32.mrf.mxu0
      %3692 = vmatprep.mubr.f32.mxu0 0.0
      %3693 = vmatmul.mubr.f32.gmra.mxu0 %v3470
      %v3694 = vpop.f32.mrf.mxu0
      %v3695 = vadd.f32 0.0, %v3694
      %v3696 = vpop.f32.mrf.mxu0
      %3697 = vmatprep.mubr.f32.mxu0 0.0
      %3698 = vmatmul.mubr.f32.gmra.mxu0 %v3473
      %v3699 = vpop.f32.mrf.mxu0
      %v3700 = vadd.f32 0.0, %v3699
      %v3701 = vpop.f32.mrf.mxu0
      %3702 = vdwg.mxu0
      %v3703 = vadd.f32 %v3312, %v3545
      %v3704 = vadd.f32 %v3313, %v3550
      %v3705 = vadd.f32 %v3314, %v3555
      %v3706 = vadd.f32 %v3315, %v3560
      %v3707 = vadd.f32 %v3316, %v3565
      %v3708 = vadd.f32 %v3317, %v3570
      %v3709 = vadd.f32 %v3318, %v3575
      %v3710 = vadd.f32 %v3319, %v3580
      %v3711 = vadd.f32 %v3320, %v3585
      %v3712 = vadd.f32 %v3321, %v3590
      %v3713 = vadd.f32 %v3322, %v3595
      %v3714 = vadd.f32 %v3323, %v3600
      %v3715 = vadd.f32 %v3324, %v3605
      %v3716 = vadd.f32 %v3325, %v3610
      %v3717 = vadd.f32 %v3326, %v3615
      %v3718 = vadd.f32 %v3327, %v3620
      %v3719 = vadd.f32 %v3328, %v3625
      %v3720 = vadd.f32 %v3329, %v3630
      %v3721 = vadd.f32 %v3330, %v3635
      %v3722 = vadd.f32 %v3331, %v3640
      %v3723 = vadd.f32 %v3332, %v3645
      %v3724 = vadd.f32 %v3333, %v3650
      %v3725 = vadd.f32 %v3334, %v3655
      %v3726 = vadd.f32 %v3335, %v3660
      %v3727 = vadd.f32 %v3336, %v3665
      %v3728 = vadd.f32 %v3337, %v3670
      %v3729 = vadd.f32 %v3338, %v3675
      %v3730 = vadd.f32 %v3339, %v3680
      %v3731 = vadd.f32 %v3340, %v3685
      %v3732 = vadd.f32 %v3341, %v3690
      %v3733 = vadd.f32 %v3342, %v3695
      %v3734 = vadd.f32 %v3343, %v3700
      %v3735 = vld [vmem:[%s2952 + $0x2] sm:$0xff]
      %v3736 = vld [vmem:[%s2952 + $0xa] sm:$0xff]
      %v3737 = vld [vmem:[%s2952 + $0x1a] sm:$0xff]
      %v3738 = vld [vmem:[%s2952 + $0x22] sm:$0xff]
      %v3739 = vld [vmem:[%s2952 + $0x32] sm:$0xff]
      %v3740 = vld [vmem:[%s2952 + $0x3a] sm:$0xff]
      %v3741 = vld [vmem:[%s2952 + $0x4a] sm:$0xff]
      %v3742 = vld [vmem:[%s2952 + $0x52] sm:$0xff]
      %v3743 = vld [vmem:[%s2952 + $0x62] sm:$0xff]
      %v3744 = vld [vmem:[%s2952 + $0x6a] sm:$0xff]
      %v3745 = vld [vmem:[%s2952 + $0x7a] sm:$0xff]
      %v3746 = vld [vmem:[%s2952 + $0x82] sm:$0xff]
      %v3747 = vld [vmem:[%s2952 + $0x92] sm:$0xff]
      %v3748 = vld [vmem:[%s2952 + $0x9a] sm:$0xff]
      %v3749 = vld [vmem:[%s2952 + $0xaa] sm:$0xff]
      %v3750 = vld [vmem:[%s2952 + $0xb2] sm:$0xff]
      %v3751 = vld [vmem:[%s2952 + $0xc2] sm:$0xff]
      %v3752 = vld [vmem:[%s2952 + $0xca] sm:$0xff]
      %v3753 = vld [vmem:[%s2952 + $0xda] sm:$0xff]
      %v3754 = vld [vmem:[%s2952 + $0xe2] sm:$0xff]
      %v3755 = vld [vmem:[%s2952 + $0xf2] sm:$0xff]
      %v3756 = vld [vmem:[%s2952 + $0xfa] sm:$0xff]
      %v3757 = vld [vmem:[%s2952 + $0x10a] sm:$0xff]
      %v3758 = vld [vmem:[%s2952 + $0x112] sm:$0xff]
      %v3759 = vld [vmem:[%s2952 + $0x122] sm:$0xff]
      %v3760 = vld [vmem:[%s2952 + $0x12a] sm:$0xff]
      %v3761 = vld [vmem:[%s2952 + $0x13a] sm:$0xff]
      %v3762 = vld [vmem:[%s2952 + $0x142] sm:$0xff]
      %v3763 = vld [vmem:[%s2952 + $0x152] sm:$0xff]
      %v3764 = vld [vmem:[%s2952 + $0x15a] sm:$0xff]
      %v3765 = vld [vmem:[%s2952 + $0x16a] sm:$0xff]
      %v3766 = vld [vmem:[%s2952 + $0x172] sm:$0xff]
      %s3767 = scalar_lea.vmem %s1, 128
      %v3768 = vld [vmem:[%s3767] sm:$0xff]
      %v3769 = vld [vmem:[%s3767 + $0x8] sm:$0x3]
      %v3771 = vsel %vm549, %v3735, 0
      %v3774 = vsel %vm549, %v3736, 0
      %v3777 = vsel %vm549, %v3737, 0
      %v3780 = vsel %vm549, %v3738, 0
      %v3783 = vsel %vm549, %v3739, 0
      %v3786 = vsel %vm549, %v3740, 0
      %v3789 = vsel %vm549, %v3741, 0
      %v3792 = vsel %vm549, %v3742, 0
      %v3795 = vsel %vm549, %v3743, 0
      %v3798 = vsel %vm549, %v3744, 0
      %v3801 = vsel %vm549, %v3745, 0
      %v3804 = vsel %vm549, %v3746, 0
      %v3807 = vsel %vm549, %v3747, 0
      %v3810 = vsel %vm549, %v3748, 0
      %v3813 = vsel %vm549, %v3749, 0
      %v3816 = vsel %vm549, %v3750, 0
      %v3819 = vsel %vm549, %v3751, 0
      %v3822 = vsel %vm549, %v3752, 0
      %v3825 = vsel %vm549, %v3753, 0
      %v3828 = vsel %vm549, %v3754, 0
      %v3831 = vsel %vm549, %v3755, 0
      %v3834 = vsel %vm549, %v3756, 0
      %v3837 = vsel %vm549, %v3757, 0
      %v3840 = vsel %vm549, %v3758, 0
      %v3843 = vsel %vm549, %v3759, 0
      %v3846 = vsel %vm549, %v3760, 0
      %v3849 = vsel %vm549, %v3761, 0
      %v3852 = vsel %vm549, %v3762, 0
      %v3855 = vsel %vm549, %v3763, 0
      %v3858 = vsel %vm549, %v3764, 0
      %v3861 = vsel %vm549, %v3765, 0
      %v3864 = vsel %vm549, %v3766, 0
      %v3867 = vsel %vm835, %v3769, 0
      %3869 = vmatprep.subr.mxu0 0.0
      %3870 = vmatpush1.msra.mxu0 0.0
      %3871 = vmatprep.subr.mxu0 0.0
      %3872 = vmatpush1.msra.mxu0 0.0
      %3873 = vmatprep.subr.mxu0 0.0
      %3874 = vmatpush1.msra.mxu0 0.0
      %3875 = vmatprep.subr.mxu0 0.0
      %3876 = vmatpush1.msra.mxu0 0.0
      %3877 = vmatprep.subr.mxu0 0.0
      %3878 = vmatpush1.msra.mxu0 0.0
      %3879 = vmatprep.subr.mxu0 0.0
      %3880 = vmatpush1.msra.mxu0 0.0
      %3881 = vmatprep.subr.mxu0 0.0
      %3882 = vmatpush1.msra.mxu0 0.0
      %3883 = vmatprep.subr.mxu0 0.0
      %3884 = vmatpush1.msra.mxu0 0.0
      %3885 = vmatprep.subr.mxu0 0.0
      %3886 = vmatpush1.msra.mxu0 0.0
      %3887 = vmatprep.subr.mxu0 0.0
      %3888 = vmatpush1.msra.mxu0 0.0
      %3889 = vmatprep.subr.mxu0 0.0
      %3890 = vmatpush1.msra.mxu0 0.0
      %3891 = vmatprep.subr.mxu0 0.0
      %3892 = vmatpush1.msra.mxu0 0.0
      %3893 = vmatprep.subr.mxu0 0.0
      %3894 = vmatpush1.msra.mxu0 0.0
      %3895 = vmatprep.subr.mxu0 0.0
      %3896 = vmatpush1.msra.mxu0 0.0
      %3897 = vmatprep.subr.mxu0 0.0
      %3898 = vmatpush1.msra.mxu0 %v3867
      %3899 = vmatprep.subr.mxu0 0.0
      %3900 = vmatpush1.msra.mxu0 %v3768
      %3901 = vmatprep.subr.mxu0 0.0
      %3902 = vmatpush2.msra.mxu0 0.0
      %3903 = vmatprep.subr.mxu0 0.0
      %3904 = vmatpush2.msra.mxu0 0.0
      %3905 = vmatprep.subr.mxu0 0.0
      %3906 = vmatpush2.msra.mxu0 0.0
      %3907 = vmatprep.subr.mxu0 0.0
      %3908 = vmatpush2.msra.mxu0 0.0
      %3909 = vmatprep.subr.mxu0 0.0
      %3910 = vmatpush2.msra.mxu0 0.0
      %3911 = vmatprep.subr.mxu0 0.0
      %3912 = vmatpush2.msra.mxu0 0.0
      %3913 = vmatprep.subr.mxu0 0.0
      %3914 = vmatpush2.msra.mxu0 0.0
      %3915 = vmatprep.subr.mxu0 0.0
      %3916 = vmatpush2.msra.mxu0 0.0
      %3917 = vmatprep.subr.mxu0 0.0
      %3918 = vmatpush2.msra.mxu0 0.0
      %3919 = vmatprep.subr.mxu0 0.0
      %3920 = vmatpush2.msra.mxu0 0.0
      %3921 = vmatprep.subr.mxu0 0.0
      %3922 = vmatpush2.msra.mxu0 0.0
      %3923 = vmatprep.subr.mxu0 0.0
      %3924 = vmatpush2.msra.mxu0 0.0
      %3925 = vmatprep.subr.mxu0 0.0
      %3926 = vmatpush2.msra.mxu0 0.0
      %3927 = vmatprep.subr.mxu0 0.0
      %3928 = vmatpush2.msra.mxu0 0.0
      %3929 = vmatprep.subr.mxu0 0.0
      %3930 = vmatpush2.msra.mxu0 0.0
      %3931 = vmatprep.subr.mxu0 0.0
      %3932 = vmatpush2.msra.mxu0 0.0
      %3933 = vmatprep.mubr.f32.mxu0 0.0
      %3934 = vmatmul.mubr.f32.gmra.mxu0 %v3771
      %v3935 = vpop.f32.mrf.mxu0
      %v3936 = vadd.f32 0.0, %v3935
      %v3937 = vpop.f32.mrf.mxu0
      %3938 = vmatprep.mubr.f32.mxu0 0.0
      %3939 = vmatmul.mubr.f32.gmra.mxu0 %v3774
      %v3940 = vpop.f32.mrf.mxu0
      %v3941 = vadd.f32 0.0, %v3940
      %v3942 = vpop.f32.mrf.mxu0
      %3943 = vmatprep.mubr.f32.mxu0 0.0
      %3944 = vmatmul.mubr.f32.gmra.mxu0 %v3777
      %v3945 = vpop.f32.mrf.mxu0
      %v3946 = vadd.f32 0.0, %v3945
      %v3947 = vpop.f32.mrf.mxu0
      %3948 = vmatprep.mubr.f32.mxu0 0.0
      %3949 = vmatmul.mubr.f32.gmra.mxu0 %v3780
      %v3950 = vpop.f32.mrf.mxu0
      %v3951 = vadd.f32 0.0, %v3950
      %v3952 = vpop.f32.mrf.mxu0
      %3953 = vmatprep.mubr.f32.mxu0 0.0
      %3954 = vmatmul.mubr.f32.gmra.mxu0 %v3783
      %v3955 = vpop.f32.mrf.mxu0
      %v3956 = vadd.f32 0.0, %v3955
      %v3957 = vpop.f32.mrf.mxu0
      %3958 = vmatprep.mubr.f32.mxu0 0.0
      %3959 = vmatmul.mubr.f32.gmra.mxu0 %v3786
      %v3960 = vpop.f32.mrf.mxu0
      %v3961 = vadd.f32 0.0, %v3960
      %v3962 = vpop.f32.mrf.mxu0
      %3963 = vmatprep.mubr.f32.mxu0 0.0
      %3964 = vmatmul.mubr.f32.gmra.mxu0 %v3789
      %v3965 = vpop.f32.mrf.mxu0
      %v3966 = vadd.f32 0.0, %v3965
      %v3967 = vpop.f32.mrf.mxu0
      %3968 = vmatprep.mubr.f32.mxu0 0.0
      %3969 = vmatmul.mubr.f32.gmra.mxu0 %v3792
      %v3970 = vpop.f32.mrf.mxu0
      %v3971 = vadd.f32 0.0, %v3970
      %v3972 = vpop.f32.mrf.mxu0
      %3973 = vmatprep.mubr.f32.mxu0 0.0
      %3974 = vmatmul.mubr.f32.gmra.mxu0 %v3795
      %v3975 = vpop.f32.mrf.mxu0
      %v3976 = vadd.f32 0.0, %v3975
      %v3977 = vpop.f32.mrf.mxu0
      %3978 = vmatprep.mubr.f32.mxu0 0.0
      %3979 = vmatmul.mubr.f32.gmra.mxu0 %v3798
      %v3980 = vpop.f32.mrf.mxu0
      %v3981 = vadd.f32 0.0, %v3980
      %v3982 = vpop.f32.mrf.mxu0
      %3983 = vmatprep.mubr.f32.mxu0 0.0
      %3984 = vmatmul.mubr.f32.gmra.mxu0 %v3801
      %v3985 = vpop.f32.mrf.mxu0
      %v3986 = vadd.f32 0.0, %v3985
      %v3987 = vpop.f32.mrf.mxu0
      %3988 = vmatprep.mubr.f32.mxu0 0.0
      %3989 = vmatmul.mubr.f32.gmra.mxu0 %v3804
      %v3990 = vpop.f32.mrf.mxu0
      %v3991 = vadd.f32 0.0, %v3990
      %v3992 = vpop.f32.mrf.mxu0
      %3993 = vmatprep.mubr.f32.mxu0 0.0
      %3994 = vmatmul.mubr.f32.gmra.mxu0 %v3807
      %v3995 = vpop.f32.mrf.mxu0
      %v3996 = vadd.f32 0.0, %v3995
      %v3997 = vpop.f32.mrf.mxu0
      %3998 = vmatprep.mubr.f32.mxu0 0.0
      %3999 = vmatmul.mubr.f32.gmra.mxu0 %v3810
      %v4000 = vpop.f32.mrf.mxu0
      %v4001 = vadd.f32 0.0, %v4000
      %v4002 = vpop.f32.mrf.mxu0
      %4003 = vmatprep.mubr.f32.mxu0 0.0
      %4004 = vmatmul.mubr.f32.gmra.mxu0 %v3813
      %v4005 = vpop.f32.mrf.mxu0
      %v4006 = vadd.f32 0.0, %v4005
      %v4007 = vpop.f32.mrf.mxu0
      %4008 = vmatprep.mubr.f32.mxu0 0.0
      %4009 = vmatmul.mubr.f32.gmra.mxu0 %v3816
      %v4010 = vpop.f32.mrf.mxu0
      %v4011 = vadd.f32 0.0, %v4010
      %v4012 = vpop.f32.mrf.mxu0
      %4013 = vmatprep.mubr.f32.mxu0 0.0
      %4014 = vmatmul.mubr.f32.gmra.mxu0 %v3819
      %v4015 = vpop.f32.mrf.mxu0
      %v4016 = vadd.f32 0.0, %v4015
      %v4017 = vpop.f32.mrf.mxu0
      %4018 = vmatprep.mubr.f32.mxu0 0.0
      %4019 = vmatmul.mubr.f32.gmra.mxu0 %v3822
      %v4020 = vpop.f32.mrf.mxu0
      %v4021 = vadd.f32 0.0, %v4020
      %v4022 = vpop.f32.mrf.mxu0
      %4023 = vmatprep.mubr.f32.mxu0 0.0
      %4024 = vmatmul.mubr.f32.gmra.mxu0 %v3825
      %v4025 = vpop.f32.mrf.mxu0
      %v4026 = vadd.f32 0.0, %v4025
      %v4027 = vpop.f32.mrf.mxu0
      %4028 = vmatprep.mubr.f32.mxu0 0.0
      %4029 = vmatmul.mubr.f32.gmra.mxu0 %v3828
      %v4030 = vpop.f32.mrf.mxu0
      %v4031 = vadd.f32 0.0, %v4030
      %v4032 = vpop.f32.mrf.mxu0
      %4033 = vmatprep.mubr.f32.mxu0 0.0
      %4034 = vmatmul.mubr.f32.gmra.mxu0 %v3831
      %v4035 = vpop.f32.mrf.mxu0
      %v4036 = vadd.f32 0.0, %v4035
      %v4037 = vpop.f32.mrf.mxu0
      %4038 = vmatprep.mubr.f32.mxu0 0.0
      %4039 = vmatmul.mubr.f32.gmra.mxu0 %v3834
      %v4040 = vpop.f32.mrf.mxu0
      %v4041 = vadd.f32 0.0, %v4040
      %v4042 = vpop.f32.mrf.mxu0
      %4043 = vmatprep.mubr.f32.mxu0 0.0
      %4044 = vmatmul.mubr.f32.gmra.mxu0 %v3837
      %v4045 = vpop.f32.mrf.mxu0
      %v4046 = vadd.f32 0.0, %v4045
      %v4047 = vpop.f32.mrf.mxu0
      %4048 = vmatprep.mubr.f32.mxu0 0.0
      %4049 = vmatmul.mubr.f32.gmra.mxu0 %v3840
      %v4050 = vpop.f32.mrf.mxu0
      %v4051 = vadd.f32 0.0, %v4050
      %v4052 = vpop.f32.mrf.mxu0
      %4053 = vmatprep.mubr.f32.mxu0 0.0
      %4054 = vmatmul.mubr.f32.gmra.mxu0 %v3843
      %v4055 = vpop.f32.mrf.mxu0
      %v4056 = vadd.f32 0.0, %v4055
      %v4057 = vpop.f32.mrf.mxu0
      %4058 = vmatprep.mubr.f32.mxu0 0.0
      %4059 = vmatmul.mubr.f32.gmra.mxu0 %v3846
      %v4060 = vpop.f32.mrf.mxu0
      %v4061 = vadd.f32 0.0, %v4060
      %v4062 = vpop.f32.mrf.mxu0
      %4063 = vmatprep.mubr.f32.mxu0 0.0
      %4064 = vmatmul.mubr.f32.gmra.mxu0 %v3849
      %v4065 = vpop.f32.mrf.mxu0
      %v4066 = vadd.f32 0.0, %v4065
      %v4067 = vpop.f32.mrf.mxu0
      %4068 = vmatprep.mubr.f32.mxu0 0.0
      %4069 = vmatmul.mubr.f32.gmra.mxu0 %v3852
      %v4070 = vpop.f32.mrf.mxu0
      %v4071 = vadd.f32 0.0, %v4070
      %v4072 = vpop.f32.mrf.mxu0
      %4073 = vmatprep.mubr.f32.mxu0 0.0
      %4074 = vmatmul.mubr.f32.gmra.mxu0 %v3855
      %v4075 = vpop.f32.mrf.mxu0
      %v4076 = vadd.f32 0.0, %v4075
      %v4077 = vpop.f32.mrf.mxu0
      %4078 = vmatprep.mubr.f32.mxu0 0.0
      %4079 = vmatmul.mubr.f32.gmra.mxu0 %v3858
      %v4080 = vpop.f32.mrf.mxu0
      %v4081 = vadd.f32 0.0, %v4080
      %v4082 = vpop.f32.mrf.mxu0
      %4083 = vmatprep.mubr.f32.mxu0 0.0
      %4084 = vmatmul.mubr.f32.gmra.mxu0 %v3861
      %v4085 = vpop.f32.mrf.mxu0
      %v4086 = vadd.f32 0.0, %v4085
      %v4087 = vpop.f32.mrf.mxu0
      %4088 = vmatprep.mubr.f32.mxu0 0.0
      %4089 = vmatmul.mubr.f32.gmra.mxu0 %v3864
      %v4090 = vpop.f32.mrf.mxu0
      %v4091 = vadd.f32 0.0, %v4090
      %v4092 = vpop.f32.mrf.mxu0
      %4093 = vdwg.mxu0
      %v4094 = vadd.f32 %v3703, %v3936
      %v4095 = vadd.f32 %v3704, %v3941
      %v4096 = vadd.f32 %v3705, %v3946
      %v4097 = vadd.f32 %v3706, %v3951
      %v4098 = vadd.f32 %v3707, %v3956
      %v4099 = vadd.f32 %v3708, %v3961
      %v4100 = vadd.f32 %v3709, %v3966
      %v4101 = vadd.f32 %v3710, %v3971
      %v4102 = vadd.f32 %v3711, %v3976
      %v4103 = vadd.f32 %v3712, %v3981
      %v4104 = vadd.f32 %v3713, %v3986
      %v4105 = vadd.f32 %v3714, %v3991
      %v4106 = vadd.f32 %v3715, %v3996
      %v4107 = vadd.f32 %v3716, %v4001
      %v4108 = vadd.f32 %v3717, %v4006
      %v4109 = vadd.f32 %v3718, %v4011
      %v4110 = vadd.f32 %v3719, %v4016
      %v4111 = vadd.f32 %v3720, %v4021
      %v4112 = vadd.f32 %v3721, %v4026
      %v4113 = vadd.f32 %v3722, %v4031
      %v4114 = vadd.f32 %v3723, %v4036
      %v4115 = vadd.f32 %v3724, %v4041
      %v4116 = vadd.f32 %v3725, %v4046
      %v4117 = vadd.f32 %v3726, %v4051
      %v4118 = vadd.f32 %v3727, %v4056
      %v4119 = vadd.f32 %v3728, %v4061
      %v4120 = vadd.f32 %v3729, %v4066
      %v4121 = vadd.f32 %v3730, %v4071
      %v4122 = vadd.f32 %v3731, %v4076
      %v4123 = vadd.f32 %v3732, %v4081
      %v4124 = vadd.f32 %v3733, %v4086
      %v4125 = vadd.f32 %v3734, %v4091
      %v4126 = vld [vmem:[%s2] sm:$0x1]
      %v4128 = vlaneseq
      %v4129 = vshrl.u32 %v4128, 7
      %v4130 = vsub.s32 0, %v4129
      %v4131 = vrot.slane %v4126, %v4130
      %v4133 = vadd.f32 %v4094, %v4131
      %v4134 = vadd.f32 %v4095, %v4131
      %v4135 = vadd.f32 %v4096, %v4131
      %v4136 = vadd.f32 %v4097, %v4131
      %v4137 = vadd.f32 %v4098, %v4131
      %v4138 = vadd.f32 %v4099, %v4131
      %v4139 = vadd.f32 %v4100, %v4131
      %v4140 = vadd.f32 %v4101, %v4131
      %v4141 = vadd.f32 %v4102, %v4131
      %v4142 = vadd.f32 %v4103, %v4131
      %v4143 = vadd.f32 %v4104, %v4131
      %v4144 = vadd.f32 %v4105, %v4131
      %v4145 = vadd.f32 %v4106, %v4131
      %v4146 = vadd.f32 %v4107, %v4131
      %v4147 = vadd.f32 %v4108, %v4131
      %v4148 = vadd.f32 %v4109, %v4131
      %v4149 = vadd.f32 %v4110, %v4131
      %v4150 = vadd.f32 %v4111, %v4131
      %v4151 = vadd.f32 %v4112, %v4131
      %v4152 = vadd.f32 %v4113, %v4131
      %v4153 = vadd.f32 %v4114, %v4131
      %v4154 = vadd.f32 %v4115, %v4131
      %v4155 = vadd.f32 %v4116, %v4131
      %v4156 = vadd.f32 %v4117, %v4131
      %v4157 = vadd.f32 %v4118, %v4131
      %v4158 = vadd.f32 %v4119, %v4131
      %v4159 = vadd.f32 %v4120, %v4131
      %v4160 = vadd.f32 %v4121, %v4131
      %v4161 = vadd.f32 %v4122, %v4131
      %v4162 = vadd.f32 %v4123, %v4131
      %v4163 = vadd.f32 %v4124, %v4131
      %v4164 = vadd.f32 %v4125, %v4131
      %v4165 = vmax.f32 %v4133, 0.0
      %v4166 = vmax.f32 %v4134, 0.0
      %v4167 = vmax.f32 %v4135, 0.0
      %v4168 = vmax.f32 %v4136, 0.0
      %v4169 = vmax.f32 %v4137, 0.0
      %v4170 = vmax.f32 %v4138, 0.0
      %v4171 = vmax.f32 %v4139, 0.0
      %v4172 = vmax.f32 %v4140, 0.0
      %v4173 = vmax.f32 %v4141, 0.0
      %v4174 = vmax.f32 %v4142, 0.0
      %v4175 = vmax.f32 %v4143, 0.0
      %v4176 = vmax.f32 %v4144, 0.0
      %v4177 = vmax.f32 %v4145, 0.0
      %v4178 = vmax.f32 %v4146, 0.0
      %v4179 = vmax.f32 %v4147, 0.0
      %v4180 = vmax.f32 %v4148, 0.0
      %v4181 = vmax.f32 %v4149, 0.0
      %v4182 = vmax.f32 %v4150, 0.0
      %v4183 = vmax.f32 %v4151, 0.0
      %v4184 = vmax.f32 %v4152, 0.0
      %v4185 = vmax.f32 %v4153, 0.0
      %v4186 = vmax.f32 %v4154, 0.0
      %v4187 = vmax.f32 %v4155, 0.0
      %v4188 = vmax.f32 %v4156, 0.0
      %v4189 = vmax.f32 %v4157, 0.0
      %v4190 = vmax.f32 %v4158, 0.0
      %v4191 = vmax.f32 %v4159, 0.0
      %v4192 = vmax.f32 %v4160, 0.0
      %v4193 = vmax.f32 %v4161, 0.0
      %v4194 = vmax.f32 %v4162, 0.0
      %v4195 = vmax.f32 %v4163, 0.0
      %v4196 = vmax.f32 %v4164, 0.0
      %4197 = vst.msk [vmem:[%s637 + $0x1] sm:$0xff] %vm549, %v4165
      %4198 = vst.msk [vmem:[%s637 + $0x9] sm:$0xff] %vm549, %v4166
      %4199 = vst.msk [vmem:[%s637 + $0x19] sm:$0xff] %vm549, %v4167
      %4200 = vst.msk [vmem:[%s637 + $0x21] sm:$0xff] %vm549, %v4168
      %4201 = vst.msk [vmem:[%s637 + $0x31] sm:$0xff] %vm549, %v4169
      %4202 = vst.msk [vmem:[%s637 + $0x39] sm:$0xff] %vm549, %v4170
      %4203 = vst.msk [vmem:[%s637 + $0x49] sm:$0xff] %vm549, %v4171
      %4204 = vst.msk [vmem:[%s637 + $0x51] sm:$0xff] %vm549, %v4172
      %4205 = vst.msk [vmem:[%s637 + $0x61] sm:$0xff] %vm549, %v4173
      %4206 = vst.msk [vmem:[%s637 + $0x69] sm:$0xff] %vm549, %v4174
      %4207 = vst.msk [vmem:[%s637 + $0x79] sm:$0xff] %vm549, %v4175
      %4208 = vst.msk [vmem:[%s637 + $0x81] sm:$0xff] %vm549, %v4176
      %4209 = vst.msk [vmem:[%s637 + $0x91] sm:$0xff] %vm549, %v4177
      %4210 = vst.msk [vmem:[%s637 + $0x99] sm:$0xff] %vm549, %v4178
      %4211 = vst.msk [vmem:[%s637 + $0xa9] sm:$0xff] %vm549, %v4179
      %4212 = vst.msk [vmem:[%s637 + $0xb1] sm:$0xff] %vm549, %v4180
      %4213 = vst.msk [vmem:[%s637 + $0xc1] sm:$0xff] %vm549, %v4181
      %4214 = vst.msk [vmem:[%s637 + $0xc9] sm:$0xff] %vm549, %v4182
      %4215 = vst.msk [vmem:[%s637 + $0xd9] sm:$0xff] %vm549, %v4183
      %4216 = vst.msk [vmem:[%s637 + $0xe1] sm:$0xff] %vm549, %v4184
      %4217 = vst.msk [vmem:[%s637 + $0xf1] sm:$0xff] %vm549, %v4185
      %4218 = vst.msk [vmem:[%s637 + $0xf9] sm:$0xff] %vm549, %v4186
      %4219 = vst.msk [vmem:[%s637 + $0x109] sm:$0xff] %vm549, %v4187
      %4220 = vst.msk [vmem:[%s637 + $0x111] sm:$0xff] %vm549, %v4188
      %4221 = vst.msk [vmem:[%s637 + $0x121] sm:$0xff] %vm549, %v4189
      %4222 = vst.msk [vmem:[%s637 + $0x129] sm:$0xff] %vm549, %v4190
      %4223 = vst.msk [vmem:[%s637 + $0x139] sm:$0xff] %vm549, %v4191
      %4224 = vst.msk [vmem:[%s637 + $0x141] sm:$0xff] %vm549, %v4192
      %4225 = vst.msk [vmem:[%s637 + $0x151] sm:$0xff] %vm549, %v4193
      %4226 = vst.msk [vmem:[%s637 + $0x159] sm:$0xff] %vm549, %v4194
      %4227 = vst.msk [vmem:[%s637 + $0x169] sm:$0xff] %vm549, %v4195
      %4228 = vst.msk [vmem:[%s637 + $0x171] sm:$0xff] %vm549, %v4196
      %v4229 = vld [vmem:[#allocation2] sm:$0xff]
      %v4230 = vld [vmem:[#allocation2 + $0x8] sm:$0xff]
      %v4231 = vld [vmem:[#allocation2 + $0x18] sm:$0xff]
      %v4232 = vld [vmem:[#allocation2 + $0x20] sm:$0xff]
      %v4233 = vld [vmem:[#allocation2 + $0x30] sm:$0xff]
      %v4234 = vld [vmem:[#allocation2 + $0x38] sm:$0xff]
      %v4235 = vld [vmem:[#allocation2 + $0x48] sm:$0xff]
      %v4236 = vld [vmem:[#allocation2 + $0x50] sm:$0xff]
      %v4237 = vld [vmem:[#allocation2 + $0x60] sm:$0xff]
      %v4238 = vld [vmem:[#allocation2 + $0x68] sm:$0xff]
      %v4239 = vld [vmem:[#allocation2 + $0x78] sm:$0xff]
      %v4240 = vld [vmem:[#allocation2 + $0x80] sm:$0xff]
      %v4241 = vld [vmem:[#allocation2 + $0x90] sm:$0xff]
      %v4242 = vld [vmem:[#allocation2 + $0x98] sm:$0xff]
      %v4243 = vld [vmem:[#allocation2 + $0xa8] sm:$0xff]
      %v4244 = vld [vmem:[#allocation2 + $0xb0] sm:$0xff]
      %v4245 = vld [vmem:[#allocation2 + $0xc0] sm:$0xff]
      %v4246 = vld [vmem:[#allocation2 + $0xc8] sm:$0xff]
      %v4247 = vld [vmem:[#allocation2 + $0xd8] sm:$0xff]
      %v4248 = vld [vmem:[#allocation2 + $0xe0] sm:$0xff]
      %v4249 = vld [vmem:[#allocation2 + $0xf0] sm:$0xff]
      %v4250 = vld [vmem:[#allocation2 + $0xf8] sm:$0xff]
      %v4251 = vld [vmem:[#allocation2 + $0x108] sm:$0xff]
      %v4252 = vld [vmem:[#allocation2 + $0x110] sm:$0xff]
      %v4253 = vld [vmem:[#allocation2 + $0x120] sm:$0xff]
      %v4254 = vld [vmem:[#allocation2 + $0x128] sm:$0xff]
      %v4255 = vld [vmem:[#allocation2 + $0x138] sm:$0xff]
      %v4256 = vld [vmem:[#allocation2 + $0x140] sm:$0xff]
      %v4257 = vld [vmem:[#allocation2 + $0x150] sm:$0xff]
      %v4258 = vld [vmem:[#allocation2 + $0x158] sm:$0xff]
      %v4259 = vld [vmem:[#allocation2 + $0x168] sm:$0xff]
      %v4260 = vld [vmem:[#allocation2 + $0x170] sm:$0xff]
      %v4261 = vld [vmem:[%s3] sm:$0xff]
      %v4262 = vld [vmem:[%s3 + $0x8] sm:$0x3]
      %v4263 = vld [vmem:[#allocation2 + $0x1] sm:$0xff]
      %v4264 = vld [vmem:[#allocation2 + $0x9] sm:$0xff]
      %v4265 = vld [vmem:[#allocation2 + $0x19] sm:$0xff]
      %v4266 = vld [vmem:[#allocation2 + $0x21] sm:$0xff]
      %v4267 = vld [vmem:[#allocation2 + $0x31] sm:$0xff]
      %v4268 = vld [vmem:[#allocation2 + $0x39] sm:$0xff]
      %v4269 = vld [vmem:[#allocation2 + $0x49] sm:$0xff]
      %v4270 = vld [vmem:[#allocation2 + $0x51] sm:$0xff]
      %v4271 = vld [vmem:[#allocation2 + $0x61] sm:$0xff]
      %v4272 = vld [vmem:[#allocation2 + $0x69] sm:$0xff]
      %v4273 = vld [vmem:[#allocation2 + $0x79] sm:$0xff]
      %v4274 = vld [vmem:[#allocation2 + $0x81] sm:$0xff]
      %v4275 = vld [vmem:[#allocation2 + $0x91] sm:$0xff]
      %v4276 = vld [vmem:[#allocation2 + $0x99] sm:$0xff]
      %v4277 = vld [vmem:[#allocation2 + $0xa9] sm:$0xff]
      %v4278 = vld [vmem:[#allocation2 + $0xb1] sm:$0xff]
      %v4279 = vld [vmem:[#allocation2 + $0xc1] sm:$0xff]
      %v4280 = vld [vmem:[#allocation2 + $0xc9] sm:$0xff]
      %v4281 = vld [vmem:[#allocation2 + $0xd9] sm:$0xff]
      %v4282 = vld [vmem:[#allocation2 + $0xe1] sm:$0xff]
      %v4283 = vld [vmem:[#allocation2 + $0xf1] sm:$0xff]
      %v4284 = vld [vmem:[#allocation2 + $0xf9] sm:$0xff]
      %v4285 = vld [vmem:[#allocation2 + $0x109] sm:$0xff]
      %v4286 = vld [vmem:[#allocation2 + $0x111] sm:$0xff]
      %v4287 = vld [vmem:[#allocation2 + $0x121] sm:$0xff]
      %v4288 = vld [vmem:[#allocation2 + $0x129] sm:$0xff]
      %v4289 = vld [vmem:[#allocation2 + $0x139] sm:$0xff]
      %v4290 = vld [vmem:[#allocation2 + $0x141] sm:$0xff]
      %v4291 = vld [vmem:[#allocation2 + $0x151] sm:$0xff]
      %v4292 = vld [vmem:[#allocation2 + $0x159] sm:$0xff]
      %v4293 = vld [vmem:[#allocation2 + $0x169] sm:$0xff]
      %v4294 = vld [vmem:[#allocation2 + $0x171] sm:$0xff]
      %s4295 = scalar_lea.vmem %s3, 16
      %v4296 = vld [vmem:[%s4295] sm:$0xff]
      %v4297 = vld [vmem:[%s4295 + $0x8] sm:$0x3]
      %v4299 = vsel %vm549, %v4263, 0
      %v4302 = vsel %vm549, %v4264, 0
      %v4305 = vsel %vm549, %v4265, 0
      %v4308 = vsel %vm549, %v4266, 0
      %v4311 = vsel %vm549, %v4267, 0
      %v4314 = vsel %vm549, %v4268, 0
      %v4317 = vsel %vm549, %v4269, 0
      %v4320 = vsel %vm549, %v4270, 0
      %v4323 = vsel %vm549, %v4271, 0
      %v4326 = vsel %vm549, %v4272, 0
      %v4329 = vsel %vm549, %v4273, 0
      %v4332 = vsel %vm549, %v4274, 0
      %v4335 = vsel %vm549, %v4275, 0
      %v4338 = vsel %vm549, %v4276, 0
      %v4341 = vsel %vm549, %v4277, 0
      %v4344 = vsel %vm549, %v4278, 0
      %v4347 = vsel %vm549, %v4279, 0
      %v4350 = vsel %vm549, %v4280, 0
      %v4353 = vsel %vm549, %v4281, 0
      %v4356 = vsel %vm549, %v4282, 0
      %v4359 = vsel %vm549, %v4283, 0
      %v4362 = vsel %vm549, %v4284, 0
      %v4365 = vsel %vm549, %v4285, 0
      %v4368 = vsel %vm549, %v4286, 0
      %v4371 = vsel %vm549, %v4287, 0
      %v4374 = vsel %vm549, %v4288, 0
      %v4377 = vsel %vm549, %v4289, 0
      %v4380 = vsel %vm549, %v4290, 0
      %v4383 = vsel %vm549, %v4291, 0
      %v4386 = vsel %vm549, %v4292, 0
      %v4389 = vsel %vm549, %v4293, 0
      %v4392 = vsel %vm549, %v4294, 0
      %v4395 = vsel %vm835, %v4297, 0
      %4397 = vmatprep.subr.mxu0 0.0
      %4398 = vmatpush1.msra.mxu0 0.0
      %4399 = vmatprep.subr.mxu0 0.0
      %4400 = vmatpush1.msra.mxu0 0.0
      %4401 = vmatprep.subr.mxu0 0.0
      %4402 = vmatpush1.msra.mxu0 0.0
      %4403 = vmatprep.subr.mxu0 0.0
      %4404 = vmatpush1.msra.mxu0 0.0
      %4405 = vmatprep.subr.mxu0 0.0
      %4406 = vmatpush1.msra.mxu0 0.0
      %4407 = vmatprep.subr.mxu0 0.0
      %4408 = vmatpush1.msra.mxu0 0.0
      %4409 = vmatprep.subr.mxu0 0.0
      %4410 = vmatpush1.msra.mxu0 0.0
      %4411 = vmatprep.subr.mxu0 0.0
      %4412 = vmatpush1.msra.mxu0 0.0
      %4413 = vmatprep.subr.mxu0 0.0
      %4414 = vmatpush1.msra.mxu0 0.0
      %4415 = vmatprep.subr.mxu0 0.0
      %4416 = vmatpush1.msra.mxu0 0.0
      %4417 = vmatprep.subr.mxu0 0.0
      %4418 = vmatpush1.msra.mxu0 0.0
      %4419 = vmatprep.subr.mxu0 0.0
      %4420 = vmatpush1.msra.mxu0 0.0
      %4421 = vmatprep.subr.mxu0 0.0
      %4422 = vmatpush1.msra.mxu0 0.0
      %4423 = vmatprep.subr.mxu0 0.0
      %4424 = vmatpush1.msra.mxu0 0.0
      %4425 = vmatprep.subr.mxu0 0.0
      %4426 = vmatpush1.msra.mxu0 %v4395
      %4427 = vmatprep.subr.mxu0 0.0
      %4428 = vmatpush1.msra.mxu0 %v4296
      %4429 = vmatprep.subr.mxu0 0.0
      %4430 = vmatpush2.msra.mxu0 0.0
      %4431 = vmatprep.subr.mxu0 0.0
      %4432 = vmatpush2.msra.mxu0 0.0
      %4433 = vmatprep.subr.mxu0 0.0
      %4434 = vmatpush2.msra.mxu0 0.0
      %4435 = vmatprep.subr.mxu0 0.0
      %4436 = vmatpush2.msra.mxu0 0.0
      %4437 = vmatprep.subr.mxu0 0.0
      %4438 = vmatpush2.msra.mxu0 0.0
      %4439 = vmatprep.subr.mxu0 0.0
      %4440 = vmatpush2.msra.mxu0 0.0
      %4441 = vmatprep.subr.mxu0 0.0
      %4442 = vmatpush2.msra.mxu0 0.0
      %4443 = vmatprep.subr.mxu0 0.0
      %4444 = vmatpush2.msra.mxu0 0.0
      %4445 = vmatprep.subr.mxu0 0.0
      %4446 = vmatpush2.msra.mxu0 0.0
      %4447 = vmatprep.subr.mxu0 0.0
      %4448 = vmatpush2.msra.mxu0 0.0
      %4449 = vmatprep.subr.mxu0 0.0
      %4450 = vmatpush2.msra.mxu0 0.0
      %4451 = vmatprep.subr.mxu0 0.0
      %4452 = vmatpush2.msra.mxu0 0.0
      %4453 = vmatprep.subr.mxu0 0.0
      %4454 = vmatpush2.msra.mxu0 0.0
      %4455 = vmatprep.subr.mxu0 0.0
      %4456 = vmatpush2.msra.mxu0 0.0
      %4457 = vmatprep.subr.mxu0 0.0
      %4458 = vmatpush2.msra.mxu0 0.0
      %4459 = vmatprep.subr.mxu0 0.0
      %4460 = vmatpush2.msra.mxu0 0.0
      %4461 = vmatprep.mubr.f32.mxu0 0.0
      %4462 = vmatmul.mubr.f32.gmra.mxu0 %v4299
      %v4463 = vpop.f32.mrf.mxu0
      %v4464 = vadd.f32 0.0, %v4463
      %v4465 = vpop.f32.mrf.mxu0
      %4466 = vmatprep.mubr.f32.mxu0 0.0
      %4467 = vmatmul.mubr.f32.gmra.mxu0 %v4302
      %v4468 = vpop.f32.mrf.mxu0
      %v4469 = vadd.f32 0.0, %v4468
      %v4470 = vpop.f32.mrf.mxu0
      %4471 = vmatprep.mubr.f32.mxu0 0.0
      %4472 = vmatmul.mubr.f32.gmra.mxu0 %v4305
      %v4473 = vpop.f32.mrf.mxu0
      %v4474 = vadd.f32 0.0, %v4473
      %v4475 = vpop.f32.mrf.mxu0
      %4476 = vmatprep.mubr.f32.mxu0 0.0
      %4477 = vmatmul.mubr.f32.gmra.mxu0 %v4308
      %v4478 = vpop.f32.mrf.mxu0
      %v4479 = vadd.f32 0.0, %v4478
      %v4480 = vpop.f32.mrf.mxu0
      %4481 = vmatprep.mubr.f32.mxu0 0.0
      %4482 = vmatmul.mubr.f32.gmra.mxu0 %v4311
      %v4483 = vpop.f32.mrf.mxu0
      %v4484 = vadd.f32 0.0, %v4483
      %v4485 = vpop.f32.mrf.mxu0
      %4486 = vmatprep.mubr.f32.mxu0 0.0
      %4487 = vmatmul.mubr.f32.gmra.mxu0 %v4314
      %v4488 = vpop.f32.mrf.mxu0
      %v4489 = vadd.f32 0.0, %v4488
      %v4490 = vpop.f32.mrf.mxu0
      %4491 = vmatprep.mubr.f32.mxu0 0.0
      %4492 = vmatmul.mubr.f32.gmra.mxu0 %v4317
      %v4493 = vpop.f32.mrf.mxu0
      %v4494 = vadd.f32 0.0, %v4493
      %v4495 = vpop.f32.mrf.mxu0
      %4496 = vmatprep.mubr.f32.mxu0 0.0
      %4497 = vmatmul.mubr.f32.gmra.mxu0 %v4320
      %v4498 = vpop.f32.mrf.mxu0
      %v4499 = vadd.f32 0.0, %v4498
      %v4500 = vpop.f32.mrf.mxu0
      %4501 = vmatprep.mubr.f32.mxu0 0.0
      %4502 = vmatmul.mubr.f32.gmra.mxu0 %v4323
      %v4503 = vpop.f32.mrf.mxu0
      %v4504 = vadd.f32 0.0, %v4503
      %v4505 = vpop.f32.mrf.mxu0
      %4506 = vmatprep.mubr.f32.mxu0 0.0
      %4507 = vmatmul.mubr.f32.gmra.mxu0 %v4326
      %v4508 = vpop.f32.mrf.mxu0
      %v4509 = vadd.f32 0.0, %v4508
      %v4510 = vpop.f32.mrf.mxu0
      %4511 = vmatprep.mubr.f32.mxu0 0.0
      %4512 = vmatmul.mubr.f32.gmra.mxu0 %v4329
      %v4513 = vpop.f32.mrf.mxu0
      %v4514 = vadd.f32 0.0, %v4513
      %v4515 = vpop.f32.mrf.mxu0
      %4516 = vmatprep.mubr.f32.mxu0 0.0
      %4517 = vmatmul.mubr.f32.gmra.mxu0 %v4332
      %v4518 = vpop.f32.mrf.mxu0
      %v4519 = vadd.f32 0.0, %v4518
      %v4520 = vpop.f32.mrf.mxu0
      %4521 = vmatprep.mubr.f32.mxu0 0.0
      %4522 = vmatmul.mubr.f32.gmra.mxu0 %v4335
      %v4523 = vpop.f32.mrf.mxu0
      %v4524 = vadd.f32 0.0, %v4523
      %v4525 = vpop.f32.mrf.mxu0
      %4526 = vmatprep.mubr.f32.mxu0 0.0
      %4527 = vmatmul.mubr.f32.gmra.mxu0 %v4338
      %v4528 = vpop.f32.mrf.mxu0
      %v4529 = vadd.f32 0.0, %v4528
      %v4530 = vpop.f32.mrf.mxu0
      %4531 = vmatprep.mubr.f32.mxu0 0.0
      %4532 = vmatmul.mubr.f32.gmra.mxu0 %v4341
      %v4533 = vpop.f32.mrf.mxu0
      %v4534 = vadd.f32 0.0, %v4533
      %v4535 = vpop.f32.mrf.mxu0
      %4536 = vmatprep.mubr.f32.mxu0 0.0
      %4537 = vmatmul.mubr.f32.gmra.mxu0 %v4344
      %v4538 = vpop.f32.mrf.mxu0
      %v4539 = vadd.f32 0.0, %v4538
      %v4540 = vpop.f32.mrf.mxu0
      %4541 = vmatprep.mubr.f32.mxu0 0.0
      %4542 = vmatmul.mubr.f32.gmra.mxu0 %v4347
      %v4543 = vpop.f32.mrf.mxu0
      %v4544 = vadd.f32 0.0, %v4543
      %v4545 = vpop.f32.mrf.mxu0
      %4546 = vmatprep.mubr.f32.mxu0 0.0
      %4547 = vmatmul.mubr.f32.gmra.mxu0 %v4350
      %v4548 = vpop.f32.mrf.mxu0
      %v4549 = vadd.f32 0.0, %v4548
      %v4550 = vpop.f32.mrf.mxu0
      %4551 = vmatprep.mubr.f32.mxu0 0.0
      %4552 = vmatmul.mubr.f32.gmra.mxu0 %v4353
      %v4553 = vpop.f32.mrf.mxu0
      %v4554 = vadd.f32 0.0, %v4553
      %v4555 = vpop.f32.mrf.mxu0
      %4556 = vmatprep.mubr.f32.mxu0 0.0
      %4557 = vmatmul.mubr.f32.gmra.mxu0 %v4356
      %v4558 = vpop.f32.mrf.mxu0
      %v4559 = vadd.f32 0.0, %v4558
      %v4560 = vpop.f32.mrf.mxu0
      %4561 = vmatprep.mubr.f32.mxu0 0.0
      %4562 = vmatmul.mubr.f32.gmra.mxu0 %v4359
      %v4563 = vpop.f32.mrf.mxu0
      %v4564 = vadd.f32 0.0, %v4563
      %v4565 = vpop.f32.mrf.mxu0
      %4566 = vmatprep.mubr.f32.mxu0 0.0
      %4567 = vmatmul.mubr.f32.gmra.mxu0 %v4362
      %v4568 = vpop.f32.mrf.mxu0
      %v4569 = vadd.f32 0.0, %v4568
      %v4570 = vpop.f32.mrf.mxu0
      %4571 = vmatprep.mubr.f32.mxu0 0.0
      %4572 = vmatmul.mubr.f32.gmra.mxu0 %v4365
      %v4573 = vpop.f32.mrf.mxu0
      %v4574 = vadd.f32 0.0, %v4573
      %v4575 = vpop.f32.mrf.mxu0
      %4576 = vmatprep.mubr.f32.mxu0 0.0
      %4577 = vmatmul.mubr.f32.gmra.mxu0 %v4368
      %v4578 = vpop.f32.mrf.mxu0
      %v4579 = vadd.f32 0.0, %v4578
      %v4580 = vpop.f32.mrf.mxu0
      %4581 = vmatprep.mubr.f32.mxu0 0.0
      %4582 = vmatmul.mubr.f32.gmra.mxu0 %v4371
      %v4583 = vpop.f32.mrf.mxu0
      %v4584 = vadd.f32 0.0, %v4583
      %v4585 = vpop.f32.mrf.mxu0
      %4586 = vmatprep.mubr.f32.mxu0 0.0
      %4587 = vmatmul.mubr.f32.gmra.mxu0 %v4374
      %v4588 = vpop.f32.mrf.mxu0
      %v4589 = vadd.f32 0.0, %v4588
      %v4590 = vpop.f32.mrf.mxu0
      %4591 = vmatprep.mubr.f32.mxu0 0.0
      %4592 = vmatmul.mubr.f32.gmra.mxu0 %v4377
      %v4593 = vpop.f32.mrf.mxu0
      %v4594 = vadd.f32 0.0, %v4593
      %v4595 = vpop.f32.mrf.mxu0
      %4596 = vmatprep.mubr.f32.mxu0 0.0
      %4597 = vmatmul.mubr.f32.gmra.mxu0 %v4380
      %v4598 = vpop.f32.mrf.mxu0
      %v4599 = vadd.f32 0.0, %v4598
      %v4600 = vpop.f32.mrf.mxu0
      %4601 = vmatprep.mubr.f32.mxu0 0.0
      %4602 = vmatmul.mubr.f32.gmra.mxu0 %v4383
      %v4603 = vpop.f32.mrf.mxu0
      %v4604 = vadd.f32 0.0, %v4603
      %v4605 = vpop.f32.mrf.mxu0
      %4606 = vmatprep.mubr.f32.mxu0 0.0
      %4607 = vmatmul.mubr.f32.gmra.mxu0 %v4386
      %v4608 = vpop.f32.mrf.mxu0
      %v4609 = vadd.f32 0.0, %v4608
      %v4610 = vpop.f32.mrf.mxu0
      %4611 = vmatprep.mubr.f32.mxu0 0.0
      %4612 = vmatmul.mubr.f32.gmra.mxu0 %v4389
      %v4613 = vpop.f32.mrf.mxu0
      %v4614 = vadd.f32 0.0, %v4613
      %v4615 = vpop.f32.mrf.mxu0
      %4616 = vmatprep.mubr.f32.mxu0 0.0
      %4617 = vmatmul.mubr.f32.gmra.mxu0 %v4392
      %v4618 = vpop.f32.mrf.mxu0
      %v4619 = vadd.f32 0.0, %v4618
      %v4620 = vpop.f32.mrf.mxu0
      %4621 = vdwg.mxu0
      %v4623 = vsel %vm549, %v4229, 0
      %v4626 = vsel %vm549, %v4230, 0
      %v4629 = vsel %vm549, %v4231, 0
      %v4632 = vsel %vm549, %v4232, 0
      %v4635 = vsel %vm549, %v4233, 0
      %v4638 = vsel %vm549, %v4234, 0
      %v4641 = vsel %vm549, %v4235, 0
      %v4644 = vsel %vm549, %v4236, 0
      %v4647 = vsel %vm549, %v4237, 0
      %v4650 = vsel %vm549, %v4238, 0
      %v4653 = vsel %vm549, %v4239, 0
      %v4656 = vsel %vm549, %v4240, 0
      %v4659 = vsel %vm549, %v4241, 0
      %v4662 = vsel %vm549, %v4242, 0
      %v4665 = vsel %vm549, %v4243, 0
      %v4668 = vsel %vm549, %v4244, 0
      %v4671 = vsel %vm549, %v4245, 0
      %v4674 = vsel %vm549, %v4246, 0
      %v4677 = vsel %vm549, %v4247, 0
      %v4680 = vsel %vm549, %v4248, 0
      %v4683 = vsel %vm549, %v4249, 0
      %v4686 = vsel %vm549, %v4250, 0
      %v4689 = vsel %vm549, %v4251, 0
      %v4692 = vsel %vm549, %v4252, 0
      %v4695 = vsel %vm549, %v4253, 0
      %v4698 = vsel %vm549, %v4254, 0
      %v4701 = vsel %vm549, %v4255, 0
      %v4704 = vsel %vm549, %v4256, 0
      %v4707 = vsel %vm549, %v4257, 0
      %v4710 = vsel %vm549, %v4258, 0
      %v4713 = vsel %vm549, %v4259, 0
      %v4716 = vsel %vm549, %v4260, 0
      %v4719 = vsel %vm835, %v4262, 0
      %4721 = vmatprep.subr.mxu0 0.0
      %4722 = vmatpush1.msra.mxu0 0.0
      %4723 = vmatprep.subr.mxu0 0.0
      %4724 = vmatpush1.msra.mxu0 0.0
      %4725 = vmatprep.subr.mxu0 0.0
      %4726 = vmatpush1.msra.mxu0 0.0
      %4727 = vmatprep.subr.mxu0 0.0
      %4728 = vmatpush1.msra.mxu0 0.0
      %4729 = vmatprep.subr.mxu0 0.0
      %4730 = vmatpush1.msra.mxu0 0.0
      %4731 = vmatprep.subr.mxu0 0.0
      %4732 = vmatpush1.msra.mxu0 0.0
      %4733 = vmatprep.subr.mxu0 0.0
      %4734 = vmatpush1.msra.mxu0 0.0
      %4735 = vmatprep.subr.mxu0 0.0
      %4736 = vmatpush1.msra.mxu0 0.0
      %4737 = vmatprep.subr.mxu0 0.0
      %4738 = vmatpush1.msra.mxu0 0.0
      %4739 = vmatprep.subr.mxu0 0.0
      %4740 = vmatpush1.msra.mxu0 0.0
      %4741 = vmatprep.subr.mxu0 0.0
      %4742 = vmatpush1.msra.mxu0 0.0
      %4743 = vmatprep.subr.mxu0 0.0
      %4744 = vmatpush1.msra.mxu0 0.0
      %4745 = vmatprep.subr.mxu0 0.0
      %4746 = vmatpush1.msra.mxu0 0.0
      %4747 = vmatprep.subr.mxu0 0.0
      %4748 = vmatpush1.msra.mxu0 0.0
      %4749 = vmatprep.subr.mxu0 0.0
      %4750 = vmatpush1.msra.mxu0 %v4719
      %4751 = vmatprep.subr.mxu0 0.0
      %4752 = vmatpush1.msra.mxu0 %v4261
      %4753 = vmatprep.subr.mxu0 0.0
      %4754 = vmatpush2.msra.mxu0 0.0
      %4755 = vmatprep.subr.mxu0 0.0
      %4756 = vmatpush2.msra.mxu0 0.0
      %4757 = vmatprep.subr.mxu0 0.0
      %4758 = vmatpush2.msra.mxu0 0.0
      %4759 = vmatprep.subr.mxu0 0.0
      %4760 = vmatpush2.msra.mxu0 0.0
      %4761 = vmatprep.subr.mxu0 0.0
      %4762 = vmatpush2.msra.mxu0 0.0
      %4763 = vmatprep.subr.mxu0 0.0
      %4764 = vmatpush2.msra.mxu0 0.0
      %4765 = vmatprep.subr.mxu0 0.0
      %4766 = vmatpush2.msra.mxu0 0.0
      %4767 = vmatprep.subr.mxu0 0.0
      %4768 = vmatpush2.msra.mxu0 0.0
      %4769 = vmatprep.subr.mxu0 0.0
      %4770 = vmatpush2.msra.mxu0 0.0
      %4771 = vmatprep.subr.mxu0 0.0
      %4772 = vmatpush2.msra.mxu0 0.0
      %4773 = vmatprep.subr.mxu0 0.0
      %4774 = vmatpush2.msra.mxu0 0.0
      %4775 = vmatprep.subr.mxu0 0.0
      %4776 = vmatpush2.msra.mxu0 0.0
      %4777 = vmatprep.subr.mxu0 0.0
      %4778 = vmatpush2.msra.mxu0 0.0
      %4779 = vmatprep.subr.mxu0 0.0
      %4780 = vmatpush2.msra.mxu0 0.0
      %4781 = vmatprep.subr.mxu0 0.0
      %4782 = vmatpush2.msra.mxu0 0.0
      %4783 = vmatprep.subr.mxu0 0.0
      %4784 = vmatpush2.msra.mxu0 0.0
      %4785 = vmatprep.mubr.f32.mxu0 0.0
      %4786 = vmatmul.mubr.f32.gmra.mxu0 %v4623
      %v4787 = vpop.f32.mrf.mxu0
      %v4788 = vadd.f32 %v4464, %v4787
      %v4789 = vpop.f32.mrf.mxu0
      %4790 = vmatprep.mubr.f32.mxu0 0.0
      %4791 = vmatmul.mubr.f32.gmra.mxu0 %v4626
      %v4792 = vpop.f32.mrf.mxu0
      %v4793 = vadd.f32 %v4469, %v4792
      %v4794 = vpop.f32.mrf.mxu0
      %4795 = vmatprep.mubr.f32.mxu0 0.0
      %4796 = vmatmul.mubr.f32.gmra.mxu0 %v4629
      %v4797 = vpop.f32.mrf.mxu0
      %v4798 = vadd.f32 %v4474, %v4797
      %v4799 = vpop.f32.mrf.mxu0
      %4800 = vmatprep.mubr.f32.mxu0 0.0
      %4801 = vmatmul.mubr.f32.gmra.mxu0 %v4632
      %v4802 = vpop.f32.mrf.mxu0
      %v4803 = vadd.f32 %v4479, %v4802
      %v4804 = vpop.f32.mrf.mxu0
      %4805 = vmatprep.mubr.f32.mxu0 0.0
      %4806 = vmatmul.mubr.f32.gmra.mxu0 %v4635
      %v4807 = vpop.f32.mrf.mxu0
      %v4808 = vadd.f32 %v4484, %v4807
      %v4809 = vpop.f32.mrf.mxu0
      %4810 = vmatprep.mubr.f32.mxu0 0.0
      %4811 = vmatmul.mubr.f32.gmra.mxu0 %v4638
      %v4812 = vpop.f32.mrf.mxu0
      %v4813 = vadd.f32 %v4489, %v4812
      %v4814 = vpop.f32.mrf.mxu0
      %4815 = vmatprep.mubr.f32.mxu0 0.0
      %4816 = vmatmul.mubr.f32.gmra.mxu0 %v4641
      %v4817 = vpop.f32.mrf.mxu0
      %v4818 = vadd.f32 %v4494, %v4817
      %v4819 = vpop.f32.mrf.mxu0
      %4820 = vmatprep.mubr.f32.mxu0 0.0
      %4821 = vmatmul.mubr.f32.gmra.mxu0 %v4644
      %v4822 = vpop.f32.mrf.mxu0
      %v4823 = vadd.f32 %v4499, %v4822
      %v4824 = vpop.f32.mrf.mxu0
      %4825 = vmatprep.mubr.f32.mxu0 0.0
      %4826 = vmatmul.mubr.f32.gmra.mxu0 %v4647
      %v4827 = vpop.f32.mrf.mxu0
      %v4828 = vadd.f32 %v4504, %v4827
      %v4829 = vpop.f32.mrf.mxu0
      %4830 = vmatprep.mubr.f32.mxu0 0.0
      %4831 = vmatmul.mubr.f32.gmra.mxu0 %v4650
      %v4832 = vpop.f32.mrf.mxu0
      %v4833 = vadd.f32 %v4509, %v4832
      %v4834 = vpop.f32.mrf.mxu0
      %4835 = vmatprep.mubr.f32.mxu0 0.0
      %4836 = vmatmul.mubr.f32.gmra.mxu0 %v4653
      %v4837 = vpop.f32.mrf.mxu0
      %v4838 = vadd.f32 %v4514, %v4837
      %v4839 = vpop.f32.mrf.mxu0
      %4840 = vmatprep.mubr.f32.mxu0 0.0
      %4841 = vmatmul.mubr.f32.gmra.mxu0 %v4656
      %v4842 = vpop.f32.mrf.mxu0
      %v4843 = vadd.f32 %v4519, %v4842
      %v4844 = vpop.f32.mrf.mxu0
      %4845 = vmatprep.mubr.f32.mxu0 0.0
      %4846 = vmatmul.mubr.f32.gmra.mxu0 %v4659
      %v4847 = vpop.f32.mrf.mxu0
      %v4848 = vadd.f32 %v4524, %v4847
      %v4849 = vpop.f32.mrf.mxu0
      %4850 = vmatprep.mubr.f32.mxu0 0.0
      %4851 = vmatmul.mubr.f32.gmra.mxu0 %v4662
      %v4852 = vpop.f32.mrf.mxu0
      %v4853 = vadd.f32 %v4529, %v4852
      %v4854 = vpop.f32.mrf.mxu0
      %4855 = vmatprep.mubr.f32.mxu0 0.0
      %4856 = vmatmul.mubr.f32.gmra.mxu0 %v4665
      %v4857 = vpop.f32.mrf.mxu0
      %v4858 = vadd.f32 %v4534, %v4857
      %v4859 = vpop.f32.mrf.mxu0
      %4860 = vmatprep.mubr.f32.mxu0 0.0
      %4861 = vmatmul.mubr.f32.gmra.mxu0 %v4668
      %v4862 = vpop.f32.mrf.mxu0
      %v4863 = vadd.f32 %v4539, %v4862
      %v4864 = vpop.f32.mrf.mxu0
      %4865 = vmatprep.mubr.f32.mxu0 0.0
      %4866 = vmatmul.mubr.f32.gmra.mxu0 %v4671
      %v4867 = vpop.f32.mrf.mxu0
      %v4868 = vadd.f32 %v4544, %v4867
      %v4869 = vpop.f32.mrf.mxu0
      %4870 = vmatprep.mubr.f32.mxu0 0.0
      %4871 = vmatmul.mubr.f32.gmra.mxu0 %v4674
      %v4872 = vpop.f32.mrf.mxu0
      %v4873 = vadd.f32 %v4549, %v4872
      %v4874 = vpop.f32.mrf.mxu0
      %4875 = vmatprep.mubr.f32.mxu0 0.0
      %4876 = vmatmul.mubr.f32.gmra.mxu0 %v4677
      %v4877 = vpop.f32.mrf.mxu0
      %v4878 = vadd.f32 %v4554, %v4877
      %v4879 = vpop.f32.mrf.mxu0
      %4880 = vmatprep.mubr.f32.mxu0 0.0
      %4881 = vmatmul.mubr.f32.gmra.mxu0 %v4680
      %v4882 = vpop.f32.mrf.mxu0
      %v4883 = vadd.f32 %v4559, %v4882
      %v4884 = vpop.f32.mrf.mxu0
      %4885 = vmatprep.mubr.f32.mxu0 0.0
      %4886 = vmatmul.mubr.f32.gmra.mxu0 %v4683
      %v4887 = vpop.f32.mrf.mxu0
      %v4888 = vadd.f32 %v4564, %v4887
      %v4889 = vpop.f32.mrf.mxu0
      %4890 = vmatprep.mubr.f32.mxu0 0.0
      %4891 = vmatmul.mubr.f32.gmra.mxu0 %v4686
      %v4892 = vpop.f32.mrf.mxu0
      %v4893 = vadd.f32 %v4569, %v4892
      %v4894 = vpop.f32.mrf.mxu0
      %4895 = vmatprep.mubr.f32.mxu0 0.0
      %4896 = vmatmul.mubr.f32.gmra.mxu0 %v4689
      %v4897 = vpop.f32.mrf.mxu0
      %v4898 = vadd.f32 %v4574, %v4897
      %v4899 = vpop.f32.mrf.mxu0
      %4900 = vmatprep.mubr.f32.mxu0 0.0
      %4901 = vmatmul.mubr.f32.gmra.mxu0 %v4692
      %v4902 = vpop.f32.mrf.mxu0
      %v4903 = vadd.f32 %v4579, %v4902
      %v4904 = vpop.f32.mrf.mxu0
      %4905 = vmatprep.mubr.f32.mxu0 0.0
      %4906 = vmatmul.mubr.f32.gmra.mxu0 %v4695
      %v4907 = vpop.f32.mrf.mxu0
      %v4908 = vadd.f32 %v4584, %v4907
      %v4909 = vpop.f32.mrf.mxu0
      %4910 = vmatprep.mubr.f32.mxu0 0.0
      %4911 = vmatmul.mubr.f32.gmra.mxu0 %v4698
      %v4912 = vpop.f32.mrf.mxu0
      %v4913 = vadd.f32 %v4589, %v4912
      %v4914 = vpop.f32.mrf.mxu0
      %4915 = vmatprep.mubr.f32.mxu0 0.0
      %4916 = vmatmul.mubr.f32.gmra.mxu0 %v4701
      %v4917 = vpop.f32.mrf.mxu0
      %v4918 = vadd.f32 %v4594, %v4917
      %v4919 = vpop.f32.mrf.mxu0
      %4920 = vmatprep.mubr.f32.mxu0 0.0
      %4921 = vmatmul.mubr.f32.gmra.mxu0 %v4704
      %v4922 = vpop.f32.mrf.mxu0
      %v4923 = vadd.f32 %v4599, %v4922
      %v4924 = vpop.f32.mrf.mxu0
      %4925 = vmatprep.mubr.f32.mxu0 0.0
      %4926 = vmatmul.mubr.f32.gmra.mxu0 %v4707
      %v4927 = vpop.f32.mrf.mxu0
      %v4928 = vadd.f32 %v4604, %v4927
      %v4929 = vpop.f32.mrf.mxu0
      %4930 = vmatprep.mubr.f32.mxu0 0.0
      %4931 = vmatmul.mubr.f32.gmra.mxu0 %v4710
      %v4932 = vpop.f32.mrf.mxu0
      %v4933 = vadd.f32 %v4609, %v4932
      %v4934 = vpop.f32.mrf.mxu0
      %4935 = vmatprep.mubr.f32.mxu0 0.0
      %4936 = vmatmul.mubr.f32.gmra.mxu0 %v4713
      %v4937 = vpop.f32.mrf.mxu0
      %v4938 = vadd.f32 %v4614, %v4937
      %v4939 = vpop.f32.mrf.mxu0
      %4940 = vmatprep.mubr.f32.mxu0 0.0
      %4941 = vmatmul.mubr.f32.gmra.mxu0 %v4716
      %v4942 = vpop.f32.mrf.mxu0
      %v4943 = vadd.f32 %v4619, %v4942
      %v4944 = vpop.f32.mrf.mxu0
      %4945 = vdwg.mxu0
      %v4946 = vld [vmem:[#allocation2 + $0x2] sm:$0xff]
      %v4947 = vld [vmem:[#allocation2 + $0xa] sm:$0xff]
      %v4948 = vld [vmem:[#allocation2 + $0x1a] sm:$0xff]
      %v4949 = vld [vmem:[#allocation2 + $0x22] sm:$0xff]
      %v4950 = vld [vmem:[#allocation2 + $0x32] sm:$0xff]
      %v4951 = vld [vmem:[#allocation2 + $0x3a] sm:$0xff]
      %v4952 = vld [vmem:[#allocation2 + $0x4a] sm:$0xff]
      %v4953 = vld [vmem:[#allocation2 + $0x52] sm:$0xff]
      %v4954 = vld [vmem:[#allocation2 + $0x62] sm:$0xff]
      %v4955 = vld [vmem:[#allocation2 + $0x6a] sm:$0xff]
      %v4956 = vld [vmem:[#allocation2 + $0x7a] sm:$0xff]
      %v4957 = vld [vmem:[#allocation2 + $0x82] sm:$0xff]
      %v4958 = vld [vmem:[#allocation2 + $0x92] sm:$0xff]
      %v4959 = vld [vmem:[#allocation2 + $0x9a] sm:$0xff]
      %v4960 = vld [vmem:[#allocation2 + $0xaa] sm:$0xff]
      %v4961 = vld [vmem:[#allocation2 + $0xb2] sm:$0xff]
      %v4962 = vld [vmem:[#allocation2 + $0xc2] sm:$0xff]
      %v4963 = vld [vmem:[#allocation2 + $0xca] sm:$0xff]
      %v4964 = vld [vmem:[#allocation2 + $0xda] sm:$0xff]
      %v4965 = vld [vmem:[#allocation2 + $0xe2] sm:$0xff]
      %v4966 = vld [vmem:[#allocation2 + $0xf2] sm:$0xff]
      %v4967 = vld [vmem:[#allocation2 + $0xfa] sm:$0xff]
      %v4968 = vld [vmem:[#allocation2 + $0x10a] sm:$0xff]
      %v4969 = vld [vmem:[#allocation2 + $0x112] sm:$0xff]
      %v4970 = vld [vmem:[#allocation2 + $0x122] sm:$0xff]
      %v4971 = vld [vmem:[#allocation2 + $0x12a] sm:$0xff]
      %v4972 = vld [vmem:[#allocation2 + $0x13a] sm:$0xff]
      %v4973 = vld [vmem:[#allocation2 + $0x142] sm:$0xff]
      %v4974 = vld [vmem:[#allocation2 + $0x152] sm:$0xff]
      %v4975 = vld [vmem:[#allocation2 + $0x15a] sm:$0xff]
      %v4976 = vld [vmem:[#allocation2 + $0x16a] sm:$0xff]
      %v4977 = vld [vmem:[#allocation2 + $0x172] sm:$0xff]
      %s4978 = scalar_lea.vmem %s3, 32
      %v4979 = vld [vmem:[%s4978] sm:$0xff]
      %v4980 = vld [vmem:[%s4978 + $0x8] sm:$0x3]
      %v4982 = vsel %vm549, %v4946, 0
      %v4985 = vsel %vm549, %v4947, 0
      %v4988 = vsel %vm549, %v4948, 0
      %v4991 = vsel %vm549, %v4949, 0
      %v4994 = vsel %vm549, %v4950, 0
      %v4997 = vsel %vm549, %v4951, 0
      %v5000 = vsel %vm549, %v4952, 0
      %v5003 = vsel %vm549, %v4953, 0
      %v5006 = vsel %vm549, %v4954, 0
      %v5009 = vsel %vm549, %v4955, 0
      %v5012 = vsel %vm549, %v4956, 0
      %v5015 = vsel %vm549, %v4957, 0
      %v5018 = vsel %vm549, %v4958, 0
      %v5021 = vsel %vm549, %v4959, 0
      %v5024 = vsel %vm549, %v4960, 0
      %v5027 = vsel %vm549, %v4961, 0
      %v5030 = vsel %vm549, %v4962, 0
      %v5033 = vsel %vm549, %v4963, 0
      %v5036 = vsel %vm549, %v4964, 0
      %v5039 = vsel %vm549, %v4965, 0
      %v5042 = vsel %vm549, %v4966, 0
      %v5045 = vsel %vm549, %v4967, 0
      %v5048 = vsel %vm549, %v4968, 0
      %v5051 = vsel %vm549, %v4969, 0
      %v5054 = vsel %vm549, %v4970, 0
      %v5057 = vsel %vm549, %v4971, 0
      %v5060 = vsel %vm549, %v4972, 0
      %v5063 = vsel %vm549, %v4973, 0
      %v5066 = vsel %vm549, %v4974, 0
      %v5069 = vsel %vm549, %v4975, 0
      %v5072 = vsel %vm549, %v4976, 0
      %v5075 = vsel %vm549, %v4977, 0
      %v5078 = vsel %vm835, %v4980, 0
      %5080 = vmatprep.subr.mxu0 0.0
      %5081 = vmatpush1.msra.mxu0 0.0
      %5082 = vmatprep.subr.mxu0 0.0
      %5083 = vmatpush1.msra.mxu0 0.0
      %5084 = vmatprep.subr.mxu0 0.0
      %5085 = vmatpush1.msra.mxu0 0.0
      %5086 = vmatprep.subr.mxu0 0.0
      %5087 = vmatpush1.msra.mxu0 0.0
      %5088 = vmatprep.subr.mxu0 0.0
      %5089 = vmatpush1.msra.mxu0 0.0
      %5090 = vmatprep.subr.mxu0 0.0
      %5091 = vmatpush1.msra.mxu0 0.0
      %5092 = vmatprep.subr.mxu0 0.0
      %5093 = vmatpush1.msra.mxu0 0.0
      %5094 = vmatprep.subr.mxu0 0.0
      %5095 = vmatpush1.msra.mxu0 0.0
      %5096 = vmatprep.subr.mxu0 0.0
      %5097 = vmatpush1.msra.mxu0 0.0
      %5098 = vmatprep.subr.mxu0 0.0
      %5099 = vmatpush1.msra.mxu0 0.0
      %5100 = vmatprep.subr.mxu0 0.0
      %5101 = vmatpush1.msra.mxu0 0.0
      %5102 = vmatprep.subr.mxu0 0.0
      %5103 = vmatpush1.msra.mxu0 0.0
      %5104 = vmatprep.subr.mxu0 0.0
      %5105 = vmatpush1.msra.mxu0 0.0
      %5106 = vmatprep.subr.mxu0 0.0
      %5107 = vmatpush1.msra.mxu0 0.0
      %5108 = vmatprep.subr.mxu0 0.0
      %5109 = vmatpush1.msra.mxu0 %v5078
      %5110 = vmatprep.subr.mxu0 0.0
      %5111 = vmatpush1.msra.mxu0 %v4979
      %5112 = vmatprep.subr.mxu0 0.0
      %5113 = vmatpush2.msra.mxu0 0.0
      %5114 = vmatprep.subr.mxu0 0.0
      %5115 = vmatpush2.msra.mxu0 0.0
      %5116 = vmatprep.subr.mxu0 0.0
      %5117 = vmatpush2.msra.mxu0 0.0
      %5118 = vmatprep.subr.mxu0 0.0
      %5119 = vmatpush2.msra.mxu0 0.0
      %5120 = vmatprep.subr.mxu0 0.0
      %5121 = vmatpush2.msra.mxu0 0.0
      %5122 = vmatprep.subr.mxu0 0.0
      %5123 = vmatpush2.msra.mxu0 0.0
      %5124 = vmatprep.subr.mxu0 0.0
      %5125 = vmatpush2.msra.mxu0 0.0
      %5126 = vmatprep.subr.mxu0 0.0
      %5127 = vmatpush2.msra.mxu0 0.0
      %5128 = vmatprep.subr.mxu0 0.0
      %5129 = vmatpush2.msra.mxu0 0.0
      %5130 = vmatprep.subr.mxu0 0.0
      %5131 = vmatpush2.msra.mxu0 0.0
      %5132 = vmatprep.subr.mxu0 0.0
      %5133 = vmatpush2.msra.mxu0 0.0
      %5134 = vmatprep.subr.mxu0 0.0
      %5135 = vmatpush2.msra.mxu0 0.0
      %5136 = vmatprep.subr.mxu0 0.0
      %5137 = vmatpush2.msra.mxu0 0.0
      %5138 = vmatprep.subr.mxu0 0.0
      %5139 = vmatpush2.msra.mxu0 0.0
      %5140 = vmatprep.subr.mxu0 0.0
      %5141 = vmatpush2.msra.mxu0 0.0
      %5142 = vmatprep.subr.mxu0 0.0
      %5143 = vmatpush2.msra.mxu0 0.0
      %5144 = vmatprep.mubr.f32.mxu0 0.0
      %5145 = vmatmul.mubr.f32.gmra.mxu0 %v4982
      %v5146 = vpop.f32.mrf.mxu0
      %v5147 = vadd.f32 0.0, %v5146
      %v5148 = vpop.f32.mrf.mxu0
      %5149 = vmatprep.mubr.f32.mxu0 0.0
      %5150 = vmatmul.mubr.f32.gmra.mxu0 %v4985
      %v5151 = vpop.f32.mrf.mxu0
      %v5152 = vadd.f32 0.0, %v5151
      %v5153 = vpop.f32.mrf.mxu0
      %5154 = vmatprep.mubr.f32.mxu0 0.0
      %5155 = vmatmul.mubr.f32.gmra.mxu0 %v4988
      %v5156 = vpop.f32.mrf.mxu0
      %v5157 = vadd.f32 0.0, %v5156
      %v5158 = vpop.f32.mrf.mxu0
      %5159 = vmatprep.mubr.f32.mxu0 0.0
      %5160 = vmatmul.mubr.f32.gmra.mxu0 %v4991
      %v5161 = vpop.f32.mrf.mxu0
      %v5162 = vadd.f32 0.0, %v5161
      %v5163 = vpop.f32.mrf.mxu0
      %5164 = vmatprep.mubr.f32.mxu0 0.0
      %5165 = vmatmul.mubr.f32.gmra.mxu0 %v4994
      %v5166 = vpop.f32.mrf.mxu0
      %v5167 = vadd.f32 0.0, %v5166
      %v5168 = vpop.f32.mrf.mxu0
      %5169 = vmatprep.mubr.f32.mxu0 0.0
      %5170 = vmatmul.mubr.f32.gmra.mxu0 %v4997
      %v5171 = vpop.f32.mrf.mxu0
      %v5172 = vadd.f32 0.0, %v5171
      %v5173 = vpop.f32.mrf.mxu0
      %5174 = vmatprep.mubr.f32.mxu0 0.0
      %5175 = vmatmul.mubr.f32.gmra.mxu0 %v5000
      %v5176 = vpop.f32.mrf.mxu0
      %v5177 = vadd.f32 0.0, %v5176
      %v5178 = vpop.f32.mrf.mxu0
      %5179 = vmatprep.mubr.f32.mxu0 0.0
      %5180 = vmatmul.mubr.f32.gmra.mxu0 %v5003
      %v5181 = vpop.f32.mrf.mxu0
      %v5182 = vadd.f32 0.0, %v5181
      %v5183 = vpop.f32.mrf.mxu0
      %5184 = vmatprep.mubr.f32.mxu0 0.0
      %5185 = vmatmul.mubr.f32.gmra.mxu0 %v5006
      %v5186 = vpop.f32.mrf.mxu0
      %v5187 = vadd.f32 0.0, %v5186
      %v5188 = vpop.f32.mrf.mxu0
      %5189 = vmatprep.mubr.f32.mxu0 0.0
      %5190 = vmatmul.mubr.f32.gmra.mxu0 %v5009
      %v5191 = vpop.f32.mrf.mxu0
      %v5192 = vadd.f32 0.0, %v5191
      %v5193 = vpop.f32.mrf.mxu0
      %5194 = vmatprep.mubr.f32.mxu0 0.0
      %5195 = vmatmul.mubr.f32.gmra.mxu0 %v5012
      %v5196 = vpop.f32.mrf.mxu0
      %v5197 = vadd.f32 0.0, %v5196
      %v5198 = vpop.f32.mrf.mxu0
      %5199 = vmatprep.mubr.f32.mxu0 0.0
      %5200 = vmatmul.mubr.f32.gmra.mxu0 %v5015
      %v5201 = vpop.f32.mrf.mxu0
      %v5202 = vadd.f32 0.0, %v5201
      %v5203 = vpop.f32.mrf.mxu0
      %5204 = vmatprep.mubr.f32.mxu0 0.0
      %5205 = vmatmul.mubr.f32.gmra.mxu0 %v5018
      %v5206 = vpop.f32.mrf.mxu0
      %v5207 = vadd.f32 0.0, %v5206
      %v5208 = vpop.f32.mrf.mxu0
      %5209 = vmatprep.mubr.f32.mxu0 0.0
      %5210 = vmatmul.mubr.f32.gmra.mxu0 %v5021
      %v5211 = vpop.f32.mrf.mxu0
      %v5212 = vadd.f32 0.0, %v5211
      %v5213 = vpop.f32.mrf.mxu0
      %5214 = vmatprep.mubr.f32.mxu0 0.0
      %5215 = vmatmul.mubr.f32.gmra.mxu0 %v5024
      %v5216 = vpop.f32.mrf.mxu0
      %v5217 = vadd.f32 0.0, %v5216
      %v5218 = vpop.f32.mrf.mxu0
      %5219 = vmatprep.mubr.f32.mxu0 0.0
      %5220 = vmatmul.mubr.f32.gmra.mxu0 %v5027
      %v5221 = vpop.f32.mrf.mxu0
      %v5222 = vadd.f32 0.0, %v5221
      %v5223 = vpop.f32.mrf.mxu0
      %5224 = vmatprep.mubr.f32.mxu0 0.0
      %5225 = vmatmul.mubr.f32.gmra.mxu0 %v5030
      %v5226 = vpop.f32.mrf.mxu0
      %v5227 = vadd.f32 0.0, %v5226
      %v5228 = vpop.f32.mrf.mxu0
      %5229 = vmatprep.mubr.f32.mxu0 0.0
      %5230 = vmatmul.mubr.f32.gmra.mxu0 %v5033
      %v5231 = vpop.f32.mrf.mxu0
      %v5232 = vadd.f32 0.0, %v5231
      %v5233 = vpop.f32.mrf.mxu0
      %5234 = vmatprep.mubr.f32.mxu0 0.0
      %5235 = vmatmul.mubr.f32.gmra.mxu0 %v5036
      %v5236 = vpop.f32.mrf.mxu0
      %v5237 = vadd.f32 0.0, %v5236
      %v5238 = vpop.f32.mrf.mxu0
      %5239 = vmatprep.mubr.f32.mxu0 0.0
      %5240 = vmatmul.mubr.f32.gmra.mxu0 %v5039
      %v5241 = vpop.f32.mrf.mxu0
      %v5242 = vadd.f32 0.0, %v5241
      %v5243 = vpop.f32.mrf.mxu0
      %5244 = vmatprep.mubr.f32.mxu0 0.0
      %5245 = vmatmul.mubr.f32.gmra.mxu0 %v5042
      %v5246 = vpop.f32.mrf.mxu0
      %v5247 = vadd.f32 0.0, %v5246
      %v5248 = vpop.f32.mrf.mxu0
      %5249 = vmatprep.mubr.f32.mxu0 0.0
      %5250 = vmatmul.mubr.f32.gmra.mxu0 %v5045
      %v5251 = vpop.f32.mrf.mxu0
      %v5252 = vadd.f32 0.0, %v5251
      %v5253 = vpop.f32.mrf.mxu0
      %5254 = vmatprep.mubr.f32.mxu0 0.0
      %5255 = vmatmul.mubr.f32.gmra.mxu0 %v5048
      %v5256 = vpop.f32.mrf.mxu0
      %v5257 = vadd.f32 0.0, %v5256
      %v5258 = vpop.f32.mrf.mxu0
      %5259 = vmatprep.mubr.f32.mxu0 0.0
      %5260 = vmatmul.mubr.f32.gmra.mxu0 %v5051
      %v5261 = vpop.f32.mrf.mxu0
      %v5262 = vadd.f32 0.0, %v5261
      %v5263 = vpop.f32.mrf.mxu0
      %5264 = vmatprep.mubr.f32.mxu0 0.0
      %5265 = vmatmul.mubr.f32.gmra.mxu0 %v5054
      %v5266 = vpop.f32.mrf.mxu0
      %v5267 = vadd.f32 0.0, %v5266
      %v5268 = vpop.f32.mrf.mxu0
      %5269 = vmatprep.mubr.f32.mxu0 0.0
      %5270 = vmatmul.mubr.f32.gmra.mxu0 %v5057
      %v5271 = vpop.f32.mrf.mxu0
      %v5272 = vadd.f32 0.0, %v5271
      %v5273 = vpop.f32.mrf.mxu0
      %5274 = vmatprep.mubr.f32.mxu0 0.0
      %5275 = vmatmul.mubr.f32.gmra.mxu0 %v5060
      %v5276 = vpop.f32.mrf.mxu0
      %v5277 = vadd.f32 0.0, %v5276
      %v5278 = vpop.f32.mrf.mxu0
      %5279 = vmatprep.mubr.f32.mxu0 0.0
      %5280 = vmatmul.mubr.f32.gmra.mxu0 %v5063
      %v5281 = vpop.f32.mrf.mxu0
      %v5282 = vadd.f32 0.0, %v5281
      %v5283 = vpop.f32.mrf.mxu0
      %5284 = vmatprep.mubr.f32.mxu0 0.0
      %5285 = vmatmul.mubr.f32.gmra.mxu0 %v5066
      %v5286 = vpop.f32.mrf.mxu0
      %v5287 = vadd.f32 0.0, %v5286
      %v5288 = vpop.f32.mrf.mxu0
      %5289 = vmatprep.mubr.f32.mxu0 0.0
      %5290 = vmatmul.mubr.f32.gmra.mxu0 %v5069
      %v5291 = vpop.f32.mrf.mxu0
      %v5292 = vadd.f32 0.0, %v5291
      %v5293 = vpop.f32.mrf.mxu0
      %5294 = vmatprep.mubr.f32.mxu0 0.0
      %5295 = vmatmul.mubr.f32.gmra.mxu0 %v5072
      %v5296 = vpop.f32.mrf.mxu0
      %v5297 = vadd.f32 0.0, %v5296
      %v5298 = vpop.f32.mrf.mxu0
      %5299 = vmatprep.mubr.f32.mxu0 0.0
      %5300 = vmatmul.mubr.f32.gmra.mxu0 %v5075
      %v5301 = vpop.f32.mrf.mxu0
      %v5302 = vadd.f32 0.0, %v5301
      %v5303 = vpop.f32.mrf.mxu0
      %5304 = vdwg.mxu0
      %v5305 = vadd.f32 %v4788, %v5147
      %v5306 = vadd.f32 %v4793, %v5152
      %v5307 = vadd.f32 %v4798, %v5157
      %v5308 = vadd.f32 %v4803, %v5162
      %v5309 = vadd.f32 %v4808, %v5167
      %v5310 = vadd.f32 %v4813, %v5172
      %v5311 = vadd.f32 %v4818, %v5177
      %v5312 = vadd.f32 %v4823, %v5182
      %v5313 = vadd.f32 %v4828, %v5187
      %v5314 = vadd.f32 %v4833, %v5192
      %v5315 = vadd.f32 %v4838, %v5197
      %v5316 = vadd.f32 %v4843, %v5202
      %v5317 = vadd.f32 %v4848, %v5207
      %v5318 = vadd.f32 %v4853, %v5212
      %v5319 = vadd.f32 %v4858, %v5217
      %v5320 = vadd.f32 %v4863, %v5222
      %v5321 = vadd.f32 %v4868, %v5227
      %v5322 = vadd.f32 %v4873, %v5232
      %v5323 = vadd.f32 %v4878, %v5237
      %v5324 = vadd.f32 %v4883, %v5242
      %v5325 = vadd.f32 %v4888, %v5247
      %v5326 = vadd.f32 %v4893, %v5252
      %v5327 = vadd.f32 %v4898, %v5257
      %v5328 = vadd.f32 %v4903, %v5262
      %v5329 = vadd.f32 %v4908, %v5267
      %v5330 = vadd.f32 %v4913, %v5272
      %v5331 = vadd.f32 %v4918, %v5277
      %v5332 = vadd.f32 %v4923, %v5282
      %v5333 = vadd.f32 %v4928, %v5287
      %v5334 = vadd.f32 %v4933, %v5292
      %v5335 = vadd.f32 %v4938, %v5297
      %v5336 = vadd.f32 %v4943, %v5302
      %v5337 = vld [vmem:[%s637] sm:$0xff]
      %v5338 = vld [vmem:[%s637 + $0x8] sm:$0xff]
      %v5339 = vld [vmem:[%s637 + $0x18] sm:$0xff]
      %v5340 = vld [vmem:[%s637 + $0x20] sm:$0xff]
      %v5341 = vld [vmem:[%s637 + $0x30] sm:$0xff]
      %v5342 = vld [vmem:[%s637 + $0x38] sm:$0xff]
      %v5343 = vld [vmem:[%s637 + $0x48] sm:$0xff]
      %v5344 = vld [vmem:[%s637 + $0x50] sm:$0xff]
      %v5345 = vld [vmem:[%s637 + $0x60] sm:$0xff]
      %v5346 = vld [vmem:[%s637 + $0x68] sm:$0xff]
      %v5347 = vld [vmem:[%s637 + $0x78] sm:$0xff]
      %v5348 = vld [vmem:[%s637 + $0x80] sm:$0xff]
      %v5349 = vld [vmem:[%s637 + $0x90] sm:$0xff]
      %v5350 = vld [vmem:[%s637 + $0x98] sm:$0xff]
      %v5351 = vld [vmem:[%s637 + $0xa8] sm:$0xff]
      %v5352 = vld [vmem:[%s637 + $0xb0] sm:$0xff]
      %v5353 = vld [vmem:[%s637 + $0xc0] sm:$0xff]
      %v5354 = vld [vmem:[%s637 + $0xc8] sm:$0xff]
      %v5355 = vld [vmem:[%s637 + $0xd8] sm:$0xff]
      %v5356 = vld [vmem:[%s637 + $0xe0] sm:$0xff]
      %v5357 = vld [vmem:[%s637 + $0xf0] sm:$0xff]
      %v5358 = vld [vmem:[%s637 + $0xf8] sm:$0xff]
      %v5359 = vld [vmem:[%s637 + $0x108] sm:$0xff]
      %v5360 = vld [vmem:[%s637 + $0x110] sm:$0xff]
      %v5361 = vld [vmem:[%s637 + $0x120] sm:$0xff]
      %v5362 = vld [vmem:[%s637 + $0x128] sm:$0xff]
      %v5363 = vld [vmem:[%s637 + $0x138] sm:$0xff]
      %v5364 = vld [vmem:[%s637 + $0x140] sm:$0xff]
      %v5365 = vld [vmem:[%s637 + $0x150] sm:$0xff]
      %v5366 = vld [vmem:[%s637 + $0x158] sm:$0xff]
      %v5367 = vld [vmem:[%s637 + $0x168] sm:$0xff]
      %v5368 = vld [vmem:[%s637 + $0x170] sm:$0xff]
      %s5369 = scalar_lea.vmem %s3, 48
      %v5370 = vld [vmem:[%s5369] sm:$0xff]
      %v5371 = vld [vmem:[%s5369 + $0x8] sm:$0x3]
      %v5373 = vsel %vm549, %v5337, 0
      %v5376 = vsel %vm549, %v5338, 0
      %v5379 = vsel %vm549, %v5339, 0
      %v5382 = vsel %vm549, %v5340, 0
      %v5385 = vsel %vm549, %v5341, 0
      %v5388 = vsel %vm549, %v5342, 0
      %v5391 = vsel %vm549, %v5343, 0
      %v5394 = vsel %vm549, %v5344, 0
      %v5397 = vsel %vm549, %v5345, 0
      %v5400 = vsel %vm549, %v5346, 0
      %v5403 = vsel %vm549, %v5347, 0
      %v5406 = vsel %vm549, %v5348, 0
      %v5409 = vsel %vm549, %v5349, 0
      %v5412 = vsel %vm549, %v5350, 0
      %v5415 = vsel %vm549, %v5351, 0
      %v5418 = vsel %vm549, %v5352, 0
      %v5421 = vsel %vm549, %v5353, 0
      %v5424 = vsel %vm549, %v5354, 0
      %v5427 = vsel %vm549, %v5355, 0
      %v5430 = vsel %vm549, %v5356, 0
      %v5433 = vsel %vm549, %v5357, 0
      %v5436 = vsel %vm549, %v5358, 0
      %v5439 = vsel %vm549, %v5359, 0
      %v5442 = vsel %vm549, %v5360, 0
      %v5445 = vsel %vm549, %v5361, 0
      %v5448 = vsel %vm549, %v5362, 0
      %v5451 = vsel %vm549, %v5363, 0
      %v5454 = vsel %vm549, %v5364, 0
      %v5457 = vsel %vm549, %v5365, 0
      %v5460 = vsel %vm549, %v5366, 0
      %v5463 = vsel %vm549, %v5367, 0
      %v5466 = vsel %vm549, %v5368, 0
      %v5469 = vsel %vm835, %v5371, 0
      %5471 = vmatprep.subr.mxu0 0.0
      %5472 = vmatpush1.msra.mxu0 0.0
      %5473 = vmatprep.subr.mxu0 0.0
      %5474 = vmatpush1.msra.mxu0 0.0
      %5475 = vmatprep.subr.mxu0 0.0
      %5476 = vmatpush1.msra.mxu0 0.0
      %5477 = vmatprep.subr.mxu0 0.0
      %5478 = vmatpush1.msra.mxu0 0.0
      %5479 = vmatprep.subr.mxu0 0.0
      %5480 = vmatpush1.msra.mxu0 0.0
      %5481 = vmatprep.subr.mxu0 0.0
      %5482 = vmatpush1.msra.mxu0 0.0
      %5483 = vmatprep.subr.mxu0 0.0
      %5484 = vmatpush1.msra.mxu0 0.0
      %5485 = vmatprep.subr.mxu0 0.0
      %5486 = vmatpush1.msra.mxu0 0.0
      %5487 = vmatprep.subr.mxu0 0.0
      %5488 = vmatpush1.msra.mxu0 0.0
      %5489 = vmatprep.subr.mxu0 0.0
      %5490 = vmatpush1.msra.mxu0 0.0
      %5491 = vmatprep.subr.mxu0 0.0
      %5492 = vmatpush1.msra.mxu0 0.0
      %5493 = vmatprep.subr.mxu0 0.0
      %5494 = vmatpush1.msra.mxu0 0.0
      %5495 = vmatprep.subr.mxu0 0.0
      %5496 = vmatpush1.msra.mxu0 0.0
      %5497 = vmatprep.subr.mxu0 0.0
      %5498 = vmatpush1.msra.mxu0 0.0
      %5499 = vmatprep.subr.mxu0 0.0
      %5500 = vmatpush1.msra.mxu0 %v5469
      %5501 = vmatprep.subr.mxu0 0.0
      %5502 = vmatpush1.msra.mxu0 %v5370
      %5503 = vmatprep.subr.mxu0 0.0
      %5504 = vmatpush2.msra.mxu0 0.0
      %5505 = vmatprep.subr.mxu0 0.0
      %5506 = vmatpush2.msra.mxu0 0.0
      %5507 = vmatprep.subr.mxu0 0.0
      %5508 = vmatpush2.msra.mxu0 0.0
      %5509 = vmatprep.subr.mxu0 0.0
      %5510 = vmatpush2.msra.mxu0 0.0
      %5511 = vmatprep.subr.mxu0 0.0
      %5512 = vmatpush2.msra.mxu0 0.0
      %5513 = vmatprep.subr.mxu0 0.0
      %5514 = vmatpush2.msra.mxu0 0.0
      %5515 = vmatprep.subr.mxu0 0.0
      %5516 = vmatpush2.msra.mxu0 0.0
      %5517 = vmatprep.subr.mxu0 0.0
      %5518 = vmatpush2.msra.mxu0 0.0
      %5519 = vmatprep.subr.mxu0 0.0
      %5520 = vmatpush2.msra.mxu0 0.0
      %5521 = vmatprep.subr.mxu0 0.0
      %5522 = vmatpush2.msra.mxu0 0.0
      %5523 = vmatprep.subr.mxu0 0.0
      %5524 = vmatpush2.msra.mxu0 0.0
      %5525 = vmatprep.subr.mxu0 0.0
      %5526 = vmatpush2.msra.mxu0 0.0
      %5527 = vmatprep.subr.mxu0 0.0
      %5528 = vmatpush2.msra.mxu0 0.0
      %5529 = vmatprep.subr.mxu0 0.0
      %5530 = vmatpush2.msra.mxu0 0.0
      %5531 = vmatprep.subr.mxu0 0.0
      %5532 = vmatpush2.msra.mxu0 0.0
      %5533 = vmatprep.subr.mxu0 0.0
      %5534 = vmatpush2.msra.mxu0 0.0
      %5535 = vmatprep.mubr.f32.mxu0 0.0
      %5536 = vmatmul.mubr.f32.gmra.mxu0 %v5373
      %v5537 = vpop.f32.mrf.mxu0
      %v5538 = vadd.f32 0.0, %v5537
      %v5539 = vpop.f32.mrf.mxu0
      %5540 = vmatprep.mubr.f32.mxu0 0.0
      %5541 = vmatmul.mubr.f32.gmra.mxu0 %v5376
      %v5542 = vpop.f32.mrf.mxu0
      %v5543 = vadd.f32 0.0, %v5542
      %v5544 = vpop.f32.mrf.mxu0
      %5545 = vmatprep.mubr.f32.mxu0 0.0
      %5546 = vmatmul.mubr.f32.gmra.mxu0 %v5379
      %v5547 = vpop.f32.mrf.mxu0
      %v5548 = vadd.f32 0.0, %v5547
      %v5549 = vpop.f32.mrf.mxu0
      %5550 = vmatprep.mubr.f32.mxu0 0.0
      %5551 = vmatmul.mubr.f32.gmra.mxu0 %v5382
      %v5552 = vpop.f32.mrf.mxu0
      %v5553 = vadd.f32 0.0, %v5552
      %v5554 = vpop.f32.mrf.mxu0
      %5555 = vmatprep.mubr.f32.mxu0 0.0
      %5556 = vmatmul.mubr.f32.gmra.mxu0 %v5385
      %v5557 = vpop.f32.mrf.mxu0
      %v5558 = vadd.f32 0.0, %v5557
      %v5559 = vpop.f32.mrf.mxu0
      %5560 = vmatprep.mubr.f32.mxu0 0.0
      %5561 = vmatmul.mubr.f32.gmra.mxu0 %v5388
      %v5562 = vpop.f32.mrf.mxu0
      %v5563 = vadd.f32 0.0, %v5562
      %v5564 = vpop.f32.mrf.mxu0
      %5565 = vmatprep.mubr.f32.mxu0 0.0
      %5566 = vmatmul.mubr.f32.gmra.mxu0 %v5391
      %v5567 = vpop.f32.mrf.mxu0
      %v5568 = vadd.f32 0.0, %v5567
      %v5569 = vpop.f32.mrf.mxu0
      %5570 = vmatprep.mubr.f32.mxu0 0.0
      %5571 = vmatmul.mubr.f32.gmra.mxu0 %v5394
      %v5572 = vpop.f32.mrf.mxu0
      %v5573 = vadd.f32 0.0, %v5572
      %v5574 = vpop.f32.mrf.mxu0
      %5575 = vmatprep.mubr.f32.mxu0 0.0
      %5576 = vmatmul.mubr.f32.gmra.mxu0 %v5397
      %v5577 = vpop.f32.mrf.mxu0
      %v5578 = vadd.f32 0.0, %v5577
      %v5579 = vpop.f32.mrf.mxu0
      %5580 = vmatprep.mubr.f32.mxu0 0.0
      %5581 = vmatmul.mubr.f32.gmra.mxu0 %v5400
      %v5582 = vpop.f32.mrf.mxu0
      %v5583 = vadd.f32 0.0, %v5582
      %v5584 = vpop.f32.mrf.mxu0
      %5585 = vmatprep.mubr.f32.mxu0 0.0
      %5586 = vmatmul.mubr.f32.gmra.mxu0 %v5403
      %v5587 = vpop.f32.mrf.mxu0
      %v5588 = vadd.f32 0.0, %v5587
      %v5589 = vpop.f32.mrf.mxu0
      %5590 = vmatprep.mubr.f32.mxu0 0.0
      %5591 = vmatmul.mubr.f32.gmra.mxu0 %v5406
      %v5592 = vpop.f32.mrf.mxu0
      %v5593 = vadd.f32 0.0, %v5592
      %v5594 = vpop.f32.mrf.mxu0
      %5595 = vmatprep.mubr.f32.mxu0 0.0
      %5596 = vmatmul.mubr.f32.gmra.mxu0 %v5409
      %v5597 = vpop.f32.mrf.mxu0
      %v5598 = vadd.f32 0.0, %v5597
      %v5599 = vpop.f32.mrf.mxu0
      %5600 = vmatprep.mubr.f32.mxu0 0.0
      %5601 = vmatmul.mubr.f32.gmra.mxu0 %v5412
      %v5602 = vpop.f32.mrf.mxu0
      %v5603 = vadd.f32 0.0, %v5602
      %v5604 = vpop.f32.mrf.mxu0
      %5605 = vmatprep.mubr.f32.mxu0 0.0
      %5606 = vmatmul.mubr.f32.gmra.mxu0 %v5415
      %v5607 = vpop.f32.mrf.mxu0
      %v5608 = vadd.f32 0.0, %v5607
      %v5609 = vpop.f32.mrf.mxu0
      %5610 = vmatprep.mubr.f32.mxu0 0.0
      %5611 = vmatmul.mubr.f32.gmra.mxu0 %v5418
      %v5612 = vpop.f32.mrf.mxu0
      %v5613 = vadd.f32 0.0, %v5612
      %v5614 = vpop.f32.mrf.mxu0
      %5615 = vmatprep.mubr.f32.mxu0 0.0
      %5616 = vmatmul.mubr.f32.gmra.mxu0 %v5421
      %v5617 = vpop.f32.mrf.mxu0
      %v5618 = vadd.f32 0.0, %v5617
      %v5619 = vpop.f32.mrf.mxu0
      %5620 = vmatprep.mubr.f32.mxu0 0.0
      %5621 = vmatmul.mubr.f32.gmra.mxu0 %v5424
      %v5622 = vpop.f32.mrf.mxu0
      %v5623 = vadd.f32 0.0, %v5622
      %v5624 = vpop.f32.mrf.mxu0
      %5625 = vmatprep.mubr.f32.mxu0 0.0
      %5626 = vmatmul.mubr.f32.gmra.mxu0 %v5427
      %v5627 = vpop.f32.mrf.mxu0
      %v5628 = vadd.f32 0.0, %v5627
      %v5629 = vpop.f32.mrf.mxu0
      %5630 = vmatprep.mubr.f32.mxu0 0.0
      %5631 = vmatmul.mubr.f32.gmra.mxu0 %v5430
      %v5632 = vpop.f32.mrf.mxu0
      %v5633 = vadd.f32 0.0, %v5632
      %v5634 = vpop.f32.mrf.mxu0
      %5635 = vmatprep.mubr.f32.mxu0 0.0
      %5636 = vmatmul.mubr.f32.gmra.mxu0 %v5433
      %v5637 = vpop.f32.mrf.mxu0
      %v5638 = vadd.f32 0.0, %v5637
      %v5639 = vpop.f32.mrf.mxu0
      %5640 = vmatprep.mubr.f32.mxu0 0.0
      %5641 = vmatmul.mubr.f32.gmra.mxu0 %v5436
      %v5642 = vpop.f32.mrf.mxu0
      %v5643 = vadd.f32 0.0, %v5642
      %v5644 = vpop.f32.mrf.mxu0
      %5645 = vmatprep.mubr.f32.mxu0 0.0
      %5646 = vmatmul.mubr.f32.gmra.mxu0 %v5439
      %v5647 = vpop.f32.mrf.mxu0
      %v5648 = vadd.f32 0.0, %v5647
      %v5649 = vpop.f32.mrf.mxu0
      %5650 = vmatprep.mubr.f32.mxu0 0.0
      %5651 = vmatmul.mubr.f32.gmra.mxu0 %v5442
      %v5652 = vpop.f32.mrf.mxu0
      %v5653 = vadd.f32 0.0, %v5652
      %v5654 = vpop.f32.mrf.mxu0
      %5655 = vmatprep.mubr.f32.mxu0 0.0
      %5656 = vmatmul.mubr.f32.gmra.mxu0 %v5445
      %v5657 = vpop.f32.mrf.mxu0
      %v5658 = vadd.f32 0.0, %v5657
      %v5659 = vpop.f32.mrf.mxu0
      %5660 = vmatprep.mubr.f32.mxu0 0.0
      %5661 = vmatmul.mubr.f32.gmra.mxu0 %v5448
      %v5662 = vpop.f32.mrf.mxu0
      %v5663 = vadd.f32 0.0, %v5662
      %v5664 = vpop.f32.mrf.mxu0
      %5665 = vmatprep.mubr.f32.mxu0 0.0
      %5666 = vmatmul.mubr.f32.gmra.mxu0 %v5451
      %v5667 = vpop.f32.mrf.mxu0
      %v5668 = vadd.f32 0.0, %v5667
      %v5669 = vpop.f32.mrf.mxu0
      %5670 = vmatprep.mubr.f32.mxu0 0.0
      %5671 = vmatmul.mubr.f32.gmra.mxu0 %v5454
      %v5672 = vpop.f32.mrf.mxu0
      %v5673 = vadd.f32 0.0, %v5672
      %v5674 = vpop.f32.mrf.mxu0
      %5675 = vmatprep.mubr.f32.mxu0 0.0
      %5676 = vmatmul.mubr.f32.gmra.mxu0 %v5457
      %v5677 = vpop.f32.mrf.mxu0
      %v5678 = vadd.f32 0.0, %v5677
      %v5679 = vpop.f32.mrf.mxu0
      %5680 = vmatprep.mubr.f32.mxu0 0.0
      %5681 = vmatmul.mubr.f32.gmra.mxu0 %v5460
      %v5682 = vpop.f32.mrf.mxu0
      %v5683 = vadd.f32 0.0, %v5682
      %v5684 = vpop.f32.mrf.mxu0
      %5685 = vmatprep.mubr.f32.mxu0 0.0
      %5686 = vmatmul.mubr.f32.gmra.mxu0 %v5463
      %v5687 = vpop.f32.mrf.mxu0
      %v5688 = vadd.f32 0.0, %v5687
      %v5689 = vpop.f32.mrf.mxu0
      %5690 = vmatprep.mubr.f32.mxu0 0.0
      %5691 = vmatmul.mubr.f32.gmra.mxu0 %v5466
      %v5692 = vpop.f32.mrf.mxu0
      %v5693 = vadd.f32 0.0, %v5692
      %v5694 = vpop.f32.mrf.mxu0
      %5695 = vdwg.mxu0
      %v5696 = vadd.f32 %v5305, %v5538
      %v5697 = vadd.f32 %v5306, %v5543
      %v5698 = vadd.f32 %v5307, %v5548
      %v5699 = vadd.f32 %v5308, %v5553
      %v5700 = vadd.f32 %v5309, %v5558
      %v5701 = vadd.f32 %v5310, %v5563
      %v5702 = vadd.f32 %v5311, %v5568
      %v5703 = vadd.f32 %v5312, %v5573
      %v5704 = vadd.f32 %v5313, %v5578
      %v5705 = vadd.f32 %v5314, %v5583
      %v5706 = vadd.f32 %v5315, %v5588
      %v5707 = vadd.f32 %v5316, %v5593
      %v5708 = vadd.f32 %v5317, %v5598
      %v5709 = vadd.f32 %v5318, %v5603
      %v5710 = vadd.f32 %v5319, %v5608
      %v5711 = vadd.f32 %v5320, %v5613
      %v5712 = vadd.f32 %v5321, %v5618
      %v5713 = vadd.f32 %v5322, %v5623
      %v5714 = vadd.f32 %v5323, %v5628
      %v5715 = vadd.f32 %v5324, %v5633
      %v5716 = vadd.f32 %v5325, %v5638
      %v5717 = vadd.f32 %v5326, %v5643
      %v5718 = vadd.f32 %v5327, %v5648
      %v5719 = vadd.f32 %v5328, %v5653
      %v5720 = vadd.f32 %v5329, %v5658
      %v5721 = vadd.f32 %v5330, %v5663
      %v5722 = vadd.f32 %v5331, %v5668
      %v5723 = vadd.f32 %v5332, %v5673
      %v5724 = vadd.f32 %v5333, %v5678
      %v5725 = vadd.f32 %v5334, %v5683
      %v5726 = vadd.f32 %v5335, %v5688
      %v5727 = vadd.f32 %v5336, %v5693
      %v5728 = vld [vmem:[%s637 + $0x1] sm:$0xff]
      %v5729 = vld [vmem:[%s637 + $0x9] sm:$0xff]
      %v5730 = vld [vmem:[%s637 + $0x19] sm:$0xff]
      %v5731 = vld [vmem:[%s637 + $0x21] sm:$0xff]
      %v5732 = vld [vmem:[%s637 + $0x31] sm:$0xff]
      %v5733 = vld [vmem:[%s637 + $0x39] sm:$0xff]
      %v5734 = vld [vmem:[%s637 + $0x49] sm:$0xff]
      %v5735 = vld [vmem:[%s637 + $0x51] sm:$0xff]
      %v5736 = vld [vmem:[%s637 + $0x61] sm:$0xff]
      %v5737 = vld [vmem:[%s637 + $0x69] sm:$0xff]
      %v5738 = vld [vmem:[%s637 + $0x79] sm:$0xff]
      %v5739 = vld [vmem:[%s637 + $0x81] sm:$0xff]
      %v5740 = vld [vmem:[%s637 + $0x91] sm:$0xff]
      %v5741 = vld [vmem:[%s637 + $0x99] sm:$0xff]
      %v5742 = vld [vmem:[%s637 + $0xa9] sm:$0xff]
      %v5743 = vld [vmem:[%s637 + $0xb1] sm:$0xff]
      %v5744 = vld [vmem:[%s637 + $0xc1] sm:$0xff]
      %v5745 = vld [vmem:[%s637 + $0xc9] sm:$0xff]
      %v5746 = vld [vmem:[%s637 + $0xd9] sm:$0xff]
      %v5747 = vld [vmem:[%s637 + $0xe1] sm:$0xff]
      %v5748 = vld [vmem:[%s637 + $0xf1] sm:$0xff]
      %v5749 = vld [vmem:[%s637 + $0xf9] sm:$0xff]
      %v5750 = vld [vmem:[%s637 + $0x109] sm:$0xff]
      %v5751 = vld [vmem:[%s637 + $0x111] sm:$0xff]
      %v5752 = vld [vmem:[%s637 + $0x121] sm:$0xff]
      %v5753 = vld [vmem:[%s637 + $0x129] sm:$0xff]
      %v5754 = vld [vmem:[%s637 + $0x139] sm:$0xff]
      %v5755 = vld [vmem:[%s637 + $0x141] sm:$0xff]
      %v5756 = vld [vmem:[%s637 + $0x151] sm:$0xff]
      %v5757 = vld [vmem:[%s637 + $0x159] sm:$0xff]
      %v5758 = vld [vmem:[%s637 + $0x169] sm:$0xff]
      %v5759 = vld [vmem:[%s637 + $0x171] sm:$0xff]
      %s5760 = scalar_lea.vmem %s3, 64
      %v5761 = vld [vmem:[%s5760] sm:$0xff]
      %v5762 = vld [vmem:[%s5760 + $0x8] sm:$0x3]
      %v5764 = vsel %vm549, %v5728, 0
      %v5767 = vsel %vm549, %v5729, 0
      %v5770 = vsel %vm549, %v5730, 0
      %v5773 = vsel %vm549, %v5731, 0
      %v5776 = vsel %vm549, %v5732, 0
      %v5779 = vsel %vm549, %v5733, 0
      %v5782 = vsel %vm549, %v5734, 0
      %v5785 = vsel %vm549, %v5735, 0
      %v5788 = vsel %vm549, %v5736, 0
      %v5791 = vsel %vm549, %v5737, 0
      %v5794 = vsel %vm549, %v5738, 0
      %v5797 = vsel %vm549, %v5739, 0
      %v5800 = vsel %vm549, %v5740, 0
      %v5803 = vsel %vm549, %v5741, 0
      %v5806 = vsel %vm549, %v5742, 0
      %v5809 = vsel %vm549, %v5743, 0
      %v5812 = vsel %vm549, %v5744, 0
      %v5815 = vsel %vm549, %v5745, 0
      %v5818 = vsel %vm549, %v5746, 0
      %v5821 = vsel %vm549, %v5747, 0
      %v5824 = vsel %vm549, %v5748, 0
      %v5827 = vsel %vm549, %v5749, 0
      %v5830 = vsel %vm549, %v5750, 0
      %v5833 = vsel %vm549, %v5751, 0
      %v5836 = vsel %vm549, %v5752, 0
      %v5839 = vsel %vm549, %v5753, 0
      %v5842 = vsel %vm549, %v5754, 0
      %v5845 = vsel %vm549, %v5755, 0
      %v5848 = vsel %vm549, %v5756, 0
      %v5851 = vsel %vm549, %v5757, 0
      %v5854 = vsel %vm549, %v5758, 0
      %v5857 = vsel %vm549, %v5759, 0
      %v5860 = vsel %vm835, %v5762, 0
      %5862 = vmatprep.subr.mxu0 0.0
      %5863 = vmatpush1.msra.mxu0 0.0
      %5864 = vmatprep.subr.mxu0 0.0
      %5865 = vmatpush1.msra.mxu0 0.0
      %5866 = vmatprep.subr.mxu0 0.0
      %5867 = vmatpush1.msra.mxu0 0.0
      %5868 = vmatprep.subr.mxu0 0.0
      %5869 = vmatpush1.msra.mxu0 0.0
      %5870 = vmatprep.subr.mxu0 0.0
      %5871 = vmatpush1.msra.mxu0 0.0
      %5872 = vmatprep.subr.mxu0 0.0
      %5873 = vmatpush1.msra.mxu0 0.0
      %5874 = vmatprep.subr.mxu0 0.0
      %5875 = vmatpush1.msra.mxu0 0.0
      %5876 = vmatprep.subr.mxu0 0.0
      %5877 = vmatpush1.msra.mxu0 0.0
      %5878 = vmatprep.subr.mxu0 0.0
      %5879 = vmatpush1.msra.mxu0 0.0
      %5880 = vmatprep.subr.mxu0 0.0
      %5881 = vmatpush1.msra.mxu0 0.0
      %5882 = vmatprep.subr.mxu0 0.0
      %5883 = vmatpush1.msra.mxu0 0.0
      %5884 = vmatprep.subr.mxu0 0.0
      %5885 = vmatpush1.msra.mxu0 0.0
      %5886 = vmatprep.subr.mxu0 0.0
      %5887 = vmatpush1.msra.mxu0 0.0
      %5888 = vmatprep.subr.mxu0 0.0
      %5889 = vmatpush1.msra.mxu0 0.0
      %5890 = vmatprep.subr.mxu0 0.0
      %5891 = vmatpush1.msra.mxu0 %v5860
      %5892 = vmatprep.subr.mxu0 0.0
      %5893 = vmatpush1.msra.mxu0 %v5761
      %5894 = vmatprep.subr.mxu0 0.0
      %5895 = vmatpush2.msra.mxu0 0.0
      %5896 = vmatprep.subr.mxu0 0.0
      %5897 = vmatpush2.msra.mxu0 0.0
      %5898 = vmatprep.subr.mxu0 0.0
      %5899 = vmatpush2.msra.mxu0 0.0
      %5900 = vmatprep.subr.mxu0 0.0
      %5901 = vmatpush2.msra.mxu0 0.0
      %5902 = vmatprep.subr.mxu0 0.0
      %5903 = vmatpush2.msra.mxu0 0.0
      %5904 = vmatprep.subr.mxu0 0.0
      %5905 = vmatpush2.msra.mxu0 0.0
      %5906 = vmatprep.subr.mxu0 0.0
      %5907 = vmatpush2.msra.mxu0 0.0
      %5908 = vmatprep.subr.mxu0 0.0
      %5909 = vmatpush2.msra.mxu0 0.0
      %5910 = vmatprep.subr.mxu0 0.0
      %5911 = vmatpush2.msra.mxu0 0.0
      %5912 = vmatprep.subr.mxu0 0.0
      %5913 = vmatpush2.msra.mxu0 0.0
      %5914 = vmatprep.subr.mxu0 0.0
      %5915 = vmatpush2.msra.mxu0 0.0
      %5916 = vmatprep.subr.mxu0 0.0
      %5917 = vmatpush2.msra.mxu0 0.0
      %5918 = vmatprep.subr.mxu0 0.0
      %5919 = vmatpush2.msra.mxu0 0.0
      %5920 = vmatprep.subr.mxu0 0.0
      %5921 = vmatpush2.msra.mxu0 0.0
      %5922 = vmatprep.subr.mxu0 0.0
      %5923 = vmatpush2.msra.mxu0 0.0
      %5924 = vmatprep.subr.mxu0 0.0
      %5925 = vmatpush2.msra.mxu0 0.0
      %5926 = vmatprep.mubr.f32.mxu0 0.0
      %5927 = vmatmul.mubr.f32.gmra.mxu0 %v5764
      %v5928 = vpop.f32.mrf.mxu0
      %v5929 = vadd.f32 0.0, %v5928
      %v5930 = vpop.f32.mrf.mxu0
      %5931 = vmatprep.mubr.f32.mxu0 0.0
      %5932 = vmatmul.mubr.f32.gmra.mxu0 %v5767
      %v5933 = vpop.f32.mrf.mxu0
      %v5934 = vadd.f32 0.0, %v5933
      %v5935 = vpop.f32.mrf.mxu0
      %5936 = vmatprep.mubr.f32.mxu0 0.0
      %5937 = vmatmul.mubr.f32.gmra.mxu0 %v5770
      %v5938 = vpop.f32.mrf.mxu0
      %v5939 = vadd.f32 0.0, %v5938
      %v5940 = vpop.f32.mrf.mxu0
      %5941 = vmatprep.mubr.f32.mxu0 0.0
      %5942 = vmatmul.mubr.f32.gmra.mxu0 %v5773
      %v5943 = vpop.f32.mrf.mxu0
      %v5944 = vadd.f32 0.0, %v5943
      %v5945 = vpop.f32.mrf.mxu0
      %5946 = vmatprep.mubr.f32.mxu0 0.0
      %5947 = vmatmul.mubr.f32.gmra.mxu0 %v5776
      %v5948 = vpop.f32.mrf.mxu0
      %v5949 = vadd.f32 0.0, %v5948
      %v5950 = vpop.f32.mrf.mxu0
      %5951 = vmatprep.mubr.f32.mxu0 0.0
      %5952 = vmatmul.mubr.f32.gmra.mxu0 %v5779
      %v5953 = vpop.f32.mrf.mxu0
      %v5954 = vadd.f32 0.0, %v5953
      %v5955 = vpop.f32.mrf.mxu0
      %5956 = vmatprep.mubr.f32.mxu0 0.0
      %5957 = vmatmul.mubr.f32.gmra.mxu0 %v5782
      %v5958 = vpop.f32.mrf.mxu0
      %v5959 = vadd.f32 0.0, %v5958
      %v5960 = vpop.f32.mrf.mxu0
      %5961 = vmatprep.mubr.f32.mxu0 0.0
      %5962 = vmatmul.mubr.f32.gmra.mxu0 %v5785
      %v5963 = vpop.f32.mrf.mxu0
      %v5964 = vadd.f32 0.0, %v5963
      %v5965 = vpop.f32.mrf.mxu0
      %5966 = vmatprep.mubr.f32.mxu0 0.0
      %5967 = vmatmul.mubr.f32.gmra.mxu0 %v5788
      %v5968 = vpop.f32.mrf.mxu0
      %v5969 = vadd.f32 0.0, %v5968
      %v5970 = vpop.f32.mrf.mxu0
      %5971 = vmatprep.mubr.f32.mxu0 0.0
      %5972 = vmatmul.mubr.f32.gmra.mxu0 %v5791
      %v5973 = vpop.f32.mrf.mxu0
      %v5974 = vadd.f32 0.0, %v5973
      %v5975 = vpop.f32.mrf.mxu0
      %5976 = vmatprep.mubr.f32.mxu0 0.0
      %5977 = vmatmul.mubr.f32.gmra.mxu0 %v5794
      %v5978 = vpop.f32.mrf.mxu0
      %v5979 = vadd.f32 0.0, %v5978
      %v5980 = vpop.f32.mrf.mxu0
      %5981 = vmatprep.mubr.f32.mxu0 0.0
      %5982 = vmatmul.mubr.f32.gmra.mxu0 %v5797
      %v5983 = vpop.f32.mrf.mxu0
      %v5984 = vadd.f32 0.0, %v5983
      %v5985 = vpop.f32.mrf.mxu0
      %5986 = vmatprep.mubr.f32.mxu0 0.0
      %5987 = vmatmul.mubr.f32.gmra.mxu0 %v5800
      %v5988 = vpop.f32.mrf.mxu0
      %v5989 = vadd.f32 0.0, %v5988
      %v5990 = vpop.f32.mrf.mxu0
      %5991 = vmatprep.mubr.f32.mxu0 0.0
      %5992 = vmatmul.mubr.f32.gmra.mxu0 %v5803
      %v5993 = vpop.f32.mrf.mxu0
      %v5994 = vadd.f32 0.0, %v5993
      %v5995 = vpop.f32.mrf.mxu0
      %5996 = vmatprep.mubr.f32.mxu0 0.0
      %5997 = vmatmul.mubr.f32.gmra.mxu0 %v5806
      %v5998 = vpop.f32.mrf.mxu0
      %v5999 = vadd.f32 0.0, %v5998
      %v6000 = vpop.f32.mrf.mxu0
      %6001 = vmatprep.mubr.f32.mxu0 0.0
      %6002 = vmatmul.mubr.f32.gmra.mxu0 %v5809
      %v6003 = vpop.f32.mrf.mxu0
      %v6004 = vadd.f32 0.0, %v6003
      %v6005 = vpop.f32.mrf.mxu0
      %6006 = vmatprep.mubr.f32.mxu0 0.0
      %6007 = vmatmul.mubr.f32.gmra.mxu0 %v5812
      %v6008 = vpop.f32.mrf.mxu0
      %v6009 = vadd.f32 0.0, %v6008
      %v6010 = vpop.f32.mrf.mxu0
      %6011 = vmatprep.mubr.f32.mxu0 0.0
      %6012 = vmatmul.mubr.f32.gmra.mxu0 %v5815
      %v6013 = vpop.f32.mrf.mxu0
      %v6014 = vadd.f32 0.0, %v6013
      %v6015 = vpop.f32.mrf.mxu0
      %6016 = vmatprep.mubr.f32.mxu0 0.0
      %6017 = vmatmul.mubr.f32.gmra.mxu0 %v5818
      %v6018 = vpop.f32.mrf.mxu0
      %v6019 = vadd.f32 0.0, %v6018
      %v6020 = vpop.f32.mrf.mxu0
      %6021 = vmatprep.mubr.f32.mxu0 0.0
      %6022 = vmatmul.mubr.f32.gmra.mxu0 %v5821
      %v6023 = vpop.f32.mrf.mxu0
      %v6024 = vadd.f32 0.0, %v6023
      %v6025 = vpop.f32.mrf.mxu0
      %6026 = vmatprep.mubr.f32.mxu0 0.0
      %6027 = vmatmul.mubr.f32.gmra.mxu0 %v5824
      %v6028 = vpop.f32.mrf.mxu0
      %v6029 = vadd.f32 0.0, %v6028
      %v6030 = vpop.f32.mrf.mxu0
      %6031 = vmatprep.mubr.f32.mxu0 0.0
      %6032 = vmatmul.mubr.f32.gmra.mxu0 %v5827
      %v6033 = vpop.f32.mrf.mxu0
      %v6034 = vadd.f32 0.0, %v6033
      %v6035 = vpop.f32.mrf.mxu0
      %6036 = vmatprep.mubr.f32.mxu0 0.0
      %6037 = vmatmul.mubr.f32.gmra.mxu0 %v5830
      %v6038 = vpop.f32.mrf.mxu0
      %v6039 = vadd.f32 0.0, %v6038
      %v6040 = vpop.f32.mrf.mxu0
      %6041 = vmatprep.mubr.f32.mxu0 0.0
      %6042 = vmatmul.mubr.f32.gmra.mxu0 %v5833
      %v6043 = vpop.f32.mrf.mxu0
      %v6044 = vadd.f32 0.0, %v6043
      %v6045 = vpop.f32.mrf.mxu0
      %6046 = vmatprep.mubr.f32.mxu0 0.0
      %6047 = vmatmul.mubr.f32.gmra.mxu0 %v5836
      %v6048 = vpop.f32.mrf.mxu0
      %v6049 = vadd.f32 0.0, %v6048
      %v6050 = vpop.f32.mrf.mxu0
      %6051 = vmatprep.mubr.f32.mxu0 0.0
      %6052 = vmatmul.mubr.f32.gmra.mxu0 %v5839
      %v6053 = vpop.f32.mrf.mxu0
      %v6054 = vadd.f32 0.0, %v6053
      %v6055 = vpop.f32.mrf.mxu0
      %6056 = vmatprep.mubr.f32.mxu0 0.0
      %6057 = vmatmul.mubr.f32.gmra.mxu0 %v5842
      %v6058 = vpop.f32.mrf.mxu0
      %v6059 = vadd.f32 0.0, %v6058
      %v6060 = vpop.f32.mrf.mxu0
      %6061 = vmatprep.mubr.f32.mxu0 0.0
      %6062 = vmatmul.mubr.f32.gmra.mxu0 %v5845
      %v6063 = vpop.f32.mrf.mxu0
      %v6064 = vadd.f32 0.0, %v6063
      %v6065 = vpop.f32.mrf.mxu0
      %6066 = vmatprep.mubr.f32.mxu0 0.0
      %6067 = vmatmul.mubr.f32.gmra.mxu0 %v5848
      %v6068 = vpop.f32.mrf.mxu0
      %v6069 = vadd.f32 0.0, %v6068
      %v6070 = vpop.f32.mrf.mxu0
      %6071 = vmatprep.mubr.f32.mxu0 0.0
      %6072 = vmatmul.mubr.f32.gmra.mxu0 %v5851
      %v6073 = vpop.f32.mrf.mxu0
      %v6074 = vadd.f32 0.0, %v6073
      %v6075 = vpop.f32.mrf.mxu0
      %6076 = vmatprep.mubr.f32.mxu0 0.0
      %6077 = vmatmul.mubr.f32.gmra.mxu0 %v5854
      %v6078 = vpop.f32.mrf.mxu0
      %v6079 = vadd.f32 0.0, %v6078
      %v6080 = vpop.f32.mrf.mxu0
      %6081 = vmatprep.mubr.f32.mxu0 0.0
      %6082 = vmatmul.mubr.f32.gmra.mxu0 %v5857
      %v6083 = vpop.f32.mrf.mxu0
      %v6084 = vadd.f32 0.0, %v6083
      %v6085 = vpop.f32.mrf.mxu0
      %6086 = vdwg.mxu0
      %v6087 = vadd.f32 %v5696, %v5929
      %v6088 = vadd.f32 %v5697, %v5934
      %v6089 = vadd.f32 %v5698, %v5939
      %v6090 = vadd.f32 %v5699, %v5944
      %v6091 = vadd.f32 %v5700, %v5949
      %v6092 = vadd.f32 %v5701, %v5954
      %v6093 = vadd.f32 %v5702, %v5959
      %v6094 = vadd.f32 %v5703, %v5964
      %v6095 = vadd.f32 %v5704, %v5969
      %v6096 = vadd.f32 %v5705, %v5974
      %v6097 = vadd.f32 %v5706, %v5979
      %v6098 = vadd.f32 %v5707, %v5984
      %v6099 = vadd.f32 %v5708, %v5989
      %v6100 = vadd.f32 %v5709, %v5994
      %v6101 = vadd.f32 %v5710, %v5999
      %v6102 = vadd.f32 %v5711, %v6004
      %v6103 = vadd.f32 %v5712, %v6009
      %v6104 = vadd.f32 %v5713, %v6014
      %v6105 = vadd.f32 %v5714, %v6019
      %v6106 = vadd.f32 %v5715, %v6024
      %v6107 = vadd.f32 %v5716, %v6029
      %v6108 = vadd.f32 %v5717, %v6034
      %v6109 = vadd.f32 %v5718, %v6039
      %v6110 = vadd.f32 %v5719, %v6044
      %v6111 = vadd.f32 %v5720, %v6049
      %v6112 = vadd.f32 %v5721, %v6054
      %v6113 = vadd.f32 %v5722, %v6059
      %v6114 = vadd.f32 %v5723, %v6064
      %v6115 = vadd.f32 %v5724, %v6069
      %v6116 = vadd.f32 %v5725, %v6074
      %v6117 = vadd.f32 %v5726, %v6079
      %v6118 = vadd.f32 %v5727, %v6084
      %v6119 = vld [vmem:[%s637 + $0x2] sm:$0xff]
      %v6120 = vld [vmem:[%s637 + $0xa] sm:$0xff]
      %v6121 = vld [vmem:[%s637 + $0x1a] sm:$0xff]
      %v6122 = vld [vmem:[%s637 + $0x22] sm:$0xff]
      %v6123 = vld [vmem:[%s637 + $0x32] sm:$0xff]
      %v6124 = vld [vmem:[%s637 + $0x3a] sm:$0xff]
      %v6125 = vld [vmem:[%s637 + $0x4a] sm:$0xff]
      %v6126 = vld [vmem:[%s637 + $0x52] sm:$0xff]
      %v6127 = vld [vmem:[%s637 + $0x62] sm:$0xff]
      %v6128 = vld [vmem:[%s637 + $0x6a] sm:$0xff]
      %v6129 = vld [vmem:[%s637 + $0x7a] sm:$0xff]
      %v6130 = vld [vmem:[%s637 + $0x82] sm:$0xff]
      %v6131 = vld [vmem:[%s637 + $0x92] sm:$0xff]
      %v6132 = vld [vmem:[%s637 + $0x9a] sm:$0xff]
      %v6133 = vld [vmem:[%s637 + $0xaa] sm:$0xff]
      %v6134 = vld [vmem:[%s637 + $0xb2] sm:$0xff]
      %v6135 = vld [vmem:[%s637 + $0xc2] sm:$0xff]
      %v6136 = vld [vmem:[%s637 + $0xca] sm:$0xff]
      %v6137 = vld [vmem:[%s637 + $0xda] sm:$0xff]
      %v6138 = vld [vmem:[%s637 + $0xe2] sm:$0xff]
      %v6139 = vld [vmem:[%s637 + $0xf2] sm:$0xff]
      %v6140 = vld [vmem:[%s637 + $0xfa] sm:$0xff]
      %v6141 = vld [vmem:[%s637 + $0x10a] sm:$0xff]
      %v6142 = vld [vmem:[%s637 + $0x112] sm:$0xff]
      %v6143 = vld [vmem:[%s637 + $0x122] sm:$0xff]
      %v6144 = vld [vmem:[%s637 + $0x12a] sm:$0xff]
      %v6145 = vld [vmem:[%s637 + $0x13a] sm:$0xff]
      %v6146 = vld [vmem:[%s637 + $0x142] sm:$0xff]
      %v6147 = vld [vmem:[%s637 + $0x152] sm:$0xff]
      %v6148 = vld [vmem:[%s637 + $0x15a] sm:$0xff]
      %v6149 = vld [vmem:[%s637 + $0x16a] sm:$0xff]
      %v6150 = vld [vmem:[%s637 + $0x172] sm:$0xff]
      %s6151 = scalar_lea.vmem %s3, 80
      %v6152 = vld [vmem:[%s6151] sm:$0xff]
      %v6153 = vld [vmem:[%s6151 + $0x8] sm:$0x3]
      %v6155 = vsel %vm549, %v6119, 0
      %v6158 = vsel %vm549, %v6120, 0
      %v6161 = vsel %vm549, %v6121, 0
      %v6164 = vsel %vm549, %v6122, 0
      %v6167 = vsel %vm549, %v6123, 0
      %v6170 = vsel %vm549, %v6124, 0
      %v6173 = vsel %vm549, %v6125, 0
      %v6176 = vsel %vm549, %v6126, 0
      %v6179 = vsel %vm549, %v6127, 0
      %v6182 = vsel %vm549, %v6128, 0
      %v6185 = vsel %vm549, %v6129, 0
      %v6188 = vsel %vm549, %v6130, 0
      %v6191 = vsel %vm549, %v6131, 0
      %v6194 = vsel %vm549, %v6132, 0
      %v6197 = vsel %vm549, %v6133, 0
      %v6200 = vsel %vm549, %v6134, 0
      %v6203 = vsel %vm549, %v6135, 0
      %v6206 = vsel %vm549, %v6136, 0
      %v6209 = vsel %vm549, %v6137, 0
      %v6212 = vsel %vm549, %v6138, 0
      %v6215 = vsel %vm549, %v6139, 0
      %v6218 = vsel %vm549, %v6140, 0
      %v6221 = vsel %vm549, %v6141, 0
      %v6224 = vsel %vm549, %v6142, 0
      %v6227 = vsel %vm549, %v6143, 0
      %v6230 = vsel %vm549, %v6144, 0
      %v6233 = vsel %vm549, %v6145, 0
      %v6236 = vsel %vm549, %v6146, 0
      %v6239 = vsel %vm549, %v6147, 0
      %v6242 = vsel %vm549, %v6148, 0
      %v6245 = vsel %vm549, %v6149, 0
      %v6248 = vsel %vm549, %v6150, 0
      %v6251 = vsel %vm835, %v6153, 0
      %6253 = vmatprep.subr.mxu0 0.0
      %6254 = vmatpush1.msra.mxu0 0.0
      %6255 = vmatprep.subr.mxu0 0.0
      %6256 = vmatpush1.msra.mxu0 0.0
      %6257 = vmatprep.subr.mxu0 0.0
      %6258 = vmatpush1.msra.mxu0 0.0
      %6259 = vmatprep.subr.mxu0 0.0
      %6260 = vmatpush1.msra.mxu0 0.0
      %6261 = vmatprep.subr.mxu0 0.0
      %6262 = vmatpush1.msra.mxu0 0.0
      %6263 = vmatprep.subr.mxu0 0.0
      %6264 = vmatpush1.msra.mxu0 0.0
      %6265 = vmatprep.subr.mxu0 0.0
      %6266 = vmatpush1.msra.mxu0 0.0
      %6267 = vmatprep.subr.mxu0 0.0
      %6268 = vmatpush1.msra.mxu0 0.0
      %6269 = vmatprep.subr.mxu0 0.0
      %6270 = vmatpush1.msra.mxu0 0.0
      %6271 = vmatprep.subr.mxu0 0.0
      %6272 = vmatpush1.msra.mxu0 0.0
      %6273 = vmatprep.subr.mxu0 0.0
      %6274 = vmatpush1.msra.mxu0 0.0
      %6275 = vmatprep.subr.mxu0 0.0
      %6276 = vmatpush1.msra.mxu0 0.0
      %6277 = vmatprep.subr.mxu0 0.0
      %6278 = vmatpush1.msra.mxu0 0.0
      %6279 = vmatprep.subr.mxu0 0.0
      %6280 = vmatpush1.msra.mxu0 0.0
      %6281 = vmatprep.subr.mxu0 0.0
      %6282 = vmatpush1.msra.mxu0 %v6251
      %6283 = vmatprep.subr.mxu0 0.0
      %6284 = vmatpush1.msra.mxu0 %v6152
      %6285 = vmatprep.subr.mxu0 0.0
      %6286 = vmatpush2.msra.mxu0 0.0
      %6287 = vmatprep.subr.mxu0 0.0
      %6288 = vmatpush2.msra.mxu0 0.0
      %6289 = vmatprep.subr.mxu0 0.0
      %6290 = vmatpush2.msra.mxu0 0.0
      %6291 = vmatprep.subr.mxu0 0.0
      %6292 = vmatpush2.msra.mxu0 0.0
      %6293 = vmatprep.subr.mxu0 0.0
      %6294 = vmatpush2.msra.mxu0 0.0
      %6295 = vmatprep.subr.mxu0 0.0
      %6296 = vmatpush2.msra.mxu0 0.0
      %6297 = vmatprep.subr.mxu0 0.0
      %6298 = vmatpush2.msra.mxu0 0.0
      %6299 = vmatprep.subr.mxu0 0.0
      %6300 = vmatpush2.msra.mxu0 0.0
      %6301 = vmatprep.subr.mxu0 0.0
      %6302 = vmatpush2.msra.mxu0 0.0
      %6303 = vmatprep.subr.mxu0 0.0
      %6304 = vmatpush2.msra.mxu0 0.0
      %6305 = vmatprep.subr.mxu0 0.0
      %6306 = vmatpush2.msra.mxu0 0.0
      %6307 = vmatprep.subr.mxu0 0.0
      %6308 = vmatpush2.msra.mxu0 0.0
      %6309 = vmatprep.subr.mxu0 0.0
      %6310 = vmatpush2.msra.mxu0 0.0
      %6311 = vmatprep.subr.mxu0 0.0
      %6312 = vmatpush2.msra.mxu0 0.0
      %6313 = vmatprep.subr.mxu0 0.0
      %6314 = vmatpush2.msra.mxu0 0.0
      %6315 = vmatprep.subr.mxu0 0.0
      %6316 = vmatpush2.msra.mxu0 0.0
      %6317 = vmatprep.mubr.f32.mxu0 0.0
      %6318 = vmatmul.mubr.f32.gmra.mxu0 %v6155
      %v6319 = vpop.f32.mrf.mxu0
      %v6320 = vadd.f32 0.0, %v6319
      %v6321 = vpop.f32.mrf.mxu0
      %6322 = vmatprep.mubr.f32.mxu0 0.0
      %6323 = vmatmul.mubr.f32.gmra.mxu0 %v6158
      %v6324 = vpop.f32.mrf.mxu0
      %v6325 = vadd.f32 0.0, %v6324
      %v6326 = vpop.f32.mrf.mxu0
      %6327 = vmatprep.mubr.f32.mxu0 0.0
      %6328 = vmatmul.mubr.f32.gmra.mxu0 %v6161
      %v6329 = vpop.f32.mrf.mxu0
      %v6330 = vadd.f32 0.0, %v6329
      %v6331 = vpop.f32.mrf.mxu0
      %6332 = vmatprep.mubr.f32.mxu0 0.0
      %6333 = vmatmul.mubr.f32.gmra.mxu0 %v6164
      %v6334 = vpop.f32.mrf.mxu0
      %v6335 = vadd.f32 0.0, %v6334
      %v6336 = vpop.f32.mrf.mxu0
      %6337 = vmatprep.mubr.f32.mxu0 0.0
      %6338 = vmatmul.mubr.f32.gmra.mxu0 %v6167
      %v6339 = vpop.f32.mrf.mxu0
      %v6340 = vadd.f32 0.0, %v6339
      %v6341 = vpop.f32.mrf.mxu0
      %6342 = vmatprep.mubr.f32.mxu0 0.0
      %6343 = vmatmul.mubr.f32.gmra.mxu0 %v6170
      %v6344 = vpop.f32.mrf.mxu0
      %v6345 = vadd.f32 0.0, %v6344
      %v6346 = vpop.f32.mrf.mxu0
      %6347 = vmatprep.mubr.f32.mxu0 0.0
      %6348 = vmatmul.mubr.f32.gmra.mxu0 %v6173
      %v6349 = vpop.f32.mrf.mxu0
      %v6350 = vadd.f32 0.0, %v6349
      %v6351 = vpop.f32.mrf.mxu0
      %6352 = vmatprep.mubr.f32.mxu0 0.0
      %6353 = vmatmul.mubr.f32.gmra.mxu0 %v6176
      %v6354 = vpop.f32.mrf.mxu0
      %v6355 = vadd.f32 0.0, %v6354
      %v6356 = vpop.f32.mrf.mxu0
      %6357 = vmatprep.mubr.f32.mxu0 0.0
      %6358 = vmatmul.mubr.f32.gmra.mxu0 %v6179
      %v6359 = vpop.f32.mrf.mxu0
      %v6360 = vadd.f32 0.0, %v6359
      %v6361 = vpop.f32.mrf.mxu0
      %6362 = vmatprep.mubr.f32.mxu0 0.0
      %6363 = vmatmul.mubr.f32.gmra.mxu0 %v6182
      %v6364 = vpop.f32.mrf.mxu0
      %v6365 = vadd.f32 0.0, %v6364
      %v6366 = vpop.f32.mrf.mxu0
      %6367 = vmatprep.mubr.f32.mxu0 0.0
      %6368 = vmatmul.mubr.f32.gmra.mxu0 %v6185
      %v6369 = vpop.f32.mrf.mxu0
      %v6370 = vadd.f32 0.0, %v6369
      %v6371 = vpop.f32.mrf.mxu0
      %6372 = vmatprep.mubr.f32.mxu0 0.0
      %6373 = vmatmul.mubr.f32.gmra.mxu0 %v6188
      %v6374 = vpop.f32.mrf.mxu0
      %v6375 = vadd.f32 0.0, %v6374
      %v6376 = vpop.f32.mrf.mxu0
      %6377 = vmatprep.mubr.f32.mxu0 0.0
      %6378 = vmatmul.mubr.f32.gmra.mxu0 %v6191
      %v6379 = vpop.f32.mrf.mxu0
      %v6380 = vadd.f32 0.0, %v6379
      %v6381 = vpop.f32.mrf.mxu0
      %6382 = vmatprep.mubr.f32.mxu0 0.0
      %6383 = vmatmul.mubr.f32.gmra.mxu0 %v6194
      %v6384 = vpop.f32.mrf.mxu0
      %v6385 = vadd.f32 0.0, %v6384
      %v6386 = vpop.f32.mrf.mxu0
      %6387 = vmatprep.mubr.f32.mxu0 0.0
      %6388 = vmatmul.mubr.f32.gmra.mxu0 %v6197
      %v6389 = vpop.f32.mrf.mxu0
      %v6390 = vadd.f32 0.0, %v6389
      %v6391 = vpop.f32.mrf.mxu0
      %6392 = vmatprep.mubr.f32.mxu0 0.0
      %6393 = vmatmul.mubr.f32.gmra.mxu0 %v6200
      %v6394 = vpop.f32.mrf.mxu0
      %v6395 = vadd.f32 0.0, %v6394
      %v6396 = vpop.f32.mrf.mxu0
      %6397 = vmatprep.mubr.f32.mxu0 0.0
      %6398 = vmatmul.mubr.f32.gmra.mxu0 %v6203
      %v6399 = vpop.f32.mrf.mxu0
      %v6400 = vadd.f32 0.0, %v6399
      %v6401 = vpop.f32.mrf.mxu0
      %6402 = vmatprep.mubr.f32.mxu0 0.0
      %6403 = vmatmul.mubr.f32.gmra.mxu0 %v6206
      %v6404 = vpop.f32.mrf.mxu0
      %v6405 = vadd.f32 0.0, %v6404
      %v6406 = vpop.f32.mrf.mxu0
      %6407 = vmatprep.mubr.f32.mxu0 0.0
      %6408 = vmatmul.mubr.f32.gmra.mxu0 %v6209
      %v6409 = vpop.f32.mrf.mxu0
      %v6410 = vadd.f32 0.0, %v6409
      %v6411 = vpop.f32.mrf.mxu0
      %6412 = vmatprep.mubr.f32.mxu0 0.0
      %6413 = vmatmul.mubr.f32.gmra.mxu0 %v6212
      %v6414 = vpop.f32.mrf.mxu0
      %v6415 = vadd.f32 0.0, %v6414
      %v6416 = vpop.f32.mrf.mxu0
      %6417 = vmatprep.mubr.f32.mxu0 0.0
      %6418 = vmatmul.mubr.f32.gmra.mxu0 %v6215
      %v6419 = vpop.f32.mrf.mxu0
      %v6420 = vadd.f32 0.0, %v6419
      %v6421 = vpop.f32.mrf.mxu0
      %6422 = vmatprep.mubr.f32.mxu0 0.0
      %6423 = vmatmul.mubr.f32.gmra.mxu0 %v6218
      %v6424 = vpop.f32.mrf.mxu0
      %v6425 = vadd.f32 0.0, %v6424
      %v6426 = vpop.f32.mrf.mxu0
      %6427 = vmatprep.mubr.f32.mxu0 0.0
      %6428 = vmatmul.mubr.f32.gmra.mxu0 %v6221
      %v6429 = vpop.f32.mrf.mxu0
      %v6430 = vadd.f32 0.0, %v6429
      %v6431 = vpop.f32.mrf.mxu0
      %6432 = vmatprep.mubr.f32.mxu0 0.0
      %6433 = vmatmul.mubr.f32.gmra.mxu0 %v6224
      %v6434 = vpop.f32.mrf.mxu0
      %v6435 = vadd.f32 0.0, %v6434
      %v6436 = vpop.f32.mrf.mxu0
      %6437 = vmatprep.mubr.f32.mxu0 0.0
      %6438 = vmatmul.mubr.f32.gmra.mxu0 %v6227
      %v6439 = vpop.f32.mrf.mxu0
      %v6440 = vadd.f32 0.0, %v6439
      %v6441 = vpop.f32.mrf.mxu0
      %6442 = vmatprep.mubr.f32.mxu0 0.0
      %6443 = vmatmul.mubr.f32.gmra.mxu0 %v6230
      %v6444 = vpop.f32.mrf.mxu0
      %v6445 = vadd.f32 0.0, %v6444
      %v6446 = vpop.f32.mrf.mxu0
      %6447 = vmatprep.mubr.f32.mxu0 0.0
      %6448 = vmatmul.mubr.f32.gmra.mxu0 %v6233
      %v6449 = vpop.f32.mrf.mxu0
      %v6450 = vadd.f32 0.0, %v6449
      %v6451 = vpop.f32.mrf.mxu0
      %6452 = vmatprep.mubr.f32.mxu0 0.0
      %6453 = vmatmul.mubr.f32.gmra.mxu0 %v6236
      %v6454 = vpop.f32.mrf.mxu0
      %v6455 = vadd.f32 0.0, %v6454
      %v6456 = vpop.f32.mrf.mxu0
      %6457 = vmatprep.mubr.f32.mxu0 0.0
      %6458 = vmatmul.mubr.f32.gmra.mxu0 %v6239
      %v6459 = vpop.f32.mrf.mxu0
      %v6460 = vadd.f32 0.0, %v6459
      %v6461 = vpop.f32.mrf.mxu0
      %6462 = vmatprep.mubr.f32.mxu0 0.0
      %6463 = vmatmul.mubr.f32.gmra.mxu0 %v6242
      %v6464 = vpop.f32.mrf.mxu0
      %v6465 = vadd.f32 0.0, %v6464
      %v6466 = vpop.f32.mrf.mxu0
      %6467 = vmatprep.mubr.f32.mxu0 0.0
      %6468 = vmatmul.mubr.f32.gmra.mxu0 %v6245
      %v6469 = vpop.f32.mrf.mxu0
      %v6470 = vadd.f32 0.0, %v6469
      %v6471 = vpop.f32.mrf.mxu0
      %6472 = vmatprep.mubr.f32.mxu0 0.0
      %6473 = vmatmul.mubr.f32.gmra.mxu0 %v6248
      %v6474 = vpop.f32.mrf.mxu0
      %v6475 = vadd.f32 0.0, %v6474
      %v6476 = vpop.f32.mrf.mxu0
      %6477 = vdwg.mxu0
      %v6478 = vadd.f32 %v6087, %v6320
      %v6479 = vadd.f32 %v6088, %v6325
      %v6480 = vadd.f32 %v6089, %v6330
      %v6481 = vadd.f32 %v6090, %v6335
      %v6482 = vadd.f32 %v6091, %v6340
      %v6483 = vadd.f32 %v6092, %v6345
      %v6484 = vadd.f32 %v6093, %v6350
      %v6485 = vadd.f32 %v6094, %v6355
      %v6486 = vadd.f32 %v6095, %v6360
      %v6487 = vadd.f32 %v6096, %v6365
      %v6488 = vadd.f32 %v6097, %v6370
      %v6489 = vadd.f32 %v6098, %v6375
      %v6490 = vadd.f32 %v6099, %v6380
      %v6491 = vadd.f32 %v6100, %v6385
      %v6492 = vadd.f32 %v6101, %v6390
      %v6493 = vadd.f32 %v6102, %v6395
      %v6494 = vadd.f32 %v6103, %v6400
      %v6495 = vadd.f32 %v6104, %v6405
      %v6496 = vadd.f32 %v6105, %v6410
      %v6497 = vadd.f32 %v6106, %v6415
      %v6498 = vadd.f32 %v6107, %v6420
      %v6499 = vadd.f32 %v6108, %v6425
      %v6500 = vadd.f32 %v6109, %v6430
      %v6501 = vadd.f32 %v6110, %v6435
      %v6502 = vadd.f32 %v6111, %v6440
      %v6503 = vadd.f32 %v6112, %v6445
      %v6504 = vadd.f32 %v6113, %v6450
      %v6505 = vadd.f32 %v6114, %v6455
      %v6506 = vadd.f32 %v6115, %v6460
      %v6507 = vadd.f32 %v6116, %v6465
      %v6508 = vadd.f32 %v6117, %v6470
      %v6509 = vadd.f32 %v6118, %v6475
      %v6510 = vld [vmem:[%s2952] sm:$0xff]
      %v6511 = vld [vmem:[%s2952 + $0x8] sm:$0xff]
      %v6512 = vld [vmem:[%s2952 + $0x18] sm:$0xff]
      %v6513 = vld [vmem:[%s2952 + $0x20] sm:$0xff]
      %v6514 = vld [vmem:[%s2952 + $0x30] sm:$0xff]
      %v6515 = vld [vmem:[%s2952 + $0x38] sm:$0xff]
      %v6516 = vld [vmem:[%s2952 + $0x48] sm:$0xff]
      %v6517 = vld [vmem:[%s2952 + $0x50] sm:$0xff]
      %v6518 = vld [vmem:[%s2952 + $0x60] sm:$0xff]
      %v6519 = vld [vmem:[%s2952 + $0x68] sm:$0xff]
      %v6520 = vld [vmem:[%s2952 + $0x78] sm:$0xff]
      %v6521 = vld [vmem:[%s2952 + $0x80] sm:$0xff]
      %v6522 = vld [vmem:[%s2952 + $0x90] sm:$0xff]
      %v6523 = vld [vmem:[%s2952 + $0x98] sm:$0xff]
      %v6524 = vld [vmem:[%s2952 + $0xa8] sm:$0xff]
      %v6525 = vld [vmem:[%s2952 + $0xb0] sm:$0xff]
      %v6526 = vld [vmem:[%s2952 + $0xc0] sm:$0xff]
      %v6527 = vld [vmem:[%s2952 + $0xc8] sm:$0xff]
      %v6528 = vld [vmem:[%s2952 + $0xd8] sm:$0xff]
      %v6529 = vld [vmem:[%s2952 + $0xe0] sm:$0xff]
      %v6530 = vld [vmem:[%s2952 + $0xf0] sm:$0xff]
      %v6531 = vld [vmem:[%s2952 + $0xf8] sm:$0xff]
      %v6532 = vld [vmem:[%s2952 + $0x108] sm:$0xff]
      %v6533 = vld [vmem:[%s2952 + $0x110] sm:$0xff]
      %v6534 = vld [vmem:[%s2952 + $0x120] sm:$0xff]
      %v6535 = vld [vmem:[%s2952 + $0x128] sm:$0xff]
      %v6536 = vld [vmem:[%s2952 + $0x138] sm:$0xff]
      %v6537 = vld [vmem:[%s2952 + $0x140] sm:$0xff]
      %v6538 = vld [vmem:[%s2952 + $0x150] sm:$0xff]
      %v6539 = vld [vmem:[%s2952 + $0x158] sm:$0xff]
      %v6540 = vld [vmem:[%s2952 + $0x168] sm:$0xff]
      %v6541 = vld [vmem:[%s2952 + $0x170] sm:$0xff]
      %s6542 = scalar_lea.vmem %s3, 96
      %v6543 = vld [vmem:[%s6542] sm:$0xff]
      %v6544 = vld [vmem:[%s6542 + $0x8] sm:$0x3]
      %v6546 = vsel %vm549, %v6510, 0
      %v6549 = vsel %vm549, %v6511, 0
      %v6552 = vsel %vm549, %v6512, 0
      %v6555 = vsel %vm549, %v6513, 0
      %v6558 = vsel %vm549, %v6514, 0
      %v6561 = vsel %vm549, %v6515, 0
      %v6564 = vsel %vm549, %v6516, 0
      %v6567 = vsel %vm549, %v6517, 0
      %v6570 = vsel %vm549, %v6518, 0
      %v6573 = vsel %vm549, %v6519, 0
      %v6576 = vsel %vm549, %v6520, 0
      %v6579 = vsel %vm549, %v6521, 0
      %v6582 = vsel %vm549, %v6522, 0
      %v6585 = vsel %vm549, %v6523, 0
      %v6588 = vsel %vm549, %v6524, 0
      %v6591 = vsel %vm549, %v6525, 0
      %v6594 = vsel %vm549, %v6526, 0
      %v6597 = vsel %vm549, %v6527, 0
      %v6600 = vsel %vm549, %v6528, 0
      %v6603 = vsel %vm549, %v6529, 0
      %v6606 = vsel %vm549, %v6530, 0
      %v6609 = vsel %vm549, %v6531, 0
      %v6612 = vsel %vm549, %v6532, 0
      %v6615 = vsel %vm549, %v6533, 0
      %v6618 = vsel %vm549, %v6534, 0
      %v6621 = vsel %vm549, %v6535, 0
      %v6624 = vsel %vm549, %v6536, 0
      %v6627 = vsel %vm549, %v6537, 0
      %v6630 = vsel %vm549, %v6538, 0
      %v6633 = vsel %vm549, %v6539, 0
      %v6636 = vsel %vm549, %v6540, 0
      %v6639 = vsel %vm549, %v6541, 0
      %v6642 = vsel %vm835, %v6544, 0
      %6644 = vmatprep.subr.mxu0 0.0
      %6645 = vmatpush1.msra.mxu0 0.0
      %6646 = vmatprep.subr.mxu0 0.0
      %6647 = vmatpush1.msra.mxu0 0.0
      %6648 = vmatprep.subr.mxu0 0.0
      %6649 = vmatpush1.msra.mxu0 0.0
      %6650 = vmatprep.subr.mxu0 0.0
      %6651 = vmatpush1.msra.mxu0 0.0
      %6652 = vmatprep.subr.mxu0 0.0
      %6653 = vmatpush1.msra.mxu0 0.0
      %6654 = vmatprep.subr.mxu0 0.0
      %6655 = vmatpush1.msra.mxu0 0.0
      %6656 = vmatprep.subr.mxu0 0.0
      %6657 = vmatpush1.msra.mxu0 0.0
      %6658 = vmatprep.subr.mxu0 0.0
      %6659 = vmatpush1.msra.mxu0 0.0
      %6660 = vmatprep.subr.mxu0 0.0
      %6661 = vmatpush1.msra.mxu0 0.0
      %6662 = vmatprep.subr.mxu0 0.0
      %6663 = vmatpush1.msra.mxu0 0.0
      %6664 = vmatprep.subr.mxu0 0.0
      %6665 = vmatpush1.msra.mxu0 0.0
      %6666 = vmatprep.subr.mxu0 0.0
      %6667 = vmatpush1.msra.mxu0 0.0
      %6668 = vmatprep.subr.mxu0 0.0
      %6669 = vmatpush1.msra.mxu0 0.0
      %6670 = vmatprep.subr.mxu0 0.0
      %6671 = vmatpush1.msra.mxu0 0.0
      %6672 = vmatprep.subr.mxu0 0.0
      %6673 = vmatpush1.msra.mxu0 %v6642
      %6674 = vmatprep.subr.mxu0 0.0
      %6675 = vmatpush1.msra.mxu0 %v6543
      %6676 = vmatprep.subr.mxu0 0.0
      %6677 = vmatpush2.msra.mxu0 0.0
      %6678 = vmatprep.subr.mxu0 0.0
      %6679 = vmatpush2.msra.mxu0 0.0
      %6680 = vmatprep.subr.mxu0 0.0
      %6681 = vmatpush2.msra.mxu0 0.0
      %6682 = vmatprep.subr.mxu0 0.0
      %6683 = vmatpush2.msra.mxu0 0.0
      %6684 = vmatprep.subr.mxu0 0.0
      %6685 = vmatpush2.msra.mxu0 0.0
      %6686 = vmatprep.subr.mxu0 0.0
      %6687 = vmatpush2.msra.mxu0 0.0
      %6688 = vmatprep.subr.mxu0 0.0
      %6689 = vmatpush2.msra.mxu0 0.0
      %6690 = vmatprep.subr.mxu0 0.0
      %6691 = vmatpush2.msra.mxu0 0.0
      %6692 = vmatprep.subr.mxu0 0.0
      %6693 = vmatpush2.msra.mxu0 0.0
      %6694 = vmatprep.subr.mxu0 0.0
      %6695 = vmatpush2.msra.mxu0 0.0
      %6696 = vmatprep.subr.mxu0 0.0
      %6697 = vmatpush2.msra.mxu0 0.0
      %6698 = vmatprep.subr.mxu0 0.0
      %6699 = vmatpush2.msra.mxu0 0.0
      %6700 = vmatprep.subr.mxu0 0.0
      %6701 = vmatpush2.msra.mxu0 0.0
      %6702 = vmatprep.subr.mxu0 0.0
      %6703 = vmatpush2.msra.mxu0 0.0
      %6704 = vmatprep.subr.mxu0 0.0
      %6705 = vmatpush2.msra.mxu0 0.0
      %6706 = vmatprep.subr.mxu0 0.0
      %6707 = vmatpush2.msra.mxu0 0.0
      %6708 = vmatprep.mubr.f32.mxu0 0.0
      %6709 = vmatmul.mubr.f32.gmra.mxu0 %v6546
      %v6710 = vpop.f32.mrf.mxu0
      %v6711 = vadd.f32 0.0, %v6710
      %v6712 = vpop.f32.mrf.mxu0
      %6713 = vmatprep.mubr.f32.mxu0 0.0
      %6714 = vmatmul.mubr.f32.gmra.mxu0 %v6549
      %v6715 = vpop.f32.mrf.mxu0
      %v6716 = vadd.f32 0.0, %v6715
      %v6717 = vpop.f32.mrf.mxu0
      %6718 = vmatprep.mubr.f32.mxu0 0.0
      %6719 = vmatmul.mubr.f32.gmra.mxu0 %v6552
      %v6720 = vpop.f32.mrf.mxu0
      %v6721 = vadd.f32 0.0, %v6720
      %v6722 = vpop.f32.mrf.mxu0
      %6723 = vmatprep.mubr.f32.mxu0 0.0
      %6724 = vmatmul.mubr.f32.gmra.mxu0 %v6555
      %v6725 = vpop.f32.mrf.mxu0
      %v6726 = vadd.f32 0.0, %v6725
      %v6727 = vpop.f32.mrf.mxu0
      %6728 = vmatprep.mubr.f32.mxu0 0.0
      %6729 = vmatmul.mubr.f32.gmra.mxu0 %v6558
      %v6730 = vpop.f32.mrf.mxu0
      %v6731 = vadd.f32 0.0, %v6730
      %v6732 = vpop.f32.mrf.mxu0
      %6733 = vmatprep.mubr.f32.mxu0 0.0
      %6734 = vmatmul.mubr.f32.gmra.mxu0 %v6561
      %v6735 = vpop.f32.mrf.mxu0
      %v6736 = vadd.f32 0.0, %v6735
      %v6737 = vpop.f32.mrf.mxu0
      %6738 = vmatprep.mubr.f32.mxu0 0.0
      %6739 = vmatmul.mubr.f32.gmra.mxu0 %v6564
      %v6740 = vpop.f32.mrf.mxu0
      %v6741 = vadd.f32 0.0, %v6740
      %v6742 = vpop.f32.mrf.mxu0
      %6743 = vmatprep.mubr.f32.mxu0 0.0
      %6744 = vmatmul.mubr.f32.gmra.mxu0 %v6567
      %v6745 = vpop.f32.mrf.mxu0
      %v6746 = vadd.f32 0.0, %v6745
      %v6747 = vpop.f32.mrf.mxu0
      %6748 = vmatprep.mubr.f32.mxu0 0.0
      %6749 = vmatmul.mubr.f32.gmra.mxu0 %v6570
      %v6750 = vpop.f32.mrf.mxu0
      %v6751 = vadd.f32 0.0, %v6750
      %v6752 = vpop.f32.mrf.mxu0
      %6753 = vmatprep.mubr.f32.mxu0 0.0
      %6754 = vmatmul.mubr.f32.gmra.mxu0 %v6573
      %v6755 = vpop.f32.mrf.mxu0
      %v6756 = vadd.f32 0.0, %v6755
      %v6757 = vpop.f32.mrf.mxu0
      %6758 = vmatprep.mubr.f32.mxu0 0.0
      %6759 = vmatmul.mubr.f32.gmra.mxu0 %v6576
      %v6760 = vpop.f32.mrf.mxu0
      %v6761 = vadd.f32 0.0, %v6760
      %v6762 = vpop.f32.mrf.mxu0
      %6763 = vmatprep.mubr.f32.mxu0 0.0
      %6764 = vmatmul.mubr.f32.gmra.mxu0 %v6579
      %v6765 = vpop.f32.mrf.mxu0
      %v6766 = vadd.f32 0.0, %v6765
      %v6767 = vpop.f32.mrf.mxu0
      %6768 = vmatprep.mubr.f32.mxu0 0.0
      %6769 = vmatmul.mubr.f32.gmra.mxu0 %v6582
      %v6770 = vpop.f32.mrf.mxu0
      %v6771 = vadd.f32 0.0, %v6770
      %v6772 = vpop.f32.mrf.mxu0
      %6773 = vmatprep.mubr.f32.mxu0 0.0
      %6774 = vmatmul.mubr.f32.gmra.mxu0 %v6585
      %v6775 = vpop.f32.mrf.mxu0
      %v6776 = vadd.f32 0.0, %v6775
      %v6777 = vpop.f32.mrf.mxu0
      %6778 = vmatprep.mubr.f32.mxu0 0.0
      %6779 = vmatmul.mubr.f32.gmra.mxu0 %v6588
      %v6780 = vpop.f32.mrf.mxu0
      %v6781 = vadd.f32 0.0, %v6780
      %v6782 = vpop.f32.mrf.mxu0
      %6783 = vmatprep.mubr.f32.mxu0 0.0
      %6784 = vmatmul.mubr.f32.gmra.mxu0 %v6591
      %v6785 = vpop.f32.mrf.mxu0
      %v6786 = vadd.f32 0.0, %v6785
      %v6787 = vpop.f32.mrf.mxu0
      %6788 = vmatprep.mubr.f32.mxu0 0.0
      %6789 = vmatmul.mubr.f32.gmra.mxu0 %v6594
      %v6790 = vpop.f32.mrf.mxu0
      %v6791 = vadd.f32 0.0, %v6790
      %v6792 = vpop.f32.mrf.mxu0
      %6793 = vmatprep.mubr.f32.mxu0 0.0
      %6794 = vmatmul.mubr.f32.gmra.mxu0 %v6597
      %v6795 = vpop.f32.mrf.mxu0
      %v6796 = vadd.f32 0.0, %v6795
      %v6797 = vpop.f32.mrf.mxu0
      %6798 = vmatprep.mubr.f32.mxu0 0.0
      %6799 = vmatmul.mubr.f32.gmra.mxu0 %v6600
      %v6800 = vpop.f32.mrf.mxu0
      %v6801 = vadd.f32 0.0, %v6800
      %v6802 = vpop.f32.mrf.mxu0
      %6803 = vmatprep.mubr.f32.mxu0 0.0
      %6804 = vmatmul.mubr.f32.gmra.mxu0 %v6603
      %v6805 = vpop.f32.mrf.mxu0
      %v6806 = vadd.f32 0.0, %v6805
      %v6807 = vpop.f32.mrf.mxu0
      %6808 = vmatprep.mubr.f32.mxu0 0.0
      %6809 = vmatmul.mubr.f32.gmra.mxu0 %v6606
      %v6810 = vpop.f32.mrf.mxu0
      %v6811 = vadd.f32 0.0, %v6810
      %v6812 = vpop.f32.mrf.mxu0
      %6813 = vmatprep.mubr.f32.mxu0 0.0
      %6814 = vmatmul.mubr.f32.gmra.mxu0 %v6609
      %v6815 = vpop.f32.mrf.mxu0
      %v6816 = vadd.f32 0.0, %v6815
      %v6817 = vpop.f32.mrf.mxu0
      %6818 = vmatprep.mubr.f32.mxu0 0.0
      %6819 = vmatmul.mubr.f32.gmra.mxu0 %v6612
      %v6820 = vpop.f32.mrf.mxu0
      %v6821 = vadd.f32 0.0, %v6820
      %v6822 = vpop.f32.mrf.mxu0
      %6823 = vmatprep.mubr.f32.mxu0 0.0
      %6824 = vmatmul.mubr.f32.gmra.mxu0 %v6615
      %v6825 = vpop.f32.mrf.mxu0
      %v6826 = vadd.f32 0.0, %v6825
      %v6827 = vpop.f32.mrf.mxu0
      %6828 = vmatprep.mubr.f32.mxu0 0.0
      %6829 = vmatmul.mubr.f32.gmra.mxu0 %v6618
      %v6830 = vpop.f32.mrf.mxu0
      %v6831 = vadd.f32 0.0, %v6830
      %v6832 = vpop.f32.mrf.mxu0
      %6833 = vmatprep.mubr.f32.mxu0 0.0
      %6834 = vmatmul.mubr.f32.gmra.mxu0 %v6621
      %v6835 = vpop.f32.mrf.mxu0
      %v6836 = vadd.f32 0.0, %v6835
      %v6837 = vpop.f32.mrf.mxu0
      %6838 = vmatprep.mubr.f32.mxu0 0.0
      %6839 = vmatmul.mubr.f32.gmra.mxu0 %v6624
      %v6840 = vpop.f32.mrf.mxu0
      %v6841 = vadd.f32 0.0, %v6840
      %v6842 = vpop.f32.mrf.mxu0
      %6843 = vmatprep.mubr.f32.mxu0 0.0
      %6844 = vmatmul.mubr.f32.gmra.mxu0 %v6627
      %v6845 = vpop.f32.mrf.mxu0
      %v6846 = vadd.f32 0.0, %v6845
      %v6847 = vpop.f32.mrf.mxu0
      %6848 = vmatprep.mubr.f32.mxu0 0.0
      %6849 = vmatmul.mubr.f32.gmra.mxu0 %v6630
      %v6850 = vpop.f32.mrf.mxu0
      %v6851 = vadd.f32 0.0, %v6850
      %v6852 = vpop.f32.mrf.mxu0
      %6853 = vmatprep.mubr.f32.mxu0 0.0
      %6854 = vmatmul.mubr.f32.gmra.mxu0 %v6633
      %v6855 = vpop.f32.mrf.mxu0
      %v6856 = vadd.f32 0.0, %v6855
      %v6857 = vpop.f32.mrf.mxu0
      %6858 = vmatprep.mubr.f32.mxu0 0.0
      %6859 = vmatmul.mubr.f32.gmra.mxu0 %v6636
      %v6860 = vpop.f32.mrf.mxu0
      %v6861 = vadd.f32 0.0, %v6860
      %v6862 = vpop.f32.mrf.mxu0
      %6863 = vmatprep.mubr.f32.mxu0 0.0
      %6864 = vmatmul.mubr.f32.gmra.mxu0 %v6639
      %v6865 = vpop.f32.mrf.mxu0
      %v6866 = vadd.f32 0.0, %v6865
      %v6867 = vpop.f32.mrf.mxu0
      %6868 = vdwg.mxu0
      %v6869 = vadd.f32 %v6478, %v6711
      %v6870 = vadd.f32 %v6479, %v6716
      %v6871 = vadd.f32 %v6480, %v6721
      %v6872 = vadd.f32 %v6481, %v6726
      %v6873 = vadd.f32 %v6482, %v6731
      %v6874 = vadd.f32 %v6483, %v6736
      %v6875 = vadd.f32 %v6484, %v6741
      %v6876 = vadd.f32 %v6485, %v6746
      %v6877 = vadd.f32 %v6486, %v6751
      %v6878 = vadd.f32 %v6487, %v6756
      %v6879 = vadd.f32 %v6488, %v6761
      %v6880 = vadd.f32 %v6489, %v6766
      %v6881 = vadd.f32 %v6490, %v6771
      %v6882 = vadd.f32 %v6491, %v6776
      %v6883 = vadd.f32 %v6492, %v6781
      %v6884 = vadd.f32 %v6493, %v6786
      %v6885 = vadd.f32 %v6494, %v6791
      %v6886 = vadd.f32 %v6495, %v6796
      %v6887 = vadd.f32 %v6496, %v6801
      %v6888 = vadd.f32 %v6497, %v6806
      %v6889 = vadd.f32 %v6498, %v6811
      %v6890 = vadd.f32 %v6499, %v6816
      %v6891 = vadd.f32 %v6500, %v6821
      %v6892 = vadd.f32 %v6501, %v6826
      %v6893 = vadd.f32 %v6502, %v6831
      %v6894 = vadd.f32 %v6503, %v6836
      %v6895 = vadd.f32 %v6504, %v6841
      %v6896 = vadd.f32 %v6505, %v6846
      %v6897 = vadd.f32 %v6506, %v6851
      %v6898 = vadd.f32 %v6507, %v6856
      %v6899 = vadd.f32 %v6508, %v6861
      %v6900 = vadd.f32 %v6509, %v6866
      %v6901 = vld [vmem:[%s2952 + $0x1] sm:$0xff]
      %v6902 = vld [vmem:[%s2952 + $0x9] sm:$0xff]
      %v6903 = vld [vmem:[%s2952 + $0x19] sm:$0xff]
      %v6904 = vld [vmem:[%s2952 + $0x21] sm:$0xff]
      %v6905 = vld [vmem:[%s2952 + $0x31] sm:$0xff]
      %v6906 = vld [vmem:[%s2952 + $0x39] sm:$0xff]
      %v6907 = vld [vmem:[%s2952 + $0x49] sm:$0xff]
      %v6908 = vld [vmem:[%s2952 + $0x51] sm:$0xff]
      %v6909 = vld [vmem:[%s2952 + $0x61] sm:$0xff]
      %v6910 = vld [vmem:[%s2952 + $0x69] sm:$0xff]
      %v6911 = vld [vmem:[%s2952 + $0x79] sm:$0xff]
      %v6912 = vld [vmem:[%s2952 + $0x81] sm:$0xff]
      %v6913 = vld [vmem:[%s2952 + $0x91] sm:$0xff]
      %v6914 = vld [vmem:[%s2952 + $0x99] sm:$0xff]
      %v6915 = vld [vmem:[%s2952 + $0xa9] sm:$0xff]
      %v6916 = vld [vmem:[%s2952 + $0xb1] sm:$0xff]
      %v6917 = vld [vmem:[%s2952 + $0xc1] sm:$0xff]
      %v6918 = vld [vmem:[%s2952 + $0xc9] sm:$0xff]
      %v6919 = vld [vmem:[%s2952 + $0xd9] sm:$0xff]
      %v6920 = vld [vmem:[%s2952 + $0xe1] sm:$0xff]
      %v6921 = vld [vmem:[%s2952 + $0xf1] sm:$0xff]
      %v6922 = vld [vmem:[%s2952 + $0xf9] sm:$0xff]
      %v6923 = vld [vmem:[%s2952 + $0x109] sm:$0xff]
      %v6924 = vld [vmem:[%s2952 + $0x111] sm:$0xff]
      %v6925 = vld [vmem:[%s2952 + $0x121] sm:$0xff]
      %v6926 = vld [vmem:[%s2952 + $0x129] sm:$0xff]
      %v6927 = vld [vmem:[%s2952 + $0x139] sm:$0xff]
      %v6928 = vld [vmem:[%s2952 + $0x141] sm:$0xff]
      %v6929 = vld [vmem:[%s2952 + $0x151] sm:$0xff]
      %v6930 = vld [vmem:[%s2952 + $0x159] sm:$0xff]
      %v6931 = vld [vmem:[%s2952 + $0x169] sm:$0xff]
      %v6932 = vld [vmem:[%s2952 + $0x171] sm:$0xff]
      %s6933 = scalar_lea.vmem %s3, 112
      %v6934 = vld [vmem:[%s6933] sm:$0xff]
      %v6935 = vld [vmem:[%s6933 + $0x8] sm:$0x3]
      %v6937 = vsel %vm549, %v6901, 0
      %v6940 = vsel %vm549, %v6902, 0
      %v6943 = vsel %vm549, %v6903, 0
      %v6946 = vsel %vm549, %v6904, 0
      %v6949 = vsel %vm549, %v6905, 0
      %v6952 = vsel %vm549, %v6906, 0
      %v6955 = vsel %vm549, %v6907, 0
      %v6958 = vsel %vm549, %v6908, 0
      %v6961 = vsel %vm549, %v6909, 0
      %v6964 = vsel %vm549, %v6910, 0
      %v6967 = vsel %vm549, %v6911, 0
      %v6970 = vsel %vm549, %v6912, 0
      %v6973 = vsel %vm549, %v6913, 0
      %v6976 = vsel %vm549, %v6914, 0
      %v6979 = vsel %vm549, %v6915, 0
      %v6982 = vsel %vm549, %v6916, 0
      %v6985 = vsel %vm549, %v6917, 0
      %v6988 = vsel %vm549, %v6918, 0
      %v6991 = vsel %vm549, %v6919, 0
      %v6994 = vsel %vm549, %v6920, 0
      %v6997 = vsel %vm549, %v6921, 0
      %v7000 = vsel %vm549, %v6922, 0
      %v7003 = vsel %vm549, %v6923, 0
      %v7006 = vsel %vm549, %v6924, 0
      %v7009 = vsel %vm549, %v6925, 0
      %v7012 = vsel %vm549, %v6926, 0
      %v7015 = vsel %vm549, %v6927, 0
      %v7018 = vsel %vm549, %v6928, 0
      %v7021 = vsel %vm549, %v6929, 0
      %v7024 = vsel %vm549, %v6930, 0
      %v7027 = vsel %vm549, %v6931, 0
      %v7030 = vsel %vm549, %v6932, 0
      %v7033 = vsel %vm835, %v6935, 0
      %7035 = vmatprep.subr.mxu0 0.0
      %7036 = vmatpush1.msra.mxu0 0.0
      %7037 = vmatprep.subr.mxu0 0.0
      %7038 = vmatpush1.msra.mxu0 0.0
      %7039 = vmatprep.subr.mxu0 0.0
      %7040 = vmatpush1.msra.mxu0 0.0
      %7041 = vmatprep.subr.mxu0 0.0
      %7042 = vmatpush1.msra.mxu0 0.0
      %7043 = vmatprep.subr.mxu0 0.0
      %7044 = vmatpush1.msra.mxu0 0.0
      %7045 = vmatprep.subr.mxu0 0.0
      %7046 = vmatpush1.msra.mxu0 0.0
      %7047 = vmatprep.subr.mxu0 0.0
      %7048 = vmatpush1.msra.mxu0 0.0
      %7049 = vmatprep.subr.mxu0 0.0
      %7050 = vmatpush1.msra.mxu0 0.0
      %7051 = vmatprep.subr.mxu0 0.0
      %7052 = vmatpush1.msra.mxu0 0.0
      %7053 = vmatprep.subr.mxu0 0.0
      %7054 = vmatpush1.msra.mxu0 0.0
      %7055 = vmatprep.subr.mxu0 0.0
      %7056 = vmatpush1.msra.mxu0 0.0
      %7057 = vmatprep.subr.mxu0 0.0
      %7058 = vmatpush1.msra.mxu0 0.0
      %7059 = vmatprep.subr.mxu0 0.0
      %7060 = vmatpush1.msra.mxu0 0.0
      %7061 = vmatprep.subr.mxu0 0.0
      %7062 = vmatpush1.msra.mxu0 0.0
      %7063 = vmatprep.subr.mxu0 0.0
      %7064 = vmatpush1.msra.mxu0 %v7033
      %7065 = vmatprep.subr.mxu0 0.0
      %7066 = vmatpush1.msra.mxu0 %v6934
      %7067 = vmatprep.subr.mxu0 0.0
      %7068 = vmatpush2.msra.mxu0 0.0
      %7069 = vmatprep.subr.mxu0 0.0
      %7070 = vmatpush2.msra.mxu0 0.0
      %7071 = vmatprep.subr.mxu0 0.0
      %7072 = vmatpush2.msra.mxu0 0.0
      %7073 = vmatprep.subr.mxu0 0.0
      %7074 = vmatpush2.msra.mxu0 0.0
      %7075 = vmatprep.subr.mxu0 0.0
      %7076 = vmatpush2.msra.mxu0 0.0
      %7077 = vmatprep.subr.mxu0 0.0
      %7078 = vmatpush2.msra.mxu0 0.0
      %7079 = vmatprep.subr.mxu0 0.0
      %7080 = vmatpush2.msra.mxu0 0.0
      %7081 = vmatprep.subr.mxu0 0.0
      %7082 = vmatpush2.msra.mxu0 0.0
      %7083 = vmatprep.subr.mxu0 0.0
      %7084 = vmatpush2.msra.mxu0 0.0
      %7085 = vmatprep.subr.mxu0 0.0
      %7086 = vmatpush2.msra.mxu0 0.0
      %7087 = vmatprep.subr.mxu0 0.0
      %7088 = vmatpush2.msra.mxu0 0.0
      %7089 = vmatprep.subr.mxu0 0.0
      %7090 = vmatpush2.msra.mxu0 0.0
      %7091 = vmatprep.subr.mxu0 0.0
      %7092 = vmatpush2.msra.mxu0 0.0
      %7093 = vmatprep.subr.mxu0 0.0
      %7094 = vmatpush2.msra.mxu0 0.0
      %7095 = vmatprep.subr.mxu0 0.0
      %7096 = vmatpush2.msra.mxu0 0.0
      %7097 = vmatprep.subr.mxu0 0.0
      %7098 = vmatpush2.msra.mxu0 0.0
      %7099 = vmatprep.mubr.f32.mxu0 0.0
      %7100 = vmatmul.mubr.f32.gmra.mxu0 %v6937
      %v7101 = vpop.f32.mrf.mxu0
      %v7102 = vadd.f32 0.0, %v7101
      %v7103 = vpop.f32.mrf.mxu0
      %7104 = vmatprep.mubr.f32.mxu0 0.0
      %7105 = vmatmul.mubr.f32.gmra.mxu0 %v6940
      %v7106 = vpop.f32.mrf.mxu0
      %v7107 = vadd.f32 0.0, %v7106
      %v7108 = vpop.f32.mrf.mxu0
      %7109 = vmatprep.mubr.f32.mxu0 0.0
      %7110 = vmatmul.mubr.f32.gmra.mxu0 %v6943
      %v7111 = vpop.f32.mrf.mxu0
      %v7112 = vadd.f32 0.0, %v7111
      %v7113 = vpop.f32.mrf.mxu0
      %7114 = vmatprep.mubr.f32.mxu0 0.0
      %7115 = vmatmul.mubr.f32.gmra.mxu0 %v6946
      %v7116 = vpop.f32.mrf.mxu0
      %v7117 = vadd.f32 0.0, %v7116
      %v7118 = vpop.f32.mrf.mxu0
      %7119 = vmatprep.mubr.f32.mxu0 0.0
      %7120 = vmatmul.mubr.f32.gmra.mxu0 %v6949
      %v7121 = vpop.f32.mrf.mxu0
      %v7122 = vadd.f32 0.0, %v7121
      %v7123 = vpop.f32.mrf.mxu0
      %7124 = vmatprep.mubr.f32.mxu0 0.0
      %7125 = vmatmul.mubr.f32.gmra.mxu0 %v6952
      %v7126 = vpop.f32.mrf.mxu0
      %v7127 = vadd.f32 0.0, %v7126
      %v7128 = vpop.f32.mrf.mxu0
      %7129 = vmatprep.mubr.f32.mxu0 0.0
      %7130 = vmatmul.mubr.f32.gmra.mxu0 %v6955
      %v7131 = vpop.f32.mrf.mxu0
      %v7132 = vadd.f32 0.0, %v7131
      %v7133 = vpop.f32.mrf.mxu0
      %7134 = vmatprep.mubr.f32.mxu0 0.0
      %7135 = vmatmul.mubr.f32.gmra.mxu0 %v6958
      %v7136 = vpop.f32.mrf.mxu0
      %v7137 = vadd.f32 0.0, %v7136
      %v7138 = vpop.f32.mrf.mxu0
      %7139 = vmatprep.mubr.f32.mxu0 0.0
      %7140 = vmatmul.mubr.f32.gmra.mxu0 %v6961
      %v7141 = vpop.f32.mrf.mxu0
      %v7142 = vadd.f32 0.0, %v7141
      %v7143 = vpop.f32.mrf.mxu0
      %7144 = vmatprep.mubr.f32.mxu0 0.0
      %7145 = vmatmul.mubr.f32.gmra.mxu0 %v6964
      %v7146 = vpop.f32.mrf.mxu0
      %v7147 = vadd.f32 0.0, %v7146
      %v7148 = vpop.f32.mrf.mxu0
      %7149 = vmatprep.mubr.f32.mxu0 0.0
      %7150 = vmatmul.mubr.f32.gmra.mxu0 %v6967
      %v7151 = vpop.f32.mrf.mxu0
      %v7152 = vadd.f32 0.0, %v7151
      %v7153 = vpop.f32.mrf.mxu0
      %7154 = vmatprep.mubr.f32.mxu0 0.0
      %7155 = vmatmul.mubr.f32.gmra.mxu0 %v6970
      %v7156 = vpop.f32.mrf.mxu0
      %v7157 = vadd.f32 0.0, %v7156
      %v7158 = vpop.f32.mrf.mxu0
      %7159 = vmatprep.mubr.f32.mxu0 0.0
      %7160 = vmatmul.mubr.f32.gmra.mxu0 %v6973
      %v7161 = vpop.f32.mrf.mxu0
      %v7162 = vadd.f32 0.0, %v7161
      %v7163 = vpop.f32.mrf.mxu0
      %7164 = vmatprep.mubr.f32.mxu0 0.0
      %7165 = vmatmul.mubr.f32.gmra.mxu0 %v6976
      %v7166 = vpop.f32.mrf.mxu0
      %v7167 = vadd.f32 0.0, %v7166
      %v7168 = vpop.f32.mrf.mxu0
      %7169 = vmatprep.mubr.f32.mxu0 0.0
      %7170 = vmatmul.mubr.f32.gmra.mxu0 %v6979
      %v7171 = vpop.f32.mrf.mxu0
      %v7172 = vadd.f32 0.0, %v7171
      %v7173 = vpop.f32.mrf.mxu0
      %7174 = vmatprep.mubr.f32.mxu0 0.0
      %7175 = vmatmul.mubr.f32.gmra.mxu0 %v6982
      %v7176 = vpop.f32.mrf.mxu0
      %v7177 = vadd.f32 0.0, %v7176
      %v7178 = vpop.f32.mrf.mxu0
      %7179 = vmatprep.mubr.f32.mxu0 0.0
      %7180 = vmatmul.mubr.f32.gmra.mxu0 %v6985
      %v7181 = vpop.f32.mrf.mxu0
      %v7182 = vadd.f32 0.0, %v7181
      %v7183 = vpop.f32.mrf.mxu0
      %7184 = vmatprep.mubr.f32.mxu0 0.0
      %7185 = vmatmul.mubr.f32.gmra.mxu0 %v6988
      %v7186 = vpop.f32.mrf.mxu0
      %v7187 = vadd.f32 0.0, %v7186
      %v7188 = vpop.f32.mrf.mxu0
      %7189 = vmatprep.mubr.f32.mxu0 0.0
      %7190 = vmatmul.mubr.f32.gmra.mxu0 %v6991
      %v7191 = vpop.f32.mrf.mxu0
      %v7192 = vadd.f32 0.0, %v7191
      %v7193 = vpop.f32.mrf.mxu0
      %7194 = vmatprep.mubr.f32.mxu0 0.0
      %7195 = vmatmul.mubr.f32.gmra.mxu0 %v6994
      %v7196 = vpop.f32.mrf.mxu0
      %v7197 = vadd.f32 0.0, %v7196
      %v7198 = vpop.f32.mrf.mxu0
      %7199 = vmatprep.mubr.f32.mxu0 0.0
      %7200 = vmatmul.mubr.f32.gmra.mxu0 %v6997
      %v7201 = vpop.f32.mrf.mxu0
      %v7202 = vadd.f32 0.0, %v7201
      %v7203 = vpop.f32.mrf.mxu0
      %7204 = vmatprep.mubr.f32.mxu0 0.0
      %7205 = vmatmul.mubr.f32.gmra.mxu0 %v7000
      %v7206 = vpop.f32.mrf.mxu0
      %v7207 = vadd.f32 0.0, %v7206
      %v7208 = vpop.f32.mrf.mxu0
      %7209 = vmatprep.mubr.f32.mxu0 0.0
      %7210 = vmatmul.mubr.f32.gmra.mxu0 %v7003
      %v7211 = vpop.f32.mrf.mxu0
      %v7212 = vadd.f32 0.0, %v7211
      %v7213 = vpop.f32.mrf.mxu0
      %7214 = vmatprep.mubr.f32.mxu0 0.0
      %7215 = vmatmul.mubr.f32.gmra.mxu0 %v7006
      %v7216 = vpop.f32.mrf.mxu0
      %v7217 = vadd.f32 0.0, %v7216
      %v7218 = vpop.f32.mrf.mxu0
      %7219 = vmatprep.mubr.f32.mxu0 0.0
      %7220 = vmatmul.mubr.f32.gmra.mxu0 %v7009
      %v7221 = vpop.f32.mrf.mxu0
      %v7222 = vadd.f32 0.0, %v7221
      %v7223 = vpop.f32.mrf.mxu0
      %7224 = vmatprep.mubr.f32.mxu0 0.0
      %7225 = vmatmul.mubr.f32.gmra.mxu0 %v7012
      %v7226 = vpop.f32.mrf.mxu0
      %v7227 = vadd.f32 0.0, %v7226
      %v7228 = vpop.f32.mrf.mxu0
      %7229 = vmatprep.mubr.f32.mxu0 0.0
      %7230 = vmatmul.mubr.f32.gmra.mxu0 %v7015
      %v7231 = vpop.f32.mrf.mxu0
      %v7232 = vadd.f32 0.0, %v7231
      %v7233 = vpop.f32.mrf.mxu0
      %7234 = vmatprep.mubr.f32.mxu0 0.0
      %7235 = vmatmul.mubr.f32.gmra.mxu0 %v7018
      %v7236 = vpop.f32.mrf.mxu0
      %v7237 = vadd.f32 0.0, %v7236
      %v7238 = vpop.f32.mrf.mxu0
      %7239 = vmatprep.mubr.f32.mxu0 0.0
      %7240 = vmatmul.mubr.f32.gmra.mxu0 %v7021
      %v7241 = vpop.f32.mrf.mxu0
      %v7242 = vadd.f32 0.0, %v7241
      %v7243 = vpop.f32.mrf.mxu0
      %7244 = vmatprep.mubr.f32.mxu0 0.0
      %7245 = vmatmul.mubr.f32.gmra.mxu0 %v7024
      %v7246 = vpop.f32.mrf.mxu0
      %v7247 = vadd.f32 0.0, %v7246
      %v7248 = vpop.f32.mrf.mxu0
      %7249 = vmatprep.mubr.f32.mxu0 0.0
      %7250 = vmatmul.mubr.f32.gmra.mxu0 %v7027
      %v7251 = vpop.f32.mrf.mxu0
      %v7252 = vadd.f32 0.0, %v7251
      %v7253 = vpop.f32.mrf.mxu0
      %7254 = vmatprep.mubr.f32.mxu0 0.0
      %7255 = vmatmul.mubr.f32.gmra.mxu0 %v7030
      %v7256 = vpop.f32.mrf.mxu0
      %v7257 = vadd.f32 0.0, %v7256
      %v7258 = vpop.f32.mrf.mxu0
      %7259 = vdwg.mxu0
      %v7260 = vadd.f32 %v6869, %v7102
      %v7261 = vadd.f32 %v6870, %v7107
      %v7262 = vadd.f32 %v6871, %v7112
      %v7263 = vadd.f32 %v6872, %v7117
      %v7264 = vadd.f32 %v6873, %v7122
      %v7265 = vadd.f32 %v6874, %v7127
      %v7266 = vadd.f32 %v6875, %v7132
      %v7267 = vadd.f32 %v6876, %v7137
      %v7268 = vadd.f32 %v6877, %v7142
      %v7269 = vadd.f32 %v6878, %v7147
      %v7270 = vadd.f32 %v6879, %v7152
      %v7271 = vadd.f32 %v6880, %v7157
      %v7272 = vadd.f32 %v6881, %v7162
      %v7273 = vadd.f32 %v6882, %v7167
      %v7274 = vadd.f32 %v6883, %v7172
      %v7275 = vadd.f32 %v6884, %v7177
      %v7276 = vadd.f32 %v6885, %v7182
      %v7277 = vadd.f32 %v6886, %v7187
      %v7278 = vadd.f32 %v6887, %v7192
      %v7279 = vadd.f32 %v6888, %v7197
      %v7280 = vadd.f32 %v6889, %v7202
      %v7281 = vadd.f32 %v6890, %v7207
      %v7282 = vadd.f32 %v6891, %v7212
      %v7283 = vadd.f32 %v6892, %v7217
      %v7284 = vadd.f32 %v6893, %v7222
      %v7285 = vadd.f32 %v6894, %v7227
      %v7286 = vadd.f32 %v6895, %v7232
      %v7287 = vadd.f32 %v6896, %v7237
      %v7288 = vadd.f32 %v6897, %v7242
      %v7289 = vadd.f32 %v6898, %v7247
      %v7290 = vadd.f32 %v6899, %v7252
      %v7291 = vadd.f32 %v6900, %v7257
      %v7292 = vld [vmem:[%s2952 + $0x2] sm:$0xff]
      %v7293 = vld [vmem:[%s2952 + $0xa] sm:$0xff]
      %v7294 = vld [vmem:[%s2952 + $0x1a] sm:$0xff]
      %v7295 = vld [vmem:[%s2952 + $0x22] sm:$0xff]
      %v7296 = vld [vmem:[%s2952 + $0x32] sm:$0xff]
      %v7297 = vld [vmem:[%s2952 + $0x3a] sm:$0xff]
      %v7298 = vld [vmem:[%s2952 + $0x4a] sm:$0xff]
      %v7299 = vld [vmem:[%s2952 + $0x52] sm:$0xff]
      %v7300 = vld [vmem:[%s2952 + $0x62] sm:$0xff]
      %v7301 = vld [vmem:[%s2952 + $0x6a] sm:$0xff]
      %v7302 = vld [vmem:[%s2952 + $0x7a] sm:$0xff]
      %v7303 = vld [vmem:[%s2952 + $0x82] sm:$0xff]
      %v7304 = vld [vmem:[%s2952 + $0x92] sm:$0xff]
      %v7305 = vld [vmem:[%s2952 + $0x9a] sm:$0xff]
      %v7306 = vld [vmem:[%s2952 + $0xaa] sm:$0xff]
      %v7307 = vld [vmem:[%s2952 + $0xb2] sm:$0xff]
      %v7308 = vld [vmem:[%s2952 + $0xc2] sm:$0xff]
      %v7309 = vld [vmem:[%s2952 + $0xca] sm:$0xff]
      %v7310 = vld [vmem:[%s2952 + $0xda] sm:$0xff]
      %v7311 = vld [vmem:[%s2952 + $0xe2] sm:$0xff]
      %v7312 = vld [vmem:[%s2952 + $0xf2] sm:$0xff]
      %v7313 = vld [vmem:[%s2952 + $0xfa] sm:$0xff]
      %v7314 = vld [vmem:[%s2952 + $0x10a] sm:$0xff]
      %v7315 = vld [vmem:[%s2952 + $0x112] sm:$0xff]
      %v7316 = vld [vmem:[%s2952 + $0x122] sm:$0xff]
      %v7317 = vld [vmem:[%s2952 + $0x12a] sm:$0xff]
      %v7318 = vld [vmem:[%s2952 + $0x13a] sm:$0xff]
      %v7319 = vld [vmem:[%s2952 + $0x142] sm:$0xff]
      %v7320 = vld [vmem:[%s2952 + $0x152] sm:$0xff]
      %v7321 = vld [vmem:[%s2952 + $0x15a] sm:$0xff]
      %v7322 = vld [vmem:[%s2952 + $0x16a] sm:$0xff]
      %v7323 = vld [vmem:[%s2952 + $0x172] sm:$0xff]
      %s7324 = scalar_lea.vmem %s3, 128
      %v7325 = vld [vmem:[%s7324] sm:$0xff]
      %v7326 = vld [vmem:[%s7324 + $0x8] sm:$0x3]
      %v7328 = vsel %vm549, %v7292, 0
      %v7331 = vsel %vm549, %v7293, 0
      %v7334 = vsel %vm549, %v7294, 0
      %v7337 = vsel %vm549, %v7295, 0
      %v7340 = vsel %vm549, %v7296, 0
      %v7343 = vsel %vm549, %v7297, 0
      %v7346 = vsel %vm549, %v7298, 0
      %v7349 = vsel %vm549, %v7299, 0
      %v7352 = vsel %vm549, %v7300, 0
      %v7355 = vsel %vm549, %v7301, 0
      %v7358 = vsel %vm549, %v7302, 0
      %v7361 = vsel %vm549, %v7303, 0
      %v7364 = vsel %vm549, %v7304, 0
      %v7367 = vsel %vm549, %v7305, 0
      %v7370 = vsel %vm549, %v7306, 0
      %v7373 = vsel %vm549, %v7307, 0
      %v7376 = vsel %vm549, %v7308, 0
      %v7379 = vsel %vm549, %v7309, 0
      %v7382 = vsel %vm549, %v7310, 0
      %v7385 = vsel %vm549, %v7311, 0
      %v7388 = vsel %vm549, %v7312, 0
      %v7391 = vsel %vm549, %v7313, 0
      %v7394 = vsel %vm549, %v7314, 0
      %v7397 = vsel %vm549, %v7315, 0
      %v7400 = vsel %vm549, %v7316, 0
      %v7403 = vsel %vm549, %v7317, 0
      %v7406 = vsel %vm549, %v7318, 0
      %v7409 = vsel %vm549, %v7319, 0
      %v7412 = vsel %vm549, %v7320, 0
      %v7415 = vsel %vm549, %v7321, 0
      %v7418 = vsel %vm549, %v7322, 0
      %v7421 = vsel %vm549, %v7323, 0
      %v7424 = vsel %vm835, %v7326, 0
      %7426 = vmatprep.subr.mxu0 0.0
      %7427 = vmatpush1.msra.mxu0 0.0
      %7428 = vmatprep.subr.mxu0 0.0
      %7429 = vmatpush1.msra.mxu0 0.0
      %7430 = vmatprep.subr.mxu0 0.0
      %7431 = vmatpush1.msra.mxu0 0.0
      %7432 = vmatprep.subr.mxu0 0.0
      %7433 = vmatpush1.msra.mxu0 0.0
      %7434 = vmatprep.subr.mxu0 0.0
      %7435 = vmatpush1.msra.mxu0 0.0
      %7436 = vmatprep.subr.mxu0 0.0
      %7437 = vmatpush1.msra.mxu0 0.0
      %7438 = vmatprep.subr.mxu0 0.0
      %7439 = vmatpush1.msra.mxu0 0.0
      %7440 = vmatprep.subr.mxu0 0.0
      %7441 = vmatpush1.msra.mxu0 0.0
      %7442 = vmatprep.subr.mxu0 0.0
      %7443 = vmatpush1.msra.mxu0 0.0
      %7444 = vmatprep.subr.mxu0 0.0
      %7445 = vmatpush1.msra.mxu0 0.0
      %7446 = vmatprep.subr.mxu0 0.0
      %7447 = vmatpush1.msra.mxu0 0.0
      %7448 = vmatprep.subr.mxu0 0.0
      %7449 = vmatpush1.msra.mxu0 0.0
      %7450 = vmatprep.subr.mxu0 0.0
      %7451 = vmatpush1.msra.mxu0 0.0
      %7452 = vmatprep.subr.mxu0 0.0
      %7453 = vmatpush1.msra.mxu0 0.0
      %7454 = vmatprep.subr.mxu0 0.0
      %7455 = vmatpush1.msra.mxu0 %v7424
      %7456 = vmatprep.subr.mxu0 0.0
      %7457 = vmatpush1.msra.mxu0 %v7325
      %7458 = vmatprep.subr.mxu0 0.0
      %7459 = vmatpush2.msra.mxu0 0.0
      %7460 = vmatprep.subr.mxu0 0.0
      %7461 = vmatpush2.msra.mxu0 0.0
      %7462 = vmatprep.subr.mxu0 0.0
      %7463 = vmatpush2.msra.mxu0 0.0
      %7464 = vmatprep.subr.mxu0 0.0
      %7465 = vmatpush2.msra.mxu0 0.0
      %7466 = vmatprep.subr.mxu0 0.0
      %7467 = vmatpush2.msra.mxu0 0.0
      %7468 = vmatprep.subr.mxu0 0.0
      %7469 = vmatpush2.msra.mxu0 0.0
      %7470 = vmatprep.subr.mxu0 0.0
      %7471 = vmatpush2.msra.mxu0 0.0
      %7472 = vmatprep.subr.mxu0 0.0
      %7473 = vmatpush2.msra.mxu0 0.0
      %7474 = vmatprep.subr.mxu0 0.0
      %7475 = vmatpush2.msra.mxu0 0.0
      %7476 = vmatprep.subr.mxu0 0.0
      %7477 = vmatpush2.msra.mxu0 0.0
      %7478 = vmatprep.subr.mxu0 0.0
      %7479 = vmatpush2.msra.mxu0 0.0
      %7480 = vmatprep.subr.mxu0 0.0
      %7481 = vmatpush2.msra.mxu0 0.0
      %7482 = vmatprep.subr.mxu0 0.0
      %7483 = vmatpush2.msra.mxu0 0.0
      %7484 = vmatprep.subr.mxu0 0.0
      %7485 = vmatpush2.msra.mxu0 0.0
      %7486 = vmatprep.subr.mxu0 0.0
      %7487 = vmatpush2.msra.mxu0 0.0
      %7488 = vmatprep.subr.mxu0 0.0
      %7489 = vmatpush2.msra.mxu0 0.0
      %7490 = vmatprep.mubr.f32.mxu0 0.0
      %7491 = vmatmul.mubr.f32.gmra.mxu0 %v7328
      %v7492 = vpop.f32.mrf.mxu0
      %v7493 = vadd.f32 0.0, %v7492
      %v7494 = vpop.f32.mrf.mxu0
      %7495 = vmatprep.mubr.f32.mxu0 0.0
      %7496 = vmatmul.mubr.f32.gmra.mxu0 %v7331
      %v7497 = vpop.f32.mrf.mxu0
      %v7498 = vadd.f32 0.0, %v7497
      %v7499 = vpop.f32.mrf.mxu0
      %7500 = vmatprep.mubr.f32.mxu0 0.0
      %7501 = vmatmul.mubr.f32.gmra.mxu0 %v7334
      %v7502 = vpop.f32.mrf.mxu0
      %v7503 = vadd.f32 0.0, %v7502
      %v7504 = vpop.f32.mrf.mxu0
      %7505 = vmatprep.mubr.f32.mxu0 0.0
      %7506 = vmatmul.mubr.f32.gmra.mxu0 %v7337
      %v7507 = vpop.f32.mrf.mxu0
      %v7508 = vadd.f32 0.0, %v7507
      %v7509 = vpop.f32.mrf.mxu0
      %7510 = vmatprep.mubr.f32.mxu0 0.0
      %7511 = vmatmul.mubr.f32.gmra.mxu0 %v7340
      %v7512 = vpop.f32.mrf.mxu0
      %v7513 = vadd.f32 0.0, %v7512
      %v7514 = vpop.f32.mrf.mxu0
      %7515 = vmatprep.mubr.f32.mxu0 0.0
      %7516 = vmatmul.mubr.f32.gmra.mxu0 %v7343
      %v7517 = vpop.f32.mrf.mxu0
      %v7518 = vadd.f32 0.0, %v7517
      %v7519 = vpop.f32.mrf.mxu0
      %7520 = vmatprep.mubr.f32.mxu0 0.0
      %7521 = vmatmul.mubr.f32.gmra.mxu0 %v7346
      %v7522 = vpop.f32.mrf.mxu0
      %v7523 = vadd.f32 0.0, %v7522
      %v7524 = vpop.f32.mrf.mxu0
      %7525 = vmatprep.mubr.f32.mxu0 0.0
      %7526 = vmatmul.mubr.f32.gmra.mxu0 %v7349
      %v7527 = vpop.f32.mrf.mxu0
      %v7528 = vadd.f32 0.0, %v7527
      %v7529 = vpop.f32.mrf.mxu0
      %7530 = vmatprep.mubr.f32.mxu0 0.0
      %7531 = vmatmul.mubr.f32.gmra.mxu0 %v7352
      %v7532 = vpop.f32.mrf.mxu0
      %v7533 = vadd.f32 0.0, %v7532
      %v7534 = vpop.f32.mrf.mxu0
      %7535 = vmatprep.mubr.f32.mxu0 0.0
      %7536 = vmatmul.mubr.f32.gmra.mxu0 %v7355
      %v7537 = vpop.f32.mrf.mxu0
      %v7538 = vadd.f32 0.0, %v7537
      %v7539 = vpop.f32.mrf.mxu0
      %7540 = vmatprep.mubr.f32.mxu0 0.0
      %7541 = vmatmul.mubr.f32.gmra.mxu0 %v7358
      %v7542 = vpop.f32.mrf.mxu0
      %v7543 = vadd.f32 0.0, %v7542
      %v7544 = vpop.f32.mrf.mxu0
      %7545 = vmatprep.mubr.f32.mxu0 0.0
      %7546 = vmatmul.mubr.f32.gmra.mxu0 %v7361
      %v7547 = vpop.f32.mrf.mxu0
      %v7548 = vadd.f32 0.0, %v7547
      %v7549 = vpop.f32.mrf.mxu0
      %7550 = vmatprep.mubr.f32.mxu0 0.0
      %7551 = vmatmul.mubr.f32.gmra.mxu0 %v7364
      %v7552 = vpop.f32.mrf.mxu0
      %v7553 = vadd.f32 0.0, %v7552
      %v7554 = vpop.f32.mrf.mxu0
      %7555 = vmatprep.mubr.f32.mxu0 0.0
      %7556 = vmatmul.mubr.f32.gmra.mxu0 %v7367
      %v7557 = vpop.f32.mrf.mxu0
      %v7558 = vadd.f32 0.0, %v7557
      %v7559 = vpop.f32.mrf.mxu0
      %7560 = vmatprep.mubr.f32.mxu0 0.0
      %7561 = vmatmul.mubr.f32.gmra.mxu0 %v7370
      %v7562 = vpop.f32.mrf.mxu0
      %v7563 = vadd.f32 0.0, %v7562
      %v7564 = vpop.f32.mrf.mxu0
      %7565 = vmatprep.mubr.f32.mxu0 0.0
      %7566 = vmatmul.mubr.f32.gmra.mxu0 %v7373
      %v7567 = vpop.f32.mrf.mxu0
      %v7568 = vadd.f32 0.0, %v7567
      %v7569 = vpop.f32.mrf.mxu0
      %7570 = vmatprep.mubr.f32.mxu0 0.0
      %7571 = vmatmul.mubr.f32.gmra.mxu0 %v7376
      %v7572 = vpop.f32.mrf.mxu0
      %v7573 = vadd.f32 0.0, %v7572
      %v7574 = vpop.f32.mrf.mxu0
      %7575 = vmatprep.mubr.f32.mxu0 0.0
      %7576 = vmatmul.mubr.f32.gmra.mxu0 %v7379
      %v7577 = vpop.f32.mrf.mxu0
      %v7578 = vadd.f32 0.0, %v7577
      %v7579 = vpop.f32.mrf.mxu0
      %7580 = vmatprep.mubr.f32.mxu0 0.0
      %7581 = vmatmul.mubr.f32.gmra.mxu0 %v7382
      %v7582 = vpop.f32.mrf.mxu0
      %v7583 = vadd.f32 0.0, %v7582
      %v7584 = vpop.f32.mrf.mxu0
      %7585 = vmatprep.mubr.f32.mxu0 0.0
      %7586 = vmatmul.mubr.f32.gmra.mxu0 %v7385
      %v7587 = vpop.f32.mrf.mxu0
      %v7588 = vadd.f32 0.0, %v7587
      %v7589 = vpop.f32.mrf.mxu0
      %7590 = vmatprep.mubr.f32.mxu0 0.0
      %7591 = vmatmul.mubr.f32.gmra.mxu0 %v7388
      %v7592 = vpop.f32.mrf.mxu0
      %v7593 = vadd.f32 0.0, %v7592
      %v7594 = vpop.f32.mrf.mxu0
      %7595 = vmatprep.mubr.f32.mxu0 0.0
      %7596 = vmatmul.mubr.f32.gmra.mxu0 %v7391
      %v7597 = vpop.f32.mrf.mxu0
      %v7598 = vadd.f32 0.0, %v7597
      %v7599 = vpop.f32.mrf.mxu0
      %7600 = vmatprep.mubr.f32.mxu0 0.0
      %7601 = vmatmul.mubr.f32.gmra.mxu0 %v7394
      %v7602 = vpop.f32.mrf.mxu0
      %v7603 = vadd.f32 0.0, %v7602
      %v7604 = vpop.f32.mrf.mxu0
      %7605 = vmatprep.mubr.f32.mxu0 0.0
      %7606 = vmatmul.mubr.f32.gmra.mxu0 %v7397
      %v7607 = vpop.f32.mrf.mxu0
      %v7608 = vadd.f32 0.0, %v7607
      %v7609 = vpop.f32.mrf.mxu0
      %7610 = vmatprep.mubr.f32.mxu0 0.0
      %7611 = vmatmul.mubr.f32.gmra.mxu0 %v7400
      %v7612 = vpop.f32.mrf.mxu0
      %v7613 = vadd.f32 0.0, %v7612
      %v7614 = vpop.f32.mrf.mxu0
      %7615 = vmatprep.mubr.f32.mxu0 0.0
      %7616 = vmatmul.mubr.f32.gmra.mxu0 %v7403
      %v7617 = vpop.f32.mrf.mxu0
      %v7618 = vadd.f32 0.0, %v7617
      %v7619 = vpop.f32.mrf.mxu0
      %7620 = vmatprep.mubr.f32.mxu0 0.0
      %7621 = vmatmul.mubr.f32.gmra.mxu0 %v7406
      %v7622 = vpop.f32.mrf.mxu0
      %v7623 = vadd.f32 0.0, %v7622
      %v7624 = vpop.f32.mrf.mxu0
      %7625 = vmatprep.mubr.f32.mxu0 0.0
      %7626 = vmatmul.mubr.f32.gmra.mxu0 %v7409
      %v7627 = vpop.f32.mrf.mxu0
      %v7628 = vadd.f32 0.0, %v7627
      %v7629 = vpop.f32.mrf.mxu0
      %7630 = vmatprep.mubr.f32.mxu0 0.0
      %7631 = vmatmul.mubr.f32.gmra.mxu0 %v7412
      %v7632 = vpop.f32.mrf.mxu0
      %v7633 = vadd.f32 0.0, %v7632
      %v7634 = vpop.f32.mrf.mxu0
      %7635 = vmatprep.mubr.f32.mxu0 0.0
      %7636 = vmatmul.mubr.f32.gmra.mxu0 %v7415
      %v7637 = vpop.f32.mrf.mxu0
      %v7638 = vadd.f32 0.0, %v7637
      %v7639 = vpop.f32.mrf.mxu0
      %7640 = vmatprep.mubr.f32.mxu0 0.0
      %7641 = vmatmul.mubr.f32.gmra.mxu0 %v7418
      %v7642 = vpop.f32.mrf.mxu0
      %v7643 = vadd.f32 0.0, %v7642
      %v7644 = vpop.f32.mrf.mxu0
      %7645 = vmatprep.mubr.f32.mxu0 0.0
      %7646 = vmatmul.mubr.f32.gmra.mxu0 %v7421
      %v7647 = vpop.f32.mrf.mxu0
      %v7648 = vadd.f32 0.0, %v7647
      %v7649 = vpop.f32.mrf.mxu0
      %7650 = vdwg.mxu0
      %v7651 = vadd.f32 %v7260, %v7493
      %v7652 = vadd.f32 %v7261, %v7498
      %v7653 = vadd.f32 %v7262, %v7503
      %v7654 = vadd.f32 %v7263, %v7508
      %v7655 = vadd.f32 %v7264, %v7513
      %v7656 = vadd.f32 %v7265, %v7518
      %v7657 = vadd.f32 %v7266, %v7523
      %v7658 = vadd.f32 %v7267, %v7528
      %v7659 = vadd.f32 %v7268, %v7533
      %v7660 = vadd.f32 %v7269, %v7538
      %v7661 = vadd.f32 %v7270, %v7543
      %v7662 = vadd.f32 %v7271, %v7548
      %v7663 = vadd.f32 %v7272, %v7553
      %v7664 = vadd.f32 %v7273, %v7558
      %v7665 = vadd.f32 %v7274, %v7563
      %v7666 = vadd.f32 %v7275, %v7568
      %v7667 = vadd.f32 %v7276, %v7573
      %v7668 = vadd.f32 %v7277, %v7578
      %v7669 = vadd.f32 %v7278, %v7583
      %v7670 = vadd.f32 %v7279, %v7588
      %v7671 = vadd.f32 %v7280, %v7593
      %v7672 = vadd.f32 %v7281, %v7598
      %v7673 = vadd.f32 %v7282, %v7603
      %v7674 = vadd.f32 %v7283, %v7608
      %v7675 = vadd.f32 %v7284, %v7613
      %v7676 = vadd.f32 %v7285, %v7618
      %v7677 = vadd.f32 %v7286, %v7623
      %v7678 = vadd.f32 %v7287, %v7628
      %v7679 = vadd.f32 %v7288, %v7633
      %v7680 = vadd.f32 %v7289, %v7638
      %v7681 = vadd.f32 %v7290, %v7643
      %v7682 = vadd.f32 %v7291, %v7648
      %v7683 = vld [vmem:[%s4] sm:$0x1]
      %v7685 = vlaneseq
      %v7686 = vshrl.u32 %v7685, 7
      %v7687 = vsub.s32 0, %v7686
      %v7688 = vrot.slane %v7683, %v7687
      %v7690 = vadd.f32 %v7651, %v7688
      %v7691 = vadd.f32 %v7652, %v7688
      %v7692 = vadd.f32 %v7653, %v7688
      %v7693 = vadd.f32 %v7654, %v7688
      %v7694 = vadd.f32 %v7655, %v7688
      %v7695 = vadd.f32 %v7656, %v7688
      %v7696 = vadd.f32 %v7657, %v7688
      %v7697 = vadd.f32 %v7658, %v7688
      %v7698 = vadd.f32 %v7659, %v7688
      %v7699 = vadd.f32 %v7660, %v7688
      %v7700 = vadd.f32 %v7661, %v7688
      %v7701 = vadd.f32 %v7662, %v7688
      %v7702 = vadd.f32 %v7663, %v7688
      %v7703 = vadd.f32 %v7664, %v7688
      %v7704 = vadd.f32 %v7665, %v7688
      %v7705 = vadd.f32 %v7666, %v7688
      %v7706 = vadd.f32 %v7667, %v7688
      %v7707 = vadd.f32 %v7668, %v7688
      %v7708 = vadd.f32 %v7669, %v7688
      %v7709 = vadd.f32 %v7670, %v7688
      %v7710 = vadd.f32 %v7671, %v7688
      %v7711 = vadd.f32 %v7672, %v7688
      %v7712 = vadd.f32 %v7673, %v7688
      %v7713 = vadd.f32 %v7674, %v7688
      %v7714 = vadd.f32 %v7675, %v7688
      %v7715 = vadd.f32 %v7676, %v7688
      %v7716 = vadd.f32 %v7677, %v7688
      %v7717 = vadd.f32 %v7678, %v7688
      %v7718 = vadd.f32 %v7679, %v7688
      %v7719 = vadd.f32 %v7680, %v7688
      %v7720 = vadd.f32 %v7681, %v7688
      %v7721 = vadd.f32 %v7682, %v7688
      %v7722 = vld [vmem:[%s5] sm:$0xff]
      %v7723 = vld [vmem:[%s5 + $0x8] sm:$0x3]
      %v7724 = vld [vmem:[%s6] sm:$0x1]
      %v7726 = vlaneseq
      %v7727 = vshrl.u32 %v7726, 7
      %v7728 = vsub.s32 0, %v7727
      %v7729 = vrot.slane %v7724, %v7728
      %v7732 = vsel %vm549, %v7690, 0
      %v7735 = vsel %vm549, %v7691, 0
      %v7738 = vsel %vm549, %v7692, 0
      %v7741 = vsel %vm549, %v7693, 0
      %v7744 = vsel %vm549, %v7694, 0
      %v7747 = vsel %vm549, %v7695, 0
      %v7750 = vsel %vm549, %v7696, 0
      %v7753 = vsel %vm549, %v7697, 0
      %v7756 = vsel %vm549, %v7698, 0
      %v7759 = vsel %vm549, %v7699, 0
      %v7762 = vsel %vm549, %v7700, 0
      %v7765 = vsel %vm549, %v7701, 0
      %v7768 = vsel %vm549, %v7702, 0
      %v7771 = vsel %vm549, %v7703, 0
      %v7774 = vsel %vm549, %v7704, 0
      %v7777 = vsel %vm549, %v7705, 0
      %v7780 = vsel %vm549, %v7706, 0
      %v7783 = vsel %vm549, %v7707, 0
      %v7786 = vsel %vm549, %v7708, 0
      %v7789 = vsel %vm549, %v7709, 0
      %v7792 = vsel %vm549, %v7710, 0
      %v7795 = vsel %vm549, %v7711, 0
      %v7798 = vsel %vm549, %v7712, 0
      %v7801 = vsel %vm549, %v7713, 0
      %v7804 = vsel %vm549, %v7714, 0
      %v7807 = vsel %vm549, %v7715, 0
      %v7810 = vsel %vm549, %v7716, 0
      %v7813 = vsel %vm549, %v7717, 0
      %v7816 = vsel %vm549, %v7718, 0
      %v7819 = vsel %vm549, %v7719, 0
      %v7822 = vsel %vm549, %v7720, 0
      %v7825 = vsel %vm549, %v7721, 0
      %v7828 = vsel %vm835, %v7723, 0
      %7830 = vmatprep.subr.mxu0 0.0
      %7831 = vmatpush1.msra.mxu0 0.0
      %7832 = vmatprep.subr.mxu0 0.0
      %7833 = vmatpush1.msra.mxu0 0.0
      %7834 = vmatprep.subr.mxu0 0.0
      %7835 = vmatpush1.msra.mxu0 0.0
      %7836 = vmatprep.subr.mxu0 0.0
      %7837 = vmatpush1.msra.mxu0 0.0
      %7838 = vmatprep.subr.mxu0 0.0
      %7839 = vmatpush1.msra.mxu0 0.0
      %7840 = vmatprep.subr.mxu0 0.0
      %7841 = vmatpush1.msra.mxu0 0.0
      %7842 = vmatprep.subr.mxu0 0.0
      %7843 = vmatpush1.msra.mxu0 0.0
      %7844 = vmatprep.subr.mxu0 0.0
      %7845 = vmatpush1.msra.mxu0 0.0
      %7846 = vmatprep.subr.mxu0 0.0
      %7847 = vmatpush1.msra.mxu0 0.0
      %7848 = vmatprep.subr.mxu0 0.0
      %7849 = vmatpush1.msra.mxu0 0.0
      %7850 = vmatprep.subr.mxu0 0.0
      %7851 = vmatpush1.msra.mxu0 0.0
      %7852 = vmatprep.subr.mxu0 0.0
      %7853 = vmatpush1.msra.mxu0 0.0
      %7854 = vmatprep.subr.mxu0 0.0
      %7855 = vmatpush1.msra.mxu0 0.0
      %7856 = vmatprep.subr.mxu0 0.0
      %7857 = vmatpush1.msra.mxu0 0.0
      %7858 = vmatprep.subr.mxu0 0.0
      %7859 = vmatpush1.msra.mxu0 %v7828
      %7860 = vmatprep.subr.mxu0 0.0
      %7861 = vmatpush1.msra.mxu0 %v7722
      %7862 = vmatprep.subr.mxu0 0.0
      %7863 = vmatpush2.msra.mxu0 0.0
      %7864 = vmatprep.subr.mxu0 0.0
      %7865 = vmatpush2.msra.mxu0 0.0
      %7866 = vmatprep.subr.mxu0 0.0
      %7867 = vmatpush2.msra.mxu0 0.0
      %7868 = vmatprep.subr.mxu0 0.0
      %7869 = vmatpush2.msra.mxu0 0.0
      %7870 = vmatprep.subr.mxu0 0.0
      %7871 = vmatpush2.msra.mxu0 0.0
      %7872 = vmatprep.subr.mxu0 0.0
      %7873 = vmatpush2.msra.mxu0 0.0
      %7874 = vmatprep.subr.mxu0 0.0
      %7875 = vmatpush2.msra.mxu0 0.0
      %7876 = vmatprep.subr.mxu0 0.0
      %7877 = vmatpush2.msra.mxu0 0.0
      %7878 = vmatprep.subr.mxu0 0.0
      %7879 = vmatpush2.msra.mxu0 0.0
      %7880 = vmatprep.subr.mxu0 0.0
      %7881 = vmatpush2.msra.mxu0 0.0
      %7882 = vmatprep.subr.mxu0 0.0
      %7883 = vmatpush2.msra.mxu0 0.0
      %7884 = vmatprep.subr.mxu0 0.0
      %7885 = vmatpush2.msra.mxu0 0.0
      %7886 = vmatprep.subr.mxu0 0.0
      %7887 = vmatpush2.msra.mxu0 0.0
      %7888 = vmatprep.subr.mxu0 0.0
      %7889 = vmatpush2.msra.mxu0 0.0
      %7890 = vmatprep.subr.mxu0 0.0
      %7891 = vmatpush2.msra.mxu0 0.0
      %7892 = vmatprep.subr.mxu0 0.0
      %7893 = vmatpush2.msra.mxu0 0.0
      %7894 = vmatprep.mubr.f32.mxu0 0.0
      %7895 = vmatmul.mubr.f32.gmra.mxu0 %v7732
      %v7896 = vpop.f32.mrf.mxu0
      %v7897 = vadd.f32 %v7729, %v7896
      %v7898 = vpop.f32.mrf.mxu0
      %7899 = vmatprep.mubr.f32.mxu0 0.0
      %7900 = vmatmul.mubr.f32.gmra.mxu0 %v7735
      %v7901 = vpop.f32.mrf.mxu0
      %v7902 = vadd.f32 %v7729, %v7901
      %v7903 = vpop.f32.mrf.mxu0
      %7904 = vmatprep.mubr.f32.mxu0 0.0
      %7905 = vmatmul.mubr.f32.gmra.mxu0 %v7738
      %v7906 = vpop.f32.mrf.mxu0
      %v7907 = vadd.f32 %v7729, %v7906
      %v7908 = vpop.f32.mrf.mxu0
      %7909 = vmatprep.mubr.f32.mxu0 0.0
      %7910 = vmatmul.mubr.f32.gmra.mxu0 %v7741
      %v7911 = vpop.f32.mrf.mxu0
      %v7912 = vadd.f32 %v7729, %v7911
      %v7913 = vpop.f32.mrf.mxu0
      %7914 = vmatprep.mubr.f32.mxu0 0.0
      %7915 = vmatmul.mubr.f32.gmra.mxu0 %v7744
      %v7916 = vpop.f32.mrf.mxu0
      %v7917 = vadd.f32 %v7729, %v7916
      %v7918 = vpop.f32.mrf.mxu0
      %7919 = vmatprep.mubr.f32.mxu0 0.0
      %7920 = vmatmul.mubr.f32.gmra.mxu0 %v7747
      %v7921 = vpop.f32.mrf.mxu0
      %v7922 = vadd.f32 %v7729, %v7921
      %v7923 = vpop.f32.mrf.mxu0
      %7924 = vmatprep.mubr.f32.mxu0 0.0
      %7925 = vmatmul.mubr.f32.gmra.mxu0 %v7750
      %v7926 = vpop.f32.mrf.mxu0
      %v7927 = vadd.f32 %v7729, %v7926
      %v7928 = vpop.f32.mrf.mxu0
      %7929 = vmatprep.mubr.f32.mxu0 0.0
      %7930 = vmatmul.mubr.f32.gmra.mxu0 %v7753
      %v7931 = vpop.f32.mrf.mxu0
      %v7932 = vadd.f32 %v7729, %v7931
      %v7933 = vpop.f32.mrf.mxu0
      %7934 = vmatprep.mubr.f32.mxu0 0.0
      %7935 = vmatmul.mubr.f32.gmra.mxu0 %v7756
      %v7936 = vpop.f32.mrf.mxu0
      %v7937 = vadd.f32 %v7729, %v7936
      %v7938 = vpop.f32.mrf.mxu0
      %7939 = vmatprep.mubr.f32.mxu0 0.0
      %7940 = vmatmul.mubr.f32.gmra.mxu0 %v7759
      %v7941 = vpop.f32.mrf.mxu0
      %v7942 = vadd.f32 %v7729, %v7941
      %v7943 = vpop.f32.mrf.mxu0
      %7944 = vmatprep.mubr.f32.mxu0 0.0
      %7945 = vmatmul.mubr.f32.gmra.mxu0 %v7762
      %v7946 = vpop.f32.mrf.mxu0
      %v7947 = vadd.f32 %v7729, %v7946
      %v7948 = vpop.f32.mrf.mxu0
      %7949 = vmatprep.mubr.f32.mxu0 0.0
      %7950 = vmatmul.mubr.f32.gmra.mxu0 %v7765
      %v7951 = vpop.f32.mrf.mxu0
      %v7952 = vadd.f32 %v7729, %v7951
      %v7953 = vpop.f32.mrf.mxu0
      %7954 = vmatprep.mubr.f32.mxu0 0.0
      %7955 = vmatmul.mubr.f32.gmra.mxu0 %v7768
      %v7956 = vpop.f32.mrf.mxu0
      %v7957 = vadd.f32 %v7729, %v7956
      %v7958 = vpop.f32.mrf.mxu0
      %7959 = vmatprep.mubr.f32.mxu0 0.0
      %7960 = vmatmul.mubr.f32.gmra.mxu0 %v7771
      %v7961 = vpop.f32.mrf.mxu0
      %v7962 = vadd.f32 %v7729, %v7961
      %v7963 = vpop.f32.mrf.mxu0
      %7964 = vmatprep.mubr.f32.mxu0 0.0
      %7965 = vmatmul.mubr.f32.gmra.mxu0 %v7774
      %v7966 = vpop.f32.mrf.mxu0
      %v7967 = vadd.f32 %v7729, %v7966
      %v7968 = vpop.f32.mrf.mxu0
      %7969 = vmatprep.mubr.f32.mxu0 0.0
      %7970 = vmatmul.mubr.f32.gmra.mxu0 %v7777
      %v7971 = vpop.f32.mrf.mxu0
      %v7972 = vadd.f32 %v7729, %v7971
      %v7973 = vpop.f32.mrf.mxu0
      %7974 = vmatprep.mubr.f32.mxu0 0.0
      %7975 = vmatmul.mubr.f32.gmra.mxu0 %v7780
      %v7976 = vpop.f32.mrf.mxu0
      %v7977 = vadd.f32 %v7729, %v7976
      %v7978 = vpop.f32.mrf.mxu0
      %7979 = vmatprep.mubr.f32.mxu0 0.0
      %7980 = vmatmul.mubr.f32.gmra.mxu0 %v7783
      %v7981 = vpop.f32.mrf.mxu0
      %v7982 = vadd.f32 %v7729, %v7981
      %v7983 = vpop.f32.mrf.mxu0
      %7984 = vmatprep.mubr.f32.mxu0 0.0
      %7985 = vmatmul.mubr.f32.gmra.mxu0 %v7786
      %v7986 = vpop.f32.mrf.mxu0
      %v7987 = vadd.f32 %v7729, %v7986
      %v7988 = vpop.f32.mrf.mxu0
      %7989 = vmatprep.mubr.f32.mxu0 0.0
      %7990 = vmatmul.mubr.f32.gmra.mxu0 %v7789
      %v7991 = vpop.f32.mrf.mxu0
      %v7992 = vadd.f32 %v7729, %v7991
      %v7993 = vpop.f32.mrf.mxu0
      %7994 = vmatprep.mubr.f32.mxu0 0.0
      %7995 = vmatmul.mubr.f32.gmra.mxu0 %v7792
      %v7996 = vpop.f32.mrf.mxu0
      %v7997 = vadd.f32 %v7729, %v7996
      %v7998 = vpop.f32.mrf.mxu0
      %7999 = vmatprep.mubr.f32.mxu0 0.0
      %8000 = vmatmul.mubr.f32.gmra.mxu0 %v7795
      %v8001 = vpop.f32.mrf.mxu0
      %v8002 = vadd.f32 %v7729, %v8001
      %v8003 = vpop.f32.mrf.mxu0
      %8004 = vmatprep.mubr.f32.mxu0 0.0
      %8005 = vmatmul.mubr.f32.gmra.mxu0 %v7798
      %v8006 = vpop.f32.mrf.mxu0
      %v8007 = vadd.f32 %v7729, %v8006
      %v8008 = vpop.f32.mrf.mxu0
      %8009 = vmatprep.mubr.f32.mxu0 0.0
      %8010 = vmatmul.mubr.f32.gmra.mxu0 %v7801
      %v8011 = vpop.f32.mrf.mxu0
      %v8012 = vadd.f32 %v7729, %v8011
      %v8013 = vpop.f32.mrf.mxu0
      %8014 = vmatprep.mubr.f32.mxu0 0.0
      %8015 = vmatmul.mubr.f32.gmra.mxu0 %v7804
      %v8016 = vpop.f32.mrf.mxu0
      %v8017 = vadd.f32 %v7729, %v8016
      %v8018 = vpop.f32.mrf.mxu0
      %8019 = vmatprep.mubr.f32.mxu0 0.0
      %8020 = vmatmul.mubr.f32.gmra.mxu0 %v7807
      %v8021 = vpop.f32.mrf.mxu0
      %v8022 = vadd.f32 %v7729, %v8021
      %v8023 = vpop.f32.mrf.mxu0
      %8024 = vmatprep.mubr.f32.mxu0 0.0
      %8025 = vmatmul.mubr.f32.gmra.mxu0 %v7810
      %v8026 = vpop.f32.mrf.mxu0
      %v8027 = vadd.f32 %v7729, %v8026
      %v8028 = vpop.f32.mrf.mxu0
      %8029 = vmatprep.mubr.f32.mxu0 0.0
      %8030 = vmatmul.mubr.f32.gmra.mxu0 %v7813
      %v8031 = vpop.f32.mrf.mxu0
      %v8032 = vadd.f32 %v7729, %v8031
      %v8033 = vpop.f32.mrf.mxu0
      %8034 = vmatprep.mubr.f32.mxu0 0.0
      %8035 = vmatmul.mubr.f32.gmra.mxu0 %v7816
      %v8036 = vpop.f32.mrf.mxu0
      %v8037 = vadd.f32 %v7729, %v8036
      %v8038 = vpop.f32.mrf.mxu0
      %8039 = vmatprep.mubr.f32.mxu0 0.0
      %8040 = vmatmul.mubr.f32.gmra.mxu0 %v7819
      %v8041 = vpop.f32.mrf.mxu0
      %v8042 = vadd.f32 %v7729, %v8041
      %v8043 = vpop.f32.mrf.mxu0
      %8044 = vmatprep.mubr.f32.mxu0 0.0
      %8045 = vmatmul.mubr.f32.gmra.mxu0 %v7822
      %v8046 = vpop.f32.mrf.mxu0
      %v8047 = vadd.f32 %v7729, %v8046
      %v8048 = vpop.f32.mrf.mxu0
      %8049 = vmatprep.mubr.f32.mxu0 0.0
      %8050 = vmatmul.mubr.f32.gmra.mxu0 %v7825
      %v8051 = vpop.f32.mrf.mxu0
      %v8052 = vadd.f32 %v7729, %v8051
      %v8053 = vpop.f32.mrf.mxu0
      %8054 = vdwg.mxu0
      %v8055 = vmax.f32 %v7897, 0.0
      %v8056 = vmax.f32 %v7902, 0.0
      %v8057 = vmax.f32 %v7907, 0.0
      %v8058 = vmax.f32 %v7912, 0.0
      %v8059 = vmax.f32 %v7917, 0.0
      %v8060 = vmax.f32 %v7922, 0.0
      %v8061 = vmax.f32 %v7927, 0.0
      %v8062 = vmax.f32 %v7932, 0.0
      %v8063 = vmax.f32 %v7937, 0.0
      %v8064 = vmax.f32 %v7942, 0.0
      %v8065 = vmax.f32 %v7947, 0.0
      %v8066 = vmax.f32 %v7952, 0.0
      %v8067 = vmax.f32 %v7957, 0.0
      %v8068 = vmax.f32 %v7962, 0.0
      %v8069 = vmax.f32 %v7967, 0.0
      %v8070 = vmax.f32 %v7972, 0.0
      %v8071 = vmax.f32 %v7977, 0.0
      %v8072 = vmax.f32 %v7982, 0.0
      %v8073 = vmax.f32 %v7987, 0.0
      %v8074 = vmax.f32 %v7992, 0.0
      %v8075 = vmax.f32 %v7997, 0.0
      %v8076 = vmax.f32 %v8002, 0.0
      %v8077 = vmax.f32 %v8007, 0.0
      %v8078 = vmax.f32 %v8012, 0.0
      %v8079 = vmax.f32 %v8017, 0.0
      %v8080 = vmax.f32 %v8022, 0.0
      %v8081 = vmax.f32 %v8027, 0.0
      %v8082 = vmax.f32 %v8032, 0.0
      %v8083 = vmax.f32 %v8037, 0.0
      %v8084 = vmax.f32 %v8042, 0.0
      %v8085 = vmax.f32 %v8047, 0.0
      %v8086 = vmax.f32 %v8052, 0.0
      %v8087 = vld [vmem:[%s7] sm:$0xff]
      %v8088 = vld [vmem:[%s7 + $0x8] sm:$0x3]
      %v8089 = vld [vmem:[%s8] sm:$0x1]
      %v8091 = vlaneseq
      %v8092 = vshrl.u32 %v8091, 7
      %v8093 = vsub.s32 0, %v8092
      %v8094 = vrot.slane %v8089, %v8093
      %v8097 = vsel %vm549, %v8055, 0
      %v8100 = vsel %vm549, %v8056, 0
      %v8103 = vsel %vm549, %v8057, 0
      %v8106 = vsel %vm549, %v8058, 0
      %v8109 = vsel %vm549, %v8059, 0
      %v8112 = vsel %vm549, %v8060, 0
      %v8115 = vsel %vm549, %v8061, 0
      %v8118 = vsel %vm549, %v8062, 0
      %v8121 = vsel %vm549, %v8063, 0
      %v8124 = vsel %vm549, %v8064, 0
      %v8127 = vsel %vm549, %v8065, 0
      %v8130 = vsel %vm549, %v8066, 0
      %v8133 = vsel %vm549, %v8067, 0
      %v8136 = vsel %vm549, %v8068, 0
      %v8139 = vsel %vm549, %v8069, 0
      %v8142 = vsel %vm549, %v8070, 0
      %v8145 = vsel %vm549, %v8071, 0
      %v8148 = vsel %vm549, %v8072, 0
      %v8151 = vsel %vm549, %v8073, 0
      %v8154 = vsel %vm549, %v8074, 0
      %v8157 = vsel %vm549, %v8075, 0
      %v8160 = vsel %vm549, %v8076, 0
      %v8163 = vsel %vm549, %v8077, 0
      %v8166 = vsel %vm549, %v8078, 0
      %v8169 = vsel %vm549, %v8079, 0
      %v8172 = vsel %vm549, %v8080, 0
      %v8175 = vsel %vm549, %v8081, 0
      %v8178 = vsel %vm549, %v8082, 0
      %v8181 = vsel %vm549, %v8083, 0
      %v8184 = vsel %vm549, %v8084, 0
      %v8187 = vsel %vm549, %v8085, 0
      %v8190 = vsel %vm549, %v8086, 0
      %v8193 = vsel %vm835, %v8088, 0
      %8195 = vmatprep.subr.mxu0 0.0
      %8196 = vmatpush1.msra.mxu0 0.0
      %8197 = vmatprep.subr.mxu0 0.0
      %8198 = vmatpush1.msra.mxu0 0.0
      %8199 = vmatprep.subr.mxu0 0.0
      %8200 = vmatpush1.msra.mxu0 0.0
      %8201 = vmatprep.subr.mxu0 0.0
      %8202 = vmatpush1.msra.mxu0 0.0
      %8203 = vmatprep.subr.mxu0 0.0
      %8204 = vmatpush1.msra.mxu0 0.0
      %8205 = vmatprep.subr.mxu0 0.0
      %8206 = vmatpush1.msra.mxu0 0.0
      %8207 = vmatprep.subr.mxu0 0.0
      %8208 = vmatpush1.msra.mxu0 0.0
      %8209 = vmatprep.subr.mxu0 0.0
      %8210 = vmatpush1.msra.mxu0 0.0
      %8211 = vmatprep.subr.mxu0 0.0
      %8212 = vmatpush1.msra.mxu0 0.0
      %8213 = vmatprep.subr.mxu0 0.0
      %8214 = vmatpush1.msra.mxu0 0.0
      %8215 = vmatprep.subr.mxu0 0.0
      %8216 = vmatpush1.msra.mxu0 0.0
      %8217 = vmatprep.subr.mxu0 0.0
      %8218 = vmatpush1.msra.mxu0 0.0
      %8219 = vmatprep.subr.mxu0 0.0
      %8220 = vmatpush1.msra.mxu0 0.0
      %8221 = vmatprep.subr.mxu0 0.0
      %8222 = vmatpush1.msra.mxu0 0.0
      %8223 = vmatprep.subr.mxu0 0.0
      %8224 = vmatpush1.msra.mxu0 %v8193
      %8225 = vmatprep.subr.mxu0 0.0
      %8226 = vmatpush1.msra.mxu0 %v8087
      %8227 = vmatprep.subr.mxu0 0.0
      %8228 = vmatpush2.msra.mxu0 0.0
      %8229 = vmatprep.subr.mxu0 0.0
      %8230 = vmatpush2.msra.mxu0 0.0
      %8231 = vmatprep.subr.mxu0 0.0
      %8232 = vmatpush2.msra.mxu0 0.0
      %8233 = vmatprep.subr.mxu0 0.0
      %8234 = vmatpush2.msra.mxu0 0.0
      %8235 = vmatprep.subr.mxu0 0.0
      %8236 = vmatpush2.msra.mxu0 0.0
      %8237 = vmatprep.subr.mxu0 0.0
      %8238 = vmatpush2.msra.mxu0 0.0
      %8239 = vmatprep.subr.mxu0 0.0
      %8240 = vmatpush2.msra.mxu0 0.0
      %8241 = vmatprep.subr.mxu0 0.0
      %8242 = vmatpush2.msra.mxu0 0.0
      %8243 = vmatprep.subr.mxu0 0.0
      %8244 = vmatpush2.msra.mxu0 0.0
      %8245 = vmatprep.subr.mxu0 0.0
      %8246 = vmatpush2.msra.mxu0 0.0
      %8247 = vmatprep.subr.mxu0 0.0
      %8248 = vmatpush2.msra.mxu0 0.0
      %8249 = vmatprep.subr.mxu0 0.0
      %8250 = vmatpush2.msra.mxu0 0.0
      %8251 = vmatprep.subr.mxu0 0.0
      %8252 = vmatpush2.msra.mxu0 0.0
      %8253 = vmatprep.subr.mxu0 0.0
      %8254 = vmatpush2.msra.mxu0 0.0
      %8255 = vmatprep.subr.mxu0 0.0
      %8256 = vmatpush2.msra.mxu0 0.0
      %8257 = vmatprep.subr.mxu0 0.0
      %8258 = vmatpush2.msra.mxu0 0.0
      %8259 = vmatprep.mubr.f32.mxu0 0.0
      %8260 = vmatmul.mubr.f32.gmra.mxu0 %v8097
      %v8261 = vpop.f32.mrf.mxu0
      %v8262 = vadd.f32 %v8094, %v8261
      %v8263 = vpop.f32.mrf.mxu0
      %8264 = vmatprep.mubr.f32.mxu0 0.0
      %8265 = vmatmul.mubr.f32.gmra.mxu0 %v8100
      %v8266 = vpop.f32.mrf.mxu0
      %v8267 = vadd.f32 %v8094, %v8266
      %v8268 = vpop.f32.mrf.mxu0
      %8269 = vmatprep.mubr.f32.mxu0 0.0
      %8270 = vmatmul.mubr.f32.gmra.mxu0 %v8103
      %v8271 = vpop.f32.mrf.mxu0
      %v8272 = vadd.f32 %v8094, %v8271
      %v8273 = vpop.f32.mrf.mxu0
      %8274 = vmatprep.mubr.f32.mxu0 0.0
      %8275 = vmatmul.mubr.f32.gmra.mxu0 %v8106
      %v8276 = vpop.f32.mrf.mxu0
      %v8277 = vadd.f32 %v8094, %v8276
      %v8278 = vpop.f32.mrf.mxu0
      %8279 = vmatprep.mubr.f32.mxu0 0.0
      %8280 = vmatmul.mubr.f32.gmra.mxu0 %v8109
      %v8281 = vpop.f32.mrf.mxu0
      %v8282 = vadd.f32 %v8094, %v8281
      %v8283 = vpop.f32.mrf.mxu0
      %8284 = vmatprep.mubr.f32.mxu0 0.0
      %8285 = vmatmul.mubr.f32.gmra.mxu0 %v8112
      %v8286 = vpop.f32.mrf.mxu0
      %v8287 = vadd.f32 %v8094, %v8286
      %v8288 = vpop.f32.mrf.mxu0
      %8289 = vmatprep.mubr.f32.mxu0 0.0
      %8290 = vmatmul.mubr.f32.gmra.mxu0 %v8115
      %v8291 = vpop.f32.mrf.mxu0
      %v8292 = vadd.f32 %v8094, %v8291
      %v8293 = vpop.f32.mrf.mxu0
      %8294 = vmatprep.mubr.f32.mxu0 0.0
      %8295 = vmatmul.mubr.f32.gmra.mxu0 %v8118
      %v8296 = vpop.f32.mrf.mxu0
      %v8297 = vadd.f32 %v8094, %v8296
      %v8298 = vpop.f32.mrf.mxu0
      %8299 = vmatprep.mubr.f32.mxu0 0.0
      %8300 = vmatmul.mubr.f32.gmra.mxu0 %v8121
      %v8301 = vpop.f32.mrf.mxu0
      %v8302 = vadd.f32 %v8094, %v8301
      %v8303 = vpop.f32.mrf.mxu0
      %8304 = vmatprep.mubr.f32.mxu0 0.0
      %8305 = vmatmul.mubr.f32.gmra.mxu0 %v8124
      %v8306 = vpop.f32.mrf.mxu0
      %v8307 = vadd.f32 %v8094, %v8306
      %v8308 = vpop.f32.mrf.mxu0
      %8309 = vmatprep.mubr.f32.mxu0 0.0
      %8310 = vmatmul.mubr.f32.gmra.mxu0 %v8127
      %v8311 = vpop.f32.mrf.mxu0
      %v8312 = vadd.f32 %v8094, %v8311
      %v8313 = vpop.f32.mrf.mxu0
      %8314 = vmatprep.mubr.f32.mxu0 0.0
      %8315 = vmatmul.mubr.f32.gmra.mxu0 %v8130
      %v8316 = vpop.f32.mrf.mxu0
      %v8317 = vadd.f32 %v8094, %v8316
      %v8318 = vpop.f32.mrf.mxu0
      %8319 = vmatprep.mubr.f32.mxu0 0.0
      %8320 = vmatmul.mubr.f32.gmra.mxu0 %v8133
      %v8321 = vpop.f32.mrf.mxu0
      %v8322 = vadd.f32 %v8094, %v8321
      %v8323 = vpop.f32.mrf.mxu0
      %8324 = vmatprep.mubr.f32.mxu0 0.0
      %8325 = vmatmul.mubr.f32.gmra.mxu0 %v8136
      %v8326 = vpop.f32.mrf.mxu0
      %v8327 = vadd.f32 %v8094, %v8326
      %v8328 = vpop.f32.mrf.mxu0
      %8329 = vmatprep.mubr.f32.mxu0 0.0
      %8330 = vmatmul.mubr.f32.gmra.mxu0 %v8139
      %v8331 = vpop.f32.mrf.mxu0
      %v8332 = vadd.f32 %v8094, %v8331
      %v8333 = vpop.f32.mrf.mxu0
      %8334 = vmatprep.mubr.f32.mxu0 0.0
      %8335 = vmatmul.mubr.f32.gmra.mxu0 %v8142
      %v8336 = vpop.f32.mrf.mxu0
      %v8337 = vadd.f32 %v8094, %v8336
      %v8338 = vpop.f32.mrf.mxu0
      %8339 = vmatprep.mubr.f32.mxu0 0.0
      %8340 = vmatmul.mubr.f32.gmra.mxu0 %v8145
      %v8341 = vpop.f32.mrf.mxu0
      %v8342 = vadd.f32 %v8094, %v8341
      %v8343 = vpop.f32.mrf.mxu0
      %8344 = vmatprep.mubr.f32.mxu0 0.0
      %8345 = vmatmul.mubr.f32.gmra.mxu0 %v8148
      %v8346 = vpop.f32.mrf.mxu0
      %v8347 = vadd.f32 %v8094, %v8346
      %v8348 = vpop.f32.mrf.mxu0
      %8349 = vmatprep.mubr.f32.mxu0 0.0
      %8350 = vmatmul.mubr.f32.gmra.mxu0 %v8151
      %v8351 = vpop.f32.mrf.mxu0
      %v8352 = vadd.f32 %v8094, %v8351
      %v8353 = vpop.f32.mrf.mxu0
      %8354 = vmatprep.mubr.f32.mxu0 0.0
      %8355 = vmatmul.mubr.f32.gmra.mxu0 %v8154
      %v8356 = vpop.f32.mrf.mxu0
      %v8357 = vadd.f32 %v8094, %v8356
      %v8358 = vpop.f32.mrf.mxu0
      %8359 = vmatprep.mubr.f32.mxu0 0.0
      %8360 = vmatmul.mubr.f32.gmra.mxu0 %v8157
      %v8361 = vpop.f32.mrf.mxu0
      %v8362 = vadd.f32 %v8094, %v8361
      %v8363 = vpop.f32.mrf.mxu0
      %8364 = vmatprep.mubr.f32.mxu0 0.0
      %8365 = vmatmul.mubr.f32.gmra.mxu0 %v8160
      %v8366 = vpop.f32.mrf.mxu0
      %v8367 = vadd.f32 %v8094, %v8366
      %v8368 = vpop.f32.mrf.mxu0
      %8369 = vmatprep.mubr.f32.mxu0 0.0
      %8370 = vmatmul.mubr.f32.gmra.mxu0 %v8163
      %v8371 = vpop.f32.mrf.mxu0
      %v8372 = vadd.f32 %v8094, %v8371
      %v8373 = vpop.f32.mrf.mxu0
      %8374 = vmatprep.mubr.f32.mxu0 0.0
      %8375 = vmatmul.mubr.f32.gmra.mxu0 %v8166
      %v8376 = vpop.f32.mrf.mxu0
      %v8377 = vadd.f32 %v8094, %v8376
      %v8378 = vpop.f32.mrf.mxu0
      %8379 = vmatprep.mubr.f32.mxu0 0.0
      %8380 = vmatmul.mubr.f32.gmra.mxu0 %v8169
      %v8381 = vpop.f32.mrf.mxu0
      %v8382 = vadd.f32 %v8094, %v8381
      %v8383 = vpop.f32.mrf.mxu0
      %8384 = vmatprep.mubr.f32.mxu0 0.0
      %8385 = vmatmul.mubr.f32.gmra.mxu0 %v8172
      %v8386 = vpop.f32.mrf.mxu0
      %v8387 = vadd.f32 %v8094, %v8386
      %v8388 = vpop.f32.mrf.mxu0
      %8389 = vmatprep.mubr.f32.mxu0 0.0
      %8390 = vmatmul.mubr.f32.gmra.mxu0 %v8175
      %v8391 = vpop.f32.mrf.mxu0
      %v8392 = vadd.f32 %v8094, %v8391
      %v8393 = vpop.f32.mrf.mxu0
      %8394 = vmatprep.mubr.f32.mxu0 0.0
      %8395 = vmatmul.mubr.f32.gmra.mxu0 %v8178
      %v8396 = vpop.f32.mrf.mxu0
      %v8397 = vadd.f32 %v8094, %v8396
      %v8398 = vpop.f32.mrf.mxu0
      %8399 = vmatprep.mubr.f32.mxu0 0.0
      %8400 = vmatmul.mubr.f32.gmra.mxu0 %v8181
      %v8401 = vpop.f32.mrf.mxu0
      %v8402 = vadd.f32 %v8094, %v8401
      %v8403 = vpop.f32.mrf.mxu0
      %8404 = vmatprep.mubr.f32.mxu0 0.0
      %8405 = vmatmul.mubr.f32.gmra.mxu0 %v8184
      %v8406 = vpop.f32.mrf.mxu0
      %v8407 = vadd.f32 %v8094, %v8406
      %v8408 = vpop.f32.mrf.mxu0
      %8409 = vmatprep.mubr.f32.mxu0 0.0
      %8410 = vmatmul.mubr.f32.gmra.mxu0 %v8187
      %v8411 = vpop.f32.mrf.mxu0
      %v8412 = vadd.f32 %v8094, %v8411
      %v8413 = vpop.f32.mrf.mxu0
      %8414 = vmatprep.mubr.f32.mxu0 0.0
      %8415 = vmatmul.mubr.f32.gmra.mxu0 %v8190
      %v8416 = vpop.f32.mrf.mxu0
      %v8417 = vadd.f32 %v8094, %v8416
      %v8418 = vpop.f32.mrf.mxu0
      %8419 = vdwg.mxu0
      %v8420 = vmax.f32 %v8262, 0.0
      %v8421 = vmax.f32 %v8267, 0.0
      %v8422 = vmax.f32 %v8272, 0.0
      %v8423 = vmax.f32 %v8277, 0.0
      %v8424 = vmax.f32 %v8282, 0.0
      %v8425 = vmax.f32 %v8287, 0.0
      %v8426 = vmax.f32 %v8292, 0.0
      %v8427 = vmax.f32 %v8297, 0.0
      %v8428 = vmax.f32 %v8302, 0.0
      %v8429 = vmax.f32 %v8307, 0.0
      %v8430 = vmax.f32 %v8312, 0.0
      %v8431 = vmax.f32 %v8317, 0.0
      %v8432 = vmax.f32 %v8322, 0.0
      %v8433 = vmax.f32 %v8327, 0.0
      %v8434 = vmax.f32 %v8332, 0.0
      %v8435 = vmax.f32 %v8337, 0.0
      %v8436 = vmax.f32 %v8342, 0.0
      %v8437 = vmax.f32 %v8347, 0.0
      %v8438 = vmax.f32 %v8352, 0.0
      %v8439 = vmax.f32 %v8357, 0.0
      %v8440 = vmax.f32 %v8362, 0.0
      %v8441 = vmax.f32 %v8367, 0.0
      %v8442 = vmax.f32 %v8372, 0.0
      %v8443 = vmax.f32 %v8377, 0.0
      %v8444 = vmax.f32 %v8382, 0.0
      %v8445 = vmax.f32 %v8387, 0.0
      %v8446 = vmax.f32 %v8392, 0.0
      %v8447 = vmax.f32 %v8397, 0.0
      %v8448 = vmax.f32 %v8402, 0.0
      %v8449 = vmax.f32 %v8407, 0.0
      %v8450 = vmax.f32 %v8412, 0.0
      %v8451 = vmax.f32 %v8417, 0.0
      %v8452 = vld [vmem:[%s9] sm:$0xff]
      %v8453 = vld [vmem:[%s9 + $0x8] sm:$0x3]
      %v8454 = vld [vmem:[%s10] sm:$0x1]
      %v8456 = vlaneseq
      %v8457 = vshrl.u32 %v8456, 7
      %v8458 = vsub.s32 0, %v8457
      %v8459 = vrot.slane %v8454, %v8458
      %v8462 = vsel %vm549, %v8420, 0
      %v8465 = vsel %vm549, %v8421, 0
      %v8468 = vsel %vm549, %v8422, 0
      %v8471 = vsel %vm549, %v8423, 0
      %v8474 = vsel %vm549, %v8424, 0
      %v8477 = vsel %vm549, %v8425, 0
      %v8480 = vsel %vm549, %v8426, 0
      %v8483 = vsel %vm549, %v8427, 0
      %v8486 = vsel %vm549, %v8428, 0
      %v8489 = vsel %vm549, %v8429, 0
      %v8492 = vsel %vm549, %v8430, 0
      %v8495 = vsel %vm549, %v8431, 0
      %v8498 = vsel %vm549, %v8432, 0
      %v8501 = vsel %vm549, %v8433, 0
      %v8504 = vsel %vm549, %v8434, 0
      %v8507 = vsel %vm549, %v8435, 0
      %v8510 = vsel %vm549, %v8436, 0
      %v8513 = vsel %vm549, %v8437, 0
      %v8516 = vsel %vm549, %v8438, 0
      %v8519 = vsel %vm549, %v8439, 0
      %v8522 = vsel %vm549, %v8440, 0
      %v8525 = vsel %vm549, %v8441, 0
      %v8528 = vsel %vm549, %v8442, 0
      %v8531 = vsel %vm549, %v8443, 0
      %v8534 = vsel %vm549, %v8444, 0
      %v8537 = vsel %vm549, %v8445, 0
      %v8540 = vsel %vm549, %v8446, 0
      %v8543 = vsel %vm549, %v8447, 0
      %v8546 = vsel %vm549, %v8448, 0
      %v8549 = vsel %vm549, %v8449, 0
      %v8552 = vsel %vm549, %v8450, 0
      %v8555 = vsel %vm549, %v8451, 0
      %v8558 = vsel %vm835, %v8453, 0
      %8560 = vmatprep.subr.mxu0 0.0
      %8561 = vmatpush1.msra.mxu0 0.0
      %8562 = vmatprep.subr.mxu0 0.0
      %8563 = vmatpush1.msra.mxu0 0.0
      %8564 = vmatprep.subr.mxu0 0.0
      %8565 = vmatpush1.msra.mxu0 0.0
      %8566 = vmatprep.subr.mxu0 0.0
      %8567 = vmatpush1.msra.mxu0 0.0
      %8568 = vmatprep.subr.mxu0 0.0
      %8569 = vmatpush1.msra.mxu0 0.0
      %8570 = vmatprep.subr.mxu0 0.0
      %8571 = vmatpush1.msra.mxu0 0.0
      %8572 = vmatprep.subr.mxu0 0.0
      %8573 = vmatpush1.msra.mxu0 0.0
      %8574 = vmatprep.subr.mxu0 0.0
      %8575 = vmatpush1.msra.mxu0 0.0
      %8576 = vmatprep.subr.mxu0 0.0
      %8577 = vmatpush1.msra.mxu0 0.0
      %8578 = vmatprep.subr.mxu0 0.0
      %8579 = vmatpush1.msra.mxu0 0.0
      %8580 = vmatprep.subr.mxu0 0.0
      %8581 = vmatpush1.msra.mxu0 0.0
      %8582 = vmatprep.subr.mxu0 0.0
      %8583 = vmatpush1.msra.mxu0 0.0
      %8584 = vmatprep.subr.mxu0 0.0
      %8585 = vmatpush1.msra.mxu0 0.0
      %8586 = vmatprep.subr.mxu0 0.0
      %8587 = vmatpush1.msra.mxu0 0.0
      %8588 = vmatprep.subr.mxu0 0.0
      %8589 = vmatpush1.msra.mxu0 %v8558
      %8590 = vmatprep.subr.mxu0 0.0
      %8591 = vmatpush1.msra.mxu0 %v8452
      %8592 = vmatprep.subr.mxu0 0.0
      %8593 = vmatpush2.msra.mxu0 0.0
      %8594 = vmatprep.subr.mxu0 0.0
      %8595 = vmatpush2.msra.mxu0 0.0
      %8596 = vmatprep.subr.mxu0 0.0
      %8597 = vmatpush2.msra.mxu0 0.0
      %8598 = vmatprep.subr.mxu0 0.0
      %8599 = vmatpush2.msra.mxu0 0.0
      %8600 = vmatprep.subr.mxu0 0.0
      %8601 = vmatpush2.msra.mxu0 0.0
      %8602 = vmatprep.subr.mxu0 0.0
      %8603 = vmatpush2.msra.mxu0 0.0
      %8604 = vmatprep.subr.mxu0 0.0
      %8605 = vmatpush2.msra.mxu0 0.0
      %8606 = vmatprep.subr.mxu0 0.0
      %8607 = vmatpush2.msra.mxu0 0.0
      %8608 = vmatprep.subr.mxu0 0.0
      %8609 = vmatpush2.msra.mxu0 0.0
      %8610 = vmatprep.subr.mxu0 0.0
      %8611 = vmatpush2.msra.mxu0 0.0
      %8612 = vmatprep.subr.mxu0 0.0
      %8613 = vmatpush2.msra.mxu0 0.0
      %8614 = vmatprep.subr.mxu0 0.0
      %8615 = vmatpush2.msra.mxu0 0.0
      %8616 = vmatprep.subr.mxu0 0.0
      %8617 = vmatpush2.msra.mxu0 0.0
      %8618 = vmatprep.subr.mxu0 0.0
      %8619 = vmatpush2.msra.mxu0 0.0
      %8620 = vmatprep.subr.mxu0 0.0
      %8621 = vmatpush2.msra.mxu0 0.0
      %8622 = vmatprep.subr.mxu0 0.0
      %8623 = vmatpush2.msra.mxu0 0.0
      %8624 = vmatprep.mubr.f32.mxu0 0.0
      %8625 = vmatmul.mubr.f32.gmra.mxu0 %v8462
      %v8626 = vpop.f32.mrf.mxu0
      %v8627 = vadd.f32 %v8459, %v8626
      %v8628 = vpop.f32.mrf.mxu0
      %8629 = vmatprep.mubr.f32.mxu0 0.0
      %8630 = vmatmul.mubr.f32.gmra.mxu0 %v8465
      %v8631 = vpop.f32.mrf.mxu0
      %v8632 = vadd.f32 %v8459, %v8631
      %v8633 = vpop.f32.mrf.mxu0
      %8634 = vmatprep.mubr.f32.mxu0 0.0
      %8635 = vmatmul.mubr.f32.gmra.mxu0 %v8468
      %v8636 = vpop.f32.mrf.mxu0
      %v8637 = vadd.f32 %v8459, %v8636
      %v8638 = vpop.f32.mrf.mxu0
      %8639 = vmatprep.mubr.f32.mxu0 0.0
      %8640 = vmatmul.mubr.f32.gmra.mxu0 %v8471
      %v8641 = vpop.f32.mrf.mxu0
      %v8642 = vadd.f32 %v8459, %v8641
      %v8643 = vpop.f32.mrf.mxu0
      %8644 = vmatprep.mubr.f32.mxu0 0.0
      %8645 = vmatmul.mubr.f32.gmra.mxu0 %v8474
      %v8646 = vpop.f32.mrf.mxu0
      %v8647 = vadd.f32 %v8459, %v8646
      %v8648 = vpop.f32.mrf.mxu0
      %8649 = vmatprep.mubr.f32.mxu0 0.0
      %8650 = vmatmul.mubr.f32.gmra.mxu0 %v8477
      %v8651 = vpop.f32.mrf.mxu0
      %v8652 = vadd.f32 %v8459, %v8651
      %v8653 = vpop.f32.mrf.mxu0
      %8654 = vmatprep.mubr.f32.mxu0 0.0
      %8655 = vmatmul.mubr.f32.gmra.mxu0 %v8480
      %v8656 = vpop.f32.mrf.mxu0
      %v8657 = vadd.f32 %v8459, %v8656
      %v8658 = vpop.f32.mrf.mxu0
      %8659 = vmatprep.mubr.f32.mxu0 0.0
      %8660 = vmatmul.mubr.f32.gmra.mxu0 %v8483
      %v8661 = vpop.f32.mrf.mxu0
      %v8662 = vadd.f32 %v8459, %v8661
      %v8663 = vpop.f32.mrf.mxu0
      %8664 = vmatprep.mubr.f32.mxu0 0.0
      %8665 = vmatmul.mubr.f32.gmra.mxu0 %v8486
      %v8666 = vpop.f32.mrf.mxu0
      %v8667 = vadd.f32 %v8459, %v8666
      %v8668 = vpop.f32.mrf.mxu0
      %8669 = vmatprep.mubr.f32.mxu0 0.0
      %8670 = vmatmul.mubr.f32.gmra.mxu0 %v8489
      %v8671 = vpop.f32.mrf.mxu0
      %v8672 = vadd.f32 %v8459, %v8671
      %v8673 = vpop.f32.mrf.mxu0
      %8674 = vmatprep.mubr.f32.mxu0 0.0
      %8675 = vmatmul.mubr.f32.gmra.mxu0 %v8492
      %v8676 = vpop.f32.mrf.mxu0
      %v8677 = vadd.f32 %v8459, %v8676
      %v8678 = vpop.f32.mrf.mxu0
      %8679 = vmatprep.mubr.f32.mxu0 0.0
      %8680 = vmatmul.mubr.f32.gmra.mxu0 %v8495
      %v8681 = vpop.f32.mrf.mxu0
      %v8682 = vadd.f32 %v8459, %v8681
      %v8683 = vpop.f32.mrf.mxu0
      %8684 = vmatprep.mubr.f32.mxu0 0.0
      %8685 = vmatmul.mubr.f32.gmra.mxu0 %v8498
      %v8686 = vpop.f32.mrf.mxu0
      %v8687 = vadd.f32 %v8459, %v8686
      %v8688 = vpop.f32.mrf.mxu0
      %8689 = vmatprep.mubr.f32.mxu0 0.0
      %8690 = vmatmul.mubr.f32.gmra.mxu0 %v8501
      %v8691 = vpop.f32.mrf.mxu0
      %v8692 = vadd.f32 %v8459, %v8691
      %v8693 = vpop.f32.mrf.mxu0
      %8694 = vmatprep.mubr.f32.mxu0 0.0
      %8695 = vmatmul.mubr.f32.gmra.mxu0 %v8504
      %v8696 = vpop.f32.mrf.mxu0
      %v8697 = vadd.f32 %v8459, %v8696
      %v8698 = vpop.f32.mrf.mxu0
      %8699 = vmatprep.mubr.f32.mxu0 0.0
      %8700 = vmatmul.mubr.f32.gmra.mxu0 %v8507
      %v8701 = vpop.f32.mrf.mxu0
      %v8702 = vadd.f32 %v8459, %v8701
      %v8703 = vpop.f32.mrf.mxu0
      %8704 = vmatprep.mubr.f32.mxu0 0.0
      %8705 = vmatmul.mubr.f32.gmra.mxu0 %v8510
      %v8706 = vpop.f32.mrf.mxu0
      %v8707 = vadd.f32 %v8459, %v8706
      %v8708 = vpop.f32.mrf.mxu0
      %8709 = vmatprep.mubr.f32.mxu0 0.0
      %8710 = vmatmul.mubr.f32.gmra.mxu0 %v8513
      %v8711 = vpop.f32.mrf.mxu0
      %v8712 = vadd.f32 %v8459, %v8711
      %v8713 = vpop.f32.mrf.mxu0
      %8714 = vmatprep.mubr.f32.mxu0 0.0
      %8715 = vmatmul.mubr.f32.gmra.mxu0 %v8516
      %v8716 = vpop.f32.mrf.mxu0
      %v8717 = vadd.f32 %v8459, %v8716
      %v8718 = vpop.f32.mrf.mxu0
      %8719 = vmatprep.mubr.f32.mxu0 0.0
      %8720 = vmatmul.mubr.f32.gmra.mxu0 %v8519
      %v8721 = vpop.f32.mrf.mxu0
      %v8722 = vadd.f32 %v8459, %v8721
      %v8723 = vpop.f32.mrf.mxu0
      %8724 = vmatprep.mubr.f32.mxu0 0.0
      %8725 = vmatmul.mubr.f32.gmra.mxu0 %v8522
      %v8726 = vpop.f32.mrf.mxu0
      %v8727 = vadd.f32 %v8459, %v8726
      %v8728 = vpop.f32.mrf.mxu0
      %8729 = vmatprep.mubr.f32.mxu0 0.0
      %8730 = vmatmul.mubr.f32.gmra.mxu0 %v8525
      %v8731 = vpop.f32.mrf.mxu0
      %v8732 = vadd.f32 %v8459, %v8731
      %v8733 = vpop.f32.mrf.mxu0
      %8734 = vmatprep.mubr.f32.mxu0 0.0
      %8735 = vmatmul.mubr.f32.gmra.mxu0 %v8528
      %v8736 = vpop.f32.mrf.mxu0
      %v8737 = vadd.f32 %v8459, %v8736
      %v8738 = vpop.f32.mrf.mxu0
      %8739 = vmatprep.mubr.f32.mxu0 0.0
      %8740 = vmatmul.mubr.f32.gmra.mxu0 %v8531
      %v8741 = vpop.f32.mrf.mxu0
      %v8742 = vadd.f32 %v8459, %v8741
      %v8743 = vpop.f32.mrf.mxu0
      %8744 = vmatprep.mubr.f32.mxu0 0.0
      %8745 = vmatmul.mubr.f32.gmra.mxu0 %v8534
      %v8746 = vpop.f32.mrf.mxu0
      %v8747 = vadd.f32 %v8459, %v8746
      %v8748 = vpop.f32.mrf.mxu0
      %8749 = vmatprep.mubr.f32.mxu0 0.0
      %8750 = vmatmul.mubr.f32.gmra.mxu0 %v8537
      %v8751 = vpop.f32.mrf.mxu0
      %v8752 = vadd.f32 %v8459, %v8751
      %v8753 = vpop.f32.mrf.mxu0
      %8754 = vmatprep.mubr.f32.mxu0 0.0
      %8755 = vmatmul.mubr.f32.gmra.mxu0 %v8540
      %v8756 = vpop.f32.mrf.mxu0
      %v8757 = vadd.f32 %v8459, %v8756
      %v8758 = vpop.f32.mrf.mxu0
      %8759 = vmatprep.mubr.f32.mxu0 0.0
      %8760 = vmatmul.mubr.f32.gmra.mxu0 %v8543
      %v8761 = vpop.f32.mrf.mxu0
      %v8762 = vadd.f32 %v8459, %v8761
      %v8763 = vpop.f32.mrf.mxu0
      %8764 = vmatprep.mubr.f32.mxu0 0.0
      %8765 = vmatmul.mubr.f32.gmra.mxu0 %v8546
      %v8766 = vpop.f32.mrf.mxu0
      %v8767 = vadd.f32 %v8459, %v8766
      %v8768 = vpop.f32.mrf.mxu0
      %8769 = vmatprep.mubr.f32.mxu0 0.0
      %8770 = vmatmul.mubr.f32.gmra.mxu0 %v8549
      %v8771 = vpop.f32.mrf.mxu0
      %v8772 = vadd.f32 %v8459, %v8771
      %v8773 = vpop.f32.mrf.mxu0
      %8774 = vmatprep.mubr.f32.mxu0 0.0
      %8775 = vmatmul.mubr.f32.gmra.mxu0 %v8552
      %v8776 = vpop.f32.mrf.mxu0
      %v8777 = vadd.f32 %v8459, %v8776
      %v8778 = vpop.f32.mrf.mxu0
      %8779 = vmatprep.mubr.f32.mxu0 0.0
      %8780 = vmatmul.mubr.f32.gmra.mxu0 %v8555
      %v8781 = vpop.f32.mrf.mxu0
      %v8782 = vadd.f32 %v8459, %v8781
      %v8783 = vpop.f32.mrf.mxu0
      %8784 = vdwg.mxu0
      %v8785 = vmax.f32 %v8627, 0.0
      %v8786 = vmax.f32 %v8632, 0.0
      %v8787 = vmax.f32 %v8637, 0.0
      %v8788 = vmax.f32 %v8642, 0.0
      %v8789 = vmax.f32 %v8647, 0.0
      %v8790 = vmax.f32 %v8652, 0.0
      %v8791 = vmax.f32 %v8657, 0.0
      %v8792 = vmax.f32 %v8662, 0.0
      %v8793 = vmax.f32 %v8667, 0.0
      %v8794 = vmax.f32 %v8672, 0.0
      %v8795 = vmax.f32 %v8677, 0.0
      %v8796 = vmax.f32 %v8682, 0.0
      %v8797 = vmax.f32 %v8687, 0.0
      %v8798 = vmax.f32 %v8692, 0.0
      %v8799 = vmax.f32 %v8697, 0.0
      %v8800 = vmax.f32 %v8702, 0.0
      %v8801 = vmax.f32 %v8707, 0.0
      %v8802 = vmax.f32 %v8712, 0.0
      %v8803 = vmax.f32 %v8717, 0.0
      %v8804 = vmax.f32 %v8722, 0.0
      %v8805 = vmax.f32 %v8727, 0.0
      %v8806 = vmax.f32 %v8732, 0.0
      %v8807 = vmax.f32 %v8737, 0.0
      %v8808 = vmax.f32 %v8742, 0.0
      %v8809 = vmax.f32 %v8747, 0.0
      %v8810 = vmax.f32 %v8752, 0.0
      %v8811 = vmax.f32 %v8757, 0.0
      %v8812 = vmax.f32 %v8762, 0.0
      %v8813 = vmax.f32 %v8767, 0.0
      %v8814 = vmax.f32 %v8772, 0.0
      %v8815 = vmax.f32 %v8777, 0.0
      %v8816 = vmax.f32 %v8782, 0.0
      %v8817 = vld [vmem:[%s11] sm:$0xff]
      %v8818 = vld [vmem:[%s11 + $0x8] sm:$0x3]
      %v8819 = vld [vmem:[%s12] sm:$0x1]
      %v8821 = vlaneseq
      %v8822 = vshrl.u32 %v8821, 7
      %v8823 = vsub.s32 0, %v8822
      %v8824 = vrot.slane %v8819, %v8823
      %v8827 = vsel %vm549, %v8785, 0
      %v8830 = vsel %vm549, %v8786, 0
      %v8833 = vsel %vm549, %v8787, 0
      %v8836 = vsel %vm549, %v8788, 0
      %v8839 = vsel %vm549, %v8789, 0
      %v8842 = vsel %vm549, %v8790, 0
      %v8845 = vsel %vm549, %v8791, 0
      %v8848 = vsel %vm549, %v8792, 0
      %v8851 = vsel %vm549, %v8793, 0
      %v8854 = vsel %vm549, %v8794, 0
      %v8857 = vsel %vm549, %v8795, 0
      %v8860 = vsel %vm549, %v8796, 0
      %v8863 = vsel %vm549, %v8797, 0
      %v8866 = vsel %vm549, %v8798, 0
      %v8869 = vsel %vm549, %v8799, 0
      %v8872 = vsel %vm549, %v8800, 0
      %v8875 = vsel %vm549, %v8801, 0
      %v8878 = vsel %vm549, %v8802, 0
      %v8881 = vsel %vm549, %v8803, 0
      %v8884 = vsel %vm549, %v8804, 0
      %v8887 = vsel %vm549, %v8805, 0
      %v8890 = vsel %vm549, %v8806, 0
      %v8893 = vsel %vm549, %v8807, 0
      %v8896 = vsel %vm549, %v8808, 0
      %v8899 = vsel %vm549, %v8809, 0
      %v8902 = vsel %vm549, %v8810, 0
      %v8905 = vsel %vm549, %v8811, 0
      %v8908 = vsel %vm549, %v8812, 0
      %v8911 = vsel %vm549, %v8813, 0
      %v8914 = vsel %vm549, %v8814, 0
      %v8917 = vsel %vm549, %v8815, 0
      %v8920 = vsel %vm549, %v8816, 0
      %v8923 = vsel %vm835, %v8818, 0
      %8925 = vmatprep.subr.mxu0 0.0
      %8926 = vmatpush1.msra.mxu0 0.0
      %8927 = vmatprep.subr.mxu0 0.0
      %8928 = vmatpush1.msra.mxu0 0.0
      %8929 = vmatprep.subr.mxu0 0.0
      %8930 = vmatpush1.msra.mxu0 0.0
      %8931 = vmatprep.subr.mxu0 0.0
      %8932 = vmatpush1.msra.mxu0 0.0
      %8933 = vmatprep.subr.mxu0 0.0
      %8934 = vmatpush1.msra.mxu0 0.0
      %8935 = vmatprep.subr.mxu0 0.0
      %8936 = vmatpush1.msra.mxu0 0.0
      %8937 = vmatprep.subr.mxu0 0.0
      %8938 = vmatpush1.msra.mxu0 0.0
      %8939 = vmatprep.subr.mxu0 0.0
      %8940 = vmatpush1.msra.mxu0 0.0
      %8941 = vmatprep.subr.mxu0 0.0
      %8942 = vmatpush1.msra.mxu0 0.0
      %8943 = vmatprep.subr.mxu0 0.0
      %8944 = vmatpush1.msra.mxu0 0.0
      %8945 = vmatprep.subr.mxu0 0.0
      %8946 = vmatpush1.msra.mxu0 0.0
      %8947 = vmatprep.subr.mxu0 0.0
      %8948 = vmatpush1.msra.mxu0 0.0
      %8949 = vmatprep.subr.mxu0 0.0
      %8950 = vmatpush1.msra.mxu0 0.0
      %8951 = vmatprep.subr.mxu0 0.0
      %8952 = vmatpush1.msra.mxu0 0.0
      %8953 = vmatprep.subr.mxu0 0.0
      %8954 = vmatpush1.msra.mxu0 %v8923
      %8955 = vmatprep.subr.mxu0 0.0
      %8956 = vmatpush1.msra.mxu0 %v8817
      %8957 = vmatprep.subr.mxu0 0.0
      %8958 = vmatpush2.msra.mxu0 0.0
      %8959 = vmatprep.subr.mxu0 0.0
      %8960 = vmatpush2.msra.mxu0 0.0
      %8961 = vmatprep.subr.mxu0 0.0
      %8962 = vmatpush2.msra.mxu0 0.0
      %8963 = vmatprep.subr.mxu0 0.0
      %8964 = vmatpush2.msra.mxu0 0.0
      %8965 = vmatprep.subr.mxu0 0.0
      %8966 = vmatpush2.msra.mxu0 0.0
      %8967 = vmatprep.subr.mxu0 0.0
      %8968 = vmatpush2.msra.mxu0 0.0
      %8969 = vmatprep.subr.mxu0 0.0
      %8970 = vmatpush2.msra.mxu0 0.0
      %8971 = vmatprep.subr.mxu0 0.0
      %8972 = vmatpush2.msra.mxu0 0.0
      %8973 = vmatprep.subr.mxu0 0.0
      %8974 = vmatpush2.msra.mxu0 0.0
      %8975 = vmatprep.subr.mxu0 0.0
      %8976 = vmatpush2.msra.mxu0 0.0
      %8977 = vmatprep.subr.mxu0 0.0
      %8978 = vmatpush2.msra.mxu0 0.0
      %8979 = vmatprep.subr.mxu0 0.0
      %8980 = vmatpush2.msra.mxu0 0.0
      %8981 = vmatprep.subr.mxu0 0.0
      %8982 = vmatpush2.msra.mxu0 0.0
      %8983 = vmatprep.subr.mxu0 0.0
      %8984 = vmatpush2.msra.mxu0 0.0
      %8985 = vmatprep.subr.mxu0 0.0
      %8986 = vmatpush2.msra.mxu0 0.0
      %8987 = vmatprep.subr.mxu0 0.0
      %8988 = vmatpush2.msra.mxu0 0.0
      %8989 = vmatprep.mubr.f32.mxu0 0.0
      %8990 = vmatmul.mubr.f32.gmra.mxu0 %v8827
      %v8991 = vpop.f32.mrf.mxu0
      %v8992 = vadd.f32 %v8824, %v8991
      %v8993 = vpop.f32.mrf.mxu0
      %8994 = vmatprep.mubr.f32.mxu0 0.0
      %8995 = vmatmul.mubr.f32.gmra.mxu0 %v8830
      %v8996 = vpop.f32.mrf.mxu0
      %v8997 = vadd.f32 %v8824, %v8996
      %v8998 = vpop.f32.mrf.mxu0
      %8999 = vmatprep.mubr.f32.mxu0 0.0
      %9000 = vmatmul.mubr.f32.gmra.mxu0 %v8833
      %v9001 = vpop.f32.mrf.mxu0
      %v9002 = vadd.f32 %v8824, %v9001
      %v9003 = vpop.f32.mrf.mxu0
      %9004 = vmatprep.mubr.f32.mxu0 0.0
      %9005 = vmatmul.mubr.f32.gmra.mxu0 %v8836
      %v9006 = vpop.f32.mrf.mxu0
      %v9007 = vadd.f32 %v8824, %v9006
      %v9008 = vpop.f32.mrf.mxu0
      %9009 = vmatprep.mubr.f32.mxu0 0.0
      %9010 = vmatmul.mubr.f32.gmra.mxu0 %v8839
      %v9011 = vpop.f32.mrf.mxu0
      %v9012 = vadd.f32 %v8824, %v9011
      %v9013 = vpop.f32.mrf.mxu0
      %9014 = vmatprep.mubr.f32.mxu0 0.0
      %9015 = vmatmul.mubr.f32.gmra.mxu0 %v8842
      %v9016 = vpop.f32.mrf.mxu0
      %v9017 = vadd.f32 %v8824, %v9016
      %v9018 = vpop.f32.mrf.mxu0
      %9019 = vmatprep.mubr.f32.mxu0 0.0
      %9020 = vmatmul.mubr.f32.gmra.mxu0 %v8845
      %v9021 = vpop.f32.mrf.mxu0
      %v9022 = vadd.f32 %v8824, %v9021
      %v9023 = vpop.f32.mrf.mxu0
      %9024 = vmatprep.mubr.f32.mxu0 0.0
      %9025 = vmatmul.mubr.f32.gmra.mxu0 %v8848
      %v9026 = vpop.f32.mrf.mxu0
      %v9027 = vadd.f32 %v8824, %v9026
      %v9028 = vpop.f32.mrf.mxu0
      %9029 = vmatprep.mubr.f32.mxu0 0.0
      %9030 = vmatmul.mubr.f32.gmra.mxu0 %v8851
      %v9031 = vpop.f32.mrf.mxu0
      %v9032 = vadd.f32 %v8824, %v9031
      %v9033 = vpop.f32.mrf.mxu0
      %9034 = vmatprep.mubr.f32.mxu0 0.0
      %9035 = vmatmul.mubr.f32.gmra.mxu0 %v8854
      %v9036 = vpop.f32.mrf.mxu0
      %v9037 = vadd.f32 %v8824, %v9036
      %v9038 = vpop.f32.mrf.mxu0
      %9039 = vmatprep.mubr.f32.mxu0 0.0
      %9040 = vmatmul.mubr.f32.gmra.mxu0 %v8857
      %v9041 = vpop.f32.mrf.mxu0
      %v9042 = vadd.f32 %v8824, %v9041
      %v9043 = vpop.f32.mrf.mxu0
      %9044 = vmatprep.mubr.f32.mxu0 0.0
      %9045 = vmatmul.mubr.f32.gmra.mxu0 %v8860
      %v9046 = vpop.f32.mrf.mxu0
      %v9047 = vadd.f32 %v8824, %v9046
      %v9048 = vpop.f32.mrf.mxu0
      %9049 = vmatprep.mubr.f32.mxu0 0.0
      %9050 = vmatmul.mubr.f32.gmra.mxu0 %v8863
      %v9051 = vpop.f32.mrf.mxu0
      %v9052 = vadd.f32 %v8824, %v9051
      %v9053 = vpop.f32.mrf.mxu0
      %9054 = vmatprep.mubr.f32.mxu0 0.0
      %9055 = vmatmul.mubr.f32.gmra.mxu0 %v8866
      %v9056 = vpop.f32.mrf.mxu0
      %v9057 = vadd.f32 %v8824, %v9056
      %v9058 = vpop.f32.mrf.mxu0
      %9059 = vmatprep.mubr.f32.mxu0 0.0
      %9060 = vmatmul.mubr.f32.gmra.mxu0 %v8869
      %v9061 = vpop.f32.mrf.mxu0
      %v9062 = vadd.f32 %v8824, %v9061
      %v9063 = vpop.f32.mrf.mxu0
      %9064 = vmatprep.mubr.f32.mxu0 0.0
      %9065 = vmatmul.mubr.f32.gmra.mxu0 %v8872
      %v9066 = vpop.f32.mrf.mxu0
      %v9067 = vadd.f32 %v8824, %v9066
      %v9068 = vpop.f32.mrf.mxu0
      %9069 = vmatprep.mubr.f32.mxu0 0.0
      %9070 = vmatmul.mubr.f32.gmra.mxu0 %v8875
      %v9071 = vpop.f32.mrf.mxu0
      %v9072 = vadd.f32 %v8824, %v9071
      %v9073 = vpop.f32.mrf.mxu0
      %9074 = vmatprep.mubr.f32.mxu0 0.0
      %9075 = vmatmul.mubr.f32.gmra.mxu0 %v8878
      %v9076 = vpop.f32.mrf.mxu0
      %v9077 = vadd.f32 %v8824, %v9076
      %v9078 = vpop.f32.mrf.mxu0
      %9079 = vmatprep.mubr.f32.mxu0 0.0
      %9080 = vmatmul.mubr.f32.gmra.mxu0 %v8881
      %v9081 = vpop.f32.mrf.mxu0
      %v9082 = vadd.f32 %v8824, %v9081
      %v9083 = vpop.f32.mrf.mxu0
      %9084 = vmatprep.mubr.f32.mxu0 0.0
      %9085 = vmatmul.mubr.f32.gmra.mxu0 %v8884
      %v9086 = vpop.f32.mrf.mxu0
      %v9087 = vadd.f32 %v8824, %v9086
      %v9088 = vpop.f32.mrf.mxu0
      %9089 = vmatprep.mubr.f32.mxu0 0.0
      %9090 = vmatmul.mubr.f32.gmra.mxu0 %v8887
      %v9091 = vpop.f32.mrf.mxu0
      %v9092 = vadd.f32 %v8824, %v9091
      %v9093 = vpop.f32.mrf.mxu0
      %9094 = vmatprep.mubr.f32.mxu0 0.0
      %9095 = vmatmul.mubr.f32.gmra.mxu0 %v8890
      %v9096 = vpop.f32.mrf.mxu0
      %v9097 = vadd.f32 %v8824, %v9096
      %v9098 = vpop.f32.mrf.mxu0
      %9099 = vmatprep.mubr.f32.mxu0 0.0
      %9100 = vmatmul.mubr.f32.gmra.mxu0 %v8893
      %v9101 = vpop.f32.mrf.mxu0
      %v9102 = vadd.f32 %v8824, %v9101
      %v9103 = vpop.f32.mrf.mxu0
      %9104 = vmatprep.mubr.f32.mxu0 0.0
      %9105 = vmatmul.mubr.f32.gmra.mxu0 %v8896
      %v9106 = vpop.f32.mrf.mxu0
      %v9107 = vadd.f32 %v8824, %v9106
      %v9108 = vpop.f32.mrf.mxu0
      %9109 = vmatprep.mubr.f32.mxu0 0.0
      %9110 = vmatmul.mubr.f32.gmra.mxu0 %v8899
      %v9111 = vpop.f32.mrf.mxu0
      %v9112 = vadd.f32 %v8824, %v9111
      %v9113 = vpop.f32.mrf.mxu0
      %9114 = vmatprep.mubr.f32.mxu0 0.0
      %9115 = vmatmul.mubr.f32.gmra.mxu0 %v8902
      %v9116 = vpop.f32.mrf.mxu0
      %v9117 = vadd.f32 %v8824, %v9116
      %v9118 = vpop.f32.mrf.mxu0
      %9119 = vmatprep.mubr.f32.mxu0 0.0
      %9120 = vmatmul.mubr.f32.gmra.mxu0 %v8905
      %v9121 = vpop.f32.mrf.mxu0
      %v9122 = vadd.f32 %v8824, %v9121
      %v9123 = vpop.f32.mrf.mxu0
      %9124 = vmatprep.mubr.f32.mxu0 0.0
      %9125 = vmatmul.mubr.f32.gmra.mxu0 %v8908
      %v9126 = vpop.f32.mrf.mxu0
      %v9127 = vadd.f32 %v8824, %v9126
      %v9128 = vpop.f32.mrf.mxu0
      %9129 = vmatprep.mubr.f32.mxu0 0.0
      %9130 = vmatmul.mubr.f32.gmra.mxu0 %v8911
      %v9131 = vpop.f32.mrf.mxu0
      %v9132 = vadd.f32 %v8824, %v9131
      %v9133 = vpop.f32.mrf.mxu0
      %9134 = vmatprep.mubr.f32.mxu0 0.0
      %9135 = vmatmul.mubr.f32.gmra.mxu0 %v8914
      %v9136 = vpop.f32.mrf.mxu0
      %v9137 = vadd.f32 %v8824, %v9136
      %v9138 = vpop.f32.mrf.mxu0
      %9139 = vmatprep.mubr.f32.mxu0 0.0
      %9140 = vmatmul.mubr.f32.gmra.mxu0 %v8917
      %v9141 = vpop.f32.mrf.mxu0
      %v9142 = vadd.f32 %v8824, %v9141
      %v9143 = vpop.f32.mrf.mxu0
      %9144 = vmatprep.mubr.f32.mxu0 0.0
      %9145 = vmatmul.mubr.f32.gmra.mxu0 %v8920
      %v9146 = vpop.f32.mrf.mxu0
      %v9147 = vadd.f32 %v8824, %v9146
      %v9148 = vpop.f32.mrf.mxu0
      %9149 = vdwg.mxu0
      %v9150 = vmax.f32 %v8992, 0.0
      %v9151 = vmax.f32 %v8997, 0.0
      %v9152 = vmax.f32 %v9002, 0.0
      %v9153 = vmax.f32 %v9007, 0.0
      %v9154 = vmax.f32 %v9012, 0.0
      %v9155 = vmax.f32 %v9017, 0.0
      %v9156 = vmax.f32 %v9022, 0.0
      %v9157 = vmax.f32 %v9027, 0.0
      %v9158 = vmax.f32 %v9032, 0.0
      %v9159 = vmax.f32 %v9037, 0.0
      %v9160 = vmax.f32 %v9042, 0.0
      %v9161 = vmax.f32 %v9047, 0.0
      %v9162 = vmax.f32 %v9052, 0.0
      %v9163 = vmax.f32 %v9057, 0.0
      %v9164 = vmax.f32 %v9062, 0.0
      %v9165 = vmax.f32 %v9067, 0.0
      %v9166 = vmax.f32 %v9072, 0.0
      %v9167 = vmax.f32 %v9077, 0.0
      %v9168 = vmax.f32 %v9082, 0.0
      %v9169 = vmax.f32 %v9087, 0.0
      %v9170 = vmax.f32 %v9092, 0.0
      %v9171 = vmax.f32 %v9097, 0.0
      %v9172 = vmax.f32 %v9102, 0.0
      %v9173 = vmax.f32 %v9107, 0.0
      %v9174 = vmax.f32 %v9112, 0.0
      %v9175 = vmax.f32 %v9117, 0.0
      %v9176 = vmax.f32 %v9122, 0.0
      %v9177 = vmax.f32 %v9127, 0.0
      %v9178 = vmax.f32 %v9132, 0.0
      %v9179 = vmax.f32 %v9137, 0.0
      %v9180 = vmax.f32 %v9142, 0.0
      %v9181 = vmax.f32 %v9147, 0.0
      %v9182 = vld [vmem:[%s13] sm:$0xff]
      %v9183 = vld [vmem:[%s13 + $0x8] sm:$0x3]
      %v9184 = vld [vmem:[%s14] sm:$0x1]
      %v9186 = vlaneseq
      %v9187 = vshrl.u32 %v9186, 7
      %v9188 = vsub.s32 0, %v9187
      %v9189 = vrot.slane %v9184, %v9188
      %v9192 = vsel %vm549, %v9150, 0
      %v9195 = vsel %vm549, %v9151, 0
      %v9198 = vsel %vm549, %v9152, 0
      %v9201 = vsel %vm549, %v9153, 0
      %v9204 = vsel %vm549, %v9154, 0
      %v9207 = vsel %vm549, %v9155, 0
      %v9210 = vsel %vm549, %v9156, 0
      %v9213 = vsel %vm549, %v9157, 0
      %v9216 = vsel %vm549, %v9158, 0
      %v9219 = vsel %vm549, %v9159, 0
      %v9222 = vsel %vm549, %v9160, 0
      %v9225 = vsel %vm549, %v9161, 0
      %v9228 = vsel %vm549, %v9162, 0
      %v9231 = vsel %vm549, %v9163, 0
      %v9234 = vsel %vm549, %v9164, 0
      %v9237 = vsel %vm549, %v9165, 0
      %v9240 = vsel %vm549, %v9166, 0
      %v9243 = vsel %vm549, %v9167, 0
      %v9246 = vsel %vm549, %v9168, 0
      %v9249 = vsel %vm549, %v9169, 0
      %v9252 = vsel %vm549, %v9170, 0
      %v9255 = vsel %vm549, %v9171, 0
      %v9258 = vsel %vm549, %v9172, 0
      %v9261 = vsel %vm549, %v9173, 0
      %v9264 = vsel %vm549, %v9174, 0
      %v9267 = vsel %vm549, %v9175, 0
      %v9270 = vsel %vm549, %v9176, 0
      %v9273 = vsel %vm549, %v9177, 0
      %v9276 = vsel %vm549, %v9178, 0
      %v9279 = vsel %vm549, %v9179, 0
      %v9282 = vsel %vm549, %v9180, 0
      %v9285 = vsel %vm549, %v9181, 0
      %v9288 = vsel %vm835, %v9183, 0
      %9290 = vmatprep.subr.mxu0 0.0
      %9291 = vmatpush1.msra.mxu0 0.0
      %9292 = vmatprep.subr.mxu0 0.0
      %9293 = vmatpush1.msra.mxu0 0.0
      %9294 = vmatprep.subr.mxu0 0.0
      %9295 = vmatpush1.msra.mxu0 0.0
      %9296 = vmatprep.subr.mxu0 0.0
      %9297 = vmatpush1.msra.mxu0 0.0
      %9298 = vmatprep.subr.mxu0 0.0
      %9299 = vmatpush1.msra.mxu0 0.0
      %9300 = vmatprep.subr.mxu0 0.0
      %9301 = vmatpush1.msra.mxu0 0.0
      %9302 = vmatprep.subr.mxu0 0.0
      %9303 = vmatpush1.msra.mxu0 0.0
      %9304 = vmatprep.subr.mxu0 0.0
      %9305 = vmatpush1.msra.mxu0 0.0
      %9306 = vmatprep.subr.mxu0 0.0
      %9307 = vmatpush1.msra.mxu0 0.0
      %9308 = vmatprep.subr.mxu0 0.0
      %9309 = vmatpush1.msra.mxu0 0.0
      %9310 = vmatprep.subr.mxu0 0.0
      %9311 = vmatpush1.msra.mxu0 0.0
      %9312 = vmatprep.subr.mxu0 0.0
      %9313 = vmatpush1.msra.mxu0 0.0
      %9314 = vmatprep.subr.mxu0 0.0
      %9315 = vmatpush1.msra.mxu0 0.0
      %9316 = vmatprep.subr.mxu0 0.0
      %9317 = vmatpush1.msra.mxu0 0.0
      %9318 = vmatprep.subr.mxu0 0.0
      %9319 = vmatpush1.msra.mxu0 %v9288
      %9320 = vmatprep.subr.mxu0 0.0
      %9321 = vmatpush1.msra.mxu0 %v9182
      %9322 = vmatprep.subr.mxu0 0.0
      %9323 = vmatpush2.msra.mxu0 0.0
      %9324 = vmatprep.subr.mxu0 0.0
      %9325 = vmatpush2.msra.mxu0 0.0
      %9326 = vmatprep.subr.mxu0 0.0
      %9327 = vmatpush2.msra.mxu0 0.0
      %9328 = vmatprep.subr.mxu0 0.0
      %9329 = vmatpush2.msra.mxu0 0.0
      %9330 = vmatprep.subr.mxu0 0.0
      %9331 = vmatpush2.msra.mxu0 0.0
      %9332 = vmatprep.subr.mxu0 0.0
      %9333 = vmatpush2.msra.mxu0 0.0
      %9334 = vmatprep.subr.mxu0 0.0
      %9335 = vmatpush2.msra.mxu0 0.0
      %9336 = vmatprep.subr.mxu0 0.0
      %9337 = vmatpush2.msra.mxu0 0.0
      %9338 = vmatprep.subr.mxu0 0.0
      %9339 = vmatpush2.msra.mxu0 0.0
      %9340 = vmatprep.subr.mxu0 0.0
      %9341 = vmatpush2.msra.mxu0 0.0
      %9342 = vmatprep.subr.mxu0 0.0
      %9343 = vmatpush2.msra.mxu0 0.0
      %9344 = vmatprep.subr.mxu0 0.0
      %9345 = vmatpush2.msra.mxu0 0.0
      %9346 = vmatprep.subr.mxu0 0.0
      %9347 = vmatpush2.msra.mxu0 0.0
      %9348 = vmatprep.subr.mxu0 0.0
      %9349 = vmatpush2.msra.mxu0 0.0
      %9350 = vmatprep.subr.mxu0 0.0
      %9351 = vmatpush2.msra.mxu0 0.0
      %9352 = vmatprep.subr.mxu0 0.0
      %9353 = vmatpush2.msra.mxu0 0.0
      %9354 = vmatprep.mubr.f32.mxu0 0.0
      %9355 = vmatmul.mubr.f32.gmra.mxu0 %v9192
      %v9356 = vpop.f32.mrf.mxu0
      %v9357 = vadd.f32 %v9189, %v9356
      %v9358 = vpop.f32.mrf.mxu0
      %9359 = vmatprep.mubr.f32.mxu0 0.0
      %9360 = vmatmul.mubr.f32.gmra.mxu0 %v9195
      %v9361 = vpop.f32.mrf.mxu0
      %v9362 = vadd.f32 %v9189, %v9361
      %v9363 = vpop.f32.mrf.mxu0
      %9364 = vmatprep.mubr.f32.mxu0 0.0
      %9365 = vmatmul.mubr.f32.gmra.mxu0 %v9198
      %v9366 = vpop.f32.mrf.mxu0
      %v9367 = vadd.f32 %v9189, %v9366
      %v9368 = vpop.f32.mrf.mxu0
      %9369 = vmatprep.mubr.f32.mxu0 0.0
      %9370 = vmatmul.mubr.f32.gmra.mxu0 %v9201
      %v9371 = vpop.f32.mrf.mxu0
      %v9372 = vadd.f32 %v9189, %v9371
      %v9373 = vpop.f32.mrf.mxu0
      %9374 = vmatprep.mubr.f32.mxu0 0.0
      %9375 = vmatmul.mubr.f32.gmra.mxu0 %v9204
      %v9376 = vpop.f32.mrf.mxu0
      %v9377 = vadd.f32 %v9189, %v9376
      %v9378 = vpop.f32.mrf.mxu0
      %9379 = vmatprep.mubr.f32.mxu0 0.0
      %9380 = vmatmul.mubr.f32.gmra.mxu0 %v9207
      %v9381 = vpop.f32.mrf.mxu0
      %v9382 = vadd.f32 %v9189, %v9381
      %v9383 = vpop.f32.mrf.mxu0
      %9384 = vmatprep.mubr.f32.mxu0 0.0
      %9385 = vmatmul.mubr.f32.gmra.mxu0 %v9210
      %v9386 = vpop.f32.mrf.mxu0
      %v9387 = vadd.f32 %v9189, %v9386
      %v9388 = vpop.f32.mrf.mxu0
      %9389 = vmatprep.mubr.f32.mxu0 0.0
      %9390 = vmatmul.mubr.f32.gmra.mxu0 %v9213
      %v9391 = vpop.f32.mrf.mxu0
      %v9392 = vadd.f32 %v9189, %v9391
      %v9393 = vpop.f32.mrf.mxu0
      %9394 = vmatprep.mubr.f32.mxu0 0.0
      %9395 = vmatmul.mubr.f32.gmra.mxu0 %v9216
      %v9396 = vpop.f32.mrf.mxu0
      %v9397 = vadd.f32 %v9189, %v9396
      %v9398 = vpop.f32.mrf.mxu0
      %9399 = vmatprep.mubr.f32.mxu0 0.0
      %9400 = vmatmul.mubr.f32.gmra.mxu0 %v9219
      %v9401 = vpop.f32.mrf.mxu0
      %v9402 = vadd.f32 %v9189, %v9401
      %v9403 = vpop.f32.mrf.mxu0
      %9404 = vmatprep.mubr.f32.mxu0 0.0
      %9405 = vmatmul.mubr.f32.gmra.mxu0 %v9222
      %v9406 = vpop.f32.mrf.mxu0
      %v9407 = vadd.f32 %v9189, %v9406
      %v9408 = vpop.f32.mrf.mxu0
      %9409 = vmatprep.mubr.f32.mxu0 0.0
      %9410 = vmatmul.mubr.f32.gmra.mxu0 %v9225
      %v9411 = vpop.f32.mrf.mxu0
      %v9412 = vadd.f32 %v9189, %v9411
      %v9413 = vpop.f32.mrf.mxu0
      %9414 = vmatprep.mubr.f32.mxu0 0.0
      %9415 = vmatmul.mubr.f32.gmra.mxu0 %v9228
      %v9416 = vpop.f32.mrf.mxu0
      %v9417 = vadd.f32 %v9189, %v9416
      %v9418 = vpop.f32.mrf.mxu0
      %9419 = vmatprep.mubr.f32.mxu0 0.0
      %9420 = vmatmul.mubr.f32.gmra.mxu0 %v9231
      %v9421 = vpop.f32.mrf.mxu0
      %v9422 = vadd.f32 %v9189, %v9421
      %v9423 = vpop.f32.mrf.mxu0
      %9424 = vmatprep.mubr.f32.mxu0 0.0
      %9425 = vmatmul.mubr.f32.gmra.mxu0 %v9234
      %v9426 = vpop.f32.mrf.mxu0
      %v9427 = vadd.f32 %v9189, %v9426
      %v9428 = vpop.f32.mrf.mxu0
      %9429 = vmatprep.mubr.f32.mxu0 0.0
      %9430 = vmatmul.mubr.f32.gmra.mxu0 %v9237
      %v9431 = vpop.f32.mrf.mxu0
      %v9432 = vadd.f32 %v9189, %v9431
      %v9433 = vpop.f32.mrf.mxu0
      %9434 = vmatprep.mubr.f32.mxu0 0.0
      %9435 = vmatmul.mubr.f32.gmra.mxu0 %v9240
      %v9436 = vpop.f32.mrf.mxu0
      %v9437 = vadd.f32 %v9189, %v9436
      %v9438 = vpop.f32.mrf.mxu0
      %9439 = vmatprep.mubr.f32.mxu0 0.0
      %9440 = vmatmul.mubr.f32.gmra.mxu0 %v9243
      %v9441 = vpop.f32.mrf.mxu0
      %v9442 = vadd.f32 %v9189, %v9441
      %v9443 = vpop.f32.mrf.mxu0
      %9444 = vmatprep.mubr.f32.mxu0 0.0
      %9445 = vmatmul.mubr.f32.gmra.mxu0 %v9246
      %v9446 = vpop.f32.mrf.mxu0
      %v9447 = vadd.f32 %v9189, %v9446
      %v9448 = vpop.f32.mrf.mxu0
      %9449 = vmatprep.mubr.f32.mxu0 0.0
      %9450 = vmatmul.mubr.f32.gmra.mxu0 %v9249
      %v9451 = vpop.f32.mrf.mxu0
      %v9452 = vadd.f32 %v9189, %v9451
      %v9453 = vpop.f32.mrf.mxu0
      %9454 = vmatprep.mubr.f32.mxu0 0.0
      %9455 = vmatmul.mubr.f32.gmra.mxu0 %v9252
      %v9456 = vpop.f32.mrf.mxu0
      %v9457 = vadd.f32 %v9189, %v9456
      %v9458 = vpop.f32.mrf.mxu0
      %9459 = vmatprep.mubr.f32.mxu0 0.0
      %9460 = vmatmul.mubr.f32.gmra.mxu0 %v9255
      %v9461 = vpop.f32.mrf.mxu0
      %v9462 = vadd.f32 %v9189, %v9461
      %v9463 = vpop.f32.mrf.mxu0
      %9464 = vmatprep.mubr.f32.mxu0 0.0
      %9465 = vmatmul.mubr.f32.gmra.mxu0 %v9258
      %v9466 = vpop.f32.mrf.mxu0
      %v9467 = vadd.f32 %v9189, %v9466
      %v9468 = vpop.f32.mrf.mxu0
      %9469 = vmatprep.mubr.f32.mxu0 0.0
      %9470 = vmatmul.mubr.f32.gmra.mxu0 %v9261
      %v9471 = vpop.f32.mrf.mxu0
      %v9472 = vadd.f32 %v9189, %v9471
      %v9473 = vpop.f32.mrf.mxu0
      %9474 = vmatprep.mubr.f32.mxu0 0.0
      %9475 = vmatmul.mubr.f32.gmra.mxu0 %v9264
      %v9476 = vpop.f32.mrf.mxu0
      %v9477 = vadd.f32 %v9189, %v9476
      %v9478 = vpop.f32.mrf.mxu0
      %9479 = vmatprep.mubr.f32.mxu0 0.0
      %9480 = vmatmul.mubr.f32.gmra.mxu0 %v9267
      %v9481 = vpop.f32.mrf.mxu0
      %v9482 = vadd.f32 %v9189, %v9481
      %v9483 = vpop.f32.mrf.mxu0
      %9484 = vmatprep.mubr.f32.mxu0 0.0
      %9485 = vmatmul.mubr.f32.gmra.mxu0 %v9270
      %v9486 = vpop.f32.mrf.mxu0
      %v9487 = vadd.f32 %v9189, %v9486
      %v9488 = vpop.f32.mrf.mxu0
      %9489 = vmatprep.mubr.f32.mxu0 0.0
      %9490 = vmatmul.mubr.f32.gmra.mxu0 %v9273
      %v9491 = vpop.f32.mrf.mxu0
      %v9492 = vadd.f32 %v9189, %v9491
      %v9493 = vpop.f32.mrf.mxu0
      %9494 = vmatprep.mubr.f32.mxu0 0.0
      %9495 = vmatmul.mubr.f32.gmra.mxu0 %v9276
      %v9496 = vpop.f32.mrf.mxu0
      %v9497 = vadd.f32 %v9189, %v9496
      %v9498 = vpop.f32.mrf.mxu0
      %9499 = vmatprep.mubr.f32.mxu0 0.0
      %9500 = vmatmul.mubr.f32.gmra.mxu0 %v9279
      %v9501 = vpop.f32.mrf.mxu0
      %v9502 = vadd.f32 %v9189, %v9501
      %v9503 = vpop.f32.mrf.mxu0
      %9504 = vmatprep.mubr.f32.mxu0 0.0
      %9505 = vmatmul.mubr.f32.gmra.mxu0 %v9282
      %v9506 = vpop.f32.mrf.mxu0
      %v9507 = vadd.f32 %v9189, %v9506
      %v9508 = vpop.f32.mrf.mxu0
      %9509 = vmatprep.mubr.f32.mxu0 0.0
      %9510 = vmatmul.mubr.f32.gmra.mxu0 %v9285
      %v9511 = vpop.f32.mrf.mxu0
      %v9512 = vadd.f32 %v9189, %v9511
      %v9513 = vpop.f32.mrf.mxu0
      %9514 = vdwg.mxu0
      %v9515 = vmax.f32 %v9357, 0.0
      %v9516 = vmax.f32 %v9362, 0.0
      %v9517 = vmax.f32 %v9367, 0.0
      %v9518 = vmax.f32 %v9372, 0.0
      %v9519 = vmax.f32 %v9377, 0.0
      %v9520 = vmax.f32 %v9382, 0.0
      %v9521 = vmax.f32 %v9387, 0.0
      %v9522 = vmax.f32 %v9392, 0.0
      %v9523 = vmax.f32 %v9397, 0.0
      %v9524 = vmax.f32 %v9402, 0.0
      %v9525 = vmax.f32 %v9407, 0.0
      %v9526 = vmax.f32 %v9412, 0.0
      %v9527 = vmax.f32 %v9417, 0.0
      %v9528 = vmax.f32 %v9422, 0.0
      %v9529 = vmax.f32 %v9427, 0.0
      %v9530 = vmax.f32 %v9432, 0.0
      %v9531 = vmax.f32 %v9437, 0.0
      %v9532 = vmax.f32 %v9442, 0.0
      %v9533 = vmax.f32 %v9447, 0.0
      %v9534 = vmax.f32 %v9452, 0.0
      %v9535 = vmax.f32 %v9457, 0.0
      %v9536 = vmax.f32 %v9462, 0.0
      %v9537 = vmax.f32 %v9467, 0.0
      %v9538 = vmax.f32 %v9472, 0.0
      %v9539 = vmax.f32 %v9477, 0.0
      %v9540 = vmax.f32 %v9482, 0.0
      %v9541 = vmax.f32 %v9487, 0.0
      %v9542 = vmax.f32 %v9492, 0.0
      %v9543 = vmax.f32 %v9497, 0.0
      %v9544 = vmax.f32 %v9502, 0.0
      %v9545 = vmax.f32 %v9507, 0.0
      %v9546 = vmax.f32 %v9512, 0.0
      %v9547 = vld [vmem:[%s15] sm:$0xff]
      %v9548 = vld [vmem:[%s15 + $0x8] sm:$0x3]
      %v9549 = vld [vmem:[%s16] sm:$0x1]
      %v9551 = vlaneseq
      %v9552 = vshrl.u32 %v9551, 7
      %v9553 = vsub.s32 0, %v9552
      %v9554 = vrot.slane %v9549, %v9553
      %v9557 = vsel %vm549, %v9515, 0
      %v9560 = vsel %vm549, %v9516, 0
      %v9563 = vsel %vm549, %v9517, 0
      %v9566 = vsel %vm549, %v9518, 0
      %v9569 = vsel %vm549, %v9519, 0
      %v9572 = vsel %vm549, %v9520, 0
      %v9575 = vsel %vm549, %v9521, 0
      %v9578 = vsel %vm549, %v9522, 0
      %v9581 = vsel %vm549, %v9523, 0
      %v9584 = vsel %vm549, %v9524, 0
      %v9587 = vsel %vm549, %v9525, 0
      %v9590 = vsel %vm549, %v9526, 0
      %v9593 = vsel %vm549, %v9527, 0
      %v9596 = vsel %vm549, %v9528, 0
      %v9599 = vsel %vm549, %v9529, 0
      %v9602 = vsel %vm549, %v9530, 0
      %v9605 = vsel %vm549, %v9531, 0
      %v9608 = vsel %vm549, %v9532, 0
      %v9611 = vsel %vm549, %v9533, 0
      %v9614 = vsel %vm549, %v9534, 0
      %v9617 = vsel %vm549, %v9535, 0
      %v9620 = vsel %vm549, %v9536, 0
      %v9623 = vsel %vm549, %v9537, 0
      %v9626 = vsel %vm549, %v9538, 0
      %v9629 = vsel %vm549, %v9539, 0
      %v9632 = vsel %vm549, %v9540, 0
      %v9635 = vsel %vm549, %v9541, 0
      %v9638 = vsel %vm549, %v9542, 0
      %v9641 = vsel %vm549, %v9543, 0
      %v9644 = vsel %vm549, %v9544, 0
      %v9647 = vsel %vm549, %v9545, 0
      %v9650 = vsel %vm549, %v9546, 0
      %v9653 = vsel %vm835, %v9548, 0
      %9655 = vmatprep.subr.mxu0 0.0
      %9656 = vmatpush1.msra.mxu0 0.0
      %9657 = vmatprep.subr.mxu0 0.0
      %9658 = vmatpush1.msra.mxu0 0.0
      %9659 = vmatprep.subr.mxu0 0.0
      %9660 = vmatpush1.msra.mxu0 0.0
      %9661 = vmatprep.subr.mxu0 0.0
      %9662 = vmatpush1.msra.mxu0 0.0
      %9663 = vmatprep.subr.mxu0 0.0
      %9664 = vmatpush1.msra.mxu0 0.0
      %9665 = vmatprep.subr.mxu0 0.0
      %9666 = vmatpush1.msra.mxu0 0.0
      %9667 = vmatprep.subr.mxu0 0.0
      %9668 = vmatpush1.msra.mxu0 0.0
      %9669 = vmatprep.subr.mxu0 0.0
      %9670 = vmatpush1.msra.mxu0 0.0
      %9671 = vmatprep.subr.mxu0 0.0
      %9672 = vmatpush1.msra.mxu0 0.0
      %9673 = vmatprep.subr.mxu0 0.0
      %9674 = vmatpush1.msra.mxu0 0.0
      %9675 = vmatprep.subr.mxu0 0.0
      %9676 = vmatpush1.msra.mxu0 0.0
      %9677 = vmatprep.subr.mxu0 0.0
      %9678 = vmatpush1.msra.mxu0 0.0
      %9679 = vmatprep.subr.mxu0 0.0
      %9680 = vmatpush1.msra.mxu0 0.0
      %9681 = vmatprep.subr.mxu0 0.0
      %9682 = vmatpush1.msra.mxu0 0.0
      %9683 = vmatprep.subr.mxu0 0.0
      %9684 = vmatpush1.msra.mxu0 %v9653
      %9685 = vmatprep.subr.mxu0 0.0
      %9686 = vmatpush1.msra.mxu0 %v9547
      %9687 = vmatprep.subr.mxu0 0.0
      %9688 = vmatpush2.msra.mxu0 0.0
      %9689 = vmatprep.subr.mxu0 0.0
      %9690 = vmatpush2.msra.mxu0 0.0
      %9691 = vmatprep.subr.mxu0 0.0
      %9692 = vmatpush2.msra.mxu0 0.0
      %9693 = vmatprep.subr.mxu0 0.0
      %9694 = vmatpush2.msra.mxu0 0.0
      %9695 = vmatprep.subr.mxu0 0.0
      %9696 = vmatpush2.msra.mxu0 0.0
      %9697 = vmatprep.subr.mxu0 0.0
      %9698 = vmatpush2.msra.mxu0 0.0
      %9699 = vmatprep.subr.mxu0 0.0
      %9700 = vmatpush2.msra.mxu0 0.0
      %9701 = vmatprep.subr.mxu0 0.0
      %9702 = vmatpush2.msra.mxu0 0.0
      %9703 = vmatprep.subr.mxu0 0.0
      %9704 = vmatpush2.msra.mxu0 0.0
      %9705 = vmatprep.subr.mxu0 0.0
      %9706 = vmatpush2.msra.mxu0 0.0
      %9707 = vmatprep.subr.mxu0 0.0
      %9708 = vmatpush2.msra.mxu0 0.0
      %9709 = vmatprep.subr.mxu0 0.0
      %9710 = vmatpush2.msra.mxu0 0.0
      %9711 = vmatprep.subr.mxu0 0.0
      %9712 = vmatpush2.msra.mxu0 0.0
      %9713 = vmatprep.subr.mxu0 0.0
      %9714 = vmatpush2.msra.mxu0 0.0
      %9715 = vmatprep.subr.mxu0 0.0
      %9716 = vmatpush2.msra.mxu0 0.0
      %9717 = vmatprep.subr.mxu0 0.0
      %9718 = vmatpush2.msra.mxu0 0.0
      %9719 = vmatprep.mubr.f32.mxu0 0.0
      %9720 = vmatmul.mubr.f32.gmra.mxu0 %v9557
      %v9721 = vpop.f32.mrf.mxu0
      %v9722 = vadd.f32 %v9554, %v9721
      %v9723 = vpop.f32.mrf.mxu0
      %9724 = vmatprep.mubr.f32.mxu0 0.0
      %9725 = vmatmul.mubr.f32.gmra.mxu0 %v9560
      %v9726 = vpop.f32.mrf.mxu0
      %v9727 = vadd.f32 %v9554, %v9726
      %v9728 = vpop.f32.mrf.mxu0
      %9729 = vmatprep.mubr.f32.mxu0 0.0
      %9730 = vmatmul.mubr.f32.gmra.mxu0 %v9563
      %v9731 = vpop.f32.mrf.mxu0
      %v9732 = vadd.f32 %v9554, %v9731
      %v9733 = vpop.f32.mrf.mxu0
      %9734 = vmatprep.mubr.f32.mxu0 0.0
      %9735 = vmatmul.mubr.f32.gmra.mxu0 %v9566
      %v9736 = vpop.f32.mrf.mxu0
      %v9737 = vadd.f32 %v9554, %v9736
      %v9738 = vpop.f32.mrf.mxu0
      %9739 = vmatprep.mubr.f32.mxu0 0.0
      %9740 = vmatmul.mubr.f32.gmra.mxu0 %v9569
      %v9741 = vpop.f32.mrf.mxu0
      %v9742 = vadd.f32 %v9554, %v9741
      %v9743 = vpop.f32.mrf.mxu0
      %9744 = vmatprep.mubr.f32.mxu0 0.0
      %9745 = vmatmul.mubr.f32.gmra.mxu0 %v9572
      %v9746 = vpop.f32.mrf.mxu0
      %v9747 = vadd.f32 %v9554, %v9746
      %v9748 = vpop.f32.mrf.mxu0
      %9749 = vmatprep.mubr.f32.mxu0 0.0
      %9750 = vmatmul.mubr.f32.gmra.mxu0 %v9575
      %v9751 = vpop.f32.mrf.mxu0
      %v9752 = vadd.f32 %v9554, %v9751
      %v9753 = vpop.f32.mrf.mxu0
      %9754 = vmatprep.mubr.f32.mxu0 0.0
      %9755 = vmatmul.mubr.f32.gmra.mxu0 %v9578
      %v9756 = vpop.f32.mrf.mxu0
      %v9757 = vadd.f32 %v9554, %v9756
      %v9758 = vpop.f32.mrf.mxu0
      %9759 = vmatprep.mubr.f32.mxu0 0.0
      %9760 = vmatmul.mubr.f32.gmra.mxu0 %v9581
      %v9761 = vpop.f32.mrf.mxu0
      %v9762 = vadd.f32 %v9554, %v9761
      %v9763 = vpop.f32.mrf.mxu0
      %9764 = vmatprep.mubr.f32.mxu0 0.0
      %9765 = vmatmul.mubr.f32.gmra.mxu0 %v9584
      %v9766 = vpop.f32.mrf.mxu0
      %v9767 = vadd.f32 %v9554, %v9766
      %v9768 = vpop.f32.mrf.mxu0
      %9769 = vmatprep.mubr.f32.mxu0 0.0
      %9770 = vmatmul.mubr.f32.gmra.mxu0 %v9587
      %v9771 = vpop.f32.mrf.mxu0
      %v9772 = vadd.f32 %v9554, %v9771
      %v9773 = vpop.f32.mrf.mxu0
      %9774 = vmatprep.mubr.f32.mxu0 0.0
      %9775 = vmatmul.mubr.f32.gmra.mxu0 %v9590
      %v9776 = vpop.f32.mrf.mxu0
      %v9777 = vadd.f32 %v9554, %v9776
      %v9778 = vpop.f32.mrf.mxu0
      %9779 = vmatprep.mubr.f32.mxu0 0.0
      %9780 = vmatmul.mubr.f32.gmra.mxu0 %v9593
      %v9781 = vpop.f32.mrf.mxu0
      %v9782 = vadd.f32 %v9554, %v9781
      %v9783 = vpop.f32.mrf.mxu0
      %9784 = vmatprep.mubr.f32.mxu0 0.0
      %9785 = vmatmul.mubr.f32.gmra.mxu0 %v9596
      %v9786 = vpop.f32.mrf.mxu0
      %v9787 = vadd.f32 %v9554, %v9786
      %v9788 = vpop.f32.mrf.mxu0
      %9789 = vmatprep.mubr.f32.mxu0 0.0
      %9790 = vmatmul.mubr.f32.gmra.mxu0 %v9599
      %v9791 = vpop.f32.mrf.mxu0
      %v9792 = vadd.f32 %v9554, %v9791
      %v9793 = vpop.f32.mrf.mxu0
      %9794 = vmatprep.mubr.f32.mxu0 0.0
      %9795 = vmatmul.mubr.f32.gmra.mxu0 %v9602
      %v9796 = vpop.f32.mrf.mxu0
      %v9797 = vadd.f32 %v9554, %v9796
      %v9798 = vpop.f32.mrf.mxu0
      %9799 = vmatprep.mubr.f32.mxu0 0.0
      %9800 = vmatmul.mubr.f32.gmra.mxu0 %v9605
      %v9801 = vpop.f32.mrf.mxu0
      %v9802 = vadd.f32 %v9554, %v9801
      %v9803 = vpop.f32.mrf.mxu0
      %9804 = vmatprep.mubr.f32.mxu0 0.0
      %9805 = vmatmul.mubr.f32.gmra.mxu0 %v9608
      %v9806 = vpop.f32.mrf.mxu0
      %v9807 = vadd.f32 %v9554, %v9806
      %v9808 = vpop.f32.mrf.mxu0
      %9809 = vmatprep.mubr.f32.mxu0 0.0
      %9810 = vmatmul.mubr.f32.gmra.mxu0 %v9611
      %v9811 = vpop.f32.mrf.mxu0
      %v9812 = vadd.f32 %v9554, %v9811
      %v9813 = vpop.f32.mrf.mxu0
      %9814 = vmatprep.mubr.f32.mxu0 0.0
      %9815 = vmatmul.mubr.f32.gmra.mxu0 %v9614
      %v9816 = vpop.f32.mrf.mxu0
      %v9817 = vadd.f32 %v9554, %v9816
      %v9818 = vpop.f32.mrf.mxu0
      %9819 = vmatprep.mubr.f32.mxu0 0.0
      %9820 = vmatmul.mubr.f32.gmra.mxu0 %v9617
      %v9821 = vpop.f32.mrf.mxu0
      %v9822 = vadd.f32 %v9554, %v9821
      %v9823 = vpop.f32.mrf.mxu0
      %9824 = vmatprep.mubr.f32.mxu0 0.0
      %9825 = vmatmul.mubr.f32.gmra.mxu0 %v9620
      %v9826 = vpop.f32.mrf.mxu0
      %v9827 = vadd.f32 %v9554, %v9826
      %v9828 = vpop.f32.mrf.mxu0
      %9829 = vmatprep.mubr.f32.mxu0 0.0
      %9830 = vmatmul.mubr.f32.gmra.mxu0 %v9623
      %v9831 = vpop.f32.mrf.mxu0
      %v9832 = vadd.f32 %v9554, %v9831
      %v9833 = vpop.f32.mrf.mxu0
      %9834 = vmatprep.mubr.f32.mxu0 0.0
      %9835 = vmatmul.mubr.f32.gmra.mxu0 %v9626
      %v9836 = vpop.f32.mrf.mxu0
      %v9837 = vadd.f32 %v9554, %v9836
      %v9838 = vpop.f32.mrf.mxu0
      %9839 = vmatprep.mubr.f32.mxu0 0.0
      %9840 = vmatmul.mubr.f32.gmra.mxu0 %v9629
      %v9841 = vpop.f32.mrf.mxu0
      %v9842 = vadd.f32 %v9554, %v9841
      %v9843 = vpop.f32.mrf.mxu0
      %9844 = vmatprep.mubr.f32.mxu0 0.0
      %9845 = vmatmul.mubr.f32.gmra.mxu0 %v9632
      %v9846 = vpop.f32.mrf.mxu0
      %v9847 = vadd.f32 %v9554, %v9846
      %v9848 = vpop.f32.mrf.mxu0
      %9849 = vmatprep.mubr.f32.mxu0 0.0
      %9850 = vmatmul.mubr.f32.gmra.mxu0 %v9635
      %v9851 = vpop.f32.mrf.mxu0
      %v9852 = vadd.f32 %v9554, %v9851
      %v9853 = vpop.f32.mrf.mxu0
      %9854 = vmatprep.mubr.f32.mxu0 0.0
      %9855 = vmatmul.mubr.f32.gmra.mxu0 %v9638
      %v9856 = vpop.f32.mrf.mxu0
      %v9857 = vadd.f32 %v9554, %v9856
      %v9858 = vpop.f32.mrf.mxu0
      %9859 = vmatprep.mubr.f32.mxu0 0.0
      %9860 = vmatmul.mubr.f32.gmra.mxu0 %v9641
      %v9861 = vpop.f32.mrf.mxu0
      %v9862 = vadd.f32 %v9554, %v9861
      %v9863 = vpop.f32.mrf.mxu0
      %9864 = vmatprep.mubr.f32.mxu0 0.0
      %9865 = vmatmul.mubr.f32.gmra.mxu0 %v9644
      %v9866 = vpop.f32.mrf.mxu0
      %v9867 = vadd.f32 %v9554, %v9866
      %v9868 = vpop.f32.mrf.mxu0
      %9869 = vmatprep.mubr.f32.mxu0 0.0
      %9870 = vmatmul.mubr.f32.gmra.mxu0 %v9647
      %v9871 = vpop.f32.mrf.mxu0
      %v9872 = vadd.f32 %v9554, %v9871
      %v9873 = vpop.f32.mrf.mxu0
      %9874 = vmatprep.mubr.f32.mxu0 0.0
      %9875 = vmatmul.mubr.f32.gmra.mxu0 %v9650
      %v9876 = vpop.f32.mrf.mxu0
      %v9877 = vadd.f32 %v9554, %v9876
      %v9878 = vpop.f32.mrf.mxu0
      %9879 = vdwg.mxu0
      %vm9880 = vcmask 48128
      %9881 = vst.msk [vmem:[%s548] sm:$0xff] %vm9880, %v9722
      %9882 = vst.msk [vmem:[%s548 + $0x8] sm:$0xff] %vm9880, %v9727
      %9883 = vst.msk [vmem:[%s548 + $0x10] sm:$0xff] %vm9880, %v9732
      %9884 = vst.msk [vmem:[%s548 + $0x18] sm:$0xff] %vm9880, %v9737
      %9885 = vst.msk [vmem:[%s548 + $0x20] sm:$0xff] %vm9880, %v9742
      %9886 = vst.msk [vmem:[%s548 + $0x28] sm:$0xff] %vm9880, %v9747
      %9887 = vst.msk [vmem:[%s548 + $0x30] sm:$0xff] %vm9880, %v9752
      %9888 = vst.msk [vmem:[%s548 + $0x38] sm:$0xff] %vm9880, %v9757
      %9889 = vst.msk [vmem:[%s548 + $0x40] sm:$0xff] %vm9880, %v9762
      %9890 = vst.msk [vmem:[%s548 + $0x48] sm:$0xff] %vm9880, %v9767
      %9891 = vst.msk [vmem:[%s548 + $0x50] sm:$0xff] %vm9880, %v9772
      %9892 = vst.msk [vmem:[%s548 + $0x58] sm:$0xff] %vm9880, %v9777
      %9893 = vst.msk [vmem:[%s548 + $0x60] sm:$0xff] %vm9880, %v9782
      %9894 = vst.msk [vmem:[%s548 + $0x68] sm:$0xff] %vm9880, %v9787
      %9895 = vst.msk [vmem:[%s548 + $0x70] sm:$0xff] %vm9880, %v9792
      %9896 = vst.msk [vmem:[%s548 + $0x78] sm:$0xff] %vm9880, %v9797
      %9897 = vst.msk [vmem:[%s548 + $0x80] sm:$0xff] %vm9880, %v9802
      %9898 = vst.msk [vmem:[%s548 + $0x88] sm:$0xff] %vm9880, %v9807
      %9899 = vst.msk [vmem:[%s548 + $0x90] sm:$0xff] %vm9880, %v9812
      %9900 = vst.msk [vmem:[%s548 + $0x98] sm:$0xff] %vm9880, %v9817
      %9901 = vst.msk [vmem:[%s548 + $0xa0] sm:$0xff] %vm9880, %v9822
      %9902 = vst.msk [vmem:[%s548 + $0xa8] sm:$0xff] %vm9880, %v9827
      %9903 = vst.msk [vmem:[%s548 + $0xb0] sm:$0xff] %vm9880, %v9832
      %9904 = vst.msk [vmem:[%s548 + $0xb8] sm:$0xff] %vm9880, %v9837
      %9905 = vst.msk [vmem:[%s548 + $0xc0] sm:$0xff] %vm9880, %v9842
      %9906 = vst.msk [vmem:[%s548 + $0xc8] sm:$0xff] %vm9880, %v9847
      %9907 = vst.msk [vmem:[%s548 + $0xd0] sm:$0xff] %vm9880, %v9852
      %9908 = vst.msk [vmem:[%s548 + $0xd8] sm:$0xff] %vm9880, %v9857
      %9909 = vst.msk [vmem:[%s548 + $0xe0] sm:$0xff] %vm9880, %v9862
      %9910 = vst.msk [vmem:[%s548 + $0xe8] sm:$0xff] %vm9880, %v9867
      %9911 = vst.msk [vmem:[%s548 + $0xf0] sm:$0xff] %vm9880, %v9872
      %9912 = vst.msk [vmem:[%s548 + $0xf8] sm:$0xff] %vm9880, %v9877
      %p9913 = scmp.lt.s32.totalorder %s28, 1
      %s9914 = scalar_select %p9913, %s28, 1
      %s9915 = smul.addr %s9914, 32
      %s9916 = smul.addr %s9915, 8
      %s9917 = scalar_lea.vmem %s17, %s9916
      // Predicated region
      $region89: #{_lambda_.4} parent=87 // pred_check
        %p9918 = pneg %p408
      $region90: #{_lambda_.4} parent=87 // pred_check_branch
        %9920 = sbr.rel (%p9918) target = $region92
      $region91: #{_lambda_.4} parent=87 // pred_region
        _
      $region92: #{_lambda_.4} parent=87 // pred_fallthru
        _
    $region88: #{_lambda_.4} parent=5 // pred_fallthru
      _
    %p9921 = scmp.le.s32.totalorder 2, %s23
    // Predicated region
    $region93: #{_lambda_.4} parent=5 // pred_check
      %p9922 = pneg %p9921
    $region94: #{_lambda_.4} parent=5 // pred_check_branch
      %9924 = sbr.rel (%p9922) target = $region96
    $region95: #{_lambda_.4} parent=5 // pred_region
      %s9925 = ssub.s32 %s23, 2
      // Predicated region
      $region97: #{_lambda_.4} parent=95 // pred_check
        %p9926 = pneg %p414
      $region98: #{_lambda_.4} parent=95 // pred_check_branch
        %9928 = sbr.rel (%p9926) target = $region100
      $region99: #{_lambda_.4} parent=95 // pred_region
        %p9929 = scmp.lt.s32.totalorder %s29, 1
        %s9930 = scalar_select %p9929, %s29, 1
        %s9931 = smul.addr %s9930, 32
        %s9932 = smul.addr %s9931, 8
        %s9933 = scalar_lea.vmem %s17, %s9932
      $region100: #{_lambda_.4} parent=95 // pred_fallthru
        _
    $region96: #{_lambda_.4} parent=5 // pred_fallthru
      _
  $region6: #{_lambda_.4} parent=0 // loop_footer
    %s27 = sadd.s32 1, %s23
  $region7: #{_lambda_.4} parent=0 // loop_footer_branch
    %22 = sbr.rel target = $region3
  $region8: #{_lambda_.4} parent=0 // loop_exit
    _

</llo_original>
